<compile_context>
chip_gen: v7x
topology: tpu7x:2x2x1
jax: 0.10.0
libtpu: 0.0.40
codegen_flags: <defaults>
</compile_context>

<pallas_src>
import functools

import jax
import jax.numpy as jnp
from jax.experimental import pallas as pl
from jax.experimental.pallas import tpu as pltpu


# ----------------------------- helpers ---------------------------------------

def _round_up(x, m):
    return (x + m - 1) // m * m


@functools.lru_cache(maxsize=None)
def _vmem_limit_bytes():
    """Generation-aware VMEM limit: ~3/4 of physical capacity, safe fallback."""
    cap = None
    try:
        cap = getattr(pltpu.get_tpu_info(), "vmem_capacity_bytes", None)
    except Exception:
        cap = None
    if not cap:
        return 48 * 1024 * 1024                    # fits every generation (v7x has 64 MiB total)
    return min(int(cap) * 3 // 4, 100 * 1024 * 1024)


def _choose_rows_per_block(Hp, S, Cout, max_conv_rows=4352, max_acc_bytes=8 * 1024 * 1024):
    """Pooled rows per block: largest divisor of Hp whose conv-row block and f32 matmul result
    stay within budget.  Asserts (instead of silently degrading) if nothing fits."""
    lanes = _round_up(3 * Cout, 128)
    for rb in sorted((d for d in range(1, Hp + 1) if Hp % d == 0), reverse=True):
        mo = 2 * rb * S
        if mo <= max_conv_rows and (mo + 2) * lanes * 4 <= max_acc_bytes:
            return rb
    raise AssertionError(f"no valid row block for Hp={Hp}, S={S}, Cout={Cout}")


# ----------------------------- Pallas kernels --------------------------------

def _conv_relu_pool_kernel(x_ref, w_ref, b_ref, o_ref, vs_ref, *, S, Rb, Wp, Cout):
    # x_ref : (1, 1, Mrows, 3*Cin) bf16  row-block of the padded, row-flattened image with the
    #                                    three dy-shifted copies pre-fused along lanes
    # w_ref : (3*Cin, 3*Cout)      bf16  [dy*Cin+ci, dx*Cout+co] = K[co, ci, dy, dx]
    # b_ref : (1, Cout)            f32
    # o_ref : (1, Rb, Wp, Cout)    bf16  pooled rows [r*Rb, (r+1)*Rb) of this image
    # vs_ref: (Rb, S, Cout)        f32   scratch: vertically max-pooled conv rows
    Mo = 2 * Rb * S                                   # conv outputs (flat, padded width) / block

    # One fused MXU contraction over (dy, ci); the dx taps are the three column blocks.
    lhs = x_ref[0, 0, 0:Mo + 2, :]                                        # (Mo+2, 3*Cin) bf16
    y = jnp.dot(lhs, w_ref[...], preferred_element_type=jnp.float32)      # (Mo+2, 3*Cout) f32

    # Combine the dx taps with +0/+1/+2 row shifts (single f32 value, no scratch RMW).
    c = (y[0:Mo, 0:Cout]
         + y[1:Mo + 1, Cout:2 * Cout]
         + y[2:Mo + 2, 2 * Cout:3 * Cout])                                # (Mo, Cout) f32

    # Vertical 2x max: contiguous, sublane-aligned slices (S % 8 == 0); one scratch pass.
    for hp in range(Rb):
        m0 = 2 * hp * S
        vs_ref[hp, :, :] = jnp.maximum(c[m0:m0 + S, :], c[m0 + S:m0 + 2 * S, :])

    # Horizontal 2x max via two stride-2 reads over the whole block.  Columns >= W of each conv
    # row hold dx wrap-around garbage; the stride-2 reads stop at column W-1 so it is never read.
    even = vs_ref[:, pl.ds(0, Wp, stride=2), :]                           # (Rb, Wp, Cout)
    odd = vs_ref[:, pl.ds(1, Wp, stride=2), :]
    # bias + ReLU hoisted past the (monotone) max; single output store per block.
    pooled = jnp.maximum(even, odd) + b_ref[...]
    o_ref[0] = jnp.maximum(pooled, 0.0).astype(o_ref.dtype)


def _head_kernel(x_ref, w_ref, b_ref, o_ref, acc_ref):
    # x_ref: (N, Fc) bf16; w_ref: (1, Fc) f32; b_ref: (1, 1) f32; o_ref: (N, 1) f32
    # acc_ref: (N, 1) f32 partial-sum accumulator across the F chunks.
    j = pl.program_id(0)

    @pl.when(j == 0)
    def _():
        acc_ref[...] = jnp.zeros_like(acc_ref)

    x = x_ref[...].astype(jnp.float32)
    w = w_ref[...].astype(jnp.float32)
    acc_ref[...] += jnp.sum(x * w, axis=1, keepdims=True)

    @pl.when(j == pl.num_programs(0) - 1)
    def _():
        z = acc_ref[...] + b_ref[...]
        o_ref[...] = 6.0 / (1.0 + jnp.exp(-z)) + 1.0          # sigmoid(z) * 6 + 1


# ------------------------------ JAX wrappers ----------------------------------

def conv_relu_pool(x_nhwc, w_oihw, b):
    N, H, W, Cin = x_nhwc.shape
    assert H % 2 == 0 and W % 2 == 0, (H, W)
    Cout = w_oihw.shape[0]
    Hp, Wp = H // 2, W // 2
    S = _round_up(W + 2, 8)                           # padded row width, sublane aligned
    Rb = _choose_rows_per_block(Hp, S, Cout)
    nR = Hp // Rb
    Mo = 2 * Rb * S
    Mrows = Mo + 8                                    # +2 rows needed for dx shifts, rounded to 8

    # Zero-pad (1 top, 3 bottom, 1 left, right out to width S) and flatten the rows.
    xp = jnp.pad(x_nhwc.astype(jnp.bfloat16), ((0, 0), (1, 3), (1, S - W - 1), (0, 0)))
    xf = xp.reshape(N, (H + 4) * S, Cin)

    # Row-block windows (halo included) with the three dy-shifted copies fused along lanes:
    #   xb[n, r, m, dy*Cin + ci] = xf[n, 2*r*Rb*S + dy*S + m, ci]
    # Pure HBM layout plumbing; bounds each block's VMEM footprint and feeds one K=3*Cin matmul.
    blocks = []
    for r in range(nR):
        base = 2 * r * Rb * S
        slabs = [jax.lax.slice_in_dim(xf, base + dy * S, base + dy * S + Mrows, axis=1)
                 for dy in range(3)]
        blocks.append(jnp.concatenate(slabs, axis=2))
    xb = jnp.stack(blocks, axis=1)                    # (N, nR, Mrows, 3*Cin)

    # Weight slab (3*Cin, 3*Cout): row = dy*Cin+ci, col = dx*Cout+co.
    wt = jnp.transpose(w_oihw, (2, 1, 3, 0)).reshape(3 * Cin, 3 * Cout).astype(jnp.bfloat16)
    b2 = b.reshape(1, Cout).astype(jnp.float32)

    kernel = functools.partial(_conv_relu_pool_kernel, S=S, Rb=Rb, Wp=Wp, Cout=Cout)
    out = pl.pallas_call(
        kernel,
        out_shape=jax.ShapeDtypeStruct((N, Hp, Wp, Cout), jnp.bfloat16),
        grid_spec=pltpu.PrefetchScalarGridSpec(
            num_scalar_prefetch=0,
            grid=(N, nR),
            in_specs=[
                pl.BlockSpec((1, 1, Mrows, 3 * Cin), lambda n, r: (n, r, 0, 0)),
                pl.BlockSpec((3 * Cin, 3 * Cout), lambda n, r: (0, 0)),
                pl.BlockSpec((1, Cout), lambda n, r: (0, 0)),
            ],
            out_specs=pl.BlockSpec((1, Rb, Wp, Cout), lambda n, r: (n, r, 0, 0)),
            scratch_shapes=[pltpu.VMEM((Rb, S, Cout), jnp.float32)],
        ),
        compiler_params=pltpu.CompilerParams(
            dimension_semantics=("parallel", "parallel"),
            vmem_limit_bytes=_vmem_limit_bytes()),
    )(xb, wt, b2)
    return out                                        # (N, Hp, Wp, Cout) bf16


def _choose_head_chunk(F, target=16384):
    if F <= target:
        return F
    for fc in range(target, 127, -128):
        if F % fc == 0:
            return fc
    return F


def head(x_flat, wl_row, bl):
    N, F = x_flat.shape
    Fc = _choose_head_chunk(F)
    nF = F // Fc
    out = pl.pallas_call(
        _head_kernel,
        out_shape=jax.ShapeDtypeStruct((N, 1), jnp.float32),
        grid_spec=pltpu.PrefetchScalarGridSpec(
            num_scalar_prefetch=0,
            grid=(nF,),
            in_specs=[
                pl.BlockSpec((N, Fc), lambda j: (0, j)),
                pl.BlockSpec((1, Fc), lambda j: (0, j)),
                pl.BlockSpec((1, 1), lambda j: (0, 0)),
            ],
            out_specs=pl.BlockSpec((N, 1), lambda j: (0, 0)),
            scratch_shapes=[pltpu.VMEM((N, 1), jnp.float32)],
        ),
        compiler_params=pltpu.CompilerParams(
            dimension_semantics=("arbitrary",),
            vmem_limit_bytes=_vmem_limit_bytes()),
    )(x_flat, wl_row.astype(jnp.float32), bl.reshape(1, 1).astype(jnp.float32))
    return out[:, 0]


def hair_feature_extractor_forward(x_nchw, params):
    x = jnp.transpose(x_nchw, (0, 2, 3, 1)).astype(jnp.bfloat16)        # NCHW -> NHWC
    for (w, b) in params["convs"]:
        x = conv_relu_pool(x, w, b)
    N, Hf, Wf, C = x.shape
    x_flat = x.reshape(N, Hf * Wf * C)                                   # NHWC flatten
    # torch flattens (C, H, W); permute the head weight to match the (H, W, C) flatten order
    wl_hwc = jnp.transpose(params["wl"].reshape(C, Hf, Wf), (1, 2, 0)).reshape(1, Hf * Wf * C)
    return head(x_flat, wl_hwc, params["bl"])                           # (N,), values in (1, 7)


# --------------------------- pure-JAX reference -------------------------------

def reference_forward(x_nchw, params):
    x = jnp.transpose(x_nchw, (0, 2, 3, 1))
    for (w, b) in params["convs"]:
        wk = jnp.transpose(w, (2, 3, 1, 0))                             # OIHW -> HWIO
        x = jax.lax.conv_general_dilated(
            x, wk, window_strides=(1, 1), padding="SAME",
            dimension_numbers=("NHWC", "HWIO", "NHWC"),
            precision=jax.lax.Precision.HIGHEST)
        x = jnp.maximum(x + b[None, None, None, :], 0.0)
        x = jax.lax.reduce_window(x, -jnp.inf, jax.lax.max,
                                  (1, 2, 2, 1), (1, 2, 2, 1), "VALID")
    N = x.shape[0]
    xf = jnp.transpose(x, (0, 3, 1, 2)).reshape(N, -1)
    z = jnp.dot(xf, params["wl"].T, precision=jax.lax.Precision.HIGHEST) + params["bl"]
    return jax.nn.sigmoid(z)[:, 0] * 6.0 + 1.0


# --------------------------------- main ----------------------------------------

if __name__ == "__main__":
    key = jax.random.PRNGKey(0)
    ks = jax.random.split(key, 9)

    # Small shapes: 32x32 input -> after 3 MaxPool2 -> 4x4, so the Linear is 128*4*4 -> 1
    # (the original module hardcodes 256x256 inputs via Linear(128*32*32, 1)).
    H = W = 32
    batch = 2

    cins = [3, 32, 64]
    couts = [32, 64, 128]
    convs = []
    for i, (ci, co) in enumerate(zip(cins, couts)):
        w = jax.random.normal(ks[2 * i], (co, ci, 3, 3), jnp.float32) * 0.08
        b = jax.random.normal(ks[2 * i + 1], (co,), jnp.float32) * 0.05
        convs.append((w, b))

    F = 128 * (H // 8) * (W // 8)
    wl = jax.random.normal(ks[6], (1, F), jnp.float32) * 0.001
    bl = jax.random.normal(ks[7], (1,), jnp.float32) * 0.02
    params = {"convs": convs, "wl": wl, "bl": bl}

    x = jax.random.normal(ks[8], (batch, 3, H, W), jnp.float32)

    fwd = jax.jit(hair_feature_extractor_forward)
    out = jax.block_until_ready(fwd(x, params))
    ref = jax.block_until_ready(jax.jit(reference_forward)(x, params))

    assert out.shape == (batch,), out.shape
    assert jnp.allclose(out, ref, rtol=5e-3, atol=5e-2), (out, ref)
    print("KERNEL_OK")
</pallas_src>

<mosaic_0001>
module attributes {stable_mosaic.version = 11 : i64} {
  func.func @_conv_relu_pool_kernel(%arg0: i32, %arg1: i32, %arg2: memref<1x1x1288x9xbf16, #tpu.memory_space<vmem>>, %arg3: memref<9x96xbf16, #tpu.memory_space<vmem>>, %arg4: memref<1x32xf32, #tpu.memory_space<vmem>>, %arg5: memref<1x16x16x32xbf16, #tpu.memory_space<vmem>>, %arg6: memref<16x40x32xf32, #tpu.memory_space<vmem>>) attributes {dimension_semantics = [#tpu.dimension_semantics<parallel>, #tpu.dimension_semantics<parallel>], iteration_bounds = array<i64: 2, 1>, scalar_prefetch = 0 : i64, scratch_operands = 1 : i64, tpu.core_type = #tpu.core_type<tc>, window_params = [{transform_indices = @transform_0, window_bounds = array<i64: 1, 1, 1288, 9>}, {pipeline_mode = #tpu.pipeline_mode<synchronous>, transform_indices = @transform_1, window_bounds = array<i64: 9, 96>}, {pipeline_mode = #tpu.pipeline_mode<synchronous>, transform_indices = @transform_2, window_bounds = array<i64: 1, 32>}, {transform_indices = @transform_3, window_bounds = array<i64: 1, 16, 16, 32>}]} {
    %c0 = arith.constant 0 : index
    %c0_0 = arith.constant 0 : index
    %c0_1 = arith.constant 0 : index
    %c0_2 = arith.constant 0 : index
    %0 = vector.load %arg2[%c0, %c0_0, %c0_1, %c0_2] : memref<1x1x1288x9xbf16, #tpu.memory_space<vmem>>, vector<1x1x1282x9xbf16>
    %1 = vector.shape_cast %0 : vector<1x1x1282x9xbf16> to vector<1282x9xbf16>
    %c0_3 = arith.constant 0 : index
    %c0_4 = arith.constant 0 : index
    %2 = vector.load %arg3[%c0_3, %c0_4] : memref<9x96xbf16, #tpu.memory_space<vmem>>, vector<9x96xbf16>
    %cst = arith.constant dense<0.000000e+00> : vector<1282x96xf32>
    %3 = tpu.matmul %1, %2, %cst {dimension_numbers = #tpu.dot_dimension_numbers<[1], [0], [0], [1], [0, 0, 1, 1], [], []>} : vector<1282x9xbf16>, vector<9x96xbf16>, vector<1282x96xf32> -> vector<1282x96xf32>
    %4 = vector.extract_strided_slice %3 {offsets = [0, 0], sizes = [1280, 32], strides = [1, 1]} : vector<1282x96xf32> to vector<1280x32xf32>
    %5 = vector.extract_strided_slice %3 {offsets = [1, 32], sizes = [1280, 32], strides = [1, 1]} : vector<1282x96xf32> to vector<1280x32xf32>
    %6 = arith.addf %4, %5 : vector<1280x32xf32>
    %7 = vector.extract_strided_slice %3 {offsets = [2, 64], sizes = [1280, 32], strides = [1, 1]} : vector<1282x96xf32> to vector<1280x32xf32>
    %8 = arith.addf %6, %7 : vector<1280x32xf32>
    %9 = vector.extract_strided_slice %8 {offsets = [0, 0], sizes = [40, 32], strides = [1, 1]} : vector<1280x32xf32> to vector<40x32xf32>
    %10 = vector.extract_strided_slice %8 {offsets = [40, 0], sizes = [40, 32], strides = [1, 1]} : vector<1280x32xf32> to vector<40x32xf32>
    %11 = arith.maximumf %9, %10 : vector<40x32xf32>
    %c0_5 = arith.constant 0 : index
    %c0_6 = arith.constant 0 : index
    %c0_7 = arith.constant 0 : index
    %12 = vector.load %arg6[%c0_5, %c0_6, %c0_7] : memref<16x40x32xf32, #tpu.memory_space<vmem>>, vector<1x40x32xf32>
    %13 = vector.shape_cast %12 : vector<1x40x32xf32> to vector<40x32xf32>
    %14 = vector.shape_cast %11 : vector<40x32xf32> to vector<1x40x32xf32>
    tpu.vector_store %arg6[%c0_5, %c0_6, %c0_7], %14 {strides = array<i32>} : memref<16x40x32xf32, #tpu.memory_space<vmem>>, vector<1x40x32xf32>,
    %15 = vector.extract_strided_slice %8 {offsets = [80, 0], sizes = [40, 32], strides = [1, 1]} : vector<1280x32xf32> to vector<40x32xf32>
    %16 = vector.extract_strided_slice %8 {offsets = [120, 0], sizes = [40, 32], strides = [1, 1]} : vector<1280x32xf32> to vector<40x32xf32>
    %17 = arith.maximumf %15, %16 : vector<40x32xf32>
    %c1 = arith.constant 1 : index
    %c0_8 = arith.constant 0 : index
    %c0_9 = arith.constant 0 : index
    %18 = vector.load %arg6[%c1, %c0_8, %c0_9] : memref<16x40x32xf32, #tpu.memory_space<vmem>>, vector<1x40x32xf32>
    %19 = vector.shape_cast %18 : vector<1x40x32xf32> to vector<40x32xf32>
    %20 = vector.shape_cast %17 : vector<40x32xf32> to vector<1x40x32xf32>
    tpu.vector_store %arg6[%c1, %c0_8, %c0_9], %20 {strides = array<i32>} : memref<16x40x32xf32, #tpu.memory_space<vmem>>, vector<1x40x32xf32>,
    %21 = vector.extract_strided_slice %8 {offsets = [160, 0], sizes = [40, 32], strides = [1, 1]} : vector<1280x32xf32> to vector<40x32xf32>
    %22 = vector.extract_strided_slice %8 {offsets = [200, 0], sizes = [40, 32], strides = [1, 1]} : vector<1280x32xf32> to vector<40x32xf32>
    %23 = arith.maximumf %21, %22 : vector<40x32xf32>
    %c2 = arith.constant 2 : index
    %c0_10 = arith.constant 0 : index
    %c0_11 = arith.constant 0 : index
    %24 = vector.load %arg6[%c2, %c0_10, %c0_11] : memref<16x40x32xf32, #tpu.memory_space<vmem>>, vector<1x40x32xf32>
    %25 = vector.shape_cast %24 : vector<1x40x32xf32> to vector<40x32xf32>
    %26 = vector.shape_cast %23 : vector<40x32xf32> to vector<1x40x32xf32>
    tpu.vector_store %arg6[%c2, %c0_10, %c0_11], %26 {strides = array<i32>} : memref<16x40x32xf32, #tpu.memory_space<vmem>>, vector<1x40x32xf32>,
    %27 = vector.extract_strided_slice %8 {offsets = [240, 0], sizes = [40, 32], strides = [1, 1]} : vector<1280x32xf32> to vector<40x32xf32>
    %28 = vector.extract_strided_slice %8 {offsets = [280, 0], sizes = [40, 32], strides = [1, 1]} : vector<1280x32xf32> to vector<40x32xf32>
    %29 = arith.maximumf %27, %28 : vector<40x32xf32>
    %c3 = arith.constant 3 : index
    %c0_12 = arith.constant 0 : index
    %c0_13 = arith.constant 0 : index
    %30 = vector.load %arg6[%c3, %c0_12, %c0_13] : memref<16x40x32xf32, #tpu.memory_space<vmem>>, vector<1x40x32xf32>
    %31 = vector.shape_cast %30 : vector<1x40x32xf32> to vector<40x32xf32>
    %32 = vector.shape_cast %29 : vector<40x32xf32> to vector<1x40x32xf32>
    tpu.vector_store %arg6[%c3, %c0_12, %c0_13], %32 {strides = array<i32>} : memref<16x40x32xf32, #tpu.memory_space<vmem>>, vector<1x40x32xf32>,
    %33 = vector.extract_strided_slice %8 {offsets = [320, 0], sizes = [40, 32], strides = [1, 1]} : vector<1280x32xf32> to vector<40x32xf32>
    %34 = vector.extract_strided_slice %8 {offsets = [360, 0], sizes = [40, 32], strides = [1, 1]} : vector<1280x32xf32> to vector<40x32xf32>
    %35 = arith.maximumf %33, %34 : vector<40x32xf32>
    %c4 = arith.constant 4 : index
    %c0_14 = arith.constant 0 : index
    %c0_15 = arith.constant 0 : index
    %36 = vector.load %arg6[%c4, %c0_14, %c0_15] : memref<16x40x32xf32, #tpu.memory_space<vmem>>, vector<1x40x32xf32>
    %37 = vector.shape_cast %36 : vector<1x40x32xf32> to vector<40x32xf32>
    %38 = vector.shape_cast %35 : vector<40x32xf32> to vector<1x40x32xf32>
    tpu.vector_store %arg6[%c4, %c0_14, %c0_15], %38 {strides = array<i32>} : memref<16x40x32xf32, #tpu.memory_space<vmem>>, vector<1x40x32xf32>,
    %39 = vector.extract_strided_slice %8 {offsets = [400, 0], sizes = [40, 32], strides = [1, 1]} : vector<1280x32xf32> to vector<40x32xf32>
    %40 = vector.extract_strided_slice %8 {offsets = [440, 0], sizes = [40, 32], strides = [1, 1]} : vector<1280x32xf32> to vector<40x32xf32>
    %41 = arith.maximumf %39, %40 : vector<40x32xf32>
    %c5 = arith.constant 5 : index
    %c0_16 = arith.constant 0 : index
    %c0_17 = arith.constant 0 : index
    %42 = vector.load %arg6[%c5, %c0_16, %c0_17] : memref<16x40x32xf32, #tpu.memory_space<vmem>>, vector<1x40x32xf32>
    %43 = vector.shape_cast %42 : vector<1x40x32xf32> to vector<40x32xf32>
    %44 = vector.shape_cast %41 : vector<40x32xf32> to vector<1x40x32xf32>
    tpu.vector_store %arg6[%c5, %c0_16, %c0_17], %44 {strides = array<i32>} : memref<16x40x32xf32, #tpu.memory_space<vmem>>, vector<1x40x32xf32>,
    %45 = vector.extract_strided_slice %8 {offsets = [480, 0], sizes = [40, 32], strides = [1, 1]} : vector<1280x32xf32> to vector<40x32xf32>
    %46 = vector.extract_strided_slice %8 {offsets = [520, 0], sizes = [40, 32], strides = [1, 1]} : vector<1280x32xf32> to vector<40x32xf32>
    %47 = arith.maximumf %45, %46 : vector<40x32xf32>
    %c6 = arith.constant 6 : index
    %c0_18 = arith.constant 0 : index
    %c0_19 = arith.constant 0 : index
    %48 = vector.load %arg6[%c6, %c0_18, %c0_19] : memref<16x40x32xf32, #tpu.memory_space<vmem>>, vector<1x40x32xf32>
    %49 = vector.shape_cast %48 : vector<1x40x32xf32> to vector<40x32xf32>
    %50 = vector.shape_cast %47 : vector<40x32xf32> to vector<1x40x32xf32>
    tpu.vector_store %arg6[%c6, %c0_18, %c0_19], %50 {strides = array<i32>} : memref<16x40x32xf32, #tpu.memory_space<vmem>>, vector<1x40x32xf32>,
    %51 = vector.extract_strided_slice %8 {offsets = [560, 0], sizes = [40, 32], strides = [1, 1]} : vector<1280x32xf32> to vector<40x32xf32>
    %52 = vector.extract_strided_slice %8 {offsets = [600, 0], sizes = [40, 32], strides = [1, 1]} : vector<1280x32xf32> to vector<40x32xf32>
    %53 = arith.maximumf %51, %52 : vector<40x32xf32>
    %c7 = arith.constant 7 : index
    %c0_20 = arith.constant 0 : index
    %c0_21 = arith.constant 0 : index
    %54 = vector.load %arg6[%c7, %c0_20, %c0_21] : memref<16x40x32xf32, #tpu.memory_space<vmem>>, vector<1x40x32xf32>
    %55 = vector.shape_cast %54 : vector<1x40x32xf32> to vector<40x32xf32>
    %56 = vector.shape_cast %53 : vector<40x32xf32> to vector<1x40x32xf32>
    tpu.vector_store %arg6[%c7, %c0_20, %c0_21], %56 {strides = array<i32>} : memref<16x40x32xf32, #tpu.memory_space<vmem>>, vector<1x40x32xf32>,
    %57 = vector.extract_strided_slice %8 {offsets = [640, 0], sizes = [40, 32], strides = [1, 1]} : vector<1280x32xf32> to vector<40x32xf32>
    %58 = vector.extract_strided_slice %8 {offsets = [680, 0], sizes = [40, 32], strides = [1, 1]} : vector<1280x32xf32> to vector<40x32xf32>
    %59 = arith.maximumf %57, %58 : vector<40x32xf32>
    %c8 = arith.constant 8 : index
    %c0_22 = arith.constant 0 : index
    %c0_23 = arith.constant 0 : index
    %60 = vector.load %arg6[%c8, %c0_22, %c0_23] : memref<16x40x32xf32, #tpu.memory_space<vmem>>, vector<1x40x32xf32>
    %61 = vector.shape_cast %60 : vector<1x40x32xf32> to vector<40x32xf32>
    %62 = vector.shape_cast %59 : vector<40x32xf32> to vector<1x40x32xf32>
    tpu.vector_store %arg6[%c8, %c0_22, %c0_23], %62 {strides = array<i32>} : memref<16x40x32xf32, #tpu.memory_space<vmem>>, vector<1x40x32xf32>,
    %63 = vector.extract_strided_slice %8 {offsets = [720, 0], sizes = [40, 32], strides = [1, 1]} : vector<1280x32xf32> to vector<40x32xf32>
    %64 = vector.extract_strided_slice %8 {offsets = [760, 0], sizes = [40, 32], strides = [1, 1]} : vector<1280x32xf32> to vector<40x32xf32>
    %65 = arith.maximumf %63, %64 : vector<40x32xf32>
    %c9 = arith.constant 9 : index
    %c0_24 = arith.constant 0 : index
    %c0_25 = arith.constant 0 : index
    %66 = vector.load %arg6[%c9, %c0_24, %c0_25] : memref<16x40x32xf32, #tpu.memory_space<vmem>>, vector<1x40x32xf32>
    %67 = vector.shape_cast %66 : vector<1x40x32xf32> to vector<40x32xf32>
    %68 = vector.shape_cast %65 : vector<40x32xf32> to vector<1x40x32xf32>
    tpu.vector_store %arg6[%c9, %c0_24, %c0_25], %68 {strides = array<i32>} : memref<16x40x32xf32, #tpu.memory_space<vmem>>, vector<1x40x32xf32>,
    %69 = vector.extract_strided_slice %8 {offsets = [800, 0], sizes = [40, 32], strides = [1, 1]} : vector<1280x32xf32> to vector<40x32xf32>
    %70 = vector.extract_strided_slice %8 {offsets = [840, 0], sizes = [40, 32], strides = [1, 1]} : vector<1280x32xf32> to vector<40x32xf32>
    %71 = arith.maximumf %69, %70 : vector<40x32xf32>
    %c10 = arith.constant 10 : index
    %c0_26 = arith.constant 0 : index
    %c0_27 = arith.constant 0 : index
    %72 = vector.load %arg6[%c10, %c0_26, %c0_27] : memref<16x40x32xf32, #tpu.memory_space<vmem>>, vector<1x40x32xf32>
    %73 = vector.shape_cast %72 : vector<1x40x32xf32> to vector<40x32xf32>
    %74 = vector.shape_cast %71 : vector<40x32xf32> to vector<1x40x32xf32>
    tpu.vector_store %arg6[%c10, %c0_26, %c0_27], %74 {strides = array<i32>} : memref<16x40x32xf32, #tpu.memory_space<vmem>>, vector<1x40x32xf32>,
    %75 = vector.extract_strided_slice %8 {offsets = [880, 0], sizes = [40, 32], strides = [1, 1]} : vector<1280x32xf32> to vector<40x32xf32>
    %76 = vector.extract_strided_slice %8 {offsets = [920, 0], sizes = [40, 32], strides = [1, 1]} : vector<1280x32xf32> to vector<40x32xf32>
    %77 = arith.maximumf %75, %76 : vector<40x32xf32>
    %c11 = arith.constant 11 : index
    %c0_28 = arith.constant 0 : index
    %c0_29 = arith.constant 0 : index
    %78 = vector.load %arg6[%c11, %c0_28, %c0_29] : memref<16x40x32xf32, #tpu.memory_space<vmem>>, vector<1x40x32xf32>
    %79 = vector.shape_cast %78 : vector<1x40x32xf32> to vector<40x32xf32>
    %80 = vector.shape_cast %77 : vector<40x32xf32> to vector<1x40x32xf32>
    tpu.vector_store %arg6[%c11, %c0_28, %c0_29], %80 {strides = array<i32>} : memref<16x40x32xf32, #tpu.memory_space<vmem>>, vector<1x40x32xf32>,
    %81 = vector.extract_strided_slice %8 {offsets = [960, 0], sizes = [40, 32], strides = [1, 1]} : vector<1280x32xf32> to vector<40x32xf32>
    %82 = vector.extract_strided_slice %8 {offsets = [1000, 0], sizes = [40, 32], strides = [1, 1]} : vector<1280x32xf32> to vector<40x32xf32>
    %83 = arith.maximumf %81, %82 : vector<40x32xf32>
    %c12 = arith.constant 12 : index
    %c0_30 = arith.constant 0 : index
    %c0_31 = arith.constant 0 : index
    %84 = vector.load %arg6[%c12, %c0_30, %c0_31] : memref<16x40x32xf32, #tpu.memory_space<vmem>>, vector<1x40x32xf32>
    %85 = vector.shape_cast %84 : vector<1x40x32xf32> to vector<40x32xf32>
    %86 = vector.shape_cast %83 : vector<40x32xf32> to vector<1x40x32xf32>
    tpu.vector_store %arg6[%c12, %c0_30, %c0_31], %86 {strides = array<i32>} : memref<16x40x32xf32, #tpu.memory_space<vmem>>, vector<1x40x32xf32>,
    %87 = vector.extract_strided_slice %8 {offsets = [1040, 0], sizes = [40, 32], strides = [1, 1]} : vector<1280x32xf32> to vector<40x32xf32>
    %88 = vector.extract_strided_slice %8 {offsets = [1080, 0], sizes = [40, 32], strides = [1, 1]} : vector<1280x32xf32> to vector<40x32xf32>
    %89 = arith.maximumf %87, %88 : vector<40x32xf32>
    %c13 = arith.constant 13 : index
    %c0_32 = arith.constant 0 : index
    %c0_33 = arith.constant 0 : index
    %90 = vector.load %arg6[%c13, %c0_32, %c0_33] : memref<16x40x32xf32, #tpu.memory_space<vmem>>, vector<1x40x32xf32>
    %91 = vector.shape_cast %90 : vector<1x40x32xf32> to vector<40x32xf32>
    %92 = vector.shape_cast %89 : vector<40x32xf32> to vector<1x40x32xf32>
    tpu.vector_store %arg6[%c13, %c0_32, %c0_33], %92 {strides = array<i32>} : memref<16x40x32xf32, #tpu.memory_space<vmem>>, vector<1x40x32xf32>,
    %93 = vector.extract_strided_slice %8 {offsets = [1120, 0], sizes = [40, 32], strides = [1, 1]} : vector<1280x32xf32> to vector<40x32xf32>
    %94 = vector.extract_strided_slice %8 {offsets = [1160, 0], sizes = [40, 32], strides = [1, 1]} : vector<1280x32xf32> to vector<40x32xf32>
    %95 = arith.maximumf %93, %94 : vector<40x32xf32>
    %c14 = arith.constant 14 : index
    %c0_34 = arith.constant 0 : index
    %c0_35 = arith.constant 0 : index
    %96 = vector.load %arg6[%c14, %c0_34, %c0_35] : memref<16x40x32xf32, #tpu.memory_space<vmem>>, vector<1x40x32xf32>
    %97 = vector.shape_cast %96 : vector<1x40x32xf32> to vector<40x32xf32>
    %98 = vector.shape_cast %95 : vector<40x32xf32> to vector<1x40x32xf32>
    tpu.vector_store %arg6[%c14, %c0_34, %c0_35], %98 {strides = array<i32>} : memref<16x40x32xf32, #tpu.memory_space<vmem>>, vector<1x40x32xf32>,
    %99 = vector.extract_strided_slice %8 {offsets = [1200, 0], sizes = [40, 32], strides = [1, 1]} : vector<1280x32xf32> to vector<40x32xf32>
    %100 = vector.extract_strided_slice %8 {offsets = [1240, 0], sizes = [40, 32], strides = [1, 1]} : vector<1280x32xf32> to vector<40x32xf32>
    %101 = arith.maximumf %99, %100 : vector<40x32xf32>
    %c15 = arith.constant 15 : index
    %c0_36 = arith.constant 0 : index
    %c0_37 = arith.constant 0 : index
    %102 = vector.load %arg6[%c15, %c0_36, %c0_37] : memref<16x40x32xf32, #tpu.memory_space<vmem>>, vector<1x40x32xf32>
    %103 = vector.shape_cast %102 : vector<1x40x32xf32> to vector<40x32xf32>
    %104 = vector.shape_cast %101 : vector<40x32xf32> to vector<1x40x32xf32>
    tpu.vector_store %arg6[%c15, %c0_36, %c0_37], %104 {strides = array<i32>} : memref<16x40x32xf32, #tpu.memory_space<vmem>>, vector<1x40x32xf32>,
    %c0_38 = arith.constant 0 : index
    %c0_39 = arith.constant 0 : index
    %c0_40 = arith.constant 0 : index
    %105 = tpu.strided_load %arg6[%c0_38, %c0_39, %c0_40] {strides = array<i32: 1, 2, 1>} : memref<16x40x32xf32, #tpu.memory_space<vmem>>, vector<16x16x32xf32>
    %c0_41 = arith.constant 0 : index
    %c1_42 = arith.constant 1 : index
    %c0_43 = arith.constant 0 : index
    %106 = tpu.strided_load %arg6[%c0_41, %c1_42, %c0_43] {strides = array<i32: 1, 2, 1>} : memref<16x40x32xf32, #tpu.memory_space<vmem>>, vector<16x16x32xf32>
    %107 = arith.maximumf %105, %106 : vector<16x16x32xf32>
    %c0_44 = arith.constant 0 : index
    %c0_45 = arith.constant 0 : index
    %108 = vector.load %arg4[%c0_44, %c0_45] : memref<1x32xf32, #tpu.memory_space<vmem>>, vector<1x32xf32>
    %109 = vector.shape_cast %108 : vector<1x32xf32> to vector<1x1x32xf32>
    %110 = vector.broadcast %109 : vector<1x1x32xf32> to vector<16x16x32xf32>
    %111 = arith.addf %107, %110 : vector<16x16x32xf32>
    %cst_46 = arith.constant 0.000000e+00 : f32
    %112 = vector.broadcast %cst_46 : f32 to vector<16x16x32xf32>
    %113 = arith.maximumf %111, %112 : vector<16x16x32xf32>
    %114 = arith.truncf %113 : vector<16x16x32xf32> to vector<16x16x32xbf16>
    %c0_47 = arith.constant 0 : index
    %c0_48 = arith.constant 0 : index
    %c0_49 = arith.constant 0 : index
    %c0_50 = arith.constant 0 : index
    %115 = vector.load %arg5[%c0_47, %c0_48, %c0_49, %c0_50] : memref<1x16x16x32xbf16, #tpu.memory_space<vmem>>, vector<1x16x16x32xbf16>
    %116 = vector.shape_cast %115 : vector<1x16x16x32xbf16> to vector<16x16x32xbf16>
    %117 = vector.shape_cast %114 : vector<16x16x32xbf16> to vector<1x16x16x32xbf16>
    tpu.vector_store %arg5[%c0_47, %c0_48, %c0_49, %c0_50], %117 {strides = array<i32>} : memref<1x16x16x32xbf16, #tpu.memory_space<vmem>>, vector<1x16x16x32xbf16>,
    return
  }
  func.func @transform_0(%arg0: i32, %arg1: i32) -> (i32, i32, i32, i32) {
    %c0_i32 = arith.constant 0 : i32
    %c0_i32_0 = arith.constant 0 : i32
    %c0_i32_1 = arith.constant 0 : i32
    return %arg0, %arg1, %c0_i32, %c0_i32_0 : i32, i32, i32, i32
  }
  func.func @transform_1(%arg0: i32, %arg1: i32) -> (i32, i32) {
    %c0_i32 = arith.constant 0 : i32
    %c0_i32_0 = arith.constant 0 : i32
    %c0_i32_1 = arith.constant 0 : i32
    return %c0_i32, %c0_i32_0 : i32, i32
  }
  func.func @transform_2(%arg0: i32, %arg1: i32) -> (i32, i32) {
    %c0_i32 = arith.constant 0 : i32
    %c0_i32_0 = arith.constant 0 : i32
    %c0_i32_1 = arith.constant 0 : i32
    return %c0_i32, %c0_i32_0 : i32, i32
  }
  func.func @transform_3(%arg0: i32, %arg1: i32) -> (i32, i32, i32, i32) {
    %c0_i32 = arith.constant 0 : i32
    %c0_i32_0 = arith.constant 0 : i32
    %c0_i32_1 = arith.constant 0 : i32
    return %arg0, %arg1, %c0_i32, %c0_i32_0 : i32, i32, i32, i32
  }
}

module attributes {stable_mosaic.version = 11 : i64} {
  func.func @_conv_relu_pool_kernel(%arg0: i32, %arg1: i32, %arg2: memref<1x1x392x96xbf16, #tpu.memory_space<vmem>>, %arg3: memref<96x192xbf16, #tpu.memory_space<vmem>>, %arg4: memref<1x64xf32, #tpu.memory_space<vmem>>, %arg5: memref<1x8x8x64xbf16, #tpu.memory_space<vmem>>, %arg6: memref<8x24x64xf32, #tpu.memory_space<vmem>>) attributes {dimension_semantics = [#tpu.dimension_semantics<parallel>, #tpu.dimension_semantics<parallel>], iteration_bounds = array<i64: 2, 1>, scalar_prefetch = 0 : i64, scratch_operands = 1 : i64, tpu.core_type = #tpu.core_type<tc>, window_params = [{transform_indices = @transform_0, window_bounds = array<i64: 1, 1, 392, 96>}, {pipeline_mode = #tpu.pipeline_mode<synchronous>, transform_indices = @transform_1, window_bounds = array<i64: 96, 192>}, {pipeline_mode = #tpu.pipeline_mode<synchronous>, transform_indices = @transform_2, window_bounds = array<i64: 1, 64>}, {transform_indices = @transform_3, window_bounds = array<i64: 1, 8, 8, 64>}]} {
    %c0 = arith.constant 0 : index
    %c0_0 = arith.constant 0 : index
    %c0_1 = arith.constant 0 : index
    %c0_2 = arith.constant 0 : index
    %0 = vector.load %arg2[%c0, %c0_0, %c0_1, %c0_2] : memref<1x1x392x96xbf16, #tpu.memory_space<vmem>>, vector<1x1x386x96xbf16>
    %1 = vector.shape_cast %0 : vector<1x1x386x96xbf16> to vector<386x96xbf16>
    %c0_3 = arith.constant 0 : index
    %c0_4 = arith.constant 0 : index
    %2 = vector.load %arg3[%c0_3, %c0_4] : memref<96x192xbf16, #tpu.memory_space<vmem>>, vector<96x192xbf16>
    %cst = arith.constant dense<0.000000e+00> : vector<386x192xf32>
    %3 = tpu.matmul %1, %2, %cst {dimension_numbers = #tpu.dot_dimension_numbers<[1], [0], [0], [1], [0, 0, 1, 1], [], []>} : vector<386x96xbf16>, vector<96x192xbf16>, vector<386x192xf32> -> vector<386x192xf32>
    %4 = vector.extract_strided_slice %3 {offsets = [0, 0], sizes = [384, 64], strides = [1, 1]} : vector<386x192xf32> to vector<384x64xf32>
    %5 = vector.extract_strided_slice %3 {offsets = [1, 64], sizes = [384, 64], strides = [1, 1]} : vector<386x192xf32> to vector<384x64xf32>
    %6 = arith.addf %4, %5 : vector<384x64xf32>
    %7 = vector.extract_strided_slice %3 {offsets = [2, 128], sizes = [384, 64], strides = [1, 1]} : vector<386x192xf32> to vector<384x64xf32>
    %8 = arith.addf %6, %7 : vector<384x64xf32>
    %9 = vector.extract_strided_slice %8 {offsets = [0, 0], sizes = [24, 64], strides = [1, 1]} : vector<384x64xf32> to vector<24x64xf32>
    %10 = vector.extract_strided_slice %8 {offsets = [24, 0], sizes = [24, 64], strides = [1, 1]} : vector<384x64xf32> to vector<24x64xf32>
    %11 = arith.maximumf %9, %10 : vector<24x64xf32>
    %c0_5 = arith.constant 0 : index
    %c0_6 = arith.constant 0 : index
    %c0_7 = arith.constant 0 : index
    %12 = vector.load %arg6[%c0_5, %c0_6, %c0_7] : memref<8x24x64xf32, #tpu.memory_space<vmem>>, vector<1x24x64xf32>
    %13 = vector.shape_cast %12 : vector<1x24x64xf32> to vector<24x64xf32>
    %14 = vector.shape_cast %11 : vector<24x64xf32> to vector<1x24x64xf32>
    tpu.vector_store %arg6[%c0_5, %c0_6, %c0_7], %14 {strides = array<i32>} : memref<8x24x64xf32, #tpu.memory_space<vmem>>, vector<1x24x64xf32>,
    %15 = vector.extract_strided_slice %8 {offsets = [48, 0], sizes = [24, 64], strides = [1, 1]} : vector<384x64xf32> to vector<24x64xf32>
    %16 = vector.extract_strided_slice %8 {offsets = [72, 0], sizes = [24, 64], strides = [1, 1]} : vector<384x64xf32> to vector<24x64xf32>
    %17 = arith.maximumf %15, %16 : vector<24x64xf32>
    %c1 = arith.constant 1 : index
    %c0_8 = arith.constant 0 : index
    %c0_9 = arith.constant 0 : index
    %18 = vector.load %arg6[%c1, %c0_8, %c0_9] : memref<8x24x64xf32, #tpu.memory_space<vmem>>, vector<1x24x64xf32>
    %19 = vector.shape_cast %18 : vector<1x24x64xf32> to vector<24x64xf32>
    %20 = vector.shape_cast %17 : vector<24x64xf32> to vector<1x24x64xf32>
    tpu.vector_store %arg6[%c1, %c0_8, %c0_9], %20 {strides = array<i32>} : memref<8x24x64xf32, #tpu.memory_space<vmem>>, vector<1x24x64xf32>,
    %21 = vector.extract_strided_slice %8 {offsets = [96, 0], sizes = [24, 64], strides = [1, 1]} : vector<384x64xf32> to vector<24x64xf32>
    %22 = vector.extract_strided_slice %8 {offsets = [120, 0], sizes = [24, 64], strides = [1, 1]} : vector<384x64xf32> to vector<24x64xf32>
    %23 = arith.maximumf %21, %22 : vector<24x64xf32>
    %c2 = arith.constant 2 : index
    %c0_10 = arith.constant 0 : index
    %c0_11 = arith.constant 0 : index
    %24 = vector.load %arg6[%c2, %c0_10, %c0_11] : memref<8x24x64xf32, #tpu.memory_space<vmem>>, vector<1x24x64xf32>
    %25 = vector.shape_cast %24 : vector<1x24x64xf32> to vector<24x64xf32>
    %26 = vector.shape_cast %23 : vector<24x64xf32> to vector<1x24x64xf32>
    tpu.vector_store %arg6[%c2, %c0_10, %c0_11], %26 {strides = array<i32>} : memref<8x24x64xf32, #tpu.memory_space<vmem>>, vector<1x24x64xf32>,
    %27 = vector.extract_strided_slice %8 {offsets = [144, 0], sizes = [24, 64], strides = [1, 1]} : vector<384x64xf32> to vector<24x64xf32>
    %28 = vector.extract_strided_slice %8 {offsets = [168, 0], sizes = [24, 64], strides = [1, 1]} : vector<384x64xf32> to vector<24x64xf32>
    %29 = arith.maximumf %27, %28 : vector<24x64xf32>
    %c3 = arith.constant 3 : index
    %c0_12 = arith.constant 0 : index
    %c0_13 = arith.constant 0 : index
    %30 = vector.load %arg6[%c3, %c0_12, %c0_13] : memref<8x24x64xf32, #tpu.memory_space<vmem>>, vector<1x24x64xf32>
    %31 = vector.shape_cast %30 : vector<1x24x64xf32> to vector<24x64xf32>
    %32 = vector.shape_cast %29 : vector<24x64xf32> to vector<1x24x64xf32>
    tpu.vector_store %arg6[%c3, %c0_12, %c0_13], %32 {strides = array<i32>} : memref<8x24x64xf32, #tpu.memory_space<vmem>>, vector<1x24x64xf32>,
    %33 = vector.extract_strided_slice %8 {offsets = [192, 0], sizes = [24, 64], strides = [1, 1]} : vector<384x64xf32> to vector<24x64xf32>
    %34 = vector.extract_strided_slice %8 {offsets = [216, 0], sizes = [24, 64], strides = [1, 1]} : vector<384x64xf32> to vector<24x64xf32>
    %35 = arith.maximumf %33, %34 : vector<24x64xf32>
    %c4 = arith.constant 4 : index
    %c0_14 = arith.constant 0 : index
    %c0_15 = arith.constant 0 : index
    %36 = vector.load %arg6[%c4, %c0_14, %c0_15] : memref<8x24x64xf32, #tpu.memory_space<vmem>>, vector<1x24x64xf32>
    %37 = vector.shape_cast %36 : vector<1x24x64xf32> to vector<24x64xf32>
    %38 = vector.shape_cast %35 : vector<24x64xf32> to vector<1x24x64xf32>
    tpu.vector_store %arg6[%c4, %c0_14, %c0_15], %38 {strides = array<i32>} : memref<8x24x64xf32, #tpu.memory_space<vmem>>, vector<1x24x64xf32>,
    %39 = vector.extract_strided_slice %8 {offsets = [240, 0], sizes = [24, 64], strides = [1, 1]} : vector<384x64xf32> to vector<24x64xf32>
    %40 = vector.extract_strided_slice %8 {offsets = [264, 0], sizes = [24, 64], strides = [1, 1]} : vector<384x64xf32> to vector<24x64xf32>
    %41 = arith.maximumf %39, %40 : vector<24x64xf32>
    %c5 = arith.constant 5 : index
    %c0_16 = arith.constant 0 : index
    %c0_17 = arith.constant 0 : index
    %42 = vector.load %arg6[%c5, %c0_16, %c0_17] : memref<8x24x64xf32, #tpu.memory_space<vmem>>, vector<1x24x64xf32>
    %43 = vector.shape_cast %42 : vector<1x24x64xf32> to vector<24x64xf32>
    %44 = vector.shape_cast %41 : vector<24x64xf32> to vector<1x24x64xf32>
    tpu.vector_store %arg6[%c5, %c0_16, %c0_17], %44 {strides = array<i32>} : memref<8x24x64xf32, #tpu.memory_space<vmem>>, vector<1x24x64xf32>,
    %45 = vector.extract_strided_slice %8 {offsets = [288, 0], sizes = [24, 64], strides = [1, 1]} : vector<384x64xf32> to vector<24x64xf32>
    %46 = vector.extract_strided_slice %8 {offsets = [312, 0], sizes = [24, 64], strides = [1, 1]} : vector<384x64xf32> to vector<24x64xf32>
    %47 = arith.maximumf %45, %46 : vector<24x64xf32>
    %c6 = arith.constant 6 : index
    %c0_18 = arith.constant 0 : index
    %c0_19 = arith.constant 0 : index
    %48 = vector.load %arg6[%c6, %c0_18, %c0_19] : memref<8x24x64xf32, #tpu.memory_space<vmem>>, vector<1x24x64xf32>
    %49 = vector.shape_cast %48 : vector<1x24x64xf32> to vector<24x64xf32>
    %50 = vector.shape_cast %47 : vector<24x64xf32> to vector<1x24x64xf32>
    tpu.vector_store %arg6[%c6, %c0_18, %c0_19], %50 {strides = array<i32>} : memref<8x24x64xf32, #tpu.memory_space<vmem>>, vector<1x24x64xf32>,
    %51 = vector.extract_strided_slice %8 {offsets = [336, 0], sizes = [24, 64], strides = [1, 1]} : vector<384x64xf32> to vector<24x64xf32>
    %52 = vector.extract_strided_slice %8 {offsets = [360, 0], sizes = [24, 64], strides = [1, 1]} : vector<384x64xf32> to vector<24x64xf32>
    %53 = arith.maximumf %51, %52 : vector<24x64xf32>
    %c7 = arith.constant 7 : index
    %c0_20 = arith.constant 0 : index
    %c0_21 = arith.constant 0 : index
    %54 = vector.load %arg6[%c7, %c0_20, %c0_21] : memref<8x24x64xf32, #tpu.memory_space<vmem>>, vector<1x24x64xf32>
    %55 = vector.shape_cast %54 : vector<1x24x64xf32> to vector<24x64xf32>
    %56 = vector.shape_cast %53 : vector<24x64xf32> to vector<1x24x64xf32>
    tpu.vector_store %arg6[%c7, %c0_20, %c0_21], %56 {strides = array<i32>} : memref<8x24x64xf32, #tpu.memory_space<vmem>>, vector<1x24x64xf32>,
    %c0_22 = arith.constant 0 : index
    %c0_23 = arith.constant 0 : index
    %c0_24 = arith.constant 0 : index
    %57 = tpu.strided_load %arg6[%c0_22, %c0_23, %c0_24] {strides = array<i32: 1, 2, 1>} : memref<8x24x64xf32, #tpu.memory_space<vmem>>, vector<8x8x64xf32>
    %c0_25 = arith.constant 0 : index
    %c1_26 = arith.constant 1 : index
    %c0_27 = arith.constant 0 : index
    %58 = tpu.strided_load %arg6[%c0_25, %c1_26, %c0_27] {strides = array<i32: 1, 2, 1>} : memref<8x24x64xf32, #tpu.memory_space<vmem>>, vector<8x8x64xf32>
    %59 = arith.maximumf %57, %58 : vector<8x8x64xf32>
    %c0_28 = arith.constant 0 : index
    %c0_29 = arith.constant 0 : index
    %60 = vector.load %arg4[%c0_28, %c0_29] : memref<1x64xf32, #tpu.memory_space<vmem>>, vector<1x64xf32>
    %61 = vector.shape_cast %60 : vector<1x64xf32> to vector<1x1x64xf32>
    %62 = vector.broadcast %61 : vector<1x1x64xf32> to vector<8x8x64xf32>
    %63 = arith.addf %59, %62 : vector<8x8x64xf32>
    %cst_30 = arith.constant 0.000000e+00 : f32
    %64 = vector.broadcast %cst_30 : f32 to vector<8x8x64xf32>
    %65 = arith.maximumf %63, %64 : vector<8x8x64xf32>
    %66 = arith.truncf %65 : vector<8x8x64xf32> to vector<8x8x64xbf16>
    %c0_31 = arith.constant 0 : index
    %c0_32 = arith.constant 0 : index
    %c0_33 = arith.constant 0 : index
    %c0_34 = arith.constant 0 : index
    %67 = vector.load %arg5[%c0_31, %c0_32, %c0_33, %c0_34] : memref<1x8x8x64xbf16, #tpu.memory_space<vmem>>, vector<1x8x8x64xbf16>
    %68 = vector.shape_cast %67 : vector<1x8x8x64xbf16> to vector<8x8x64xbf16>
    %69 = vector.shape_cast %66 : vector<8x8x64xbf16> to vector<1x8x8x64xbf16>
    tpu.vector_store %arg5[%c0_31, %c0_32, %c0_33, %c0_34], %69 {strides = array<i32>} : memref<1x8x8x64xbf16, #tpu.memory_space<vmem>>, vector<1x8x8x64xbf16>,
    return
  }
  func.func @transform_0(%arg0: i32, %arg1: i32) -> (i32, i32, i32, i32) {
    %c0_i32 = arith.constant 0 : i32
    %c0_i32_0 = arith.constant 0 : i32
    %c0_i32_1 = arith.constant 0 : i32
    return %arg0, %arg1, %c0_i32, %c0_i32_0 : i32, i32, i32, i32
  }
  func.func @transform_1(%arg0: i32, %arg1: i32) -> (i32, i32) {
    %c0_i32 = arith.constant 0 : i32
    %c0_i32_0 = arith.constant 0 : i32
    %c0_i32_1 = arith.constant 0 : i32
    return %c0_i32, %c0_i32_0 : i32, i32
  }
  func.func @transform_2(%arg0: i32, %arg1: i32) -> (i32, i32) {
    %c0_i32 = arith.constant 0 : i32
    %c0_i32_0 = arith.constant 0 : i32
    %c0_i32_1 = arith.constant 0 : i32
    return %c0_i32, %c0_i32_0 : i32, i32
  }
  func.func @transform_3(%arg0: i32, %arg1: i32) -> (i32, i32, i32, i32) {
    %c0_i32 = arith.constant 0 : i32
    %c0_i32_0 = arith.constant 0 : i32
    %c0_i32_1 = arith.constant 0 : i32
    return %arg0, %arg1, %c0_i32, %c0_i32_0 : i32, i32, i32, i32
  }
}

module attributes {stable_mosaic.version = 11 : i64} {
  func.func @_conv_relu_pool_kernel(%arg0: i32, %arg1: i32, %arg2: memref<1x1x136x192xbf16, #tpu.memory_space<vmem>>, %arg3: memref<192x384xbf16, #tpu.memory_space<vmem>>, %arg4: memref<1x128xf32, #tpu.memory_space<vmem>>, %arg5: memref<1x4x4x128xbf16, #tpu.memory_space<vmem>>, %arg6: memref<4x16x128xf32, #tpu.memory_space<vmem>>) attributes {dimension_semantics = [#tpu.dimension_semantics<parallel>, #tpu.dimension_semantics<parallel>], iteration_bounds = array<i64: 2, 1>, scalar_prefetch = 0 : i64, scratch_operands = 1 : i64, tpu.core_type = #tpu.core_type<tc>, window_params = [{transform_indices = @transform_0, window_bounds = array<i64: 1, 1, 136, 192>}, {pipeline_mode = #tpu.pipeline_mode<synchronous>, transform_indices = @transform_1, window_bounds = array<i64: 192, 384>}, {pipeline_mode = #tpu.pipeline_mode<synchronous>, transform_indices = @transform_2, window_bounds = array<i64: 1, 128>}, {transform_indices = @transform_3, window_bounds = array<i64: 1, 4, 4, 128>}]} {
    %c0 = arith.constant 0 : index
    %c0_0 = arith.constant 0 : index
    %c0_1 = arith.constant 0 : index
    %c0_2 = arith.constant 0 : index
    %0 = vector.load %arg2[%c0, %c0_0, %c0_1, %c0_2] : memref<1x1x136x192xbf16, #tpu.memory_space<vmem>>, vector<1x1x130x192xbf16>
    %1 = vector.shape_cast %0 : vector<1x1x130x192xbf16> to vector<130x192xbf16>
    %c0_3 = arith.constant 0 : index
    %c0_4 = arith.constant 0 : index
    %2 = vector.load %arg3[%c0_3, %c0_4] : memref<192x384xbf16, #tpu.memory_space<vmem>>, vector<192x384xbf16>
    %cst = arith.constant dense<0.000000e+00> : vector<130x384xf32>
    %3 = tpu.matmul %1, %2, %cst {dimension_numbers = #tpu.dot_dimension_numbers<[1], [0], [0], [1], [0, 0, 1, 1], [], []>} : vector<130x192xbf16>, vector<192x384xbf16>, vector<130x384xf32> -> vector<130x384xf32>
    %4 = vector.extract_strided_slice %3 {offsets = [0, 0], sizes = [128, 128], strides = [1, 1]} : vector<130x384xf32> to vector<128x128xf32>
    %5 = vector.extract_strided_slice %3 {offsets = [1, 128], sizes = [128, 128], strides = [1, 1]} : vector<130x384xf32> to vector<128x128xf32>
    %6 = arith.addf %4, %5 : vector<128x128xf32>
    %7 = vector.extract_strided_slice %3 {offsets = [2, 256], sizes = [128, 128], strides = [1, 1]} : vector<130x384xf32> to vector<128x128xf32>
    %8 = arith.addf %6, %7 : vector<128x128xf32>
    %9 = vector.extract_strided_slice %8 {offsets = [0, 0], sizes = [16, 128], strides = [1, 1]} : vector<128x128xf32> to vector<16x128xf32>
    %10 = vector.extract_strided_slice %8 {offsets = [16, 0], sizes = [16, 128], strides = [1, 1]} : vector<128x128xf32> to vector<16x128xf32>
    %11 = arith.maximumf %9, %10 : vector<16x128xf32>
    %c0_5 = arith.constant 0 : index
    %c0_6 = arith.constant 0 : index
    %c0_7 = arith.constant 0 : index
    %12 = vector.load %arg6[%c0_5, %c0_6, %c0_7] : memref<4x16x128xf32, #tpu.memory_space<vmem>>, vector<1x16x128xf32>
    %13 = vector.shape_cast %12 : vector<1x16x128xf32> to vector<16x128xf32>
    %14 = vector.shape_cast %11 : vector<16x128xf32> to vector<1x16x128xf32>
    tpu.vector_store %arg6[%c0_5, %c0_6, %c0_7], %14 {strides = array<i32>} : memref<4x16x128xf32, #tpu.memory_space<vmem>>, vector<1x16x128xf32>,
    %15 = vector.extract_strided_slice %8 {offsets = [32, 0], sizes = [16, 128], strides = [1, 1]} : vector<128x128xf32> to vector<16x128xf32>
    %16 = vector.extract_strided_slice %8 {offsets = [48, 0], sizes = [16, 128], strides = [1, 1]} : vector<128x128xf32> to vector<16x128xf32>
    %17 = arith.maximumf %15, %16 : vector<16x128xf32>
    %c1 = arith.constant 1 : index
    %c0_8 = arith.constant 0 : index
    %c0_9 = arith.constant 0 : index
    %18 = vector.load %arg6[%c1, %c0_8, %c0_9] : memref<4x16x128xf32, #tpu.memory_space<vmem>>, vector<1x16x128xf32>
    %19 = vector.shape_cast %18 : vector<1x16x128xf32> to vector<16x128xf32>
    %20 = vector.shape_cast %17 : vector<16x128xf32> to vector<1x16x128xf32>
    tpu.vector_store %arg6[%c1, %c0_8, %c0_9], %20 {strides = array<i32>} : memref<4x16x128xf32, #tpu.memory_space<vmem>>, vector<1x16x128xf32>,
    %21 = vector.extract_strided_slice %8 {offsets = [64, 0], sizes = [16, 128], strides = [1, 1]} : vector<128x128xf32> to vector<16x128xf32>
    %22 = vector.extract_strided_slice %8 {offsets = [80, 0], sizes = [16, 128], strides = [1, 1]} : vector<128x128xf32> to vector<16x128xf32>
    %23 = arith.maximumf %21, %22 : vector<16x128xf32>
    %c2 = arith.constant 2 : index
    %c0_10 = arith.constant 0 : index
    %c0_11 = arith.constant 0 : index
    %24 = vector.load %arg6[%c2, %c0_10, %c0_11] : memref<4x16x128xf32, #tpu.memory_space<vmem>>, vector<1x16x128xf32>
    %25 = vector.shape_cast %24 : vector<1x16x128xf32> to vector<16x128xf32>
    %26 = vector.shape_cast %23 : vector<16x128xf32> to vector<1x16x128xf32>
    tpu.vector_store %arg6[%c2, %c0_10, %c0_11], %26 {strides = array<i32>} : memref<4x16x128xf32, #tpu.memory_space<vmem>>, vector<1x16x128xf32>,
    %27 = vector.extract_strided_slice %8 {offsets = [96, 0], sizes = [16, 128], strides = [1, 1]} : vector<128x128xf32> to vector<16x128xf32>
    %28 = vector.extract_strided_slice %8 {offsets = [112, 0], sizes = [16, 128], strides = [1, 1]} : vector<128x128xf32> to vector<16x128xf32>
    %29 = arith.maximumf %27, %28 : vector<16x128xf32>
    %c3 = arith.constant 3 : index
    %c0_12 = arith.constant 0 : index
    %c0_13 = arith.constant 0 : index
    %30 = vector.load %arg6[%c3, %c0_12, %c0_13] : memref<4x16x128xf32, #tpu.memory_space<vmem>>, vector<1x16x128xf32>
    %31 = vector.shape_cast %30 : vector<1x16x128xf32> to vector<16x128xf32>
    %32 = vector.shape_cast %29 : vector<16x128xf32> to vector<1x16x128xf32>
    tpu.vector_store %arg6[%c3, %c0_12, %c0_13], %32 {strides = array<i32>} : memref<4x16x128xf32, #tpu.memory_space<vmem>>, vector<1x16x128xf32>,
    %c0_14 = arith.constant 0 : index
    %c0_15 = arith.constant 0 : index
    %c0_16 = arith.constant 0 : index
    %33 = tpu.strided_load %arg6[%c0_14, %c0_15, %c0_16] {strides = array<i32: 1, 2, 1>} : memref<4x16x128xf32, #tpu.memory_space<vmem>>, vector<4x4x128xf32>
    %c0_17 = arith.constant 0 : index
    %c1_18 = arith.constant 1 : index
    %c0_19 = arith.constant 0 : index
    %34 = tpu.strided_load %arg6[%c0_17, %c1_18, %c0_19] {strides = array<i32: 1, 2, 1>} : memref<4x16x128xf32, #tpu.memory_space<vmem>>, vector<4x4x128xf32>
    %35 = arith.maximumf %33, %34 : vector<4x4x128xf32>
    %c0_20 = arith.constant 0 : index
    %c0_21 = arith.constant 0 : index
    %36 = vector.load %arg4[%c0_20, %c0_21] : memref<1x128xf32, #tpu.memory_space<vmem>>, vector<1x128xf32>
    %37 = vector.shape_cast %36 : vector<1x128xf32> to vector<1x1x128xf32>
    %38 = vector.broadcast %37 : vector<1x1x128xf32> to vector<4x4x128xf32>
    %39 = arith.addf %35, %38 : vector<4x4x128xf32>
    %cst_22 = arith.constant 0.000000e+00 : f32
    %40 = vector.broadcast %cst_22 : f32 to vector<4x4x128xf32>
    %41 = arith.maximumf %39, %40 : vector<4x4x128xf32>
    %42 = arith.truncf %41 : vector<4x4x128xf32> to vector<4x4x128xbf16>
    %c0_23 = arith.constant 0 : index
    %c0_24 = arith.constant 0 : index
    %c0_25 = arith.constant 0 : index
    %c0_26 = arith.constant 0 : index
    %43 = vector.load %arg5[%c0_23, %c0_24, %c0_25, %c0_26] : memref<1x4x4x128xbf16, #tpu.memory_space<vmem>>, vector<1x4x4x128xbf16>
    %44 = vector.shape_cast %43 : vector<1x4x4x128xbf16> to vector<4x4x128xbf16>
    %45 = vector.shape_cast %42 : vector<4x4x128xbf16> to vector<1x4x4x128xbf16>
    tpu.vector_store %arg5[%c0_23, %c0_24, %c0_25, %c0_26], %45 {strides = array<i32>} : memref<1x4x4x128xbf16, #tpu.memory_space<vmem>>, vector<1x4x4x128xbf16>,
    return
  }
  func.func @transform_0(%arg0: i32, %arg1: i32) -> (i32, i32, i32, i32) {
    %c0_i32 = arith.constant 0 : i32
    %c0_i32_0 = arith.constant 0 : i32
    %c0_i32_1 = arith.constant 0 : i32
    return %arg0, %arg1, %c0_i32, %c0_i32_0 : i32, i32, i32, i32
  }
  func.func @transform_1(%arg0: i32, %arg1: i32) -> (i32, i32) {
    %c0_i32 = arith.constant 0 : i32
    %c0_i32_0 = arith.constant 0 : i32
    %c0_i32_1 = arith.constant 0 : i32
    return %c0_i32, %c0_i32_0 : i32, i32
  }
  func.func @transform_2(%arg0: i32, %arg1: i32) -> (i32, i32) {
    %c0_i32 = arith.constant 0 : i32
    %c0_i32_0 = arith.constant 0 : i32
    %c0_i32_1 = arith.constant 0 : i32
    return %c0_i32, %c0_i32_0 : i32, i32
  }
  func.func @transform_3(%arg0: i32, %arg1: i32) -> (i32, i32, i32, i32) {
    %c0_i32 = arith.constant 0 : i32
    %c0_i32_0 = arith.constant 0 : i32
    %c0_i32_1 = arith.constant 0 : i32
    return %arg0, %arg1, %c0_i32, %c0_i32_0 : i32, i32, i32, i32
  }
}

module attributes {stable_mosaic.version = 11 : i64} {
  func.func @_head_kernel(%arg0: i32, %arg1: memref<2x2048xbf16, #tpu.memory_space<vmem>>, %arg2: memref<1x2048xf32, #tpu.memory_space<vmem>>, %arg3: memref<1x1xf32, #tpu.memory_space<vmem>>, %arg4: memref<2x1xf32, #tpu.memory_space<vmem>>, %arg5: memref<2x1xf32, #tpu.memory_space<vmem>>) attributes {dimension_semantics = [#tpu.dimension_semantics<arbitrary>], iteration_bounds = array<i64: 1>, scalar_prefetch = 0 : i64, scratch_operands = 1 : i64, tpu.core_type = #tpu.core_type<tc>, window_params = [{transform_indices = @transform_0, window_bounds = array<i64: 2, 2048>}, {transform_indices = @transform_1, window_bounds = array<i64: 1, 2048>}, {pipeline_mode = #tpu.pipeline_mode<synchronous>, transform_indices = @transform_2, window_bounds = array<i64: 1, 1>}, {pipeline_mode = #tpu.pipeline_mode<synchronous>, transform_indices = @transform_3, window_bounds = array<i64: 2, 1>}]} {
    %c0_i32 = arith.constant 0 : i32
    %0 = arith.cmpi eq, %arg0, %c0_i32 : i32
    %1 = arith.extui %0 : i1 to i32
    %c0_i32_0 = arith.constant 0 : i32
    %2 = arith.cmpi ne, %1, %c0_i32_0 : i32
    scf.if %2 {
      %cst_10 = arith.constant 0.000000e+00 : f32
      %16 = vector.broadcast %cst_10 : f32 to vector<2x1xf32>
      %c0_11 = arith.constant 0 : index
      %c0_12 = arith.constant 0 : index
      %17 = vector.load %arg5[%c0_11, %c0_12] : memref<2x1xf32, #tpu.memory_space<vmem>>, vector<2x1xf32>
      tpu.vector_store %arg5[%c0_11, %c0_12], %16 {strides = array<i32>} : memref<2x1xf32, #tpu.memory_space<vmem>>, vector<2x1xf32>,
    } else {
    }
    %c0 = arith.constant 0 : index
    %c0_1 = arith.constant 0 : index
    %3 = vector.load %arg1[%c0, %c0_1] : memref<2x2048xbf16, #tpu.memory_space<vmem>>, vector<2x2048xbf16>
    %4 = arith.extf %3 : vector<2x2048xbf16> to vector<2x2048xf32>
    %c0_2 = arith.constant 0 : index
    %c0_3 = arith.constant 0 : index
    %5 = vector.load %arg2[%c0_2, %c0_3] : memref<1x2048xf32, #tpu.memory_space<vmem>>, vector<1x2048xf32>
    %c0_4 = arith.constant 0 : index
    %c0_5 = arith.constant 0 : index
    %6 = vector.load %arg5[%c0_4, %c0_5] : memref<2x1xf32, #tpu.memory_space<vmem>>, vector<2x1xf32>
    %7 = vector.broadcast %5 : vector<1x2048xf32> to vector<2x2048xf32>
    %8 = arith.mulf %4, %7 : vector<2x2048xf32>
    %cst = arith.constant dense<0.000000e+00> : vector<2xf32>
    %9 = vector.multi_reduction <add>, %8, %cst [1] : vector<2x2048xf32> to vector<2xf32>
    %10 = vector.shape_cast %9 : vector<2xf32> to vector<2x1xf32>
    %11 = arith.addf %6, %10 : vector<2x1xf32>
    %c0_6 = arith.constant 0 : index
    %c0_7 = arith.constant 0 : index
    %12 = vector.load %arg5[%c0_6, %c0_7] : memref<2x1xf32, #tpu.memory_space<vmem>>, vector<2x1xf32>
    tpu.vector_store %arg5[%c0_6, %c0_7], %11 {strides = array<i32>} : memref<2x1xf32, #tpu.memory_space<vmem>>, vector<2x1xf32>,
    %c0_i32_8 = arith.constant 0 : i32
    %13 = arith.cmpi eq, %arg0, %c0_i32_8 : i32
    %14 = arith.extui %13 : i1 to i32
    %c0_i32_9 = arith.constant 0 : i32
    %15 = arith.cmpi ne, %14, %c0_i32_9 : i32
    scf.if %15 {
      %c0_10 = arith.constant 0 : index
      %c0_11 = arith.constant 0 : index
      %16 = vector.load %arg5[%c0_10, %c0_11] : memref<2x1xf32, #tpu.memory_space<vmem>>, vector<2x1xf32>
      %c0_12 = arith.constant 0 : index
      %c0_13 = arith.constant 0 : index
      %17 = vector.load %arg3[%c0_12, %c0_13] : memref<1x1xf32, #tpu.memory_space<vmem>>, vector<1x1xf32>
      %18 = vector.broadcast %17 : vector<1x1xf32> to vector<2x1xf32>
      %19 = arith.addf %16, %18 : vector<2x1xf32>
      %cst_14 = arith.constant 0.000000e+00 : f32
      %20 = vector.broadcast %cst_14 : f32 to vector<2x1xf32>
      %21 = arith.subf %20, %19 : vector<2x1xf32>
      %22 = math.exp %21 : vector<2x1xf32>
      %cst_15 = arith.constant 1.000000e+00 : f32
      %23 = vector.broadcast %cst_15 : f32 to vector<2x1xf32>
      %24 = arith.addf %23, %22 : vector<2x1xf32>
      %cst_16 = arith.constant 6.000000e+00 : f32
      %25 = vector.broadcast %cst_16 : f32 to vector<2x1xf32>
      %26 = arith.divf %25, %24 : vector<2x1xf32>
      %cst_17 = arith.constant 1.000000e+00 : f32
      %27 = vector.broadcast %cst_17 : f32 to vector<2x1xf32>
      %28 = arith.addf %26, %27 : vector<2x1xf32>
      %c0_18 = arith.constant 0 : index
      %c0_19 = arith.constant 0 : index
      %29 = vector.load %arg4[%c0_18, %c0_19] : memref<2x1xf32, #tpu.memory_space<vmem>>, vector<2x1xf32>
      tpu.vector_store %arg4[%c0_18, %c0_19], %28 {strides = array<i32>} : memref<2x1xf32, #tpu.memory_space<vmem>>, vector<2x1xf32>,
    } else {
    }
    return
  }
  func.func @transform_0(%arg0: i32) -> (i32, i32) {
    %c0_i32 = arith.constant 0 : i32
    %c0_i32_0 = arith.constant 0 : i32
    return %c0_i32, %arg0 : i32, i32
  }
  func.func @transform_1(%arg0: i32) -> (i32, i32) {
    %c0_i32 = arith.constant 0 : i32
    %c0_i32_0 = arith.constant 0 : i32
    return %c0_i32, %arg0 : i32, i32
  }
  func.func @transform_2(%arg0: i32) -> (i32, i32) {
    %c0_i32 = arith.constant 0 : i32
    %c0_i32_0 = arith.constant 0 : i32
    %c0_i32_1 = arith.constant 0 : i32
    return %c0_i32, %c0_i32_0 : i32, i32
  }
  func.func @transform_3(%arg0: i32) -> (i32, i32) {
    %c0_i32 = arith.constant 0 : i32
    %c0_i32_0 = arith.constant 0 : i32
    %c0_i32_1 = arith.constant 0 : i32
    return %c0_i32, %c0_i32_0 : i32, i32
  }
}

</mosaic_0001>

<llo_original>
// kernel: hair_feature_extractor_forward.5
$region0: #{hair_feature_extractor_forward.5}
  #allocation0 [shape = 'u32[]', space=smem, size = 0x4, offset = 0x4, fixed_abs, tag = 'smem constant byte address 0x4 - core index']
  #allocation1 [shape = 'u32[144,128]{1,0:T(1,128)}', space=vmem, size = 0x12000, scoped, tag = 'internal scratch']
  #allocation2 [shape = 'f32[8,24,64]{2,1,0:T(8,128)}', space=vmem, size = 0x18000, scoped, tag = 'scratch operand']
  %s0 = inlined_call_operand.vmem [shape: bf16[2,1,392,96], index: 0, kind: input, shape index: {}]
  %s1 = inlined_call_operand.vmem [shape: bf16[96,192], index: 1, kind: input, shape index: {}]
  %s2 = inlined_call_operand.vmem [shape: f32[1,64], index: 2, kind: input, shape index: {}]
  %s3 = inlined_call_operand.vmem [shape: bf16[2,8,8,64], index: 3, kind: output, shape index: {}]
  %s4 = sld [smem:[#allocation0]]
  $region45: #{hair_feature_extractor_forward.5} parent=0
    _
  %s6 = ssub.s32 1, %s4
  %s7 = scalar_select 0, %s6, %s4
  loop: start=0, step=1, limit=4
  $region2: #{hair_feature_extractor_forward.5} parent=0 // loop_pre_header
    _
  $region3: #{hair_feature_extractor_forward.5} parent=0 // loop_header
    %s9 = sphi 0, %s13
    %p10 = scmp.ge.s32.totalorder %s9, 4
    %s16 = sphi 0, %s28
    %s17 = sphi 0, %s24
    %s18 = sphi 0, %s16
    %s19 = sphi 0, %s17
    %s20 = sphi 0, %s18
    %s21 = sphi 0, %s19
    %s33 = sphi 0, %s35
    %s36 = sphi 0, %s33
    %s37 = sphi 0, %s36
    %s53 = sphi 0, %s37
    %s57 = sphi 0, %s57
    %s59 = sphi 0, %s57
    %s60 = sphi 0, %s59
    %s74 = sphi 0, %s60
    %s78 = sphi 0, %s78
    %s80 = sphi 0, %s78
    %s81 = sphi 0, %s80
    %s95 = sphi 0, %s81
    %s103 = sphi 0, %s105
    %s106 = sphi 0, %s103
    %s107 = sphi 0, %s106
    %s123 = sphi 0, %s107
  $region4: #{hair_feature_extractor_forward.5} parent=0 // loop_header_branch
    %12 = sbr.rel (%p10) target = $region8
  $region5: #{hair_feature_extractor_forward.5} parent=0 // loop_body
    %s14 = ssub.s32 %s9, 1
    %s15 = ssub.s32 %s9, 2
    %s22 = sadd.s32 1, %s17
    %p23 = scmp.ge.s32.totalorder %s22, 1
    %s24 = scalar_select %p23, 0, %s22
    %s25 = sadd.s32 1, %s16
    %s26 = scalar_select %p23, %s25, %s16
    %p27 = scmp.ge.s32.totalorder %s26, 2
    %s28 = scalar_select %p27, 0, %s26
    %s29 = ssub.s32 %s16, %s28
    %s30 = ssub.s32 %s17, %s24
    %s31 = sor.u32 %s29, %s30
    %p32 = scmp.eq.s32.totalorder %s31, 0
    %s34 = sadd.s32 %s33, 1
    %s35 = scalar_select %p32, %s33, %s34
    %p38 = pneg %p32
    %p39 = scmp.eq.s32.totalorder %s9, 1
    %p40 = por %p38, %p39
    %p41 = scmp.ne.s32.totalorder %s33, %s36
    %p42 = scmp.eq.s32.totalorder %s9, 0
    %p43 = por %p41, %p42
    %p44 = scmp.ne.s32.totalorder %s33, %s36
    %p45 = scmp.eq.s32.totalorder %s14, 1
    %p46 = por %p44, %p45
    %p47 = scmp.ne.s32.totalorder %s36, %s37
    %p48 = scmp.eq.s32.totalorder %s14, 0
    %p49 = por %p47, %p48
    %p50 = scmp.ne.s32.totalorder %s36, %s37
    %p51 = scmp.eq.s32.totalorder %s15, 1
    %p52 = por %p50, %p51
    %p54 = scmp.ne.s32.totalorder %s37, %s53
    %p55 = scmp.eq.s32.totalorder %s15, 0
    %p56 = por %p54, %p55
    %s58 = sadd.s32 %s57, 1
    %p61 = scmp.eq.s32.totalorder %s9, 1
    %p62 = scmp.ne.s32.totalorder %s57, %s59
    %p63 = scmp.eq.s32.totalorder %s9, 0
    %p64 = por %p62, %p63
    %p65 = scmp.ne.s32.totalorder %s57, %s59
    %p66 = scmp.eq.s32.totalorder %s14, 1
    %p67 = por %p65, %p66
    %p68 = scmp.ne.s32.totalorder %s59, %s60
    %p69 = scmp.eq.s32.totalorder %s14, 0
    %p70 = por %p68, %p69
    %p71 = scmp.ne.s32.totalorder %s59, %s60
    %p72 = scmp.eq.s32.totalorder %s15, 1
    %p73 = por %p71, %p72
    %p75 = scmp.ne.s32.totalorder %s60, %s74
    %p76 = scmp.eq.s32.totalorder %s15, 0
    %p77 = por %p75, %p76
    %s79 = sadd.s32 %s78, 1
    %p82 = scmp.eq.s32.totalorder %s9, 1
    %p83 = scmp.ne.s32.totalorder %s78, %s80
    %p84 = scmp.eq.s32.totalorder %s9, 0
    %p85 = por %p83, %p84
    %p86 = scmp.ne.s32.totalorder %s78, %s80
    %p87 = scmp.eq.s32.totalorder %s14, 1
    %p88 = por %p86, %p87
    %p89 = scmp.ne.s32.totalorder %s80, %s81
    %p90 = scmp.eq.s32.totalorder %s14, 0
    %p91 = por %p89, %p90
    %p92 = scmp.ne.s32.totalorder %s80, %s81
    %p93 = scmp.eq.s32.totalorder %s15, 1
    %p94 = por %p92, %p93
    %p96 = scmp.ne.s32.totalorder %s81, %s95
    %p97 = scmp.eq.s32.totalorder %s15, 0
    %p98 = por %p96, %p97
    %s99 = ssub.s32 %s16, %s28
    %s100 = ssub.s32 %s17, %s24
    %s101 = sor.u32 %s99, %s100
    %p102 = scmp.eq.s32.totalorder %s101, 0
    %s104 = sadd.s32 %s103, 1
    %s105 = scalar_select %p102, %s103, %s104
    %p108 = pneg %p102
    %p109 = scmp.eq.s32.totalorder %s9, 1
    %p110 = por %p108, %p109
    %p111 = scmp.ne.s32.totalorder %s103, %s106
    %p112 = scmp.eq.s32.totalorder %s9, 0
    %p113 = por %p111, %p112
    %p114 = scmp.ne.s32.totalorder %s103, %s106
    %p115 = scmp.eq.s32.totalorder %s14, 1
    %p116 = por %p114, %p115
    %p117 = scmp.ne.s32.totalorder %s106, %s107
    %p118 = scmp.eq.s32.totalorder %s14, 0
    %p119 = por %p117, %p118
    %p120 = scmp.ne.s32.totalorder %s106, %s107
    %p121 = scmp.eq.s32.totalorder %s15, 1
    %p122 = por %p120, %p121
    %p124 = scmp.ne.s32.totalorder %s107, %s123
    %p125 = scmp.eq.s32.totalorder %s15, 0
    %p126 = por %p124, %p125
    %p127 = scmp.le.s32.totalorder 1, %s9
    %p128 = scmp.lt.s32.totalorder %s9, 3
    %p129 = pnand %p127, %p128
    %p130 = pneg %p129
    // Predicated region
    $region9: #{hair_feature_extractor_forward.5} parent=5 // pred_check
      _
    $region10: #{hair_feature_extractor_forward.5} parent=5 // pred_check_branch
      %132 = sbr.rel (%p129) target = $region12
    $region11: #{hair_feature_extractor_forward.5} parent=5 // pred_region
      %s133 = ssub.s32 %s9, 1
      // Predicated region
      $region13: #{hair_feature_extractor_forward.5} parent=11 // pred_check
        %p134 = pneg %p70
      $region14: #{hair_feature_extractor_forward.5} parent=11 // pred_check_branch
        %136 = sbr.rel (%p134) target = $region16
      $region15: #{hair_feature_extractor_forward.5} parent=11 // pred_region
        _
      $region16: #{hair_feature_extractor_forward.5} parent=11 // pred_fallthru
        _
      // Predicated region
      $region17: #{hair_feature_extractor_forward.5} parent=11 // pred_check
        %p137 = pneg %p91
      $region18: #{hair_feature_extractor_forward.5} parent=11 // pred_check_branch
        %139 = sbr.rel (%p137) target = $region20
      $region19: #{hair_feature_extractor_forward.5} parent=11 // pred_region
        _
      $region20: #{hair_feature_extractor_forward.5} parent=11 // pred_fallthru
        _
    $region12: #{hair_feature_extractor_forward.5} parent=5 // pred_fallthru
      _
    %p140 = scmp.lt.s32.totalorder %s9, 2
    // Predicated region
    $region21: #{hair_feature_extractor_forward.5} parent=5 // pred_check
      %p141 = pneg %p140
    $region22: #{hair_feature_extractor_forward.5} parent=5 // pred_check_branch
      %143 = sbr.rel (%p141) target = $region24
    $region23: #{hair_feature_extractor_forward.5} parent=5 // pred_region
      // Predicated region
      $region25: #{hair_feature_extractor_forward.5} parent=23 // pred_check
        %p144 = pneg %p43
      $region26: #{hair_feature_extractor_forward.5} parent=23 // pred_check_branch
        %146 = sbr.rel (%p144) target = $region28
      $region27: #{hair_feature_extractor_forward.5} parent=23 // pred_region
        %p147 = scmp.lt.s32.totalorder %s16, 1
        %s148 = scalar_select %p147, %s16, 1
        %p149 = scmp.lt.s32.totalorder %s17, 0
        %s150 = scalar_select %p149, %s17, 0
        %s151 = smul.addr %s150, 49
        %s152 = smul.addr %s148, 49
        %s153 = sadd.s32 %s151, %s152
        %s154 = smul.addr %s153, 4
        %s155 = scalar_lea.vmem %s0, %s154
      $region28: #{hair_feature_extractor_forward.5} parent=23 // pred_fallthru
        _
    $region24: #{hair_feature_extractor_forward.5} parent=5 // pred_fallthru
      _
    %p156 = scmp.le.s32.totalorder 1, %s9
    %p157 = scmp.lt.s32.totalorder %s9, 3
    %p158 = pnand %p156, %p157
    %p159 = pneg %p158
    // Predicated region
    $region29: #{hair_feature_extractor_forward.5} parent=5 // pred_check
      _
    $region30: #{hair_feature_extractor_forward.5} parent=5 // pred_check_branch
      %161 = sbr.rel (%p158) target = $region32
    $region31: #{hair_feature_extractor_forward.5} parent=5 // pred_region
      %s162 = ssub.s32 %s9, 1
      %p163 = scmp.lt.s32.totalorder %s18, 1
      %s164 = scalar_select %p163, %s18, 1
      %p165 = scmp.lt.s32.totalorder %s19, 0
      %s166 = scalar_select %p165, %s19, 0
      %s167 = smul.addr %s166, 49
      %s168 = smul.addr %s164, 49
      %s169 = sadd.s32 %s167, %s168
      %s170 = smul.addr %s169, 4
      %s171 = scalar_lea.vmem %s0, %s170
      %p172 = pneg %p49
      %p173 = pneg %p46
      %p174 = pneg %p70
      %p175 = pneg %p67
      %p176 = pneg %p91
      %p177 = pneg %p88
      %p178 = pneg %p119
      %p179 = pneg %p116
      %s180 = smul.u32 8, %s19
      %p181 = scmp.lt.s32.totalorder %s18, 1
      %s182 = scalar_select %p181, %s18, 1
      %p183 = scmp.lt.s32.totalorder %s180, 7
      %s184 = scalar_select %p183, %s180, 7
      %s185 = smul.addr %s182, 8
      %s186 = sadd.s32 %s184, %s185
      %s187 = smul.addr %s186, 4
      %s188 = scalar_lea.vmem %s3, %s187
      %p189 = scmp.lt.s32.totalorder %s18, 1
      %s190 = scalar_select %p189, %s18, 1
      %p191 = scmp.lt.s32.totalorder %s19, 0
      %s192 = scalar_select %p191, %s19, 0
      %s193 = smul.addr %s192, 49
      %s194 = smul.addr %s190, 49
      %s195 = sadd.s32 %s193, %s194
      %s196 = smul.addr %s195, 4
      %s197 = scalar_lea.vmem %s0, %s196
      %s198 = smul.u32 8, %s19
      %p199 = scmp.lt.s32.totalorder %s18, 1
      %s200 = scalar_select %p199, %s18, 1
      %p201 = scmp.lt.s32.totalorder %s198, 7
      %s202 = scalar_select %p201, %s198, 7
      %s203 = smul.addr %s200, 8
      %s204 = sadd.s32 %s202, %s203
      %s205 = smul.addr %s204, 4
      %s206 = scalar_lea.vmem %s3, %s205
      %s207 = smul.u32 8, %s19
      %v209 = vld [vmem:[%s197] sm:$0xf]
      %v210 = vld [vmem:[%s197 + $0x4] sm:$0xf]
      %v211 = vld [vmem:[%s197 + $0x8] sm:$0xf]
      %v212 = vld [vmem:[%s197 + $0xc] sm:$0xf]
      %v213 = vld [vmem:[%s197 + $0x10] sm:$0xf]
      %v214 = vld [vmem:[%s197 + $0x14] sm:$0xf]
      %v215 = vld [vmem:[%s197 + $0x18] sm:$0xf]
      %v216 = vld [vmem:[%s197 + $0x1c] sm:$0xf]
      %v217 = vld [vmem:[%s197 + $0x20] sm:$0xf]
      %v218 = vld [vmem:[%s197 + $0x24] sm:$0xf]
      %v219 = vld [vmem:[%s197 + $0x28] sm:$0xf]
      %v220 = vld [vmem:[%s197 + $0x2c] sm:$0xf]
      %v221 = vld [vmem:[%s197 + $0x30] sm:$0xf]
      %v222 = vld [vmem:[%s197 + $0x34] sm:$0xf]
      %v223 = vld [vmem:[%s197 + $0x38] sm:$0xf]
      %v224 = vld [vmem:[%s197 + $0x3c] sm:$0xf]
      %v225 = vld [vmem:[%s197 + $0x40] sm:$0xf]
      %v226 = vld [vmem:[%s197 + $0x44] sm:$0xf]
      %v227 = vld [vmem:[%s197 + $0x48] sm:$0xf]
      %v228 = vld [vmem:[%s197 + $0x4c] sm:$0xf]
      %v229 = vld [vmem:[%s197 + $0x50] sm:$0xf]
      %v230 = vld [vmem:[%s197 + $0x54] sm:$0xf]
      %v231 = vld [vmem:[%s197 + $0x58] sm:$0xf]
      %v232 = vld [vmem:[%s197 + $0x5c] sm:$0xf]
      %v233 = vld [vmem:[%s197 + $0x60] sm:$0xf]
      %v234 = vld [vmem:[%s197 + $0x64] sm:$0xf]
      %v235 = vld [vmem:[%s197 + $0x68] sm:$0xf]
      %v236 = vld [vmem:[%s197 + $0x6c] sm:$0xf]
      %v237 = vld [vmem:[%s197 + $0x70] sm:$0xf]
      %v238 = vld [vmem:[%s197 + $0x74] sm:$0xf]
      %v239 = vld [vmem:[%s197 + $0x78] sm:$0xf]
      %v240 = vld [vmem:[%s197 + $0x7c] sm:$0xf]
      %v241 = vld [vmem:[%s197 + $0x80] sm:$0xf]
      %v242 = vld [vmem:[%s197 + $0x84] sm:$0xf]
      %v243 = vld [vmem:[%s197 + $0x88] sm:$0xf]
      %v244 = vld [vmem:[%s197 + $0x8c] sm:$0xf]
      %v245 = vld [vmem:[%s197 + $0x90] sm:$0xf]
      %v246 = vld [vmem:[%s197 + $0x94] sm:$0xf]
      %v247 = vld [vmem:[%s197 + $0x98] sm:$0xf]
      %v248 = vld [vmem:[%s197 + $0x9c] sm:$0xf]
      %v249 = vld [vmem:[%s197 + $0xa0] sm:$0xf]
      %v250 = vld [vmem:[%s197 + $0xa4] sm:$0xf]
      %v251 = vld [vmem:[%s197 + $0xa8] sm:$0xf]
      %v252 = vld [vmem:[%s197 + $0xac] sm:$0xf]
      %v253 = vld [vmem:[%s197 + $0xb0] sm:$0xf]
      %v254 = vld [vmem:[%s197 + $0xb4] sm:$0xf]
      %v255 = vld [vmem:[%s197 + $0xb8] sm:$0xf]
      %v256 = vld [vmem:[%s197 + $0xbc] sm:$0xf]
      %v257 = vld [vmem:[%s197 + $0xc0] sm:$0x1]
      %v258 = vld [vmem:[%s1] sm:$0xff]
      %v259 = vld [vmem:[%s1 + $0x8] sm:$0xff]
      %v260 = vld [vmem:[%s1 + $0x10] sm:$0xff]
      %v261 = vld [vmem:[%s1 + $0x18] sm:$0xff]
      %v262 = vld [vmem:[%s1 + $0x20] sm:$0xff]
      %v263 = vld [vmem:[%s1 + $0x28] sm:$0xff]
      %v264 = vld [vmem:[%s1 + $0x30] sm:$0xff]
      %v265 = vld [vmem:[%s1 + $0x38] sm:$0xff]
      %v266 = vld [vmem:[%s1 + $0x40] sm:$0xff]
      %v267 = vld [vmem:[%s1 + $0x48] sm:$0xff]
      %v268 = vld [vmem:[%s1 + $0x50] sm:$0xff]
      %v269 = vld [vmem:[%s1 + $0x58] sm:$0xff]
      %v319 = vunpack.c.l.b16 %v209
      %v320 = vunpack.c.l.b16 %v210
      %v321 = vunpack.c.l.b16 %v211
      %v322 = vunpack.c.l.b16 %v212
      %v323 = vunpack.c.l.b16 %v213
      %v324 = vunpack.c.l.b16 %v214
      %v325 = vunpack.c.l.b16 %v215
      %v326 = vunpack.c.l.b16 %v216
      %v327 = vunpack.c.l.b16 %v217
      %v328 = vunpack.c.l.b16 %v218
      %v329 = vunpack.c.l.b16 %v219
      %v330 = vunpack.c.l.b16 %v220
      %v331 = vunpack.c.l.b16 %v221
      %v332 = vunpack.c.l.b16 %v222
      %v333 = vunpack.c.l.b16 %v223
      %v334 = vunpack.c.l.b16 %v224
      %v335 = vunpack.c.l.b16 %v225
      %v336 = vunpack.c.l.b16 %v226
      %v337 = vunpack.c.l.b16 %v227
      %v338 = vunpack.c.l.b16 %v228
      %v339 = vunpack.c.l.b16 %v229
      %v340 = vunpack.c.l.b16 %v230
      %v341 = vunpack.c.l.b16 %v231
      %v342 = vunpack.c.l.b16 %v232
      %v343 = vunpack.c.l.b16 %v233
      %v344 = vunpack.c.l.b16 %v234
      %v345 = vunpack.c.l.b16 %v235
      %v346 = vunpack.c.l.b16 %v236
      %v347 = vunpack.c.l.b16 %v237
      %v348 = vunpack.c.l.b16 %v238
      %v349 = vunpack.c.l.b16 %v239
      %v350 = vunpack.c.l.b16 %v240
      %v351 = vunpack.c.l.b16 %v241
      %v352 = vunpack.c.l.b16 %v242
      %v353 = vunpack.c.l.b16 %v243
      %v354 = vunpack.c.l.b16 %v244
      %v355 = vunpack.c.l.b16 %v245
      %v356 = vunpack.c.l.b16 %v246
      %v357 = vunpack.c.l.b16 %v247
      %v358 = vunpack.c.l.b16 %v248
      %v359 = vunpack.c.l.b16 %v249
      %v360 = vunpack.c.l.b16 %v250
      %v361 = vunpack.c.l.b16 %v251
      %v362 = vunpack.c.l.b16 %v252
      %v363 = vunpack.c.l.b16 %v253
      %v364 = vunpack.c.l.b16 %v254
      %v365 = vunpack.c.l.b16 %v255
      %v366 = vunpack.c.l.b16 %v256
      %v367 = vunpack.c.l.b16 %v257
      %v368 = vpack.c.b16 %v320, %v319
      %v369 = vpack.c.b16 %v322, %v321
      %v370 = vpack.c.b16 %v324, %v323
      %v371 = vpack.c.b16 %v326, %v325
      %v372 = vpack.c.b16 %v328, %v327
      %v373 = vpack.c.b16 %v330, %v329
      %v374 = vpack.c.b16 %v332, %v331
      %v375 = vpack.c.b16 %v334, %v333
      %v376 = vpack.c.b16 %v336, %v335
      %v377 = vpack.c.b16 %v338, %v337
      %v378 = vpack.c.b16 %v340, %v339
      %v379 = vpack.c.b16 %v342, %v341
      %v380 = vpack.c.b16 %v344, %v343
      %v381 = vpack.c.b16 %v346, %v345
      %v382 = vpack.c.b16 %v348, %v347
      %v383 = vpack.c.b16 %v350, %v349
      %v384 = vpack.c.b16 %v352, %v351
      %v385 = vpack.c.b16 %v354, %v353
      %v386 = vpack.c.b16 %v356, %v355
      %v387 = vpack.c.b16 %v358, %v357
      %v388 = vpack.c.b16 %v360, %v359
      %v389 = vpack.c.b16 %v362, %v361
      %v390 = vpack.c.b16 %v364, %v363
      %v391 = vpack.c.b16 %v366, %v365
      %v392 = vpack.c.b16 %v367, %v367
      %v405 = vunpack.c.l.b16 %v258
      %v406 = vunpack.c.h.b16 %v258
      %v407 = vunpack.c.l.b16 %v259
      %v408 = vunpack.c.h.b16 %v259
      %v409 = vunpack.c.l.b16 %v260
      %v410 = vunpack.c.h.b16 %v260
      %v411 = vunpack.c.l.b16 %v261
      %v412 = vunpack.c.h.b16 %v261
      %v413 = vunpack.c.l.b16 %v262
      %v414 = vunpack.c.h.b16 %v262
      %v415 = vunpack.c.l.b16 %v263
      %v416 = vunpack.c.h.b16 %v263
      %v417 = vunpack.c.l.b16 %v264
      %v418 = vunpack.c.h.b16 %v264
      %v419 = vunpack.c.l.b16 %v265
      %v420 = vunpack.c.h.b16 %v265
      %v421 = vunpack.c.l.b16 %v266
      %v422 = vunpack.c.h.b16 %v266
      %v423 = vunpack.c.l.b16 %v267
      %v424 = vunpack.c.h.b16 %v267
      %v425 = vunpack.c.l.b16 %v268
      %v426 = vunpack.c.h.b16 %v268
      %v427 = vunpack.c.l.b16 %v269
      %v428 = vunpack.c.h.b16 %v269
      %v429 = vpack.c.b16 %v407, %v405
      %v430 = vpack.c.b16 %v408, %v406
      %v431 = vpack.c.b16 %v411, %v409
      %v432 = vpack.c.b16 %v412, %v410
      %v433 = vpack.c.b16 %v415, %v413
      %v434 = vpack.c.b16 %v416, %v414
      %v435 = vpack.c.b16 %v419, %v417
      %v436 = vpack.c.b16 %v420, %v418
      %v437 = vpack.c.b16 %v423, %v421
      %v438 = vpack.c.b16 %v424, %v422
      %v439 = vpack.c.b16 %v427, %v425
      %v440 = vpack.c.b16 %v428, %v426
      %vm453 = vcmask 785408
      %v455 = vsel %vm453, %v368, 0
      %v458 = vsel %vm453, %v369, 0
      %v461 = vsel %vm453, %v370, 0
      %v464 = vsel %vm453, %v371, 0
      %v467 = vsel %vm453, %v372, 0
      %v470 = vsel %vm453, %v373, 0
      %v473 = vsel %vm453, %v374, 0
      %v476 = vsel %vm453, %v375, 0
      %v479 = vsel %vm453, %v376, 0
      %v482 = vsel %vm453, %v377, 0
      %v485 = vsel %vm453, %v378, 0
      %v488 = vsel %vm453, %v379, 0
      %v491 = vsel %vm453, %v380, 0
      %v494 = vsel %vm453, %v381, 0
      %v497 = vsel %vm453, %v382, 0
      %v500 = vsel %vm453, %v383, 0
      %v503 = vsel %vm453, %v384, 0
      %v506 = vsel %vm453, %v385, 0
      %v509 = vsel %vm453, %v386, 0
      %v512 = vsel %vm453, %v387, 0
      %v515 = vsel %vm453, %v388, 0
      %v518 = vsel %vm453, %v389, 0
      %v521 = vsel %vm453, %v390, 0
      %v524 = vsel %vm453, %v391, 0
      %v527 = vsel %vm453, %v392, 0
      %529 = vmatprep.subr.bf16.mxu0 %v430
      %530 = vmatpush1.bf16.msra.mxu0 %v429
      %531 = vmatprep.subr.bf16.mxu0 %v432
      %532 = vmatpush1.bf16.msra.mxu0 %v431
      %533 = vmatprep.subr.bf16.mxu0 %v434
      %534 = vmatpush1.bf16.msra.mxu0 %v433
      %535 = vmatprep.subr.bf16.mxu0 %v436
      %536 = vmatpush1.bf16.msra.mxu0 %v435
      %537 = vmatprep.subr.bf16.mxu0 %v438
      %538 = vmatpush1.bf16.msra.mxu0 %v437
      %539 = vmatprep.subr.bf16.mxu0 %v440
      %540 = vmatpush1.bf16.msra.mxu0 %v439
      %541 = vmatprep.subr.bf16.mxu0 0
      %542 = vmatpush1.bf16.msra.mxu0 0
      %543 = vmatprep.subr.bf16.mxu0 0
      %544 = vmatpush1.bf16.msra.mxu0 0
      %545 = vmatprep.subr.bf16.mxu0 0
      %546 = vmatpush1.bf16.msra.mxu0 0
      %547 = vmatprep.subr.bf16.mxu0 0
      %548 = vmatpush1.bf16.msra.mxu0 0
      %549 = vmatprep.subr.bf16.mxu0 0
      %550 = vmatpush1.bf16.msra.mxu0 0
      %551 = vmatprep.subr.bf16.mxu0 0
      %552 = vmatpush1.bf16.msra.mxu0 0
      %553 = vmatprep.subr.bf16.mxu0 0
      %554 = vmatpush1.bf16.msra.mxu0 0
      %555 = vmatprep.subr.bf16.mxu0 0
      %556 = vmatpush1.bf16.msra.mxu0 0
      %557 = vmatprep.subr.bf16.mxu0 0
      %558 = vmatpush1.bf16.msra.mxu0 0
      %559 = vmatprep.subr.bf16.mxu0 0
      %560 = vmatpush1.bf16.msra.mxu0 0
      %561 = vmatprep.mubr.bf16.mxu0 0
      %562 = vmatmul.mubr.bf16.gmra.mrb[0].mxu0 %v455
      %v563 = vpop.f32.mrb[0].mxu0
      %v564 = vadd.f32 0.0, %v563
      %v565 = vpop.f32.mrb[0].mxu0
      %v566 = vadd.f32 0.0, %v565
      %v567 = vpop.f32.mrb[0].mxu0
      %v568 = vadd.f32 0.0, %v567
      %v569 = vpop.f32.mrb[0].mxu0
      %v570 = vadd.f32 0.0, %v569
      %571 = vmatprep.mubr.bf16.mxu0 0
      %572 = vmatmul.mubr.bf16.gmra.mrb[0].mxu0 %v458
      %v573 = vpop.f32.mrb[0].mxu0
      %v574 = vadd.f32 0.0, %v573
      %v575 = vpop.f32.mrb[0].mxu0
      %v576 = vadd.f32 0.0, %v575
      %v577 = vpop.f32.mrb[0].mxu0
      %v578 = vadd.f32 0.0, %v577
      %v579 = vpop.f32.mrb[0].mxu0
      %v580 = vadd.f32 0.0, %v579
      %581 = vmatprep.mubr.bf16.mxu0 0
      %582 = vmatmul.mubr.bf16.gmra.mrb[0].mxu0 %v461
      %v583 = vpop.f32.mrb[0].mxu0
      %v584 = vadd.f32 0.0, %v583
      %v585 = vpop.f32.mrb[0].mxu0
      %v586 = vadd.f32 0.0, %v585
      %v587 = vpop.f32.mrb[0].mxu0
      %v588 = vadd.f32 0.0, %v587
      %v589 = vpop.f32.mrb[0].mxu0
      %v590 = vadd.f32 0.0, %v589
      %591 = vmatprep.mubr.bf16.mxu0 0
      %592 = vmatmul.mubr.bf16.gmra.mrb[0].mxu0 %v464
      %v593 = vpop.f32.mrb[0].mxu0
      %v594 = vadd.f32 0.0, %v593
      %v595 = vpop.f32.mrb[0].mxu0
      %v596 = vadd.f32 0.0, %v595
      %v597 = vpop.f32.mrb[0].mxu0
      %v598 = vadd.f32 0.0, %v597
      %v599 = vpop.f32.mrb[0].mxu0
      %v600 = vadd.f32 0.0, %v599
      %601 = vmatprep.mubr.bf16.mxu0 0
      %602 = vmatmul.mubr.bf16.gmra.mrb[0].mxu0 %v467
      %v603 = vpop.f32.mrb[0].mxu0
      %v604 = vadd.f32 0.0, %v603
      %v605 = vpop.f32.mrb[0].mxu0
      %v606 = vadd.f32 0.0, %v605
      %v607 = vpop.f32.mrb[0].mxu0
      %v608 = vadd.f32 0.0, %v607
      %v609 = vpop.f32.mrb[0].mxu0
      %v610 = vadd.f32 0.0, %v609
      %611 = vmatprep.mubr.bf16.mxu0 0
      %612 = vmatmul.mubr.bf16.gmra.mrb[0].mxu0 %v470
      %v613 = vpop.f32.mrb[0].mxu0
      %v614 = vadd.f32 0.0, %v613
      %v615 = vpop.f32.mrb[0].mxu0
      %v616 = vadd.f32 0.0, %v615
      %v617 = vpop.f32.mrb[0].mxu0
      %v618 = vadd.f32 0.0, %v617
      %v619 = vpop.f32.mrb[0].mxu0
      %v620 = vadd.f32 0.0, %v619
      %621 = vmatprep.mubr.bf16.mxu0 0
      %622 = vmatmul.mubr.bf16.gmra.mrb[0].mxu0 %v473
      %v623 = vpop.f32.mrb[0].mxu0
      %v624 = vadd.f32 0.0, %v623
      %v625 = vpop.f32.mrb[0].mxu0
      %v626 = vadd.f32 0.0, %v625
      %v627 = vpop.f32.mrb[0].mxu0
      %v628 = vadd.f32 0.0, %v627
      %v629 = vpop.f32.mrb[0].mxu0
      %v630 = vadd.f32 0.0, %v629
      %631 = vmatprep.mubr.bf16.mxu0 0
      %632 = vmatmul.mubr.bf16.gmra.mrb[0].mxu0 %v476
      %v633 = vpop.f32.mrb[0].mxu0
      %v634 = vadd.f32 0.0, %v633
      %v635 = vpop.f32.mrb[0].mxu0
      %v636 = vadd.f32 0.0, %v635
      %v637 = vpop.f32.mrb[0].mxu0
      %v638 = vadd.f32 0.0, %v637
      %v639 = vpop.f32.mrb[0].mxu0
      %v640 = vadd.f32 0.0, %v639
      %641 = vmatprep.mubr.bf16.mxu0 0
      %642 = vmatmul.mubr.bf16.gmra.mrb[0].mxu0 %v479
      %v643 = vpop.f32.mrb[0].mxu0
      %v644 = vadd.f32 0.0, %v643
      %v645 = vpop.f32.mrb[0].mxu0
      %v646 = vadd.f32 0.0, %v645
      %v647 = vpop.f32.mrb[0].mxu0
      %v648 = vadd.f32 0.0, %v647
      %v649 = vpop.f32.mrb[0].mxu0
      %v650 = vadd.f32 0.0, %v649
      %651 = vmatprep.mubr.bf16.mxu0 0
      %652 = vmatmul.mubr.bf16.gmra.mrb[0].mxu0 %v482
      %v653 = vpop.f32.mrb[0].mxu0
      %v654 = vadd.f32 0.0, %v653
      %v655 = vpop.f32.mrb[0].mxu0
      %v656 = vadd.f32 0.0, %v655
      %v657 = vpop.f32.mrb[0].mxu0
      %v658 = vadd.f32 0.0, %v657
      %v659 = vpop.f32.mrb[0].mxu0
      %v660 = vadd.f32 0.0, %v659
      %661 = vmatprep.mubr.bf16.mxu0 0
      %662 = vmatmul.mubr.bf16.gmra.mrb[0].mxu0 %v485
      %v663 = vpop.f32.mrb[0].mxu0
      %v664 = vadd.f32 0.0, %v663
      %v665 = vpop.f32.mrb[0].mxu0
      %v666 = vadd.f32 0.0, %v665
      %v667 = vpop.f32.mrb[0].mxu0
      %v668 = vadd.f32 0.0, %v667
      %v669 = vpop.f32.mrb[0].mxu0
      %v670 = vadd.f32 0.0, %v669
      %671 = vmatprep.mubr.bf16.mxu0 0
      %672 = vmatmul.mubr.bf16.gmra.mrb[0].mxu0 %v488
      %v673 = vpop.f32.mrb[0].mxu0
      %v674 = vadd.f32 0.0, %v673
      %v675 = vpop.f32.mrb[0].mxu0
      %v676 = vadd.f32 0.0, %v675
      %v677 = vpop.f32.mrb[0].mxu0
      %v678 = vadd.f32 0.0, %v677
      %v679 = vpop.f32.mrb[0].mxu0
      %v680 = vadd.f32 0.0, %v679
      %681 = vmatprep.mubr.bf16.mxu0 0
      %682 = vmatmul.mubr.bf16.gmra.mrb[0].mxu0 %v491
      %v683 = vpop.f32.mrb[0].mxu0
      %v684 = vadd.f32 0.0, %v683
      %v685 = vpop.f32.mrb[0].mxu0
      %v686 = vadd.f32 0.0, %v685
      %v687 = vpop.f32.mrb[0].mxu0
      %v688 = vadd.f32 0.0, %v687
      %v689 = vpop.f32.mrb[0].mxu0
      %v690 = vadd.f32 0.0, %v689
      %691 = vmatprep.mubr.bf16.mxu0 0
      %692 = vmatmul.mubr.bf16.gmra.mrb[0].mxu0 %v494
      %v693 = vpop.f32.mrb[0].mxu0
      %v694 = vadd.f32 0.0, %v693
      %v695 = vpop.f32.mrb[0].mxu0
      %v696 = vadd.f32 0.0, %v695
      %v697 = vpop.f32.mrb[0].mxu0
      %v698 = vadd.f32 0.0, %v697
      %v699 = vpop.f32.mrb[0].mxu0
      %v700 = vadd.f32 0.0, %v699
      %701 = vmatprep.mubr.bf16.mxu0 0
      %702 = vmatmul.mubr.bf16.gmra.mrb[0].mxu0 %v497
      %v703 = vpop.f32.mrb[0].mxu0
      %v704 = vadd.f32 0.0, %v703
      %v705 = vpop.f32.mrb[0].mxu0
      %v706 = vadd.f32 0.0, %v705
      %v707 = vpop.f32.mrb[0].mxu0
      %v708 = vadd.f32 0.0, %v707
      %v709 = vpop.f32.mrb[0].mxu0
      %v710 = vadd.f32 0.0, %v709
      %711 = vmatprep.mubr.bf16.mxu0 0
      %712 = vmatmul.mubr.bf16.gmra.mrb[0].mxu0 %v500
      %v713 = vpop.f32.mrb[0].mxu0
      %v714 = vadd.f32 0.0, %v713
      %v715 = vpop.f32.mrb[0].mxu0
      %v716 = vadd.f32 0.0, %v715
      %v717 = vpop.f32.mrb[0].mxu0
      %v718 = vadd.f32 0.0, %v717
      %v719 = vpop.f32.mrb[0].mxu0
      %v720 = vadd.f32 0.0, %v719
      %721 = vmatprep.mubr.bf16.mxu0 0
      %722 = vmatmul.mubr.bf16.gmra.mrb[0].mxu0 %v503
      %v723 = vpop.f32.mrb[0].mxu0
      %v724 = vadd.f32 0.0, %v723
      %v725 = vpop.f32.mrb[0].mxu0
      %v726 = vadd.f32 0.0, %v725
      %v727 = vpop.f32.mrb[0].mxu0
      %v728 = vadd.f32 0.0, %v727
      %v729 = vpop.f32.mrb[0].mxu0
      %v730 = vadd.f32 0.0, %v729
      %731 = vmatprep.mubr.bf16.mxu0 0
      %732 = vmatmul.mubr.bf16.gmra.mrb[0].mxu0 %v506
      %v733 = vpop.f32.mrb[0].mxu0
      %v734 = vadd.f32 0.0, %v733
      %v735 = vpop.f32.mrb[0].mxu0
      %v736 = vadd.f32 0.0, %v735
      %v737 = vpop.f32.mrb[0].mxu0
      %v738 = vadd.f32 0.0, %v737
      %v739 = vpop.f32.mrb[0].mxu0
      %v740 = vadd.f32 0.0, %v739
      %741 = vmatprep.mubr.bf16.mxu0 0
      %742 = vmatmul.mubr.bf16.gmra.mrb[0].mxu0 %v509
      %v743 = vpop.f32.mrb[0].mxu0
      %v744 = vadd.f32 0.0, %v743
      %v745 = vpop.f32.mrb[0].mxu0
      %v746 = vadd.f32 0.0, %v745
      %v747 = vpop.f32.mrb[0].mxu0
      %v748 = vadd.f32 0.0, %v747
      %v749 = vpop.f32.mrb[0].mxu0
      %v750 = vadd.f32 0.0, %v749
      %751 = vmatprep.mubr.bf16.mxu0 0
      %752 = vmatmul.mubr.bf16.gmra.mrb[0].mxu0 %v512
      %v753 = vpop.f32.mrb[0].mxu0
      %v754 = vadd.f32 0.0, %v753
      %v755 = vpop.f32.mrb[0].mxu0
      %v756 = vadd.f32 0.0, %v755
      %v757 = vpop.f32.mrb[0].mxu0
      %v758 = vadd.f32 0.0, %v757
      %v759 = vpop.f32.mrb[0].mxu0
      %v760 = vadd.f32 0.0, %v759
      %761 = vmatprep.mubr.bf16.mxu0 0
      %762 = vmatmul.mubr.bf16.gmra.mrb[0].mxu0 %v515
      %v763 = vpop.f32.mrb[0].mxu0
      %v764 = vadd.f32 0.0, %v763
      %v765 = vpop.f32.mrb[0].mxu0
      %v766 = vadd.f32 0.0, %v765
      %v767 = vpop.f32.mrb[0].mxu0
      %v768 = vadd.f32 0.0, %v767
      %v769 = vpop.f32.mrb[0].mxu0
      %v770 = vadd.f32 0.0, %v769
      %771 = vmatprep.mubr.bf16.mxu0 0
      %772 = vmatmul.mubr.bf16.gmra.mrb[0].mxu0 %v518
      %v773 = vpop.f32.mrb[0].mxu0
      %v774 = vadd.f32 0.0, %v773
      %v775 = vpop.f32.mrb[0].mxu0
      %v776 = vadd.f32 0.0, %v775
      %v777 = vpop.f32.mrb[0].mxu0
      %v778 = vadd.f32 0.0, %v777
      %v779 = vpop.f32.mrb[0].mxu0
      %v780 = vadd.f32 0.0, %v779
      %781 = vmatprep.mubr.bf16.mxu0 0
      %782 = vmatmul.mubr.bf16.gmra.mrb[0].mxu0 %v521
      %v783 = vpop.f32.mrb[0].mxu0
      %v784 = vadd.f32 0.0, %v783
      %v785 = vpop.f32.mrb[0].mxu0
      %v786 = vadd.f32 0.0, %v785
      %v787 = vpop.f32.mrb[0].mxu0
      %v788 = vadd.f32 0.0, %v787
      %v789 = vpop.f32.mrb[0].mxu0
      %v790 = vadd.f32 0.0, %v789
      %791 = vmatprep.mubr.bf16.mxu0 0
      %792 = vmatmul.mubr.bf16.gmra.mrb[0].mxu0 %v524
      %v793 = vpop.f32.mrb[0].mxu0
      %v794 = vadd.f32 0.0, %v793
      %v795 = vpop.f32.mrb[0].mxu0
      %v796 = vadd.f32 0.0, %v795
      %v797 = vpop.f32.mrb[0].mxu0
      %v798 = vadd.f32 0.0, %v797
      %v799 = vpop.f32.mrb[0].mxu0
      %v800 = vadd.f32 0.0, %v799
      %801 = vmatprep.mubr.bf16.mxu0 0
      %802 = vmatmul.mubr.bf16.gmra.mrb[0].mxu0 %v527
      %v803 = vpop.f32.mrb[0].mxu0
      %v804 = vadd.f32 0.0, %v803
      %v805 = vpop.f32.mrb[0].mxu0
      %v806 = vadd.f32 0.0, %v805
      %v807 = vpop.f32.mrb[0].mxu0
      %v808 = vpop.f32.mrb[0].mxu0
      %809 = vdwg.mxu0
      %vm859 = vcmask 1046528
      %v860 = vrot.slane %v564, 1
      %v861 = vrot.slane %v568, 1
      %v862 = vsel %vm859, %v860, %v861
      %v863 = vrot.slane %v574, 1
      %v864 = vsel %vm859, %v861, %v863
      %v865 = vrot.slane %v578, 1
      %v866 = vsel %vm859, %v863, %v865
      %v867 = vrot.slane %v584, 1
      %v868 = vsel %vm859, %v865, %v867
      %v869 = vrot.slane %v588, 1
      %v870 = vsel %vm859, %v867, %v869
      %v871 = vrot.slane %v594, 1
      %v872 = vsel %vm859, %v869, %v871
      %v873 = vrot.slane %v598, 1
      %v874 = vsel %vm859, %v871, %v873
      %v875 = vrot.slane %v604, 1
      %v876 = vsel %vm859, %v873, %v875
      %v877 = vrot.slane %v608, 1
      %v878 = vsel %vm859, %v875, %v877
      %v879 = vrot.slane %v614, 1
      %v880 = vsel %vm859, %v877, %v879
      %v881 = vrot.slane %v618, 1
      %v882 = vsel %vm859, %v879, %v881
      %v883 = vrot.slane %v624, 1
      %v884 = vsel %vm859, %v881, %v883
      %v885 = vrot.slane %v628, 1
      %v886 = vsel %vm859, %v883, %v885
      %v887 = vrot.slane %v634, 1
      %v888 = vsel %vm859, %v885, %v887
      %v889 = vrot.slane %v638, 1
      %v890 = vsel %vm859, %v887, %v889
      %v891 = vrot.slane %v644, 1
      %v892 = vsel %vm859, %v889, %v891
      %v893 = vrot.slane %v648, 1
      %v894 = vsel %vm859, %v891, %v893
      %v895 = vrot.slane %v654, 1
      %v896 = vsel %vm859, %v893, %v895
      %v897 = vrot.slane %v658, 1
      %v898 = vsel %vm859, %v895, %v897
      %v899 = vrot.slane %v664, 1
      %v900 = vsel %vm859, %v897, %v899
      %v901 = vrot.slane %v668, 1
      %v902 = vsel %vm859, %v899, %v901
      %v903 = vrot.slane %v674, 1
      %v904 = vsel %vm859, %v901, %v903
      %v905 = vrot.slane %v678, 1
      %v906 = vsel %vm859, %v903, %v905
      %v907 = vrot.slane %v684, 1
      %v908 = vsel %vm859, %v905, %v907
      %v909 = vrot.slane %v688, 1
      %v910 = vsel %vm859, %v907, %v909
      %v911 = vrot.slane %v694, 1
      %v912 = vsel %vm859, %v909, %v911
      %v913 = vrot.slane %v698, 1
      %v914 = vsel %vm859, %v911, %v913
      %v915 = vrot.slane %v704, 1
      %v916 = vsel %vm859, %v913, %v915
      %v917 = vrot.slane %v708, 1
      %v918 = vsel %vm859, %v915, %v917
      %v919 = vrot.slane %v714, 1
      %v920 = vsel %vm859, %v917, %v919
      %v921 = vrot.slane %v718, 1
      %v922 = vsel %vm859, %v919, %v921
      %v923 = vrot.slane %v724, 1
      %v924 = vsel %vm859, %v921, %v923
      %v925 = vrot.slane %v728, 1
      %v926 = vsel %vm859, %v923, %v925
      %v927 = vrot.slane %v734, 1
      %v928 = vsel %vm859, %v925, %v927
      %v929 = vrot.slane %v738, 1
      %v930 = vsel %vm859, %v927, %v929
      %v931 = vrot.slane %v744, 1
      %v932 = vsel %vm859, %v929, %v931
      %v933 = vrot.slane %v748, 1
      %v934 = vsel %vm859, %v931, %v933
      %v935 = vrot.slane %v754, 1
      %v936 = vsel %vm859, %v933, %v935
      %v937 = vrot.slane %v758, 1
      %v938 = vsel %vm859, %v935, %v937
      %v939 = vrot.slane %v764, 1
      %v940 = vsel %vm859, %v937, %v939
      %v941 = vrot.slane %v768, 1
      %v942 = vsel %vm859, %v939, %v941
      %v943 = vrot.slane %v774, 1
      %v944 = vsel %vm859, %v941, %v943
      %v945 = vrot.slane %v778, 1
      %v946 = vsel %vm859, %v943, %v945
      %v947 = vrot.slane %v784, 1
      %v948 = vsel %vm859, %v945, %v947
      %v949 = vrot.slane %v788, 1
      %v950 = vsel %vm859, %v947, %v949
      %v951 = vrot.slane %v794, 1
      %v952 = vsel %vm859, %v949, %v951
      %v953 = vrot.slane %v798, 1
      %v954 = vsel %vm859, %v951, %v953
      %v955 = vrot.slane %v804, 1
      %v956 = vsel %vm859, %v953, %v955
      %957 = vrot.lane.b32.xlu0 %v862, 64
      %v958 = vpop.permute.xlu0 %957
      %959 = vrot.lane.b32.xlu0 %v864, 64
      %v960 = vpop.permute.xlu0 %959
      %961 = vrot.lane.b32.xlu0 %v866, 64
      %v962 = vpop.permute.xlu0 %961
      %963 = vrot.lane.b32.xlu0 %v868, 64
      %v964 = vpop.permute.xlu0 %963
      %965 = vrot.lane.b32.xlu0 %v870, 64
      %v966 = vpop.permute.xlu0 %965
      %967 = vrot.lane.b32.xlu0 %v872, 64
      %v968 = vpop.permute.xlu0 %967
      %969 = vrot.lane.b32.xlu0 %v874, 64
      %v970 = vpop.permute.xlu0 %969
      %971 = vrot.lane.b32.xlu0 %v876, 64
      %v972 = vpop.permute.xlu0 %971
      %973 = vrot.lane.b32.xlu0 %v878, 64
      %v974 = vpop.permute.xlu0 %973
      %975 = vrot.lane.b32.xlu0 %v880, 64
      %v976 = vpop.permute.xlu0 %975
      %977 = vrot.lane.b32.xlu0 %v882, 64
      %v978 = vpop.permute.xlu0 %977
      %979 = vrot.lane.b32.xlu0 %v884, 64
      %v980 = vpop.permute.xlu0 %979
      %981 = vrot.lane.b32.xlu0 %v886, 64
      %v982 = vpop.permute.xlu0 %981
      %983 = vrot.lane.b32.xlu0 %v888, 64
      %v984 = vpop.permute.xlu0 %983
      %985 = vrot.lane.b32.xlu0 %v890, 64
      %v986 = vpop.permute.xlu0 %985
      %987 = vrot.lane.b32.xlu0 %v892, 64
      %v988 = vpop.permute.xlu0 %987
      %989 = vrot.lane.b32.xlu0 %v894, 64
      %v990 = vpop.permute.xlu0 %989
      %991 = vrot.lane.b32.xlu0 %v896, 64
      %v992 = vpop.permute.xlu0 %991
      %993 = vrot.lane.b32.xlu0 %v898, 64
      %v994 = vpop.permute.xlu0 %993
      %995 = vrot.lane.b32.xlu0 %v900, 64
      %v996 = vpop.permute.xlu0 %995
      %997 = vrot.lane.b32.xlu0 %v902, 64
      %v998 = vpop.permute.xlu0 %997
      %999 = vrot.lane.b32.xlu0 %v904, 64
      %v1000 = vpop.permute.xlu0 %999
      %1001 = vrot.lane.b32.xlu0 %v906, 64
      %v1002 = vpop.permute.xlu0 %1001
      %1003 = vrot.lane.b32.xlu0 %v908, 64
      %v1004 = vpop.permute.xlu0 %1003
      %1005 = vrot.lane.b32.xlu0 %v910, 64
      %v1006 = vpop.permute.xlu0 %1005
      %1007 = vrot.lane.b32.xlu0 %v912, 64
      %v1008 = vpop.permute.xlu0 %1007
      %1009 = vrot.lane.b32.xlu0 %v914, 64
      %v1010 = vpop.permute.xlu0 %1009
      %1011 = vrot.lane.b32.xlu0 %v916, 64
      %v1012 = vpop.permute.xlu0 %1011
      %1013 = vrot.lane.b32.xlu0 %v918, 64
      %v1014 = vpop.permute.xlu0 %1013
      %1015 = vrot.lane.b32.xlu0 %v920, 64
      %v1016 = vpop.permute.xlu0 %1015
      %1017 = vrot.lane.b32.xlu0 %v922, 64
      %v1018 = vpop.permute.xlu0 %1017
      %1019 = vrot.lane.b32.xlu0 %v924, 64
      %v1020 = vpop.permute.xlu0 %1019
      %1021 = vrot.lane.b32.xlu0 %v926, 64
      %v1022 = vpop.permute.xlu0 %1021
      %1023 = vrot.lane.b32.xlu0 %v928, 64
      %v1024 = vpop.permute.xlu0 %1023
      %1025 = vrot.lane.b32.xlu0 %v930, 64
      %v1026 = vpop.permute.xlu0 %1025
      %1027 = vrot.lane.b32.xlu0 %v932, 64
      %v1028 = vpop.permute.xlu0 %1027
      %1029 = vrot.lane.b32.xlu0 %v934, 64
      %v1030 = vpop.permute.xlu0 %1029
      %1031 = vrot.lane.b32.xlu0 %v936, 64
      %v1032 = vpop.permute.xlu0 %1031
      %1033 = vrot.lane.b32.xlu0 %v938, 64
      %v1034 = vpop.permute.xlu0 %1033
      %1035 = vrot.lane.b32.xlu0 %v940, 64
      %v1036 = vpop.permute.xlu0 %1035
      %1037 = vrot.lane.b32.xlu0 %v942, 64
      %v1038 = vpop.permute.xlu0 %1037
      %1039 = vrot.lane.b32.xlu0 %v944, 64
      %v1040 = vpop.permute.xlu0 %1039
      %1041 = vrot.lane.b32.xlu0 %v946, 64
      %v1042 = vpop.permute.xlu0 %1041
      %1043 = vrot.lane.b32.xlu0 %v948, 64
      %v1044 = vpop.permute.xlu0 %1043
      %1045 = vrot.lane.b32.xlu0 %v950, 64
      %v1046 = vpop.permute.xlu0 %1045
      %1047 = vrot.lane.b32.xlu0 %v952, 64
      %v1048 = vpop.permute.xlu0 %1047
      %1049 = vrot.lane.b32.xlu0 %v954, 64
      %v1050 = vpop.permute.xlu0 %1049
      %1051 = vrot.lane.b32.xlu0 %v956, 64
      %v1052 = vpop.permute.xlu0 %1051
      %v1101 = vadd.f32 %v564, %v958
      %v1102 = vadd.f32 %v568, %v960
      %v1103 = vadd.f32 %v574, %v962
      %v1104 = vadd.f32 %v578, %v964
      %v1105 = vadd.f32 %v584, %v966
      %v1106 = vadd.f32 %v588, %v968
      %v1107 = vadd.f32 %v594, %v970
      %v1108 = vadd.f32 %v598, %v972
      %v1109 = vadd.f32 %v604, %v974
      %v1110 = vadd.f32 %v608, %v976
      %v1111 = vadd.f32 %v614, %v978
      %v1112 = vadd.f32 %v618, %v980
      %v1113 = vadd.f32 %v624, %v982
      %v1114 = vadd.f32 %v628, %v984
      %v1115 = vadd.f32 %v634, %v986
      %v1116 = vadd.f32 %v638, %v988
      %v1117 = vadd.f32 %v644, %v990
      %v1118 = vadd.f32 %v648, %v992
      %v1119 = vadd.f32 %v654, %v994
      %v1120 = vadd.f32 %v658, %v996
      %v1121 = vadd.f32 %v664, %v998
      %v1122 = vadd.f32 %v668, %v1000
      %v1123 = vadd.f32 %v674, %v1002
      %v1124 = vadd.f32 %v678, %v1004
      %v1125 = vadd.f32 %v684, %v1006
      %v1126 = vadd.f32 %v688, %v1008
      %v1127 = vadd.f32 %v694, %v1010
      %v1128 = vadd.f32 %v698, %v1012
      %v1129 = vadd.f32 %v704, %v1014
      %v1130 = vadd.f32 %v708, %v1016
      %v1131 = vadd.f32 %v714, %v1018
      %v1132 = vadd.f32 %v718, %v1020
      %v1133 = vadd.f32 %v724, %v1022
      %v1134 = vadd.f32 %v728, %v1024
      %v1135 = vadd.f32 %v734, %v1026
      %v1136 = vadd.f32 %v738, %v1028
      %v1137 = vadd.f32 %v744, %v1030
      %v1138 = vadd.f32 %v748, %v1032
      %v1139 = vadd.f32 %v754, %v1034
      %v1140 = vadd.f32 %v758, %v1036
      %v1141 = vadd.f32 %v764, %v1038
      %v1142 = vadd.f32 %v768, %v1040
      %v1143 = vadd.f32 %v774, %v1042
      %v1144 = vadd.f32 %v778, %v1044
      %v1145 = vadd.f32 %v784, %v1046
      %v1146 = vadd.f32 %v788, %v1048
      %v1147 = vadd.f32 %v794, %v1050
      %v1148 = vadd.f32 %v798, %v1052
      %vm1198 = vcmask 1045504
      %v1199 = vrot.slane %v566, 2
      %v1200 = vrot.slane %v570, 2
      %v1201 = vsel %vm1198, %v1199, %v1200
      %v1202 = vrot.slane %v576, 2
      %v1203 = vsel %vm1198, %v1200, %v1202
      %v1204 = vrot.slane %v580, 2
      %v1205 = vsel %vm1198, %v1202, %v1204
      %v1206 = vrot.slane %v586, 2
      %v1207 = vsel %vm1198, %v1204, %v1206
      %v1208 = vrot.slane %v590, 2
      %v1209 = vsel %vm1198, %v1206, %v1208
      %v1210 = vrot.slane %v596, 2
      %v1211 = vsel %vm1198, %v1208, %v1210
      %v1212 = vrot.slane %v600, 2
      %v1213 = vsel %vm1198, %v1210, %v1212
      %v1214 = vrot.slane %v606, 2
      %v1215 = vsel %vm1198, %v1212, %v1214
      %v1216 = vrot.slane %v610, 2
      %v1217 = vsel %vm1198, %v1214, %v1216
      %v1218 = vrot.slane %v616, 2
      %v1219 = vsel %vm1198, %v1216, %v1218
      %v1220 = vrot.slane %v620, 2
      %v1221 = vsel %vm1198, %v1218, %v1220
      %v1222 = vrot.slane %v626, 2
      %v1223 = vsel %vm1198, %v1220, %v1222
      %v1224 = vrot.slane %v630, 2
      %v1225 = vsel %vm1198, %v1222, %v1224
      %v1226 = vrot.slane %v636, 2
      %v1227 = vsel %vm1198, %v1224, %v1226
      %v1228 = vrot.slane %v640, 2
      %v1229 = vsel %vm1198, %v1226, %v1228
      %v1230 = vrot.slane %v646, 2
      %v1231 = vsel %vm1198, %v1228, %v1230
      %v1232 = vrot.slane %v650, 2
      %v1233 = vsel %vm1198, %v1230, %v1232
      %v1234 = vrot.slane %v656, 2
      %v1235 = vsel %vm1198, %v1232, %v1234
      %v1236 = vrot.slane %v660, 2
      %v1237 = vsel %vm1198, %v1234, %v1236
      %v1238 = vrot.slane %v666, 2
      %v1239 = vsel %vm1198, %v1236, %v1238
      %v1240 = vrot.slane %v670, 2
      %v1241 = vsel %vm1198, %v1238, %v1240
      %v1242 = vrot.slane %v676, 2
      %v1243 = vsel %vm1198, %v1240, %v1242
      %v1244 = vrot.slane %v680, 2
      %v1245 = vsel %vm1198, %v1242, %v1244
      %v1246 = vrot.slane %v686, 2
      %v1247 = vsel %vm1198, %v1244, %v1246
      %v1248 = vrot.slane %v690, 2
      %v1249 = vsel %vm1198, %v1246, %v1248
      %v1250 = vrot.slane %v696, 2
      %v1251 = vsel %vm1198, %v1248, %v1250
      %v1252 = vrot.slane %v700, 2
      %v1253 = vsel %vm1198, %v1250, %v1252
      %v1254 = vrot.slane %v706, 2
      %v1255 = vsel %vm1198, %v1252, %v1254
      %v1256 = vrot.slane %v710, 2
      %v1257 = vsel %vm1198, %v1254, %v1256
      %v1258 = vrot.slane %v716, 2
      %v1259 = vsel %vm1198, %v1256, %v1258
      %v1260 = vrot.slane %v720, 2
      %v1261 = vsel %vm1198, %v1258, %v1260
      %v1262 = vrot.slane %v726, 2
      %v1263 = vsel %vm1198, %v1260, %v1262
      %v1264 = vrot.slane %v730, 2
      %v1265 = vsel %vm1198, %v1262, %v1264
      %v1266 = vrot.slane %v736, 2
      %v1267 = vsel %vm1198, %v1264, %v1266
      %v1268 = vrot.slane %v740, 2
      %v1269 = vsel %vm1198, %v1266, %v1268
      %v1270 = vrot.slane %v746, 2
      %v1271 = vsel %vm1198, %v1268, %v1270
      %v1272 = vrot.slane %v750, 2
      %v1273 = vsel %vm1198, %v1270, %v1272
      %v1274 = vrot.slane %v756, 2
      %v1275 = vsel %vm1198, %v1272, %v1274
      %v1276 = vrot.slane %v760, 2
      %v1277 = vsel %vm1198, %v1274, %v1276
      %v1278 = vrot.slane %v766, 2
      %v1279 = vsel %vm1198, %v1276, %v1278
      %v1280 = vrot.slane %v770, 2
      %v1281 = vsel %vm1198, %v1278, %v1280
      %v1282 = vrot.slane %v776, 2
      %v1283 = vsel %vm1198, %v1280, %v1282
      %v1284 = vrot.slane %v780, 2
      %v1285 = vsel %vm1198, %v1282, %v1284
      %v1286 = vrot.slane %v786, 2
      %v1287 = vsel %vm1198, %v1284, %v1286
      %v1288 = vrot.slane %v790, 2
      %v1289 = vsel %vm1198, %v1286, %v1288
      %v1290 = vrot.slane %v796, 2
      %v1291 = vsel %vm1198, %v1288, %v1290
      %v1292 = vrot.slane %v800, 2
      %v1293 = vsel %vm1198, %v1290, %v1292
      %v1294 = vrot.slane %v806, 2
      %v1295 = vsel %vm1198, %v1292, %v1294
      %v1344 = vadd.f32 %v1101, %v1201
      %v1345 = vadd.f32 %v1102, %v1203
      %v1346 = vadd.f32 %v1103, %v1205
      %v1347 = vadd.f32 %v1104, %v1207
      %v1348 = vadd.f32 %v1105, %v1209
      %v1349 = vadd.f32 %v1106, %v1211
      %v1350 = vadd.f32 %v1107, %v1213
      %v1351 = vadd.f32 %v1108, %v1215
      %v1352 = vadd.f32 %v1109, %v1217
      %v1353 = vadd.f32 %v1110, %v1219
      %v1354 = vadd.f32 %v1111, %v1221
      %v1355 = vadd.f32 %v1112, %v1223
      %v1356 = vadd.f32 %v1113, %v1225
      %v1357 = vadd.f32 %v1114, %v1227
      %v1358 = vadd.f32 %v1115, %v1229
      %v1359 = vadd.f32 %v1116, %v1231
      %v1360 = vadd.f32 %v1117, %v1233
      %v1361 = vadd.f32 %v1118, %v1235
      %v1362 = vadd.f32 %v1119, %v1237
      %v1363 = vadd.f32 %v1120, %v1239
      %v1364 = vadd.f32 %v1121, %v1241
      %v1365 = vadd.f32 %v1122, %v1243
      %v1366 = vadd.f32 %v1123, %v1245
      %v1367 = vadd.f32 %v1124, %v1247
      %v1368 = vadd.f32 %v1125, %v1249
      %v1369 = vadd.f32 %v1126, %v1251
      %v1370 = vadd.f32 %v1127, %v1253
      %v1371 = vadd.f32 %v1128, %v1255
      %v1372 = vadd.f32 %v1129, %v1257
      %v1373 = vadd.f32 %v1130, %v1259
      %v1374 = vadd.f32 %v1131, %v1261
      %v1375 = vadd.f32 %v1132, %v1263
      %v1376 = vadd.f32 %v1133, %v1265
      %v1377 = vadd.f32 %v1134, %v1267
      %v1378 = vadd.f32 %v1135, %v1269
      %v1379 = vadd.f32 %v1136, %v1271
      %v1380 = vadd.f32 %v1137, %v1273
      %v1381 = vadd.f32 %v1138, %v1275
      %v1382 = vadd.f32 %v1139, %v1277
      %v1383 = vadd.f32 %v1140, %v1279
      %v1384 = vadd.f32 %v1141, %v1281
      %v1385 = vadd.f32 %v1142, %v1283
      %v1386 = vadd.f32 %v1143, %v1285
      %v1387 = vadd.f32 %v1144, %v1287
      %v1388 = vadd.f32 %v1145, %v1289
      %v1389 = vadd.f32 %v1146, %v1291
      %v1390 = vadd.f32 %v1147, %v1293
      %v1391 = vadd.f32 %v1148, %v1295
      %v1392 = vmax.f32 %v1344, %v1347
      %v1393 = vmax.f32 %v1345, %v1348
      %v1394 = vmax.f32 %v1346, %v1349
      %vm1395 = vcmask 523264
      %1396 = vst.msk [vmem:[#allocation2] sm:$0xff] %vm1395, %v1392
      %1397 = vst.msk [vmem:[#allocation2 + $0x8] sm:$0xff] %vm1395, %v1393
      %1398 = vst.msk [vmem:[#allocation2 + $0x10] sm:$0xff] %vm1395, %v1394
      %v1399 = vmax.f32 %v1350, %v1353
      %v1400 = vmax.f32 %v1351, %v1354
      %v1401 = vmax.f32 %v1352, %v1355
      %s1402 = scalar_lea.vmem [#allocation2], 24
      %1403 = vst.msk [vmem:[%s1402] sm:$0xff] %vm1395, %v1399
      %1404 = vst.msk [vmem:[%s1402 + $0x8] sm:$0xff] %vm1395, %v1400
      %1405 = vst.msk [vmem:[%s1402 + $0x10] sm:$0xff] %vm1395, %v1401
      %v1406 = vmax.f32 %v1356, %v1359
      %v1407 = vmax.f32 %v1357, %v1360
      %v1408 = vmax.f32 %v1358, %v1361
      %s1409 = scalar_lea.vmem [#allocation2], 48
      %1410 = vst.msk [vmem:[%s1409] sm:$0xff] %vm1395, %v1406
      %1411 = vst.msk [vmem:[%s1409 + $0x8] sm:$0xff] %vm1395, %v1407
      %1412 = vst.msk [vmem:[%s1409 + $0x10] sm:$0xff] %vm1395, %v1408
      %v1413 = vmax.f32 %v1362, %v1365
      %v1414 = vmax.f32 %v1363, %v1366
      %v1415 = vmax.f32 %v1364, %v1367
      %s1416 = scalar_lea.vmem [#allocation2], 72
      %1417 = vst.msk [vmem:[%s1416] sm:$0xff] %vm1395, %v1413
      %1418 = vst.msk [vmem:[%s1416 + $0x8] sm:$0xff] %vm1395, %v1414
      %1419 = vst.msk [vmem:[%s1416 + $0x10] sm:$0xff] %vm1395, %v1415
      %v1420 = vmax.f32 %v1368, %v1371
      %v1421 = vmax.f32 %v1369, %v1372
      %v1422 = vmax.f32 %v1370, %v1373
      %s1423 = scalar_lea.vmem [#allocation2], 96
      %1424 = vst.msk [vmem:[%s1423] sm:$0xff] %vm1395, %v1420
      %1425 = vst.msk [vmem:[%s1423 + $0x8] sm:$0xff] %vm1395, %v1421
      %1426 = vst.msk [vmem:[%s1423 + $0x10] sm:$0xff] %vm1395, %v1422
      %v1427 = vmax.f32 %v1374, %v1377
      %v1428 = vmax.f32 %v1375, %v1378
      %v1429 = vmax.f32 %v1376, %v1379
      %s1430 = scalar_lea.vmem [#allocation2], 120
      %1431 = vst.msk [vmem:[%s1430] sm:$0xff] %vm1395, %v1427
      %1432 = vst.msk [vmem:[%s1430 + $0x8] sm:$0xff] %vm1395, %v1428
      %1433 = vst.msk [vmem:[%s1430 + $0x10] sm:$0xff] %vm1395, %v1429
      %v1434 = vmax.f32 %v1380, %v1383
      %v1435 = vmax.f32 %v1381, %v1384
      %v1436 = vmax.f32 %v1382, %v1385
      %s1437 = scalar_lea.vmem [#allocation2], 144
      %1438 = vst.msk [vmem:[%s1437] sm:$0xff] %vm1395, %v1434
      %1439 = vst.msk [vmem:[%s1437 + $0x8] sm:$0xff] %vm1395, %v1435
      %1440 = vst.msk [vmem:[%s1437 + $0x10] sm:$0xff] %vm1395, %v1436
      %v1441 = vmax.f32 %v1386, %v1389
      %v1442 = vmax.f32 %v1387, %v1390
      %v1443 = vmax.f32 %v1388, %v1391
      %s1444 = scalar_lea.vmem [#allocation2], 168
      %1445 = vst.msk [vmem:[%s1444] sm:$0xff] %vm1395, %v1441
      %1446 = vst.msk [vmem:[%s1444 + $0x8] sm:$0xff] %vm1395, %v1442
      %1447 = vst.msk [vmem:[%s1444 + $0x10] sm:$0xff] %vm1395, %v1443
      %v1448 = vld [vmem:[#allocation2] ss:$2 sm:$0xff]
      %s1449 = scalar_lea.vmem [#allocation2], 24
      %v1450 = vld [vmem:[%s1449] ss:$2 sm:$0xff]
      %s1451 = scalar_lea.vmem [#allocation2], 48
      %v1452 = vld [vmem:[%s1451] ss:$2 sm:$0xff]
      %s1453 = scalar_lea.vmem [#allocation2], 72
      %v1454 = vld [vmem:[%s1453] ss:$2 sm:$0xff]
      %s1455 = scalar_lea.vmem [#allocation2], 96
      %v1456 = vld [vmem:[%s1455] ss:$2 sm:$0xff]
      %s1457 = scalar_lea.vmem [#allocation2], 120
      %v1458 = vld [vmem:[%s1457] ss:$2 sm:$0xff]
      %s1459 = scalar_lea.vmem [#allocation2], 144
      %v1460 = vld [vmem:[%s1459] ss:$2 sm:$0xff]
      %s1461 = scalar_lea.vmem [#allocation2], 168
      %v1462 = vld [vmem:[%s1461] ss:$2 sm:$0xff]
      %s1463 = scalar_lea.vmem [#allocation2], 1
      %v1464 = vld [vmem:[%s1463] ss:$2 sm:$0xff]
      %s1465 = scalar_lea.vmem [#allocation2], 25
      %v1466 = vld [vmem:[%s1465] ss:$2 sm:$0xff]
      %s1467 = scalar_lea.vmem [#allocation2], 49
      %v1468 = vld [vmem:[%s1467] ss:$2 sm:$0xff]
      %s1469 = scalar_lea.vmem [#allocation2], 73
      %v1470 = vld [vmem:[%s1469] ss:$2 sm:$0xff]
      %s1471 = scalar_lea.vmem [#allocation2], 97
      %v1472 = vld [vmem:[%s1471] ss:$2 sm:$0xff]
      %s1473 = scalar_lea.vmem [#allocation2], 121
      %v1474 = vld [vmem:[%s1473] ss:$2 sm:$0xff]
      %s1475 = scalar_lea.vmem [#allocation2], 145
      %v1476 = vld [vmem:[%s1475] ss:$2 sm:$0xff]
      %s1477 = scalar_lea.vmem [#allocation2], 169
      %v1478 = vld [vmem:[%s1477] ss:$2 sm:$0xff]
      %v1479 = vmax.f32 %v1448, %v1464
      %v1480 = vmax.f32 %v1450, %v1466
      %v1481 = vmax.f32 %v1452, %v1468
      %v1482 = vmax.f32 %v1454, %v1470
      %v1483 = vmax.f32 %v1456, %v1472
      %v1484 = vmax.f32 %v1458, %v1474
      %v1485 = vmax.f32 %v1460, %v1476
      %v1486 = vmax.f32 %v1462, %v1478
      %v1487 = vld [vmem:[%s2] sm:$0x1]
      %v1489 = vlaneseq
      %v1490 = vshrl.u32 %v1489, 7
      %v1491 = vsub.s32 0, %v1490
      %v1492 = vrot.slane %v1487, %v1491
      %v1494 = vadd.f32 %v1479, %v1492
      %v1495 = vadd.f32 %v1480, %v1492
      %v1496 = vadd.f32 %v1481, %v1492
      %v1497 = vadd.f32 %v1482, %v1492
      %v1498 = vadd.f32 %v1483, %v1492
      %v1499 = vadd.f32 %v1484, %v1492
      %v1500 = vadd.f32 %v1485, %v1492
      %v1501 = vadd.f32 %v1486, %v1492
      %v1502 = vmax.f32 %v1494, 0.0
      %v1503 = vmax.f32 %v1495, 0.0
      %v1504 = vmax.f32 %v1496, 0.0
      %v1505 = vmax.f32 %v1497, 0.0
      %v1506 = vmax.f32 %v1498, 0.0
      %v1507 = vmax.f32 %v1499, 0.0
      %v1508 = vmax.f32 %v1500, 0.0
      %v1509 = vmax.f32 %v1501, 0.0
      %v1510 = vpack.c.bf16 %v1502, %v1502
      %v1511 = vpack.c.bf16 %v1503, %v1503
      %v1512 = vpack.c.bf16 %v1504, %v1504
      %v1513 = vpack.c.bf16 %v1505, %v1505
      %v1514 = vpack.c.bf16 %v1506, %v1506
      %v1515 = vpack.c.bf16 %v1507, %v1507
      %v1516 = vpack.c.bf16 %v1508, %v1508
      %v1517 = vpack.c.bf16 %v1509, %v1509
      %vm1518 = vcmask 519168
      %1519 = vst.msk [vmem:[%s206] sm:$0xf] %vm1518, %v1510
      %1520 = vst.msk [vmem:[%s206 + $0x4] sm:$0xf] %vm1518, %v1511
      %1521 = vst.msk [vmem:[%s206 + $0x8] sm:$0xf] %vm1518, %v1512
      %1522 = vst.msk [vmem:[%s206 + $0xc] sm:$0xf] %vm1518, %v1513
      %1523 = vst.msk [vmem:[%s206 + $0x10] sm:$0xf] %vm1518, %v1514
      %1524 = vst.msk [vmem:[%s206 + $0x14] sm:$0xf] %vm1518, %v1515
      %1525 = vst.msk [vmem:[%s206 + $0x18] sm:$0xf] %vm1518, %v1516
      %1526 = vst.msk [vmem:[%s206 + $0x1c] sm:$0xf] %vm1518, %v1517
      %s1527 = smul.u32 8, %s19
      %p1528 = scmp.lt.s32.totalorder %s18, 1
      %s1529 = scalar_select %p1528, %s18, 1
      %p1530 = scmp.lt.s32.totalorder %s1527, 7
      %s1531 = scalar_select %p1530, %s1527, 7
      %s1532 = smul.addr %s1529, 8
      %s1533 = sadd.s32 %s1531, %s1532
      %s1534 = smul.addr %s1533, 4
      %s1535 = scalar_lea.vmem %s3, %s1534
      // Predicated region
      $region33: #{hair_feature_extractor_forward.5} parent=31 // pred_check
        %p1536 = pneg %p116
      $region34: #{hair_feature_extractor_forward.5} parent=31 // pred_check_branch
        %1538 = sbr.rel (%p1536) target = $region36
      $region35: #{hair_feature_extractor_forward.5} parent=31 // pred_region
        %s1539 = smul.u32 8, %s19
      $region36: #{hair_feature_extractor_forward.5} parent=31 // pred_fallthru
        _
    $region32: #{hair_feature_extractor_forward.5} parent=5 // pred_fallthru
      _
    %p1540 = scmp.le.s32.totalorder 2, %s9
    // Predicated region
    $region37: #{hair_feature_extractor_forward.5} parent=5 // pred_check
      %p1541 = pneg %p1540
    $region38: #{hair_feature_extractor_forward.5} parent=5 // pred_check_branch
      %1543 = sbr.rel (%p1541) target = $region40
    $region39: #{hair_feature_extractor_forward.5} parent=5 // pred_region
      %s1544 = ssub.s32 %s9, 2
      // Predicated region
      $region41: #{hair_feature_extractor_forward.5} parent=39 // pred_check
        %p1545 = pneg %p122
      $region42: #{hair_feature_extractor_forward.5} parent=39 // pred_check_branch
        %1547 = sbr.rel (%p1545) target = $region44
      $region43: #{hair_feature_extractor_forward.5} parent=39 // pred_region
        %s1548 = smul.u32 8, %s21
        %p1549 = scmp.lt.s32.totalorder %s20, 1
        %s1550 = scalar_select %p1549, %s20, 1
        %p1551 = scmp.lt.s32.totalorder %s1548, 7
        %s1552 = scalar_select %p1551, %s1548, 7
        %s1553 = smul.addr %s1550, 8
        %s1554 = sadd.s32 %s1552, %s1553
        %s1555 = smul.addr %s1554, 4
        %s1556 = scalar_lea.vmem %s3, %s1555
      $region44: #{hair_feature_extractor_forward.5} parent=39 // pred_fallthru
        _
    $region40: #{hair_feature_extractor_forward.5} parent=5 // pred_fallthru
      _
  $region6: #{hair_feature_extractor_forward.5} parent=0 // loop_footer
    %s13 = sadd.s32 1, %s9
  $region7: #{hair_feature_extractor_forward.5} parent=0 // loop_footer_branch
    %8 = sbr.rel target = $region3
  $region8: #{hair_feature_extractor_forward.5} parent=0 // loop_exit
    _

// kernel: hair_feature_extractor_forward.4
$region0: #{hair_feature_extractor_forward.4}
  #allocation0 [shape = 'u32[]', space=smem, size = 0x4, offset = 0x4, fixed_abs, tag = 'smem constant byte address 0x4 - core index']
  #allocation1 [shape = 'u32[144,128]{1,0:T(1,128)}', space=vmem, size = 0x12000, scoped, tag = 'internal scratch']
  #allocation2 [shape = 'f32[16,40,32]{2,1,0:T(8,128)}', space=vmem, size = 0x50000, scoped, tag = 'scratch operand']
  %s0 = inlined_call_operand.vmem [shape: bf16[2,1,1288,9], index: 0, kind: input, shape index: {}]
  %s1 = inlined_call_operand.vmem [shape: bf16[9,96], index: 1, kind: input, shape index: {}]
  %s2 = inlined_call_operand.vmem [shape: f32[1,32], index: 2, kind: input, shape index: {}]
  %s3 = inlined_call_operand.vmem [shape: bf16[2,16,16,32], index: 3, kind: output, shape index: {}]
  %s4 = sld [smem:[#allocation0]]
  $region45: #{hair_feature_extractor_forward.4} parent=0
    _
  %s6 = ssub.s32 1, %s4
  %s7 = scalar_select 0, %s6, %s4
  loop: start=0, step=1, limit=4
  $region2: #{hair_feature_extractor_forward.4} parent=0 // loop_pre_header
    _
  $region3: #{hair_feature_extractor_forward.4} parent=0 // loop_header
    %s9 = sphi 0, %s13
    %p10 = scmp.ge.s32.totalorder %s9, 4
    %s16 = sphi 0, %s28
    %s17 = sphi 0, %s24
    %s18 = sphi 0, %s16
    %s19 = sphi 0, %s17
    %s20 = sphi 0, %s18
    %s21 = sphi 0, %s19
    %s33 = sphi 0, %s35
    %s36 = sphi 0, %s33
    %s37 = sphi 0, %s36
    %s53 = sphi 0, %s37
    %s57 = sphi 0, %s57
    %s59 = sphi 0, %s57
    %s60 = sphi 0, %s59
    %s74 = sphi 0, %s60
    %s78 = sphi 0, %s78
    %s80 = sphi 0, %s78
    %s81 = sphi 0, %s80
    %s95 = sphi 0, %s81
    %s103 = sphi 0, %s105
    %s106 = sphi 0, %s103
    %s107 = sphi 0, %s106
    %s123 = sphi 0, %s107
  $region4: #{hair_feature_extractor_forward.4} parent=0 // loop_header_branch
    %12 = sbr.rel (%p10) target = $region8
  $region5: #{hair_feature_extractor_forward.4} parent=0 // loop_body
    %s14 = ssub.s32 %s9, 1
    %s15 = ssub.s32 %s9, 2
    %s22 = sadd.s32 1, %s17
    %p23 = scmp.ge.s32.totalorder %s22, 1
    %s24 = scalar_select %p23, 0, %s22
    %s25 = sadd.s32 1, %s16
    %s26 = scalar_select %p23, %s25, %s16
    %p27 = scmp.ge.s32.totalorder %s26, 2
    %s28 = scalar_select %p27, 0, %s26
    %s29 = ssub.s32 %s16, %s28
    %s30 = ssub.s32 %s17, %s24
    %s31 = sor.u32 %s29, %s30
    %p32 = scmp.eq.s32.totalorder %s31, 0
    %s34 = sadd.s32 %s33, 1
    %s35 = scalar_select %p32, %s33, %s34
    %p38 = pneg %p32
    %p39 = scmp.eq.s32.totalorder %s9, 1
    %p40 = por %p38, %p39
    %p41 = scmp.ne.s32.totalorder %s33, %s36
    %p42 = scmp.eq.s32.totalorder %s9, 0
    %p43 = por %p41, %p42
    %p44 = scmp.ne.s32.totalorder %s33, %s36
    %p45 = scmp.eq.s32.totalorder %s14, 1
    %p46 = por %p44, %p45
    %p47 = scmp.ne.s32.totalorder %s36, %s37
    %p48 = scmp.eq.s32.totalorder %s14, 0
    %p49 = por %p47, %p48
    %p50 = scmp.ne.s32.totalorder %s36, %s37
    %p51 = scmp.eq.s32.totalorder %s15, 1
    %p52 = por %p50, %p51
    %p54 = scmp.ne.s32.totalorder %s37, %s53
    %p55 = scmp.eq.s32.totalorder %s15, 0
    %p56 = por %p54, %p55
    %s58 = sadd.s32 %s57, 1
    %p61 = scmp.eq.s32.totalorder %s9, 1
    %p62 = scmp.ne.s32.totalorder %s57, %s59
    %p63 = scmp.eq.s32.totalorder %s9, 0
    %p64 = por %p62, %p63
    %p65 = scmp.ne.s32.totalorder %s57, %s59
    %p66 = scmp.eq.s32.totalorder %s14, 1
    %p67 = por %p65, %p66
    %p68 = scmp.ne.s32.totalorder %s59, %s60
    %p69 = scmp.eq.s32.totalorder %s14, 0
    %p70 = por %p68, %p69
    %p71 = scmp.ne.s32.totalorder %s59, %s60
    %p72 = scmp.eq.s32.totalorder %s15, 1
    %p73 = por %p71, %p72
    %p75 = scmp.ne.s32.totalorder %s60, %s74
    %p76 = scmp.eq.s32.totalorder %s15, 0
    %p77 = por %p75, %p76
    %s79 = sadd.s32 %s78, 1
    %p82 = scmp.eq.s32.totalorder %s9, 1
    %p83 = scmp.ne.s32.totalorder %s78, %s80
    %p84 = scmp.eq.s32.totalorder %s9, 0
    %p85 = por %p83, %p84
    %p86 = scmp.ne.s32.totalorder %s78, %s80
    %p87 = scmp.eq.s32.totalorder %s14, 1
    %p88 = por %p86, %p87
    %p89 = scmp.ne.s32.totalorder %s80, %s81
    %p90 = scmp.eq.s32.totalorder %s14, 0
    %p91 = por %p89, %p90
    %p92 = scmp.ne.s32.totalorder %s80, %s81
    %p93 = scmp.eq.s32.totalorder %s15, 1
    %p94 = por %p92, %p93
    %p96 = scmp.ne.s32.totalorder %s81, %s95
    %p97 = scmp.eq.s32.totalorder %s15, 0
    %p98 = por %p96, %p97
    %s99 = ssub.s32 %s16, %s28
    %s100 = ssub.s32 %s17, %s24
    %s101 = sor.u32 %s99, %s100
    %p102 = scmp.eq.s32.totalorder %s101, 0
    %s104 = sadd.s32 %s103, 1
    %s105 = scalar_select %p102, %s103, %s104
    %p108 = pneg %p102
    %p109 = scmp.eq.s32.totalorder %s9, 1
    %p110 = por %p108, %p109
    %p111 = scmp.ne.s32.totalorder %s103, %s106
    %p112 = scmp.eq.s32.totalorder %s9, 0
    %p113 = por %p111, %p112
    %p114 = scmp.ne.s32.totalorder %s103, %s106
    %p115 = scmp.eq.s32.totalorder %s14, 1
    %p116 = por %p114, %p115
    %p117 = scmp.ne.s32.totalorder %s106, %s107
    %p118 = scmp.eq.s32.totalorder %s14, 0
    %p119 = por %p117, %p118
    %p120 = scmp.ne.s32.totalorder %s106, %s107
    %p121 = scmp.eq.s32.totalorder %s15, 1
    %p122 = por %p120, %p121
    %p124 = scmp.ne.s32.totalorder %s107, %s123
    %p125 = scmp.eq.s32.totalorder %s15, 0
    %p126 = por %p124, %p125
    %p127 = scmp.le.s32.totalorder 1, %s9
    %p128 = scmp.lt.s32.totalorder %s9, 3
    %p129 = pnand %p127, %p128
    %p130 = pneg %p129
    // Predicated region
    $region9: #{hair_feature_extractor_forward.4} parent=5 // pred_check
      _
    $region10: #{hair_feature_extractor_forward.4} parent=5 // pred_check_branch
      %132 = sbr.rel (%p129) target = $region12
    $region11: #{hair_feature_extractor_forward.4} parent=5 // pred_region
      %s133 = ssub.s32 %s9, 1
      // Predicated region
      $region13: #{hair_feature_extractor_forward.4} parent=11 // pred_check
        %p134 = pneg %p70
      $region14: #{hair_feature_extractor_forward.4} parent=11 // pred_check_branch
        %136 = sbr.rel (%p134) target = $region16
      $region15: #{hair_feature_extractor_forward.4} parent=11 // pred_region
        _
      $region16: #{hair_feature_extractor_forward.4} parent=11 // pred_fallthru
        _
      // Predicated region
      $region17: #{hair_feature_extractor_forward.4} parent=11 // pred_check
        %p137 = pneg %p91
      $region18: #{hair_feature_extractor_forward.4} parent=11 // pred_check_branch
        %139 = sbr.rel (%p137) target = $region20
      $region19: #{hair_feature_extractor_forward.4} parent=11 // pred_region
        _
      $region20: #{hair_feature_extractor_forward.4} parent=11 // pred_fallthru
        _
    $region12: #{hair_feature_extractor_forward.4} parent=5 // pred_fallthru
      _
    %p140 = scmp.lt.s32.totalorder %s9, 2
    // Predicated region
    $region21: #{hair_feature_extractor_forward.4} parent=5 // pred_check
      %p141 = pneg %p140
    $region22: #{hair_feature_extractor_forward.4} parent=5 // pred_check_branch
      %143 = sbr.rel (%p141) target = $region24
    $region23: #{hair_feature_extractor_forward.4} parent=5 // pred_region
      // Predicated region
      $region25: #{hair_feature_extractor_forward.4} parent=23 // pred_check
        %p144 = pneg %p43
      $region26: #{hair_feature_extractor_forward.4} parent=23 // pred_check_branch
        %146 = sbr.rel (%p144) target = $region28
      $region27: #{hair_feature_extractor_forward.4} parent=23 // pred_region
        %p147 = scmp.lt.s32.totalorder %s16, 1
        %s148 = scalar_select %p147, %s16, 1
        %p149 = scmp.lt.s32.totalorder %s17, 0
        %s150 = scalar_select %p149, %s17, 0
        %s151 = smul.addr %s150, 161
        %s152 = smul.addr %s148, 161
        %s153 = sadd.s32 %s151, %s152
        %s154 = smul.addr %s153, 4
        %s155 = scalar_lea.vmem %s0, %s154
      $region28: #{hair_feature_extractor_forward.4} parent=23 // pred_fallthru
        _
    $region24: #{hair_feature_extractor_forward.4} parent=5 // pred_fallthru
      _
    %p156 = scmp.le.s32.totalorder 1, %s9
    %p157 = scmp.lt.s32.totalorder %s9, 3
    %p158 = pnand %p156, %p157
    %p159 = pneg %p158
    // Predicated region
    $region29: #{hair_feature_extractor_forward.4} parent=5 // pred_check
      _
    $region30: #{hair_feature_extractor_forward.4} parent=5 // pred_check_branch
      %161 = sbr.rel (%p158) target = $region32
    $region31: #{hair_feature_extractor_forward.4} parent=5 // pred_region
      %s162 = ssub.s32 %s9, 1
      %p163 = scmp.lt.s32.totalorder %s18, 1
      %s164 = scalar_select %p163, %s18, 1
      %p165 = scmp.lt.s32.totalorder %s19, 0
      %s166 = scalar_select %p165, %s19, 0
      %s167 = smul.addr %s166, 161
      %s168 = smul.addr %s164, 161
      %s169 = sadd.s32 %s167, %s168
      %s170 = smul.addr %s169, 4
      %s171 = scalar_lea.vmem %s0, %s170
      %p172 = pneg %p49
      %p173 = pneg %p46
      %p174 = pneg %p70
      %p175 = pneg %p67
      %p176 = pneg %p91
      %p177 = pneg %p88
      %p178 = pneg %p119
      %p179 = pneg %p116
      %s180 = smul.u32 16, %s19
      %p181 = scmp.lt.s32.totalorder %s18, 1
      %s182 = scalar_select %p181, %s18, 1
      %p183 = scmp.lt.s32.totalorder %s180, 15
      %s184 = scalar_select %p183, %s180, 15
      %s185 = smul.addr %s184, 2
      %s186 = smul.addr %s182, 32
      %s187 = sadd.s32 %s185, %s186
      %s188 = smul.addr %s187, 4
      %s189 = scalar_lea.vmem %s3, %s188
      %p190 = scmp.lt.s32.totalorder %s18, 1
      %s191 = scalar_select %p190, %s18, 1
      %p192 = scmp.lt.s32.totalorder %s19, 0
      %s193 = scalar_select %p192, %s19, 0
      %s194 = smul.addr %s193, 161
      %s195 = smul.addr %s191, 161
      %s196 = sadd.s32 %s194, %s195
      %s197 = smul.addr %s196, 4
      %s198 = scalar_lea.vmem %s0, %s197
      %s199 = smul.u32 16, %s19
      %p200 = scmp.lt.s32.totalorder %s18, 1
      %s201 = scalar_select %p200, %s18, 1
      %p202 = scmp.lt.s32.totalorder %s199, 15
      %s203 = scalar_select %p202, %s199, 15
      %s204 = smul.addr %s203, 2
      %s205 = smul.addr %s201, 32
      %s206 = sadd.s32 %s204, %s205
      %s207 = smul.addr %s206, 4
      %s208 = scalar_lea.vmem %s3, %s207
      %s209 = smul.u32 16, %s19
      %v211 = vld [vmem:[%s198] sm:$0xf]
      %v212 = vld [vmem:[%s198 + $0x4] sm:$0xf]
      %v213 = vld [vmem:[%s198 + $0x8] sm:$0xf]
      %v214 = vld [vmem:[%s198 + $0xc] sm:$0xf]
      %v215 = vld [vmem:[%s198 + $0x10] sm:$0xf]
      %v216 = vld [vmem:[%s198 + $0x14] sm:$0xf]
      %v217 = vld [vmem:[%s198 + $0x18] sm:$0xf]
      %v218 = vld [vmem:[%s198 + $0x1c] sm:$0xf]
      %v219 = vld [vmem:[%s198 + $0x20] sm:$0xf]
      %v220 = vld [vmem:[%s198 + $0x24] sm:$0xf]
      %v221 = vld [vmem:[%s198 + $0x28] sm:$0xf]
      %v222 = vld [vmem:[%s198 + $0x2c] sm:$0xf]
      %v223 = vld [vmem:[%s198 + $0x30] sm:$0xf]
      %v224 = vld [vmem:[%s198 + $0x34] sm:$0xf]
      %v225 = vld [vmem:[%s198 + $0x38] sm:$0xf]
      %v226 = vld [vmem:[%s198 + $0x3c] sm:$0xf]
      %v227 = vld [vmem:[%s198 + $0x40] sm:$0xf]
      %v228 = vld [vmem:[%s198 + $0x44] sm:$0xf]
      %v229 = vld [vmem:[%s198 + $0x48] sm:$0xf]
      %v230 = vld [vmem:[%s198 + $0x4c] sm:$0xf]
      %v231 = vld [vmem:[%s198 + $0x50] sm:$0xf]
      %v232 = vld [vmem:[%s198 + $0x54] sm:$0xf]
      %v233 = vld [vmem:[%s198 + $0x58] sm:$0xf]
      %v234 = vld [vmem:[%s198 + $0x5c] sm:$0xf]
      %v235 = vld [vmem:[%s198 + $0x60] sm:$0xf]
      %v236 = vld [vmem:[%s198 + $0x64] sm:$0xf]
      %v237 = vld [vmem:[%s198 + $0x68] sm:$0xf]
      %v238 = vld [vmem:[%s198 + $0x6c] sm:$0xf]
      %v239 = vld [vmem:[%s198 + $0x70] sm:$0xf]
      %v240 = vld [vmem:[%s198 + $0x74] sm:$0xf]
      %v241 = vld [vmem:[%s198 + $0x78] sm:$0xf]
      %v242 = vld [vmem:[%s198 + $0x7c] sm:$0xf]
      %v243 = vld [vmem:[%s198 + $0x80] sm:$0xf]
      %v244 = vld [vmem:[%s198 + $0x84] sm:$0xf]
      %v245 = vld [vmem:[%s198 + $0x88] sm:$0xf]
      %v246 = vld [vmem:[%s198 + $0x8c] sm:$0xf]
      %v247 = vld [vmem:[%s198 + $0x90] sm:$0xf]
      %v248 = vld [vmem:[%s198 + $0x94] sm:$0xf]
      %v249 = vld [vmem:[%s198 + $0x98] sm:$0xf]
      %v250 = vld [vmem:[%s198 + $0x9c] sm:$0xf]
      %v251 = vld [vmem:[%s198 + $0xa0] sm:$0xf]
      %v252 = vld [vmem:[%s198 + $0xa4] sm:$0xf]
      %v253 = vld [vmem:[%s198 + $0xa8] sm:$0xf]
      %v254 = vld [vmem:[%s198 + $0xac] sm:$0xf]
      %v255 = vld [vmem:[%s198 + $0xb0] sm:$0xf]
      %v256 = vld [vmem:[%s198 + $0xb4] sm:$0xf]
      %v257 = vld [vmem:[%s198 + $0xb8] sm:$0xf]
      %v258 = vld [vmem:[%s198 + $0xbc] sm:$0xf]
      %v259 = vld [vmem:[%s198 + $0xc0] sm:$0xf]
      %v260 = vld [vmem:[%s198 + $0xc4] sm:$0xf]
      %v261 = vld [vmem:[%s198 + $0xc8] sm:$0xf]
      %v262 = vld [vmem:[%s198 + $0xcc] sm:$0xf]
      %v263 = vld [vmem:[%s198 + $0xd0] sm:$0xf]
      %v264 = vld [vmem:[%s198 + $0xd4] sm:$0xf]
      %v265 = vld [vmem:[%s198 + $0xd8] sm:$0xf]
      %v266 = vld [vmem:[%s198 + $0xdc] sm:$0xf]
      %v267 = vld [vmem:[%s198 + $0xe0] sm:$0xf]
      %v268 = vld [vmem:[%s198 + $0xe4] sm:$0xf]
      %v269 = vld [vmem:[%s198 + $0xe8] sm:$0xf]
      %v270 = vld [vmem:[%s198 + $0xec] sm:$0xf]
      %v271 = vld [vmem:[%s198 + $0xf0] sm:$0xf]
      %v272 = vld [vmem:[%s198 + $0xf4] sm:$0xf]
      %v273 = vld [vmem:[%s198 + $0xf8] sm:$0xf]
      %v274 = vld [vmem:[%s198 + $0xfc] sm:$0xf]
      %v275 = vld [vmem:[%s198 + $0x100] sm:$0xf]
      %v276 = vld [vmem:[%s198 + $0x104] sm:$0xf]
      %v277 = vld [vmem:[%s198 + $0x108] sm:$0xf]
      %v278 = vld [vmem:[%s198 + $0x10c] sm:$0xf]
      %v279 = vld [vmem:[%s198 + $0x110] sm:$0xf]
      %v280 = vld [vmem:[%s198 + $0x114] sm:$0xf]
      %v281 = vld [vmem:[%s198 + $0x118] sm:$0xf]
      %v282 = vld [vmem:[%s198 + $0x11c] sm:$0xf]
      %v283 = vld [vmem:[%s198 + $0x120] sm:$0xf]
      %v284 = vld [vmem:[%s198 + $0x124] sm:$0xf]
      %v285 = vld [vmem:[%s198 + $0x128] sm:$0xf]
      %v286 = vld [vmem:[%s198 + $0x12c] sm:$0xf]
      %v287 = vld [vmem:[%s198 + $0x130] sm:$0xf]
      %v288 = vld [vmem:[%s198 + $0x134] sm:$0xf]
      %v289 = vld [vmem:[%s198 + $0x138] sm:$0xf]
      %v290 = vld [vmem:[%s198 + $0x13c] sm:$0xf]
      %v291 = vld [vmem:[%s198 + $0x140] sm:$0xf]
      %v292 = vld [vmem:[%s198 + $0x144] sm:$0xf]
      %v293 = vld [vmem:[%s198 + $0x148] sm:$0xf]
      %v294 = vld [vmem:[%s198 + $0x14c] sm:$0xf]
      %v295 = vld [vmem:[%s198 + $0x150] sm:$0xf]
      %v296 = vld [vmem:[%s198 + $0x154] sm:$0xf]
      %v297 = vld [vmem:[%s198 + $0x158] sm:$0xf]
      %v298 = vld [vmem:[%s198 + $0x15c] sm:$0xf]
      %v299 = vld [vmem:[%s198 + $0x160] sm:$0xf]
      %v300 = vld [vmem:[%s198 + $0x164] sm:$0xf]
      %v301 = vld [vmem:[%s198 + $0x168] sm:$0xf]
      %v302 = vld [vmem:[%s198 + $0x16c] sm:$0xf]
      %v303 = vld [vmem:[%s198 + $0x170] sm:$0xf]
      %v304 = vld [vmem:[%s198 + $0x174] sm:$0xf]
      %v305 = vld [vmem:[%s198 + $0x178] sm:$0xf]
      %v306 = vld [vmem:[%s198 + $0x17c] sm:$0xf]
      %v307 = vld [vmem:[%s198 + $0x180] sm:$0xf]
      %v308 = vld [vmem:[%s198 + $0x184] sm:$0xf]
      %v309 = vld [vmem:[%s198 + $0x188] sm:$0xf]
      %v310 = vld [vmem:[%s198 + $0x18c] sm:$0xf]
      %v311 = vld [vmem:[%s198 + $0x190] sm:$0xf]
      %v312 = vld [vmem:[%s198 + $0x194] sm:$0xf]
      %v313 = vld [vmem:[%s198 + $0x198] sm:$0xf]
      %v314 = vld [vmem:[%s198 + $0x19c] sm:$0xf]
      %v315 = vld [vmem:[%s198 + $0x1a0] sm:$0xf]
      %v316 = vld [vmem:[%s198 + $0x1a4] sm:$0xf]
      %v317 = vld [vmem:[%s198 + $0x1a8] sm:$0xf]
      %v318 = vld [vmem:[%s198 + $0x1ac] sm:$0xf]
      %v319 = vld [vmem:[%s198 + $0x1b0] sm:$0xf]
      %v320 = vld [vmem:[%s198 + $0x1b4] sm:$0xf]
      %v321 = vld [vmem:[%s198 + $0x1b8] sm:$0xf]
      %v322 = vld [vmem:[%s198 + $0x1bc] sm:$0xf]
      %v323 = vld [vmem:[%s198 + $0x1c0] sm:$0xf]
      %v324 = vld [vmem:[%s198 + $0x1c4] sm:$0xf]
      %v325 = vld [vmem:[%s198 + $0x1c8] sm:$0xf]
      %v326 = vld [vmem:[%s198 + $0x1cc] sm:$0xf]
      %v327 = vld [vmem:[%s198 + $0x1d0] sm:$0xf]
      %v328 = vld [vmem:[%s198 + $0x1d4] sm:$0xf]
      %v329 = vld [vmem:[%s198 + $0x1d8] sm:$0xf]
      %v330 = vld [vmem:[%s198 + $0x1dc] sm:$0xf]
      %v331 = vld [vmem:[%s198 + $0x1e0] sm:$0xf]
      %v332 = vld [vmem:[%s198 + $0x1e4] sm:$0xf]
      %v333 = vld [vmem:[%s198 + $0x1e8] sm:$0xf]
      %v334 = vld [vmem:[%s198 + $0x1ec] sm:$0xf]
      %v335 = vld [vmem:[%s198 + $0x1f0] sm:$0xf]
      %v336 = vld [vmem:[%s198 + $0x1f4] sm:$0xf]
      %v337 = vld [vmem:[%s198 + $0x1f8] sm:$0xf]
      %v338 = vld [vmem:[%s198 + $0x1fc] sm:$0xf]
      %v339 = vld [vmem:[%s198 + $0x200] sm:$0xf]
      %v340 = vld [vmem:[%s198 + $0x204] sm:$0xf]
      %v341 = vld [vmem:[%s198 + $0x208] sm:$0xf]
      %v342 = vld [vmem:[%s198 + $0x20c] sm:$0xf]
      %v343 = vld [vmem:[%s198 + $0x210] sm:$0xf]
      %v344 = vld [vmem:[%s198 + $0x214] sm:$0xf]
      %v345 = vld [vmem:[%s198 + $0x218] sm:$0xf]
      %v346 = vld [vmem:[%s198 + $0x21c] sm:$0xf]
      %v347 = vld [vmem:[%s198 + $0x220] sm:$0xf]
      %v348 = vld [vmem:[%s198 + $0x224] sm:$0xf]
      %v349 = vld [vmem:[%s198 + $0x228] sm:$0xf]
      %v350 = vld [vmem:[%s198 + $0x22c] sm:$0xf]
      %v351 = vld [vmem:[%s198 + $0x230] sm:$0xf]
      %v352 = vld [vmem:[%s198 + $0x234] sm:$0xf]
      %v353 = vld [vmem:[%s198 + $0x238] sm:$0xf]
      %v354 = vld [vmem:[%s198 + $0x23c] sm:$0xf]
      %v355 = vld [vmem:[%s198 + $0x240] sm:$0xf]
      %v356 = vld [vmem:[%s198 + $0x244] sm:$0xf]
      %v357 = vld [vmem:[%s198 + $0x248] sm:$0xf]
      %v358 = vld [vmem:[%s198 + $0x24c] sm:$0xf]
      %v359 = vld [vmem:[%s198 + $0x250] sm:$0xf]
      %v360 = vld [vmem:[%s198 + $0x254] sm:$0xf]
      %v361 = vld [vmem:[%s198 + $0x258] sm:$0xf]
      %v362 = vld [vmem:[%s198 + $0x25c] sm:$0xf]
      %v363 = vld [vmem:[%s198 + $0x260] sm:$0xf]
      %v364 = vld [vmem:[%s198 + $0x264] sm:$0xf]
      %v365 = vld [vmem:[%s198 + $0x268] sm:$0xf]
      %v366 = vld [vmem:[%s198 + $0x26c] sm:$0xf]
      %v367 = vld [vmem:[%s198 + $0x270] sm:$0xf]
      %v368 = vld [vmem:[%s198 + $0x274] sm:$0xf]
      %v369 = vld [vmem:[%s198 + $0x278] sm:$0xf]
      %v370 = vld [vmem:[%s198 + $0x27c] sm:$0xf]
      %v371 = vld [vmem:[%s198 + $0x280] sm:$0x1]
      %v372 = vld [vmem:[%s1] sm:$0xf]
      %v373 = vld [vmem:[%s1 + $0x4] sm:$0x1]
      %v535 = vunpack.c.l.b16 %v211
      %v536 = vunpack.c.l.b16 %v212
      %v537 = vunpack.c.l.b16 %v213
      %v538 = vunpack.c.l.b16 %v214
      %v539 = vunpack.c.l.b16 %v215
      %v540 = vunpack.c.l.b16 %v216
      %v541 = vunpack.c.l.b16 %v217
      %v542 = vunpack.c.l.b16 %v218
      %v543 = vunpack.c.l.b16 %v219
      %v544 = vunpack.c.l.b16 %v220
      %v545 = vunpack.c.l.b16 %v221
      %v546 = vunpack.c.l.b16 %v222
      %v547 = vunpack.c.l.b16 %v223
      %v548 = vunpack.c.l.b16 %v224
      %v549 = vunpack.c.l.b16 %v225
      %v550 = vunpack.c.l.b16 %v226
      %v551 = vunpack.c.l.b16 %v227
      %v552 = vunpack.c.l.b16 %v228
      %v553 = vunpack.c.l.b16 %v229
      %v554 = vunpack.c.l.b16 %v230
      %v555 = vunpack.c.l.b16 %v231
      %v556 = vunpack.c.l.b16 %v232
      %v557 = vunpack.c.l.b16 %v233
      %v558 = vunpack.c.l.b16 %v234
      %v559 = vunpack.c.l.b16 %v235
      %v560 = vunpack.c.l.b16 %v236
      %v561 = vunpack.c.l.b16 %v237
      %v562 = vunpack.c.l.b16 %v238
      %v563 = vunpack.c.l.b16 %v239
      %v564 = vunpack.c.l.b16 %v240
      %v565 = vunpack.c.l.b16 %v241
      %v566 = vunpack.c.l.b16 %v242
      %v567 = vunpack.c.l.b16 %v243
      %v568 = vunpack.c.l.b16 %v244
      %v569 = vunpack.c.l.b16 %v245
      %v570 = vunpack.c.l.b16 %v246
      %v571 = vunpack.c.l.b16 %v247
      %v572 = vunpack.c.l.b16 %v248
      %v573 = vunpack.c.l.b16 %v249
      %v574 = vunpack.c.l.b16 %v250
      %v575 = vunpack.c.l.b16 %v251
      %v576 = vunpack.c.l.b16 %v252
      %v577 = vunpack.c.l.b16 %v253
      %v578 = vunpack.c.l.b16 %v254
      %v579 = vunpack.c.l.b16 %v255
      %v580 = vunpack.c.l.b16 %v256
      %v581 = vunpack.c.l.b16 %v257
      %v582 = vunpack.c.l.b16 %v258
      %v583 = vunpack.c.l.b16 %v259
      %v584 = vunpack.c.l.b16 %v260
      %v585 = vunpack.c.l.b16 %v261
      %v586 = vunpack.c.l.b16 %v262
      %v587 = vunpack.c.l.b16 %v263
      %v588 = vunpack.c.l.b16 %v264
      %v589 = vunpack.c.l.b16 %v265
      %v590 = vunpack.c.l.b16 %v266
      %v591 = vunpack.c.l.b16 %v267
      %v592 = vunpack.c.l.b16 %v268
      %v593 = vunpack.c.l.b16 %v269
      %v594 = vunpack.c.l.b16 %v270
      %v595 = vunpack.c.l.b16 %v271
      %v596 = vunpack.c.l.b16 %v272
      %v597 = vunpack.c.l.b16 %v273
      %v598 = vunpack.c.l.b16 %v274
      %v599 = vunpack.c.l.b16 %v275
      %v600 = vunpack.c.l.b16 %v276
      %v601 = vunpack.c.l.b16 %v277
      %v602 = vunpack.c.l.b16 %v278
      %v603 = vunpack.c.l.b16 %v279
      %v604 = vunpack.c.l.b16 %v280
      %v605 = vunpack.c.l.b16 %v281
      %v606 = vunpack.c.l.b16 %v282
      %v607 = vunpack.c.l.b16 %v283
      %v608 = vunpack.c.l.b16 %v284
      %v609 = vunpack.c.l.b16 %v285
      %v610 = vunpack.c.l.b16 %v286
      %v611 = vunpack.c.l.b16 %v287
      %v612 = vunpack.c.l.b16 %v288
      %v613 = vunpack.c.l.b16 %v289
      %v614 = vunpack.c.l.b16 %v290
      %v615 = vunpack.c.l.b16 %v291
      %v616 = vunpack.c.l.b16 %v292
      %v617 = vunpack.c.l.b16 %v293
      %v618 = vunpack.c.l.b16 %v294
      %v619 = vunpack.c.l.b16 %v295
      %v620 = vunpack.c.l.b16 %v296
      %v621 = vunpack.c.l.b16 %v297
      %v622 = vunpack.c.l.b16 %v298
      %v623 = vunpack.c.l.b16 %v299
      %v624 = vunpack.c.l.b16 %v300
      %v625 = vunpack.c.l.b16 %v301
      %v626 = vunpack.c.l.b16 %v302
      %v627 = vunpack.c.l.b16 %v303
      %v628 = vunpack.c.l.b16 %v304
      %v629 = vunpack.c.l.b16 %v305
      %v630 = vunpack.c.l.b16 %v306
      %v631 = vunpack.c.l.b16 %v307
      %v632 = vunpack.c.l.b16 %v308
      %v633 = vunpack.c.l.b16 %v309
      %v634 = vunpack.c.l.b16 %v310
      %v635 = vunpack.c.l.b16 %v311
      %v636 = vunpack.c.l.b16 %v312
      %v637 = vunpack.c.l.b16 %v313
      %v638 = vunpack.c.l.b16 %v314
      %v639 = vunpack.c.l.b16 %v315
      %v640 = vunpack.c.l.b16 %v316
      %v641 = vunpack.c.l.b16 %v317
      %v642 = vunpack.c.l.b16 %v318
      %v643 = vunpack.c.l.b16 %v319
      %v644 = vunpack.c.l.b16 %v320
      %v645 = vunpack.c.l.b16 %v321
      %v646 = vunpack.c.l.b16 %v322
      %v647 = vunpack.c.l.b16 %v323
      %v648 = vunpack.c.l.b16 %v324
      %v649 = vunpack.c.l.b16 %v325
      %v650 = vunpack.c.l.b16 %v326
      %v651 = vunpack.c.l.b16 %v327
      %v652 = vunpack.c.l.b16 %v328
      %v653 = vunpack.c.l.b16 %v329
      %v654 = vunpack.c.l.b16 %v330
      %v655 = vunpack.c.l.b16 %v331
      %v656 = vunpack.c.l.b16 %v332
      %v657 = vunpack.c.l.b16 %v333
      %v658 = vunpack.c.l.b16 %v334
      %v659 = vunpack.c.l.b16 %v335
      %v660 = vunpack.c.l.b16 %v336
      %v661 = vunpack.c.l.b16 %v337
      %v662 = vunpack.c.l.b16 %v338
      %v663 = vunpack.c.l.b16 %v339
      %v664 = vunpack.c.l.b16 %v340
      %v665 = vunpack.c.l.b16 %v341
      %v666 = vunpack.c.l.b16 %v342
      %v667 = vunpack.c.l.b16 %v343
      %v668 = vunpack.c.l.b16 %v344
      %v669 = vunpack.c.l.b16 %v345
      %v670 = vunpack.c.l.b16 %v346
      %v671 = vunpack.c.l.b16 %v347
      %v672 = vunpack.c.l.b16 %v348
      %v673 = vunpack.c.l.b16 %v349
      %v674 = vunpack.c.l.b16 %v350
      %v675 = vunpack.c.l.b16 %v351
      %v676 = vunpack.c.l.b16 %v352
      %v677 = vunpack.c.l.b16 %v353
      %v678 = vunpack.c.l.b16 %v354
      %v679 = vunpack.c.l.b16 %v355
      %v680 = vunpack.c.l.b16 %v356
      %v681 = vunpack.c.l.b16 %v357
      %v682 = vunpack.c.l.b16 %v358
      %v683 = vunpack.c.l.b16 %v359
      %v684 = vunpack.c.l.b16 %v360
      %v685 = vunpack.c.l.b16 %v361
      %v686 = vunpack.c.l.b16 %v362
      %v687 = vunpack.c.l.b16 %v363
      %v688 = vunpack.c.l.b16 %v364
      %v689 = vunpack.c.l.b16 %v365
      %v690 = vunpack.c.l.b16 %v366
      %v691 = vunpack.c.l.b16 %v367
      %v692 = vunpack.c.l.b16 %v368
      %v693 = vunpack.c.l.b16 %v369
      %v694 = vunpack.c.l.b16 %v370
      %v695 = vunpack.c.l.b16 %v371
      %v696 = vpack.c.b16 %v536, %v535
      %v697 = vpack.c.b16 %v538, %v537
      %v698 = vpack.c.b16 %v540, %v539
      %v699 = vpack.c.b16 %v542, %v541
      %v700 = vpack.c.b16 %v544, %v543
      %v701 = vpack.c.b16 %v546, %v545
      %v702 = vpack.c.b16 %v548, %v547
      %v703 = vpack.c.b16 %v550, %v549
      %v704 = vpack.c.b16 %v552, %v551
      %v705 = vpack.c.b16 %v554, %v553
      %v706 = vpack.c.b16 %v556, %v555
      %v707 = vpack.c.b16 %v558, %v557
      %v708 = vpack.c.b16 %v560, %v559
      %v709 = vpack.c.b16 %v562, %v561
      %v710 = vpack.c.b16 %v564, %v563
      %v711 = vpack.c.b16 %v566, %v565
      %v712 = vpack.c.b16 %v568, %v567
      %v713 = vpack.c.b16 %v570, %v569
      %v714 = vpack.c.b16 %v572, %v571
      %v715 = vpack.c.b16 %v574, %v573
      %v716 = vpack.c.b16 %v576, %v575
      %v717 = vpack.c.b16 %v578, %v577
      %v718 = vpack.c.b16 %v580, %v579
      %v719 = vpack.c.b16 %v582, %v581
      %v720 = vpack.c.b16 %v584, %v583
      %v721 = vpack.c.b16 %v586, %v585
      %v722 = vpack.c.b16 %v588, %v587
      %v723 = vpack.c.b16 %v590, %v589
      %v724 = vpack.c.b16 %v592, %v591
      %v725 = vpack.c.b16 %v594, %v593
      %v726 = vpack.c.b16 %v596, %v595
      %v727 = vpack.c.b16 %v598, %v597
      %v728 = vpack.c.b16 %v600, %v599
      %v729 = vpack.c.b16 %v602, %v601
      %v730 = vpack.c.b16 %v604, %v603
      %v731 = vpack.c.b16 %v606, %v605
      %v732 = vpack.c.b16 %v608, %v607
      %v733 = vpack.c.b16 %v610, %v609
      %v734 = vpack.c.b16 %v612, %v611
      %v735 = vpack.c.b16 %v614, %v613
      %v736 = vpack.c.b16 %v616, %v615
      %v737 = vpack.c.b16 %v618, %v617
      %v738 = vpack.c.b16 %v620, %v619
      %v739 = vpack.c.b16 %v622, %v621
      %v740 = vpack.c.b16 %v624, %v623
      %v741 = vpack.c.b16 %v626, %v625
      %v742 = vpack.c.b16 %v628, %v627
      %v743 = vpack.c.b16 %v630, %v629
      %v744 = vpack.c.b16 %v632, %v631
      %v745 = vpack.c.b16 %v634, %v633
      %v746 = vpack.c.b16 %v636, %v635
      %v747 = vpack.c.b16 %v638, %v637
      %v748 = vpack.c.b16 %v640, %v639
      %v749 = vpack.c.b16 %v642, %v641
      %v750 = vpack.c.b16 %v644, %v643
      %v751 = vpack.c.b16 %v646, %v645
      %v752 = vpack.c.b16 %v648, %v647
      %v753 = vpack.c.b16 %v650, %v649
      %v754 = vpack.c.b16 %v652, %v651
      %v755 = vpack.c.b16 %v654, %v653
      %v756 = vpack.c.b16 %v656, %v655
      %v757 = vpack.c.b16 %v658, %v657
      %v758 = vpack.c.b16 %v660, %v659
      %v759 = vpack.c.b16 %v662, %v661
      %v760 = vpack.c.b16 %v664, %v663
      %v761 = vpack.c.b16 %v666, %v665
      %v762 = vpack.c.b16 %v668, %v667
      %v763 = vpack.c.b16 %v670, %v669
      %v764 = vpack.c.b16 %v672, %v671
      %v765 = vpack.c.b16 %v674, %v673
      %v766 = vpack.c.b16 %v676, %v675
      %v767 = vpack.c.b16 %v678, %v677
      %v768 = vpack.c.b16 %v680, %v679
      %v769 = vpack.c.b16 %v682, %v681
      %v770 = vpack.c.b16 %v684, %v683
      %v771 = vpack.c.b16 %v686, %v685
      %v772 = vpack.c.b16 %v688, %v687
      %v773 = vpack.c.b16 %v690, %v689
      %v774 = vpack.c.b16 %v692, %v691
      %v775 = vpack.c.b16 %v694, %v693
      %v776 = vpack.c.b16 %v695, %v695
      %v779 = vunpack.c.l.b16 %v372
      %v780 = vunpack.c.l.b16 %v373
      %v781 = vpack.c.b16 %v780, %v779
      %vm782 = vcmask 72704
      %v784 = vsel %vm782, %v696, 0
      %v787 = vsel %vm782, %v697, 0
      %v790 = vsel %vm782, %v698, 0
      %v793 = vsel %vm782, %v699, 0
      %v796 = vsel %vm782, %v700, 0
      %v799 = vsel %vm782, %v701, 0
      %v802 = vsel %vm782, %v702, 0
      %v805 = vsel %vm782, %v703, 0
      %v808 = vsel %vm782, %v704, 0
      %v811 = vsel %vm782, %v705, 0
      %v814 = vsel %vm782, %v706, 0
      %v817 = vsel %vm782, %v707, 0
      %v820 = vsel %vm782, %v708, 0
      %v823 = vsel %vm782, %v709, 0
      %v826 = vsel %vm782, %v710, 0
      %v829 = vsel %vm782, %v711, 0
      %v832 = vsel %vm782, %v712, 0
      %v835 = vsel %vm782, %v713, 0
      %v838 = vsel %vm782, %v714, 0
      %v841 = vsel %vm782, %v715, 0
      %v844 = vsel %vm782, %v716, 0
      %v847 = vsel %vm782, %v717, 0
      %v850 = vsel %vm782, %v718, 0
      %v853 = vsel %vm782, %v719, 0
      %v856 = vsel %vm782, %v720, 0
      %v859 = vsel %vm782, %v721, 0
      %v862 = vsel %vm782, %v722, 0
      %v865 = vsel %vm782, %v723, 0
      %v868 = vsel %vm782, %v724, 0
      %v871 = vsel %vm782, %v725, 0
      %v874 = vsel %vm782, %v726, 0
      %v877 = vsel %vm782, %v727, 0
      %v880 = vsel %vm782, %v728, 0
      %v883 = vsel %vm782, %v729, 0
      %v886 = vsel %vm782, %v730, 0
      %v889 = vsel %vm782, %v731, 0
      %v892 = vsel %vm782, %v732, 0
      %v895 = vsel %vm782, %v733, 0
      %v898 = vsel %vm782, %v734, 0
      %v901 = vsel %vm782, %v735, 0
      %v904 = vsel %vm782, %v736, 0
      %v907 = vsel %vm782, %v737, 0
      %v910 = vsel %vm782, %v738, 0
      %v913 = vsel %vm782, %v739, 0
      %v916 = vsel %vm782, %v740, 0
      %v919 = vsel %vm782, %v741, 0
      %v922 = vsel %vm782, %v742, 0
      %v925 = vsel %vm782, %v743, 0
      %v928 = vsel %vm782, %v744, 0
      %v931 = vsel %vm782, %v745, 0
      %v934 = vsel %vm782, %v746, 0
      %v937 = vsel %vm782, %v747, 0
      %v940 = vsel %vm782, %v748, 0
      %v943 = vsel %vm782, %v749, 0
      %v946 = vsel %vm782, %v750, 0
      %v949 = vsel %vm782, %v751, 0
      %v952 = vsel %vm782, %v752, 0
      %v955 = vsel %vm782, %v753, 0
      %v958 = vsel %vm782, %v754, 0
      %v961 = vsel %vm782, %v755, 0
      %v964 = vsel %vm782, %v756, 0
      %v967 = vsel %vm782, %v757, 0
      %v970 = vsel %vm782, %v758, 0
      %v973 = vsel %vm782, %v759, 0
      %v976 = vsel %vm782, %v760, 0
      %v979 = vsel %vm782, %v761, 0
      %v982 = vsel %vm782, %v762, 0
      %v985 = vsel %vm782, %v763, 0
      %v988 = vsel %vm782, %v764, 0
      %v991 = vsel %vm782, %v765, 0
      %v994 = vsel %vm782, %v766, 0
      %v997 = vsel %vm782, %v767, 0
      %v1000 = vsel %vm782, %v768, 0
      %v1003 = vsel %vm782, %v769, 0
      %v1006 = vsel %vm782, %v770, 0
      %v1009 = vsel %vm782, %v771, 0
      %v1012 = vsel %vm782, %v772, 0
      %v1015 = vsel %vm782, %v773, 0
      %v1018 = vsel %vm782, %v774, 0
      %v1021 = vsel %vm782, %v775, 0
      %v1024 = vsel %vm782, %v776, 0
      %vm1026 = vcmask 1043456
      %vm1027 = vcmask 1044480
      %v1028 = vsel %vm1026, 4294967295, 65535
      %v1029 = vsel %vm1027, %v1028, 0
      %v1031 = vand.u32 %v781, %v1029
      %1033 = vmatprep.subr.bf16.mxu0 0
      %1034 = vmatpush1.bf16.msra.mxu0 %v1031
      %1035 = vmatprep.subr.bf16.mxu0 0
      %1036 = vmatpush1.bf16.msra.mxu0 0
      %1037 = vmatprep.subr.bf16.mxu0 0
      %1038 = vmatpush1.bf16.msra.mxu0 0
      %1039 = vmatprep.subr.bf16.mxu0 0
      %1040 = vmatpush1.bf16.msra.mxu0 0
      %1041 = vmatprep.subr.bf16.mxu0 0
      %1042 = vmatpush1.bf16.msra.mxu0 0
      %1043 = vmatprep.subr.bf16.mxu0 0
      %1044 = vmatpush1.bf16.msra.mxu0 0
      %1045 = vmatprep.subr.bf16.mxu0 0
      %1046 = vmatpush1.bf16.msra.mxu0 0
      %1047 = vmatprep.subr.bf16.mxu0 0
      %1048 = vmatpush1.bf16.msra.mxu0 0
      %1049 = vmatprep.subr.bf16.mxu0 0
      %1050 = vmatpush1.bf16.msra.mxu0 0
      %1051 = vmatprep.subr.bf16.mxu0 0
      %1052 = vmatpush1.bf16.msra.mxu0 0
      %1053 = vmatprep.subr.bf16.mxu0 0
      %1054 = vmatpush1.bf16.msra.mxu0 0
      %1055 = vmatprep.subr.bf16.mxu0 0
      %1056 = vmatpush1.bf16.msra.mxu0 0
      %1057 = vmatprep.subr.bf16.mxu0 0
      %1058 = vmatpush1.bf16.msra.mxu0 0
      %1059 = vmatprep.subr.bf16.mxu0 0
      %1060 = vmatpush1.bf16.msra.mxu0 0
      %1061 = vmatprep.subr.bf16.mxu0 0
      %1062 = vmatpush1.bf16.msra.mxu0 0
      %1063 = vmatprep.subr.bf16.mxu0 0
      %1064 = vmatpush1.bf16.msra.mxu0 0
      %1065 = vmatprep.mubr.bf16.mxu0 0
      %1066 = vmatmul.mubr.bf16.gmra.mrb[0].mxu0 %v784
      %v1067 = vpop.f32.mrb[0].mxu0
      %v1068 = vadd.f32 0.0, %v1067
      %v1069 = vpop.f32.mrb[0].mxu0
      %v1070 = vpop.f32.mrb[0].mxu0
      %v1071 = vadd.f32 0.0, %v1070
      %v1072 = vpop.f32.mrb[0].mxu0
      %1073 = vmatprep.mubr.bf16.mxu0 0
      %1074 = vmatmul.mubr.bf16.gmra.mrb[0].mxu0 %v787
      %v1075 = vpop.f32.mrb[0].mxu0
      %v1076 = vadd.f32 0.0, %v1075
      %v1077 = vpop.f32.mrb[0].mxu0
      %v1078 = vpop.f32.mrb[0].mxu0
      %v1079 = vadd.f32 0.0, %v1078
      %v1080 = vpop.f32.mrb[0].mxu0
      %1081 = vmatprep.mubr.bf16.mxu0 0
      %1082 = vmatmul.mubr.bf16.gmra.mrb[0].mxu0 %v790
      %v1083 = vpop.f32.mrb[0].mxu0
      %v1084 = vadd.f32 0.0, %v1083
      %v1085 = vpop.f32.mrb[0].mxu0
      %v1086 = vpop.f32.mrb[0].mxu0
      %v1087 = vadd.f32 0.0, %v1086
      %v1088 = vpop.f32.mrb[0].mxu0
      %1089 = vmatprep.mubr.bf16.mxu0 0
      %1090 = vmatmul.mubr.bf16.gmra.mrb[0].mxu0 %v793
      %v1091 = vpop.f32.mrb[0].mxu0
      %v1092 = vadd.f32 0.0, %v1091
      %v1093 = vpop.f32.mrb[0].mxu0
      %v1094 = vpop.f32.mrb[0].mxu0
      %v1095 = vadd.f32 0.0, %v1094
      %v1096 = vpop.f32.mrb[0].mxu0
      %1097 = vmatprep.mubr.bf16.mxu0 0
      %1098 = vmatmul.mubr.bf16.gmra.mrb[0].mxu0 %v796
      %v1099 = vpop.f32.mrb[0].mxu0
      %v1100 = vadd.f32 0.0, %v1099
      %v1101 = vpop.f32.mrb[0].mxu0
      %v1102 = vpop.f32.mrb[0].mxu0
      %v1103 = vadd.f32 0.0, %v1102
      %v1104 = vpop.f32.mrb[0].mxu0
      %1105 = vmatprep.mubr.bf16.mxu0 0
      %1106 = vmatmul.mubr.bf16.gmra.mrb[0].mxu0 %v799
      %v1107 = vpop.f32.mrb[0].mxu0
      %v1108 = vadd.f32 0.0, %v1107
      %v1109 = vpop.f32.mrb[0].mxu0
      %v1110 = vpop.f32.mrb[0].mxu0
      %v1111 = vadd.f32 0.0, %v1110
      %v1112 = vpop.f32.mrb[0].mxu0
      %1113 = vmatprep.mubr.bf16.mxu0 0
      %1114 = vmatmul.mubr.bf16.gmra.mrb[0].mxu0 %v802
      %v1115 = vpop.f32.mrb[0].mxu0
      %v1116 = vadd.f32 0.0, %v1115
      %v1117 = vpop.f32.mrb[0].mxu0
      %v1118 = vpop.f32.mrb[0].mxu0
      %v1119 = vadd.f32 0.0, %v1118
      %v1120 = vpop.f32.mrb[0].mxu0
      %1121 = vmatprep.mubr.bf16.mxu0 0
      %1122 = vmatmul.mubr.bf16.gmra.mrb[0].mxu0 %v805
      %v1123 = vpop.f32.mrb[0].mxu0
      %v1124 = vadd.f32 0.0, %v1123
      %v1125 = vpop.f32.mrb[0].mxu0
      %v1126 = vpop.f32.mrb[0].mxu0
      %v1127 = vadd.f32 0.0, %v1126
      %v1128 = vpop.f32.mrb[0].mxu0
      %1129 = vmatprep.mubr.bf16.mxu0 0
      %1130 = vmatmul.mubr.bf16.gmra.mrb[0].mxu0 %v808
      %v1131 = vpop.f32.mrb[0].mxu0
      %v1132 = vadd.f32 0.0, %v1131
      %v1133 = vpop.f32.mrb[0].mxu0
      %v1134 = vpop.f32.mrb[0].mxu0
      %v1135 = vadd.f32 0.0, %v1134
      %v1136 = vpop.f32.mrb[0].mxu0
      %1137 = vmatprep.mubr.bf16.mxu0 0
      %1138 = vmatmul.mubr.bf16.gmra.mrb[0].mxu0 %v811
      %v1139 = vpop.f32.mrb[0].mxu0
      %v1140 = vadd.f32 0.0, %v1139
      %v1141 = vpop.f32.mrb[0].mxu0
      %v1142 = vpop.f32.mrb[0].mxu0
      %v1143 = vadd.f32 0.0, %v1142
      %v1144 = vpop.f32.mrb[0].mxu0
      %1145 = vmatprep.mubr.bf16.mxu0 0
      %1146 = vmatmul.mubr.bf16.gmra.mrb[0].mxu0 %v814
      %v1147 = vpop.f32.mrb[0].mxu0
      %v1148 = vadd.f32 0.0, %v1147
      %v1149 = vpop.f32.mrb[0].mxu0
      %v1150 = vpop.f32.mrb[0].mxu0
      %v1151 = vadd.f32 0.0, %v1150
      %v1152 = vpop.f32.mrb[0].mxu0
      %1153 = vmatprep.mubr.bf16.mxu0 0
      %1154 = vmatmul.mubr.bf16.gmra.mrb[0].mxu0 %v817
      %v1155 = vpop.f32.mrb[0].mxu0
      %v1156 = vadd.f32 0.0, %v1155
      %v1157 = vpop.f32.mrb[0].mxu0
      %v1158 = vpop.f32.mrb[0].mxu0
      %v1159 = vadd.f32 0.0, %v1158
      %v1160 = vpop.f32.mrb[0].mxu0
      %1161 = vmatprep.mubr.bf16.mxu0 0
      %1162 = vmatmul.mubr.bf16.gmra.mrb[0].mxu0 %v820
      %v1163 = vpop.f32.mrb[0].mxu0
      %v1164 = vadd.f32 0.0, %v1163
      %v1165 = vpop.f32.mrb[0].mxu0
      %v1166 = vpop.f32.mrb[0].mxu0
      %v1167 = vadd.f32 0.0, %v1166
      %v1168 = vpop.f32.mrb[0].mxu0
      %1169 = vmatprep.mubr.bf16.mxu0 0
      %1170 = vmatmul.mubr.bf16.gmra.mrb[0].mxu0 %v823
      %v1171 = vpop.f32.mrb[0].mxu0
      %v1172 = vadd.f32 0.0, %v1171
      %v1173 = vpop.f32.mrb[0].mxu0
      %v1174 = vpop.f32.mrb[0].mxu0
      %v1175 = vadd.f32 0.0, %v1174
      %v1176 = vpop.f32.mrb[0].mxu0
      %1177 = vmatprep.mubr.bf16.mxu0 0
      %1178 = vmatmul.mubr.bf16.gmra.mrb[0].mxu0 %v826
      %v1179 = vpop.f32.mrb[0].mxu0
      %v1180 = vadd.f32 0.0, %v1179
      %v1181 = vpop.f32.mrb[0].mxu0
      %v1182 = vpop.f32.mrb[0].mxu0
      %v1183 = vadd.f32 0.0, %v1182
      %v1184 = vpop.f32.mrb[0].mxu0
      %1185 = vmatprep.mubr.bf16.mxu0 0
      %1186 = vmatmul.mubr.bf16.gmra.mrb[0].mxu0 %v829
      %v1187 = vpop.f32.mrb[0].mxu0
      %v1188 = vadd.f32 0.0, %v1187
      %v1189 = vpop.f32.mrb[0].mxu0
      %v1190 = vpop.f32.mrb[0].mxu0
      %v1191 = vadd.f32 0.0, %v1190
      %v1192 = vpop.f32.mrb[0].mxu0
      %1193 = vmatprep.mubr.bf16.mxu0 0
      %1194 = vmatmul.mubr.bf16.gmra.mrb[0].mxu0 %v832
      %v1195 = vpop.f32.mrb[0].mxu0
      %v1196 = vadd.f32 0.0, %v1195
      %v1197 = vpop.f32.mrb[0].mxu0
      %v1198 = vpop.f32.mrb[0].mxu0
      %v1199 = vadd.f32 0.0, %v1198
      %v1200 = vpop.f32.mrb[0].mxu0
      %1201 = vmatprep.mubr.bf16.mxu0 0
      %1202 = vmatmul.mubr.bf16.gmra.mrb[0].mxu0 %v835
      %v1203 = vpop.f32.mrb[0].mxu0
      %v1204 = vadd.f32 0.0, %v1203
      %v1205 = vpop.f32.mrb[0].mxu0
      %v1206 = vpop.f32.mrb[0].mxu0
      %v1207 = vadd.f32 0.0, %v1206
      %v1208 = vpop.f32.mrb[0].mxu0
      %1209 = vmatprep.mubr.bf16.mxu0 0
      %1210 = vmatmul.mubr.bf16.gmra.mrb[0].mxu0 %v838
      %v1211 = vpop.f32.mrb[0].mxu0
      %v1212 = vadd.f32 0.0, %v1211
      %v1213 = vpop.f32.mrb[0].mxu0
      %v1214 = vpop.f32.mrb[0].mxu0
      %v1215 = vadd.f32 0.0, %v1214
      %v1216 = vpop.f32.mrb[0].mxu0
      %1217 = vmatprep.mubr.bf16.mxu0 0
      %1218 = vmatmul.mubr.bf16.gmra.mrb[0].mxu0 %v841
      %v1219 = vpop.f32.mrb[0].mxu0
      %v1220 = vadd.f32 0.0, %v1219
      %v1221 = vpop.f32.mrb[0].mxu0
      %v1222 = vpop.f32.mrb[0].mxu0
      %v1223 = vadd.f32 0.0, %v1222
      %v1224 = vpop.f32.mrb[0].mxu0
      %1225 = vmatprep.mubr.bf16.mxu0 0
      %1226 = vmatmul.mubr.bf16.gmra.mrb[0].mxu0 %v844
      %v1227 = vpop.f32.mrb[0].mxu0
      %v1228 = vadd.f32 0.0, %v1227
      %v1229 = vpop.f32.mrb[0].mxu0
      %v1230 = vpop.f32.mrb[0].mxu0
      %v1231 = vadd.f32 0.0, %v1230
      %v1232 = vpop.f32.mrb[0].mxu0
      %1233 = vmatprep.mubr.bf16.mxu0 0
      %1234 = vmatmul.mubr.bf16.gmra.mrb[0].mxu0 %v847
      %v1235 = vpop.f32.mrb[0].mxu0
      %v1236 = vadd.f32 0.0, %v1235
      %v1237 = vpop.f32.mrb[0].mxu0
      %v1238 = vpop.f32.mrb[0].mxu0
      %v1239 = vadd.f32 0.0, %v1238
      %v1240 = vpop.f32.mrb[0].mxu0
      %1241 = vmatprep.mubr.bf16.mxu0 0
      %1242 = vmatmul.mubr.bf16.gmra.mrb[0].mxu0 %v850
      %v1243 = vpop.f32.mrb[0].mxu0
      %v1244 = vadd.f32 0.0, %v1243
      %v1245 = vpop.f32.mrb[0].mxu0
      %v1246 = vpop.f32.mrb[0].mxu0
      %v1247 = vadd.f32 0.0, %v1246
      %v1248 = vpop.f32.mrb[0].mxu0
      %1249 = vmatprep.mubr.bf16.mxu0 0
      %1250 = vmatmul.mubr.bf16.gmra.mrb[0].mxu0 %v853
      %v1251 = vpop.f32.mrb[0].mxu0
      %v1252 = vadd.f32 0.0, %v1251
      %v1253 = vpop.f32.mrb[0].mxu0
      %v1254 = vpop.f32.mrb[0].mxu0
      %v1255 = vadd.f32 0.0, %v1254
      %v1256 = vpop.f32.mrb[0].mxu0
      %1257 = vmatprep.mubr.bf16.mxu0 0
      %1258 = vmatmul.mubr.bf16.gmra.mrb[0].mxu0 %v856
      %v1259 = vpop.f32.mrb[0].mxu0
      %v1260 = vadd.f32 0.0, %v1259
      %v1261 = vpop.f32.mrb[0].mxu0
      %v1262 = vpop.f32.mrb[0].mxu0
      %v1263 = vadd.f32 0.0, %v1262
      %v1264 = vpop.f32.mrb[0].mxu0
      %1265 = vmatprep.mubr.bf16.mxu0 0
      %1266 = vmatmul.mubr.bf16.gmra.mrb[0].mxu0 %v859
      %v1267 = vpop.f32.mrb[0].mxu0
      %v1268 = vadd.f32 0.0, %v1267
      %v1269 = vpop.f32.mrb[0].mxu0
      %v1270 = vpop.f32.mrb[0].mxu0
      %v1271 = vadd.f32 0.0, %v1270
      %v1272 = vpop.f32.mrb[0].mxu0
      %1273 = vmatprep.mubr.bf16.mxu0 0
      %1274 = vmatmul.mubr.bf16.gmra.mrb[0].mxu0 %v862
      %v1275 = vpop.f32.mrb[0].mxu0
      %v1276 = vadd.f32 0.0, %v1275
      %v1277 = vpop.f32.mrb[0].mxu0
      %v1278 = vpop.f32.mrb[0].mxu0
      %v1279 = vadd.f32 0.0, %v1278
      %v1280 = vpop.f32.mrb[0].mxu0
      %1281 = vmatprep.mubr.bf16.mxu0 0
      %1282 = vmatmul.mubr.bf16.gmra.mrb[0].mxu0 %v865
      %v1283 = vpop.f32.mrb[0].mxu0
      %v1284 = vadd.f32 0.0, %v1283
      %v1285 = vpop.f32.mrb[0].mxu0
      %v1286 = vpop.f32.mrb[0].mxu0
      %v1287 = vadd.f32 0.0, %v1286
      %v1288 = vpop.f32.mrb[0].mxu0
      %1289 = vmatprep.mubr.bf16.mxu0 0
      %1290 = vmatmul.mubr.bf16.gmra.mrb[0].mxu0 %v868
      %v1291 = vpop.f32.mrb[0].mxu0
      %v1292 = vadd.f32 0.0, %v1291
      %v1293 = vpop.f32.mrb[0].mxu0
      %v1294 = vpop.f32.mrb[0].mxu0
      %v1295 = vadd.f32 0.0, %v1294
      %v1296 = vpop.f32.mrb[0].mxu0
      %1297 = vmatprep.mubr.bf16.mxu0 0
      %1298 = vmatmul.mubr.bf16.gmra.mrb[0].mxu0 %v871
      %v1299 = vpop.f32.mrb[0].mxu0
      %v1300 = vadd.f32 0.0, %v1299
      %v1301 = vpop.f32.mrb[0].mxu0
      %v1302 = vpop.f32.mrb[0].mxu0
      %v1303 = vadd.f32 0.0, %v1302
      %v1304 = vpop.f32.mrb[0].mxu0
      %1305 = vmatprep.mubr.bf16.mxu0 0
      %1306 = vmatmul.mubr.bf16.gmra.mrb[0].mxu0 %v874
      %v1307 = vpop.f32.mrb[0].mxu0
      %v1308 = vadd.f32 0.0, %v1307
      %v1309 = vpop.f32.mrb[0].mxu0
      %v1310 = vpop.f32.mrb[0].mxu0
      %v1311 = vadd.f32 0.0, %v1310
      %v1312 = vpop.f32.mrb[0].mxu0
      %1313 = vmatprep.mubr.bf16.mxu0 0
      %1314 = vmatmul.mubr.bf16.gmra.mrb[0].mxu0 %v877
      %v1315 = vpop.f32.mrb[0].mxu0
      %v1316 = vadd.f32 0.0, %v1315
      %v1317 = vpop.f32.mrb[0].mxu0
      %v1318 = vpop.f32.mrb[0].mxu0
      %v1319 = vadd.f32 0.0, %v1318
      %v1320 = vpop.f32.mrb[0].mxu0
      %1321 = vmatprep.mubr.bf16.mxu0 0
      %1322 = vmatmul.mubr.bf16.gmra.mrb[0].mxu0 %v880
      %v1323 = vpop.f32.mrb[0].mxu0
      %v1324 = vadd.f32 0.0, %v1323
      %v1325 = vpop.f32.mrb[0].mxu0
      %v1326 = vpop.f32.mrb[0].mxu0
      %v1327 = vadd.f32 0.0, %v1326
      %v1328 = vpop.f32.mrb[0].mxu0
      %1329 = vmatprep.mubr.bf16.mxu0 0
      %1330 = vmatmul.mubr.bf16.gmra.mrb[0].mxu0 %v883
      %v1331 = vpop.f32.mrb[0].mxu0
      %v1332 = vadd.f32 0.0, %v1331
      %v1333 = vpop.f32.mrb[0].mxu0
      %v1334 = vpop.f32.mrb[0].mxu0
      %v1335 = vadd.f32 0.0, %v1334
      %v1336 = vpop.f32.mrb[0].mxu0
      %1337 = vmatprep.mubr.bf16.mxu0 0
      %1338 = vmatmul.mubr.bf16.gmra.mrb[0].mxu0 %v886
      %v1339 = vpop.f32.mrb[0].mxu0
      %v1340 = vadd.f32 0.0, %v1339
      %v1341 = vpop.f32.mrb[0].mxu0
      %v1342 = vpop.f32.mrb[0].mxu0
      %v1343 = vadd.f32 0.0, %v1342
      %v1344 = vpop.f32.mrb[0].mxu0
      %1345 = vmatprep.mubr.bf16.mxu0 0
      %1346 = vmatmul.mubr.bf16.gmra.mrb[0].mxu0 %v889
      %v1347 = vpop.f32.mrb[0].mxu0
      %v1348 = vadd.f32 0.0, %v1347
      %v1349 = vpop.f32.mrb[0].mxu0
      %v1350 = vpop.f32.mrb[0].mxu0
      %v1351 = vadd.f32 0.0, %v1350
      %v1352 = vpop.f32.mrb[0].mxu0
      %1353 = vmatprep.mubr.bf16.mxu0 0
      %1354 = vmatmul.mubr.bf16.gmra.mrb[0].mxu0 %v892
      %v1355 = vpop.f32.mrb[0].mxu0
      %v1356 = vadd.f32 0.0, %v1355
      %v1357 = vpop.f32.mrb[0].mxu0
      %v1358 = vpop.f32.mrb[0].mxu0
      %v1359 = vadd.f32 0.0, %v1358
      %v1360 = vpop.f32.mrb[0].mxu0
      %1361 = vmatprep.mubr.bf16.mxu0 0
      %1362 = vmatmul.mubr.bf16.gmra.mrb[0].mxu0 %v895
      %v1363 = vpop.f32.mrb[0].mxu0
      %v1364 = vadd.f32 0.0, %v1363
      %v1365 = vpop.f32.mrb[0].mxu0
      %v1366 = vpop.f32.mrb[0].mxu0
      %v1367 = vadd.f32 0.0, %v1366
      %v1368 = vpop.f32.mrb[0].mxu0
      %1369 = vmatprep.mubr.bf16.mxu0 0
      %1370 = vmatmul.mubr.bf16.gmra.mrb[0].mxu0 %v898
      %v1371 = vpop.f32.mrb[0].mxu0
      %v1372 = vadd.f32 0.0, %v1371
      %v1373 = vpop.f32.mrb[0].mxu0
      %v1374 = vpop.f32.mrb[0].mxu0
      %v1375 = vadd.f32 0.0, %v1374
      %v1376 = vpop.f32.mrb[0].mxu0
      %1377 = vmatprep.mubr.bf16.mxu0 0
      %1378 = vmatmul.mubr.bf16.gmra.mrb[0].mxu0 %v901
      %v1379 = vpop.f32.mrb[0].mxu0
      %v1380 = vadd.f32 0.0, %v1379
      %v1381 = vpop.f32.mrb[0].mxu0
      %v1382 = vpop.f32.mrb[0].mxu0
      %v1383 = vadd.f32 0.0, %v1382
      %v1384 = vpop.f32.mrb[0].mxu0
      %1385 = vmatprep.mubr.bf16.mxu0 0
      %1386 = vmatmul.mubr.bf16.gmra.mrb[0].mxu0 %v904
      %v1387 = vpop.f32.mrb[0].mxu0
      %v1388 = vadd.f32 0.0, %v1387
      %v1389 = vpop.f32.mrb[0].mxu0
      %v1390 = vpop.f32.mrb[0].mxu0
      %v1391 = vadd.f32 0.0, %v1390
      %v1392 = vpop.f32.mrb[0].mxu0
      %1393 = vmatprep.mubr.bf16.mxu0 0
      %1394 = vmatmul.mubr.bf16.gmra.mrb[0].mxu0 %v907
      %v1395 = vpop.f32.mrb[0].mxu0
      %v1396 = vadd.f32 0.0, %v1395
      %v1397 = vpop.f32.mrb[0].mxu0
      %v1398 = vpop.f32.mrb[0].mxu0
      %v1399 = vadd.f32 0.0, %v1398
      %v1400 = vpop.f32.mrb[0].mxu0
      %1401 = vmatprep.mubr.bf16.mxu0 0
      %1402 = vmatmul.mubr.bf16.gmra.mrb[0].mxu0 %v910
      %v1403 = vpop.f32.mrb[0].mxu0
      %v1404 = vadd.f32 0.0, %v1403
      %v1405 = vpop.f32.mrb[0].mxu0
      %v1406 = vpop.f32.mrb[0].mxu0
      %v1407 = vadd.f32 0.0, %v1406
      %v1408 = vpop.f32.mrb[0].mxu0
      %1409 = vmatprep.mubr.bf16.mxu0 0
      %1410 = vmatmul.mubr.bf16.gmra.mrb[0].mxu0 %v913
      %v1411 = vpop.f32.mrb[0].mxu0
      %v1412 = vadd.f32 0.0, %v1411
      %v1413 = vpop.f32.mrb[0].mxu0
      %v1414 = vpop.f32.mrb[0].mxu0
      %v1415 = vadd.f32 0.0, %v1414
      %v1416 = vpop.f32.mrb[0].mxu0
      %1417 = vmatprep.mubr.bf16.mxu0 0
      %1418 = vmatmul.mubr.bf16.gmra.mrb[0].mxu0 %v916
      %v1419 = vpop.f32.mrb[0].mxu0
      %v1420 = vadd.f32 0.0, %v1419
      %v1421 = vpop.f32.mrb[0].mxu0
      %v1422 = vpop.f32.mrb[0].mxu0
      %v1423 = vadd.f32 0.0, %v1422
      %v1424 = vpop.f32.mrb[0].mxu0
      %1425 = vmatprep.mubr.bf16.mxu0 0
      %1426 = vmatmul.mubr.bf16.gmra.mrb[0].mxu0 %v919
      %v1427 = vpop.f32.mrb[0].mxu0
      %v1428 = vadd.f32 0.0, %v1427
      %v1429 = vpop.f32.mrb[0].mxu0
      %v1430 = vpop.f32.mrb[0].mxu0
      %v1431 = vadd.f32 0.0, %v1430
      %v1432 = vpop.f32.mrb[0].mxu0
      %1433 = vmatprep.mubr.bf16.mxu0 0
      %1434 = vmatmul.mubr.bf16.gmra.mrb[0].mxu0 %v922
      %v1435 = vpop.f32.mrb[0].mxu0
      %v1436 = vadd.f32 0.0, %v1435
      %v1437 = vpop.f32.mrb[0].mxu0
      %v1438 = vpop.f32.mrb[0].mxu0
      %v1439 = vadd.f32 0.0, %v1438
      %v1440 = vpop.f32.mrb[0].mxu0
      %1441 = vmatprep.mubr.bf16.mxu0 0
      %1442 = vmatmul.mubr.bf16.gmra.mrb[0].mxu0 %v925
      %v1443 = vpop.f32.mrb[0].mxu0
      %v1444 = vadd.f32 0.0, %v1443
      %v1445 = vpop.f32.mrb[0].mxu0
      %v1446 = vpop.f32.mrb[0].mxu0
      %v1447 = vadd.f32 0.0, %v1446
      %v1448 = vpop.f32.mrb[0].mxu0
      %1449 = vmatprep.mubr.bf16.mxu0 0
      %1450 = vmatmul.mubr.bf16.gmra.mrb[0].mxu0 %v928
      %v1451 = vpop.f32.mrb[0].mxu0
      %v1452 = vadd.f32 0.0, %v1451
      %v1453 = vpop.f32.mrb[0].mxu0
      %v1454 = vpop.f32.mrb[0].mxu0
      %v1455 = vadd.f32 0.0, %v1454
      %v1456 = vpop.f32.mrb[0].mxu0
      %1457 = vmatprep.mubr.bf16.mxu0 0
      %1458 = vmatmul.mubr.bf16.gmra.mrb[0].mxu0 %v931
      %v1459 = vpop.f32.mrb[0].mxu0
      %v1460 = vadd.f32 0.0, %v1459
      %v1461 = vpop.f32.mrb[0].mxu0
      %v1462 = vpop.f32.mrb[0].mxu0
      %v1463 = vadd.f32 0.0, %v1462
      %v1464 = vpop.f32.mrb[0].mxu0
      %1465 = vmatprep.mubr.bf16.mxu0 0
      %1466 = vmatmul.mubr.bf16.gmra.mrb[0].mxu0 %v934
      %v1467 = vpop.f32.mrb[0].mxu0
      %v1468 = vadd.f32 0.0, %v1467
      %v1469 = vpop.f32.mrb[0].mxu0
      %v1470 = vpop.f32.mrb[0].mxu0
      %v1471 = vadd.f32 0.0, %v1470
      %v1472 = vpop.f32.mrb[0].mxu0
      %1473 = vmatprep.mubr.bf16.mxu0 0
      %1474 = vmatmul.mubr.bf16.gmra.mrb[0].mxu0 %v937
      %v1475 = vpop.f32.mrb[0].mxu0
      %v1476 = vadd.f32 0.0, %v1475
      %v1477 = vpop.f32.mrb[0].mxu0
      %v1478 = vpop.f32.mrb[0].mxu0
      %v1479 = vadd.f32 0.0, %v1478
      %v1480 = vpop.f32.mrb[0].mxu0
      %1481 = vmatprep.mubr.bf16.mxu0 0
      %1482 = vmatmul.mubr.bf16.gmra.mrb[0].mxu0 %v940
      %v1483 = vpop.f32.mrb[0].mxu0
      %v1484 = vadd.f32 0.0, %v1483
      %v1485 = vpop.f32.mrb[0].mxu0
      %v1486 = vpop.f32.mrb[0].mxu0
      %v1487 = vadd.f32 0.0, %v1486
      %v1488 = vpop.f32.mrb[0].mxu0
      %1489 = vmatprep.mubr.bf16.mxu0 0
      %1490 = vmatmul.mubr.bf16.gmra.mrb[0].mxu0 %v943
      %v1491 = vpop.f32.mrb[0].mxu0
      %v1492 = vadd.f32 0.0, %v1491
      %v1493 = vpop.f32.mrb[0].mxu0
      %v1494 = vpop.f32.mrb[0].mxu0
      %v1495 = vadd.f32 0.0, %v1494
      %v1496 = vpop.f32.mrb[0].mxu0
      %1497 = vmatprep.mubr.bf16.mxu0 0
      %1498 = vmatmul.mubr.bf16.gmra.mrb[0].mxu0 %v946
      %v1499 = vpop.f32.mrb[0].mxu0
      %v1500 = vadd.f32 0.0, %v1499
      %v1501 = vpop.f32.mrb[0].mxu0
      %v1502 = vpop.f32.mrb[0].mxu0
      %v1503 = vadd.f32 0.0, %v1502
      %v1504 = vpop.f32.mrb[0].mxu0
      %1505 = vmatprep.mubr.bf16.mxu0 0
      %1506 = vmatmul.mubr.bf16.gmra.mrb[0].mxu0 %v949
      %v1507 = vpop.f32.mrb[0].mxu0
      %v1508 = vadd.f32 0.0, %v1507
      %v1509 = vpop.f32.mrb[0].mxu0
      %v1510 = vpop.f32.mrb[0].mxu0
      %v1511 = vadd.f32 0.0, %v1510
      %v1512 = vpop.f32.mrb[0].mxu0
      %1513 = vmatprep.mubr.bf16.mxu0 0
      %1514 = vmatmul.mubr.bf16.gmra.mrb[0].mxu0 %v952
      %v1515 = vpop.f32.mrb[0].mxu0
      %v1516 = vadd.f32 0.0, %v1515
      %v1517 = vpop.f32.mrb[0].mxu0
      %v1518 = vpop.f32.mrb[0].mxu0
      %v1519 = vadd.f32 0.0, %v1518
      %v1520 = vpop.f32.mrb[0].mxu0
      %1521 = vmatprep.mubr.bf16.mxu0 0
      %1522 = vmatmul.mubr.bf16.gmra.mrb[0].mxu0 %v955
      %v1523 = vpop.f32.mrb[0].mxu0
      %v1524 = vadd.f32 0.0, %v1523
      %v1525 = vpop.f32.mrb[0].mxu0
      %v1526 = vpop.f32.mrb[0].mxu0
      %v1527 = vadd.f32 0.0, %v1526
      %v1528 = vpop.f32.mrb[0].mxu0
      %1529 = vmatprep.mubr.bf16.mxu0 0
      %1530 = vmatmul.mubr.bf16.gmra.mrb[0].mxu0 %v958
      %v1531 = vpop.f32.mrb[0].mxu0
      %v1532 = vadd.f32 0.0, %v1531
      %v1533 = vpop.f32.mrb[0].mxu0
      %v1534 = vpop.f32.mrb[0].mxu0
      %v1535 = vadd.f32 0.0, %v1534
      %v1536 = vpop.f32.mrb[0].mxu0
      %1537 = vmatprep.mubr.bf16.mxu0 0
      %1538 = vmatmul.mubr.bf16.gmra.mrb[0].mxu0 %v961
      %v1539 = vpop.f32.mrb[0].mxu0
      %v1540 = vadd.f32 0.0, %v1539
      %v1541 = vpop.f32.mrb[0].mxu0
      %v1542 = vpop.f32.mrb[0].mxu0
      %v1543 = vadd.f32 0.0, %v1542
      %v1544 = vpop.f32.mrb[0].mxu0
      %1545 = vmatprep.mubr.bf16.mxu0 0
      %1546 = vmatmul.mubr.bf16.gmra.mrb[0].mxu0 %v964
      %v1547 = vpop.f32.mrb[0].mxu0
      %v1548 = vadd.f32 0.0, %v1547
      %v1549 = vpop.f32.mrb[0].mxu0
      %v1550 = vpop.f32.mrb[0].mxu0
      %v1551 = vadd.f32 0.0, %v1550
      %v1552 = vpop.f32.mrb[0].mxu0
      %1553 = vmatprep.mubr.bf16.mxu0 0
      %1554 = vmatmul.mubr.bf16.gmra.mrb[0].mxu0 %v967
      %v1555 = vpop.f32.mrb[0].mxu0
      %v1556 = vadd.f32 0.0, %v1555
      %v1557 = vpop.f32.mrb[0].mxu0
      %v1558 = vpop.f32.mrb[0].mxu0
      %v1559 = vadd.f32 0.0, %v1558
      %v1560 = vpop.f32.mrb[0].mxu0
      %1561 = vmatprep.mubr.bf16.mxu0 0
      %1562 = vmatmul.mubr.bf16.gmra.mrb[0].mxu0 %v970
      %v1563 = vpop.f32.mrb[0].mxu0
      %v1564 = vadd.f32 0.0, %v1563
      %v1565 = vpop.f32.mrb[0].mxu0
      %v1566 = vpop.f32.mrb[0].mxu0
      %v1567 = vadd.f32 0.0, %v1566
      %v1568 = vpop.f32.mrb[0].mxu0
      %1569 = vmatprep.mubr.bf16.mxu0 0
      %1570 = vmatmul.mubr.bf16.gmra.mrb[0].mxu0 %v973
      %v1571 = vpop.f32.mrb[0].mxu0
      %v1572 = vadd.f32 0.0, %v1571
      %v1573 = vpop.f32.mrb[0].mxu0
      %v1574 = vpop.f32.mrb[0].mxu0
      %v1575 = vadd.f32 0.0, %v1574
      %v1576 = vpop.f32.mrb[0].mxu0
      %1577 = vmatprep.mubr.bf16.mxu0 0
      %1578 = vmatmul.mubr.bf16.gmra.mrb[0].mxu0 %v976
      %v1579 = vpop.f32.mrb[0].mxu0
      %v1580 = vadd.f32 0.0, %v1579
      %v1581 = vpop.f32.mrb[0].mxu0
      %v1582 = vpop.f32.mrb[0].mxu0
      %v1583 = vadd.f32 0.0, %v1582
      %v1584 = vpop.f32.mrb[0].mxu0
      %1585 = vmatprep.mubr.bf16.mxu0 0
      %1586 = vmatmul.mubr.bf16.gmra.mrb[0].mxu0 %v979
      %v1587 = vpop.f32.mrb[0].mxu0
      %v1588 = vadd.f32 0.0, %v1587
      %v1589 = vpop.f32.mrb[0].mxu0
      %v1590 = vpop.f32.mrb[0].mxu0
      %v1591 = vadd.f32 0.0, %v1590
      %v1592 = vpop.f32.mrb[0].mxu0
      %1593 = vmatprep.mubr.bf16.mxu0 0
      %1594 = vmatmul.mubr.bf16.gmra.mrb[0].mxu0 %v982
      %v1595 = vpop.f32.mrb[0].mxu0
      %v1596 = vadd.f32 0.0, %v1595
      %v1597 = vpop.f32.mrb[0].mxu0
      %v1598 = vpop.f32.mrb[0].mxu0
      %v1599 = vadd.f32 0.0, %v1598
      %v1600 = vpop.f32.mrb[0].mxu0
      %1601 = vmatprep.mubr.bf16.mxu0 0
      %1602 = vmatmul.mubr.bf16.gmra.mrb[0].mxu0 %v985
      %v1603 = vpop.f32.mrb[0].mxu0
      %v1604 = vadd.f32 0.0, %v1603
      %v1605 = vpop.f32.mrb[0].mxu0
      %v1606 = vpop.f32.mrb[0].mxu0
      %v1607 = vadd.f32 0.0, %v1606
      %v1608 = vpop.f32.mrb[0].mxu0
      %1609 = vmatprep.mubr.bf16.mxu0 0
      %1610 = vmatmul.mubr.bf16.gmra.mrb[0].mxu0 %v988
      %v1611 = vpop.f32.mrb[0].mxu0
      %v1612 = vadd.f32 0.0, %v1611
      %v1613 = vpop.f32.mrb[0].mxu0
      %v1614 = vpop.f32.mrb[0].mxu0
      %v1615 = vadd.f32 0.0, %v1614
      %v1616 = vpop.f32.mrb[0].mxu0
      %1617 = vmatprep.mubr.bf16.mxu0 0
      %1618 = vmatmul.mubr.bf16.gmra.mrb[0].mxu0 %v991
      %v1619 = vpop.f32.mrb[0].mxu0
      %v1620 = vadd.f32 0.0, %v1619
      %v1621 = vpop.f32.mrb[0].mxu0
      %v1622 = vpop.f32.mrb[0].mxu0
      %v1623 = vadd.f32 0.0, %v1622
      %v1624 = vpop.f32.mrb[0].mxu0
      %1625 = vmatprep.mubr.bf16.mxu0 0
      %1626 = vmatmul.mubr.bf16.gmra.mrb[0].mxu0 %v994
      %v1627 = vpop.f32.mrb[0].mxu0
      %v1628 = vadd.f32 0.0, %v1627
      %v1629 = vpop.f32.mrb[0].mxu0
      %v1630 = vpop.f32.mrb[0].mxu0
      %v1631 = vadd.f32 0.0, %v1630
      %v1632 = vpop.f32.mrb[0].mxu0
      %1633 = vmatprep.mubr.bf16.mxu0 0
      %1634 = vmatmul.mubr.bf16.gmra.mrb[0].mxu0 %v997
      %v1635 = vpop.f32.mrb[0].mxu0
      %v1636 = vadd.f32 0.0, %v1635
      %v1637 = vpop.f32.mrb[0].mxu0
      %v1638 = vpop.f32.mrb[0].mxu0
      %v1639 = vadd.f32 0.0, %v1638
      %v1640 = vpop.f32.mrb[0].mxu0
      %1641 = vmatprep.mubr.bf16.mxu0 0
      %1642 = vmatmul.mubr.bf16.gmra.mrb[0].mxu0 %v1000
      %v1643 = vpop.f32.mrb[0].mxu0
      %v1644 = vadd.f32 0.0, %v1643
      %v1645 = vpop.f32.mrb[0].mxu0
      %v1646 = vpop.f32.mrb[0].mxu0
      %v1647 = vadd.f32 0.0, %v1646
      %v1648 = vpop.f32.mrb[0].mxu0
      %1649 = vmatprep.mubr.bf16.mxu0 0
      %1650 = vmatmul.mubr.bf16.gmra.mrb[0].mxu0 %v1003
      %v1651 = vpop.f32.mrb[0].mxu0
      %v1652 = vadd.f32 0.0, %v1651
      %v1653 = vpop.f32.mrb[0].mxu0
      %v1654 = vpop.f32.mrb[0].mxu0
      %v1655 = vadd.f32 0.0, %v1654
      %v1656 = vpop.f32.mrb[0].mxu0
      %1657 = vmatprep.mubr.bf16.mxu0 0
      %1658 = vmatmul.mubr.bf16.gmra.mrb[0].mxu0 %v1006
      %v1659 = vpop.f32.mrb[0].mxu0
      %v1660 = vadd.f32 0.0, %v1659
      %v1661 = vpop.f32.mrb[0].mxu0
      %v1662 = vpop.f32.mrb[0].mxu0
      %v1663 = vadd.f32 0.0, %v1662
      %v1664 = vpop.f32.mrb[0].mxu0
      %1665 = vmatprep.mubr.bf16.mxu0 0
      %1666 = vmatmul.mubr.bf16.gmra.mrb[0].mxu0 %v1009
      %v1667 = vpop.f32.mrb[0].mxu0
      %v1668 = vadd.f32 0.0, %v1667
      %v1669 = vpop.f32.mrb[0].mxu0
      %v1670 = vpop.f32.mrb[0].mxu0
      %v1671 = vadd.f32 0.0, %v1670
      %v1672 = vpop.f32.mrb[0].mxu0
      %1673 = vmatprep.mubr.bf16.mxu0 0
      %1674 = vmatmul.mubr.bf16.gmra.mrb[0].mxu0 %v1012
      %v1675 = vpop.f32.mrb[0].mxu0
      %v1676 = vadd.f32 0.0, %v1675
      %v1677 = vpop.f32.mrb[0].mxu0
      %v1678 = vpop.f32.mrb[0].mxu0
      %v1679 = vadd.f32 0.0, %v1678
      %v1680 = vpop.f32.mrb[0].mxu0
      %1681 = vmatprep.mubr.bf16.mxu0 0
      %1682 = vmatmul.mubr.bf16.gmra.mrb[0].mxu0 %v1015
      %v1683 = vpop.f32.mrb[0].mxu0
      %v1684 = vadd.f32 0.0, %v1683
      %v1685 = vpop.f32.mrb[0].mxu0
      %v1686 = vpop.f32.mrb[0].mxu0
      %v1687 = vadd.f32 0.0, %v1686
      %v1688 = vpop.f32.mrb[0].mxu0
      %1689 = vmatprep.mubr.bf16.mxu0 0
      %1690 = vmatmul.mubr.bf16.gmra.mrb[0].mxu0 %v1018
      %v1691 = vpop.f32.mrb[0].mxu0
      %v1692 = vadd.f32 0.0, %v1691
      %v1693 = vpop.f32.mrb[0].mxu0
      %v1694 = vpop.f32.mrb[0].mxu0
      %v1695 = vadd.f32 0.0, %v1694
      %v1696 = vpop.f32.mrb[0].mxu0
      %1697 = vmatprep.mubr.bf16.mxu0 0
      %1698 = vmatmul.mubr.bf16.gmra.mrb[0].mxu0 %v1021
      %v1699 = vpop.f32.mrb[0].mxu0
      %v1700 = vadd.f32 0.0, %v1699
      %v1701 = vpop.f32.mrb[0].mxu0
      %v1702 = vpop.f32.mrb[0].mxu0
      %v1703 = vadd.f32 0.0, %v1702
      %v1704 = vpop.f32.mrb[0].mxu0
      %1705 = vmatprep.mubr.bf16.mxu0 0
      %1706 = vmatmul.mubr.bf16.gmra.mrb[0].mxu0 %v1024
      %v1707 = vpop.f32.mrb[0].mxu0
      %v1708 = vadd.f32 0.0, %v1707
      %v1709 = vpop.f32.mrb[0].mxu0
      %v1710 = vpop.f32.mrb[0].mxu0
      %v1711 = vpop.f32.mrb[0].mxu0
      %1712 = vdwg.mxu0
      %vm1874 = vcmask 1046528
      %v1875 = vrot.slane %v1068, 1
      %v1876 = vrot.slane %v1071, 1
      %v1877 = vsel %vm1874, %v1875, %v1876
      %v1878 = vrot.slane %v1076, 1
      %v1879 = vsel %vm1874, %v1876, %v1878
      %v1880 = vrot.slane %v1079, 1
      %v1881 = vsel %vm1874, %v1878, %v1880
      %v1882 = vrot.slane %v1084, 1
      %v1883 = vsel %vm1874, %v1880, %v1882
      %v1884 = vrot.slane %v1087, 1
      %v1885 = vsel %vm1874, %v1882, %v1884
      %v1886 = vrot.slane %v1092, 1
      %v1887 = vsel %vm1874, %v1884, %v1886
      %v1888 = vrot.slane %v1095, 1
      %v1889 = vsel %vm1874, %v1886, %v1888
      %v1890 = vrot.slane %v1100, 1
      %v1891 = vsel %vm1874, %v1888, %v1890
      %v1892 = vrot.slane %v1103, 1
      %v1893 = vsel %vm1874, %v1890, %v1892
      %v1894 = vrot.slane %v1108, 1
      %v1895 = vsel %vm1874, %v1892, %v1894
      %v1896 = vrot.slane %v1111, 1
      %v1897 = vsel %vm1874, %v1894, %v1896
      %v1898 = vrot.slane %v1116, 1
      %v1899 = vsel %vm1874, %v1896, %v1898
      %v1900 = vrot.slane %v1119, 1
      %v1901 = vsel %vm1874, %v1898, %v1900
      %v1902 = vrot.slane %v1124, 1
      %v1903 = vsel %vm1874, %v1900, %v1902
      %v1904 = vrot.slane %v1127, 1
      %v1905 = vsel %vm1874, %v1902, %v1904
      %v1906 = vrot.slane %v1132, 1
      %v1907 = vsel %vm1874, %v1904, %v1906
      %v1908 = vrot.slane %v1135, 1
      %v1909 = vsel %vm1874, %v1906, %v1908
      %v1910 = vrot.slane %v1140, 1
      %v1911 = vsel %vm1874, %v1908, %v1910
      %v1912 = vrot.slane %v1143, 1
      %v1913 = vsel %vm1874, %v1910, %v1912
      %v1914 = vrot.slane %v1148, 1
      %v1915 = vsel %vm1874, %v1912, %v1914
      %v1916 = vrot.slane %v1151, 1
      %v1917 = vsel %vm1874, %v1914, %v1916
      %v1918 = vrot.slane %v1156, 1
      %v1919 = vsel %vm1874, %v1916, %v1918
      %v1920 = vrot.slane %v1159, 1
      %v1921 = vsel %vm1874, %v1918, %v1920
      %v1922 = vrot.slane %v1164, 1
      %v1923 = vsel %vm1874, %v1920, %v1922
      %v1924 = vrot.slane %v1167, 1
      %v1925 = vsel %vm1874, %v1922, %v1924
      %v1926 = vrot.slane %v1172, 1
      %v1927 = vsel %vm1874, %v1924, %v1926
      %v1928 = vrot.slane %v1175, 1
      %v1929 = vsel %vm1874, %v1926, %v1928
      %v1930 = vrot.slane %v1180, 1
      %v1931 = vsel %vm1874, %v1928, %v1930
      %v1932 = vrot.slane %v1183, 1
      %v1933 = vsel %vm1874, %v1930, %v1932
      %v1934 = vrot.slane %v1188, 1
      %v1935 = vsel %vm1874, %v1932, %v1934
      %v1936 = vrot.slane %v1191, 1
      %v1937 = vsel %vm1874, %v1934, %v1936
      %v1938 = vrot.slane %v1196, 1
      %v1939 = vsel %vm1874, %v1936, %v1938
      %v1940 = vrot.slane %v1199, 1
      %v1941 = vsel %vm1874, %v1938, %v1940
      %v1942 = vrot.slane %v1204, 1
      %v1943 = vsel %vm1874, %v1940, %v1942
      %v1944 = vrot.slane %v1207, 1
      %v1945 = vsel %vm1874, %v1942, %v1944
      %v1946 = vrot.slane %v1212, 1
      %v1947 = vsel %vm1874, %v1944, %v1946
      %v1948 = vrot.slane %v1215, 1
      %v1949 = vsel %vm1874, %v1946, %v1948
      %v1950 = vrot.slane %v1220, 1
      %v1951 = vsel %vm1874, %v1948, %v1950
      %v1952 = vrot.slane %v1223, 1
      %v1953 = vsel %vm1874, %v1950, %v1952
      %v1954 = vrot.slane %v1228, 1
      %v1955 = vsel %vm1874, %v1952, %v1954
      %v1956 = vrot.slane %v1231, 1
      %v1957 = vsel %vm1874, %v1954, %v1956
      %v1958 = vrot.slane %v1236, 1
      %v1959 = vsel %vm1874, %v1956, %v1958
      %v1960 = vrot.slane %v1239, 1
      %v1961 = vsel %vm1874, %v1958, %v1960
      %v1962 = vrot.slane %v1244, 1
      %v1963 = vsel %vm1874, %v1960, %v1962
      %v1964 = vrot.slane %v1247, 1
      %v1965 = vsel %vm1874, %v1962, %v1964
      %v1966 = vrot.slane %v1252, 1
      %v1967 = vsel %vm1874, %v1964, %v1966
      %v1968 = vrot.slane %v1255, 1
      %v1969 = vsel %vm1874, %v1966, %v1968
      %v1970 = vrot.slane %v1260, 1
      %v1971 = vsel %vm1874, %v1968, %v1970
      %v1972 = vrot.slane %v1263, 1
      %v1973 = vsel %vm1874, %v1970, %v1972
      %v1974 = vrot.slane %v1268, 1
      %v1975 = vsel %vm1874, %v1972, %v1974
      %v1976 = vrot.slane %v1271, 1
      %v1977 = vsel %vm1874, %v1974, %v1976
      %v1978 = vrot.slane %v1276, 1
      %v1979 = vsel %vm1874, %v1976, %v1978
      %v1980 = vrot.slane %v1279, 1
      %v1981 = vsel %vm1874, %v1978, %v1980
      %v1982 = vrot.slane %v1284, 1
      %v1983 = vsel %vm1874, %v1980, %v1982
      %v1984 = vrot.slane %v1287, 1
      %v1985 = vsel %vm1874, %v1982, %v1984
      %v1986 = vrot.slane %v1292, 1
      %v1987 = vsel %vm1874, %v1984, %v1986
      %v1988 = vrot.slane %v1295, 1
      %v1989 = vsel %vm1874, %v1986, %v1988
      %v1990 = vrot.slane %v1300, 1
      %v1991 = vsel %vm1874, %v1988, %v1990
      %v1992 = vrot.slane %v1303, 1
      %v1993 = vsel %vm1874, %v1990, %v1992
      %v1994 = vrot.slane %v1308, 1
      %v1995 = vsel %vm1874, %v1992, %v1994
      %v1996 = vrot.slane %v1311, 1
      %v1997 = vsel %vm1874, %v1994, %v1996
      %v1998 = vrot.slane %v1316, 1
      %v1999 = vsel %vm1874, %v1996, %v1998
      %v2000 = vrot.slane %v1319, 1
      %v2001 = vsel %vm1874, %v1998, %v2000
      %v2002 = vrot.slane %v1324, 1
      %v2003 = vsel %vm1874, %v2000, %v2002
      %v2004 = vrot.slane %v1327, 1
      %v2005 = vsel %vm1874, %v2002, %v2004
      %v2006 = vrot.slane %v1332, 1
      %v2007 = vsel %vm1874, %v2004, %v2006
      %v2008 = vrot.slane %v1335, 1
      %v2009 = vsel %vm1874, %v2006, %v2008
      %v2010 = vrot.slane %v1340, 1
      %v2011 = vsel %vm1874, %v2008, %v2010
      %v2012 = vrot.slane %v1343, 1
      %v2013 = vsel %vm1874, %v2010, %v2012
      %v2014 = vrot.slane %v1348, 1
      %v2015 = vsel %vm1874, %v2012, %v2014
      %v2016 = vrot.slane %v1351, 1
      %v2017 = vsel %vm1874, %v2014, %v2016
      %v2018 = vrot.slane %v1356, 1
      %v2019 = vsel %vm1874, %v2016, %v2018
      %v2020 = vrot.slane %v1359, 1
      %v2021 = vsel %vm1874, %v2018, %v2020
      %v2022 = vrot.slane %v1364, 1
      %v2023 = vsel %vm1874, %v2020, %v2022
      %v2024 = vrot.slane %v1367, 1
      %v2025 = vsel %vm1874, %v2022, %v2024
      %v2026 = vrot.slane %v1372, 1
      %v2027 = vsel %vm1874, %v2024, %v2026
      %v2028 = vrot.slane %v1375, 1
      %v2029 = vsel %vm1874, %v2026, %v2028
      %v2030 = vrot.slane %v1380, 1
      %v2031 = vsel %vm1874, %v2028, %v2030
      %v2032 = vrot.slane %v1383, 1
      %v2033 = vsel %vm1874, %v2030, %v2032
      %v2034 = vrot.slane %v1388, 1
      %v2035 = vsel %vm1874, %v2032, %v2034
      %v2036 = vrot.slane %v1391, 1
      %v2037 = vsel %vm1874, %v2034, %v2036
      %v2038 = vrot.slane %v1396, 1
      %v2039 = vsel %vm1874, %v2036, %v2038
      %v2040 = vrot.slane %v1399, 1
      %v2041 = vsel %vm1874, %v2038, %v2040
      %v2042 = vrot.slane %v1404, 1
      %v2043 = vsel %vm1874, %v2040, %v2042
      %v2044 = vrot.slane %v1407, 1
      %v2045 = vsel %vm1874, %v2042, %v2044
      %v2046 = vrot.slane %v1412, 1
      %v2047 = vsel %vm1874, %v2044, %v2046
      %v2048 = vrot.slane %v1415, 1
      %v2049 = vsel %vm1874, %v2046, %v2048
      %v2050 = vrot.slane %v1420, 1
      %v2051 = vsel %vm1874, %v2048, %v2050
      %v2052 = vrot.slane %v1423, 1
      %v2053 = vsel %vm1874, %v2050, %v2052
      %v2054 = vrot.slane %v1428, 1
      %v2055 = vsel %vm1874, %v2052, %v2054
      %v2056 = vrot.slane %v1431, 1
      %v2057 = vsel %vm1874, %v2054, %v2056
      %v2058 = vrot.slane %v1436, 1
      %v2059 = vsel %vm1874, %v2056, %v2058
      %v2060 = vrot.slane %v1439, 1
      %v2061 = vsel %vm1874, %v2058, %v2060
      %v2062 = vrot.slane %v1444, 1
      %v2063 = vsel %vm1874, %v2060, %v2062
      %v2064 = vrot.slane %v1447, 1
      %v2065 = vsel %vm1874, %v2062, %v2064
      %v2066 = vrot.slane %v1452, 1
      %v2067 = vsel %vm1874, %v2064, %v2066
      %v2068 = vrot.slane %v1455, 1
      %v2069 = vsel %vm1874, %v2066, %v2068
      %v2070 = vrot.slane %v1460, 1
      %v2071 = vsel %vm1874, %v2068, %v2070
      %v2072 = vrot.slane %v1463, 1
      %v2073 = vsel %vm1874, %v2070, %v2072
      %v2074 = vrot.slane %v1468, 1
      %v2075 = vsel %vm1874, %v2072, %v2074
      %v2076 = vrot.slane %v1471, 1
      %v2077 = vsel %vm1874, %v2074, %v2076
      %v2078 = vrot.slane %v1476, 1
      %v2079 = vsel %vm1874, %v2076, %v2078
      %v2080 = vrot.slane %v1479, 1
      %v2081 = vsel %vm1874, %v2078, %v2080
      %v2082 = vrot.slane %v1484, 1
      %v2083 = vsel %vm1874, %v2080, %v2082
      %v2084 = vrot.slane %v1487, 1
      %v2085 = vsel %vm1874, %v2082, %v2084
      %v2086 = vrot.slane %v1492, 1
      %v2087 = vsel %vm1874, %v2084, %v2086
      %v2088 = vrot.slane %v1495, 1
      %v2089 = vsel %vm1874, %v2086, %v2088
      %v2090 = vrot.slane %v1500, 1
      %v2091 = vsel %vm1874, %v2088, %v2090
      %v2092 = vrot.slane %v1503, 1
      %v2093 = vsel %vm1874, %v2090, %v2092
      %v2094 = vrot.slane %v1508, 1
      %v2095 = vsel %vm1874, %v2092, %v2094
      %v2096 = vrot.slane %v1511, 1
      %v2097 = vsel %vm1874, %v2094, %v2096
      %v2098 = vrot.slane %v1516, 1
      %v2099 = vsel %vm1874, %v2096, %v2098
      %v2100 = vrot.slane %v1519, 1
      %v2101 = vsel %vm1874, %v2098, %v2100
      %v2102 = vrot.slane %v1524, 1
      %v2103 = vsel %vm1874, %v2100, %v2102
      %v2104 = vrot.slane %v1527, 1
      %v2105 = vsel %vm1874, %v2102, %v2104
      %v2106 = vrot.slane %v1532, 1
      %v2107 = vsel %vm1874, %v2104, %v2106
      %v2108 = vrot.slane %v1535, 1
      %v2109 = vsel %vm1874, %v2106, %v2108
      %v2110 = vrot.slane %v1540, 1
      %v2111 = vsel %vm1874, %v2108, %v2110
      %v2112 = vrot.slane %v1543, 1
      %v2113 = vsel %vm1874, %v2110, %v2112
      %v2114 = vrot.slane %v1548, 1
      %v2115 = vsel %vm1874, %v2112, %v2114
      %v2116 = vrot.slane %v1551, 1
      %v2117 = vsel %vm1874, %v2114, %v2116
      %v2118 = vrot.slane %v1556, 1
      %v2119 = vsel %vm1874, %v2116, %v2118
      %v2120 = vrot.slane %v1559, 1
      %v2121 = vsel %vm1874, %v2118, %v2120
      %v2122 = vrot.slane %v1564, 1
      %v2123 = vsel %vm1874, %v2120, %v2122
      %v2124 = vrot.slane %v1567, 1
      %v2125 = vsel %vm1874, %v2122, %v2124
      %v2126 = vrot.slane %v1572, 1
      %v2127 = vsel %vm1874, %v2124, %v2126
      %v2128 = vrot.slane %v1575, 1
      %v2129 = vsel %vm1874, %v2126, %v2128
      %v2130 = vrot.slane %v1580, 1
      %v2131 = vsel %vm1874, %v2128, %v2130
      %v2132 = vrot.slane %v1583, 1
      %v2133 = vsel %vm1874, %v2130, %v2132
      %v2134 = vrot.slane %v1588, 1
      %v2135 = vsel %vm1874, %v2132, %v2134
      %v2136 = vrot.slane %v1591, 1
      %v2137 = vsel %vm1874, %v2134, %v2136
      %v2138 = vrot.slane %v1596, 1
      %v2139 = vsel %vm1874, %v2136, %v2138
      %v2140 = vrot.slane %v1599, 1
      %v2141 = vsel %vm1874, %v2138, %v2140
      %v2142 = vrot.slane %v1604, 1
      %v2143 = vsel %vm1874, %v2140, %v2142
      %v2144 = vrot.slane %v1607, 1
      %v2145 = vsel %vm1874, %v2142, %v2144
      %v2146 = vrot.slane %v1612, 1
      %v2147 = vsel %vm1874, %v2144, %v2146
      %v2148 = vrot.slane %v1615, 1
      %v2149 = vsel %vm1874, %v2146, %v2148
      %v2150 = vrot.slane %v1620, 1
      %v2151 = vsel %vm1874, %v2148, %v2150
      %v2152 = vrot.slane %v1623, 1
      %v2153 = vsel %vm1874, %v2150, %v2152
      %v2154 = vrot.slane %v1628, 1
      %v2155 = vsel %vm1874, %v2152, %v2154
      %v2156 = vrot.slane %v1631, 1
      %v2157 = vsel %vm1874, %v2154, %v2156
      %v2158 = vrot.slane %v1636, 1
      %v2159 = vsel %vm1874, %v2156, %v2158
      %v2160 = vrot.slane %v1639, 1
      %v2161 = vsel %vm1874, %v2158, %v2160
      %v2162 = vrot.slane %v1644, 1
      %v2163 = vsel %vm1874, %v2160, %v2162
      %v2164 = vrot.slane %v1647, 1
      %v2165 = vsel %vm1874, %v2162, %v2164
      %v2166 = vrot.slane %v1652, 1
      %v2167 = vsel %vm1874, %v2164, %v2166
      %v2168 = vrot.slane %v1655, 1
      %v2169 = vsel %vm1874, %v2166, %v2168
      %v2170 = vrot.slane %v1660, 1
      %v2171 = vsel %vm1874, %v2168, %v2170
      %v2172 = vrot.slane %v1663, 1
      %v2173 = vsel %vm1874, %v2170, %v2172
      %v2174 = vrot.slane %v1668, 1
      %v2175 = vsel %vm1874, %v2172, %v2174
      %v2176 = vrot.slane %v1671, 1
      %v2177 = vsel %vm1874, %v2174, %v2176
      %v2178 = vrot.slane %v1676, 1
      %v2179 = vsel %vm1874, %v2176, %v2178
      %v2180 = vrot.slane %v1679, 1
      %v2181 = vsel %vm1874, %v2178, %v2180
      %v2182 = vrot.slane %v1684, 1
      %v2183 = vsel %vm1874, %v2180, %v2182
      %v2184 = vrot.slane %v1687, 1
      %v2185 = vsel %vm1874, %v2182, %v2184
      %v2186 = vrot.slane %v1692, 1
      %v2187 = vsel %vm1874, %v2184, %v2186
      %v2188 = vrot.slane %v1695, 1
      %v2189 = vsel %vm1874, %v2186, %v2188
      %v2190 = vrot.slane %v1700, 1
      %v2191 = vsel %vm1874, %v2188, %v2190
      %v2192 = vrot.slane %v1703, 1
      %v2193 = vsel %vm1874, %v2190, %v2192
      %v2194 = vrot.slane %v1708, 1
      %v2195 = vsel %vm1874, %v2192, %v2194
      %2196 = vrot.lane.b32.xlu0 %v1877, 96
      %v2197 = vpop.permute.xlu0 %2196
      %2198 = vrot.lane.b32.xlu0 %v1879, 96
      %v2199 = vpop.permute.xlu0 %2198
      %2200 = vrot.lane.b32.xlu0 %v1881, 96
      %v2201 = vpop.permute.xlu0 %2200
      %2202 = vrot.lane.b32.xlu0 %v1883, 96
      %v2203 = vpop.permute.xlu0 %2202
      %2204 = vrot.lane.b32.xlu0 %v1885, 96
      %v2205 = vpop.permute.xlu0 %2204
      %2206 = vrot.lane.b32.xlu0 %v1887, 96
      %v2207 = vpop.permute.xlu0 %2206
      %2208 = vrot.lane.b32.xlu0 %v1889, 96
      %v2209 = vpop.permute.xlu0 %2208
      %2210 = vrot.lane.b32.xlu0 %v1891, 96
      %v2211 = vpop.permute.xlu0 %2210
      %2212 = vrot.lane.b32.xlu0 %v1893, 96
      %v2213 = vpop.permute.xlu0 %2212
      %2214 = vrot.lane.b32.xlu0 %v1895, 96
      %v2215 = vpop.permute.xlu0 %2214
      %2216 = vrot.lane.b32.xlu0 %v1897, 96
      %v2217 = vpop.permute.xlu0 %2216
      %2218 = vrot.lane.b32.xlu0 %v1899, 96
      %v2219 = vpop.permute.xlu0 %2218
      %2220 = vrot.lane.b32.xlu0 %v1901, 96
      %v2221 = vpop.permute.xlu0 %2220
      %2222 = vrot.lane.b32.xlu0 %v1903, 96
      %v2223 = vpop.permute.xlu0 %2222
      %2224 = vrot.lane.b32.xlu0 %v1905, 96
      %v2225 = vpop.permute.xlu0 %2224
      %2226 = vrot.lane.b32.xlu0 %v1907, 96
      %v2227 = vpop.permute.xlu0 %2226
      %2228 = vrot.lane.b32.xlu0 %v1909, 96
      %v2229 = vpop.permute.xlu0 %2228
      %2230 = vrot.lane.b32.xlu0 %v1911, 96
      %v2231 = vpop.permute.xlu0 %2230
      %2232 = vrot.lane.b32.xlu0 %v1913, 96
      %v2233 = vpop.permute.xlu0 %2232
      %2234 = vrot.lane.b32.xlu0 %v1915, 96
      %v2235 = vpop.permute.xlu0 %2234
      %2236 = vrot.lane.b32.xlu0 %v1917, 96
      %v2237 = vpop.permute.xlu0 %2236
      %2238 = vrot.lane.b32.xlu0 %v1919, 96
      %v2239 = vpop.permute.xlu0 %2238
      %2240 = vrot.lane.b32.xlu0 %v1921, 96
      %v2241 = vpop.permute.xlu0 %2240
      %2242 = vrot.lane.b32.xlu0 %v1923, 96
      %v2243 = vpop.permute.xlu0 %2242
      %2244 = vrot.lane.b32.xlu0 %v1925, 96
      %v2245 = vpop.permute.xlu0 %2244
      %2246 = vrot.lane.b32.xlu0 %v1927, 96
      %v2247 = vpop.permute.xlu0 %2246
      %2248 = vrot.lane.b32.xlu0 %v1929, 96
      %v2249 = vpop.permute.xlu0 %2248
      %2250 = vrot.lane.b32.xlu0 %v1931, 96
      %v2251 = vpop.permute.xlu0 %2250
      %2252 = vrot.lane.b32.xlu0 %v1933, 96
      %v2253 = vpop.permute.xlu0 %2252
      %2254 = vrot.lane.b32.xlu0 %v1935, 96
      %v2255 = vpop.permute.xlu0 %2254
      %2256 = vrot.lane.b32.xlu0 %v1937, 96
      %v2257 = vpop.permute.xlu0 %2256
      %2258 = vrot.lane.b32.xlu0 %v1939, 96
      %v2259 = vpop.permute.xlu0 %2258
      %2260 = vrot.lane.b32.xlu0 %v1941, 96
      %v2261 = vpop.permute.xlu0 %2260
      %2262 = vrot.lane.b32.xlu0 %v1943, 96
      %v2263 = vpop.permute.xlu0 %2262
      %2264 = vrot.lane.b32.xlu0 %v1945, 96
      %v2265 = vpop.permute.xlu0 %2264
      %2266 = vrot.lane.b32.xlu0 %v1947, 96
      %v2267 = vpop.permute.xlu0 %2266
      %2268 = vrot.lane.b32.xlu0 %v1949, 96
      %v2269 = vpop.permute.xlu0 %2268
      %2270 = vrot.lane.b32.xlu0 %v1951, 96
      %v2271 = vpop.permute.xlu0 %2270
      %2272 = vrot.lane.b32.xlu0 %v1953, 96
      %v2273 = vpop.permute.xlu0 %2272
      %2274 = vrot.lane.b32.xlu0 %v1955, 96
      %v2275 = vpop.permute.xlu0 %2274
      %2276 = vrot.lane.b32.xlu0 %v1957, 96
      %v2277 = vpop.permute.xlu0 %2276
      %2278 = vrot.lane.b32.xlu0 %v1959, 96
      %v2279 = vpop.permute.xlu0 %2278
      %2280 = vrot.lane.b32.xlu0 %v1961, 96
      %v2281 = vpop.permute.xlu0 %2280
      %2282 = vrot.lane.b32.xlu0 %v1963, 96
      %v2283 = vpop.permute.xlu0 %2282
      %2284 = vrot.lane.b32.xlu0 %v1965, 96
      %v2285 = vpop.permute.xlu0 %2284
      %2286 = vrot.lane.b32.xlu0 %v1967, 96
      %v2287 = vpop.permute.xlu0 %2286
      %2288 = vrot.lane.b32.xlu0 %v1969, 96
      %v2289 = vpop.permute.xlu0 %2288
      %2290 = vrot.lane.b32.xlu0 %v1971, 96
      %v2291 = vpop.permute.xlu0 %2290
      %2292 = vrot.lane.b32.xlu0 %v1973, 96
      %v2293 = vpop.permute.xlu0 %2292
      %2294 = vrot.lane.b32.xlu0 %v1975, 96
      %v2295 = vpop.permute.xlu0 %2294
      %2296 = vrot.lane.b32.xlu0 %v1977, 96
      %v2297 = vpop.permute.xlu0 %2296
      %2298 = vrot.lane.b32.xlu0 %v1979, 96
      %v2299 = vpop.permute.xlu0 %2298
      %2300 = vrot.lane.b32.xlu0 %v1981, 96
      %v2301 = vpop.permute.xlu0 %2300
      %2302 = vrot.lane.b32.xlu0 %v1983, 96
      %v2303 = vpop.permute.xlu0 %2302
      %2304 = vrot.lane.b32.xlu0 %v1985, 96
      %v2305 = vpop.permute.xlu0 %2304
      %2306 = vrot.lane.b32.xlu0 %v1987, 96
      %v2307 = vpop.permute.xlu0 %2306
      %2308 = vrot.lane.b32.xlu0 %v1989, 96
      %v2309 = vpop.permute.xlu0 %2308
      %2310 = vrot.lane.b32.xlu0 %v1991, 96
      %v2311 = vpop.permute.xlu0 %2310
      %2312 = vrot.lane.b32.xlu0 %v1993, 96
      %v2313 = vpop.permute.xlu0 %2312
      %2314 = vrot.lane.b32.xlu0 %v1995, 96
      %v2315 = vpop.permute.xlu0 %2314
      %2316 = vrot.lane.b32.xlu0 %v1997, 96
      %v2317 = vpop.permute.xlu0 %2316
      %2318 = vrot.lane.b32.xlu0 %v1999, 96
      %v2319 = vpop.permute.xlu0 %2318
      %2320 = vrot.lane.b32.xlu0 %v2001, 96
      %v2321 = vpop.permute.xlu0 %2320
      %2322 = vrot.lane.b32.xlu0 %v2003, 96
      %v2323 = vpop.permute.xlu0 %2322
      %2324 = vrot.lane.b32.xlu0 %v2005, 96
      %v2325 = vpop.permute.xlu0 %2324
      %2326 = vrot.lane.b32.xlu0 %v2007, 96
      %v2327 = vpop.permute.xlu0 %2326
      %2328 = vrot.lane.b32.xlu0 %v2009, 96
      %v2329 = vpop.permute.xlu0 %2328
      %2330 = vrot.lane.b32.xlu0 %v2011, 96
      %v2331 = vpop.permute.xlu0 %2330
      %2332 = vrot.lane.b32.xlu0 %v2013, 96
      %v2333 = vpop.permute.xlu0 %2332
      %2334 = vrot.lane.b32.xlu0 %v2015, 96
      %v2335 = vpop.permute.xlu0 %2334
      %2336 = vrot.lane.b32.xlu0 %v2017, 96
      %v2337 = vpop.permute.xlu0 %2336
      %2338 = vrot.lane.b32.xlu0 %v2019, 96
      %v2339 = vpop.permute.xlu0 %2338
      %2340 = vrot.lane.b32.xlu0 %v2021, 96
      %v2341 = vpop.permute.xlu0 %2340
      %2342 = vrot.lane.b32.xlu0 %v2023, 96
      %v2343 = vpop.permute.xlu0 %2342
      %2344 = vrot.lane.b32.xlu0 %v2025, 96
      %v2345 = vpop.permute.xlu0 %2344
      %2346 = vrot.lane.b32.xlu0 %v2027, 96
      %v2347 = vpop.permute.xlu0 %2346
      %2348 = vrot.lane.b32.xlu0 %v2029, 96
      %v2349 = vpop.permute.xlu0 %2348
      %2350 = vrot.lane.b32.xlu0 %v2031, 96
      %v2351 = vpop.permute.xlu0 %2350
      %2352 = vrot.lane.b32.xlu0 %v2033, 96
      %v2353 = vpop.permute.xlu0 %2352
      %2354 = vrot.lane.b32.xlu0 %v2035, 96
      %v2355 = vpop.permute.xlu0 %2354
      %2356 = vrot.lane.b32.xlu0 %v2037, 96
      %v2357 = vpop.permute.xlu0 %2356
      %2358 = vrot.lane.b32.xlu0 %v2039, 96
      %v2359 = vpop.permute.xlu0 %2358
      %2360 = vrot.lane.b32.xlu0 %v2041, 96
      %v2361 = vpop.permute.xlu0 %2360
      %2362 = vrot.lane.b32.xlu0 %v2043, 96
      %v2363 = vpop.permute.xlu0 %2362
      %2364 = vrot.lane.b32.xlu0 %v2045, 96
      %v2365 = vpop.permute.xlu0 %2364
      %2366 = vrot.lane.b32.xlu0 %v2047, 96
      %v2367 = vpop.permute.xlu0 %2366
      %2368 = vrot.lane.b32.xlu0 %v2049, 96
      %v2369 = vpop.permute.xlu0 %2368
      %2370 = vrot.lane.b32.xlu0 %v2051, 96
      %v2371 = vpop.permute.xlu0 %2370
      %2372 = vrot.lane.b32.xlu0 %v2053, 96
      %v2373 = vpop.permute.xlu0 %2372
      %2374 = vrot.lane.b32.xlu0 %v2055, 96
      %v2375 = vpop.permute.xlu0 %2374
      %2376 = vrot.lane.b32.xlu0 %v2057, 96
      %v2377 = vpop.permute.xlu0 %2376
      %2378 = vrot.lane.b32.xlu0 %v2059, 96
      %v2379 = vpop.permute.xlu0 %2378
      %2380 = vrot.lane.b32.xlu0 %v2061, 96
      %v2381 = vpop.permute.xlu0 %2380
      %2382 = vrot.lane.b32.xlu0 %v2063, 96
      %v2383 = vpop.permute.xlu0 %2382
      %2384 = vrot.lane.b32.xlu0 %v2065, 96
      %v2385 = vpop.permute.xlu0 %2384
      %2386 = vrot.lane.b32.xlu0 %v2067, 96
      %v2387 = vpop.permute.xlu0 %2386
      %2388 = vrot.lane.b32.xlu0 %v2069, 96
      %v2389 = vpop.permute.xlu0 %2388
      %2390 = vrot.lane.b32.xlu0 %v2071, 96
      %v2391 = vpop.permute.xlu0 %2390
      %2392 = vrot.lane.b32.xlu0 %v2073, 96
      %v2393 = vpop.permute.xlu0 %2392
      %2394 = vrot.lane.b32.xlu0 %v2075, 96
      %v2395 = vpop.permute.xlu0 %2394
      %2396 = vrot.lane.b32.xlu0 %v2077, 96
      %v2397 = vpop.permute.xlu0 %2396
      %2398 = vrot.lane.b32.xlu0 %v2079, 96
      %v2399 = vpop.permute.xlu0 %2398
      %2400 = vrot.lane.b32.xlu0 %v2081, 96
      %v2401 = vpop.permute.xlu0 %2400
      %2402 = vrot.lane.b32.xlu0 %v2083, 96
      %v2403 = vpop.permute.xlu0 %2402
      %2404 = vrot.lane.b32.xlu0 %v2085, 96
      %v2405 = vpop.permute.xlu0 %2404
      %2406 = vrot.lane.b32.xlu0 %v2087, 96
      %v2407 = vpop.permute.xlu0 %2406
      %2408 = vrot.lane.b32.xlu0 %v2089, 96
      %v2409 = vpop.permute.xlu0 %2408
      %2410 = vrot.lane.b32.xlu0 %v2091, 96
      %v2411 = vpop.permute.xlu0 %2410
      %2412 = vrot.lane.b32.xlu0 %v2093, 96
      %v2413 = vpop.permute.xlu0 %2412
      %2414 = vrot.lane.b32.xlu0 %v2095, 96
      %v2415 = vpop.permute.xlu0 %2414
      %2416 = vrot.lane.b32.xlu0 %v2097, 96
      %v2417 = vpop.permute.xlu0 %2416
      %2418 = vrot.lane.b32.xlu0 %v2099, 96
      %v2419 = vpop.permute.xlu0 %2418
      %2420 = vrot.lane.b32.xlu0 %v2101, 96
      %v2421 = vpop.permute.xlu0 %2420
      %2422 = vrot.lane.b32.xlu0 %v2103, 96
      %v2423 = vpop.permute.xlu0 %2422
      %2424 = vrot.lane.b32.xlu0 %v2105, 96
      %v2425 = vpop.permute.xlu0 %2424
      %2426 = vrot.lane.b32.xlu0 %v2107, 96
      %v2427 = vpop.permute.xlu0 %2426
      %2428 = vrot.lane.b32.xlu0 %v2109, 96
      %v2429 = vpop.permute.xlu0 %2428
      %2430 = vrot.lane.b32.xlu0 %v2111, 96
      %v2431 = vpop.permute.xlu0 %2430
      %2432 = vrot.lane.b32.xlu0 %v2113, 96
      %v2433 = vpop.permute.xlu0 %2432
      %2434 = vrot.lane.b32.xlu0 %v2115, 96
      %v2435 = vpop.permute.xlu0 %2434
      %2436 = vrot.lane.b32.xlu0 %v2117, 96
      %v2437 = vpop.permute.xlu0 %2436
      %2438 = vrot.lane.b32.xlu0 %v2119, 96
      %v2439 = vpop.permute.xlu0 %2438
      %2440 = vrot.lane.b32.xlu0 %v2121, 96
      %v2441 = vpop.permute.xlu0 %2440
      %2442 = vrot.lane.b32.xlu0 %v2123, 96
      %v2443 = vpop.permute.xlu0 %2442
      %2444 = vrot.lane.b32.xlu0 %v2125, 96
      %v2445 = vpop.permute.xlu0 %2444
      %2446 = vrot.lane.b32.xlu0 %v2127, 96
      %v2447 = vpop.permute.xlu0 %2446
      %2448 = vrot.lane.b32.xlu0 %v2129, 96
      %v2449 = vpop.permute.xlu0 %2448
      %2450 = vrot.lane.b32.xlu0 %v2131, 96
      %v2451 = vpop.permute.xlu0 %2450
      %2452 = vrot.lane.b32.xlu0 %v2133, 96
      %v2453 = vpop.permute.xlu0 %2452
      %2454 = vrot.lane.b32.xlu0 %v2135, 96
      %v2455 = vpop.permute.xlu0 %2454
      %2456 = vrot.lane.b32.xlu0 %v2137, 96
      %v2457 = vpop.permute.xlu0 %2456
      %2458 = vrot.lane.b32.xlu0 %v2139, 96
      %v2459 = vpop.permute.xlu0 %2458
      %2460 = vrot.lane.b32.xlu0 %v2141, 96
      %v2461 = vpop.permute.xlu0 %2460
      %2462 = vrot.lane.b32.xlu0 %v2143, 96
      %v2463 = vpop.permute.xlu0 %2462
      %2464 = vrot.lane.b32.xlu0 %v2145, 96
      %v2465 = vpop.permute.xlu0 %2464
      %2466 = vrot.lane.b32.xlu0 %v2147, 96
      %v2467 = vpop.permute.xlu0 %2466
      %2468 = vrot.lane.b32.xlu0 %v2149, 96
      %v2469 = vpop.permute.xlu0 %2468
      %2470 = vrot.lane.b32.xlu0 %v2151, 96
      %v2471 = vpop.permute.xlu0 %2470
      %2472 = vrot.lane.b32.xlu0 %v2153, 96
      %v2473 = vpop.permute.xlu0 %2472
      %2474 = vrot.lane.b32.xlu0 %v2155, 96
      %v2475 = vpop.permute.xlu0 %2474
      %2476 = vrot.lane.b32.xlu0 %v2157, 96
      %v2477 = vpop.permute.xlu0 %2476
      %2478 = vrot.lane.b32.xlu0 %v2159, 96
      %v2479 = vpop.permute.xlu0 %2478
      %2480 = vrot.lane.b32.xlu0 %v2161, 96
      %v2481 = vpop.permute.xlu0 %2480
      %2482 = vrot.lane.b32.xlu0 %v2163, 96
      %v2483 = vpop.permute.xlu0 %2482
      %2484 = vrot.lane.b32.xlu0 %v2165, 96
      %v2485 = vpop.permute.xlu0 %2484
      %2486 = vrot.lane.b32.xlu0 %v2167, 96
      %v2487 = vpop.permute.xlu0 %2486
      %2488 = vrot.lane.b32.xlu0 %v2169, 96
      %v2489 = vpop.permute.xlu0 %2488
      %2490 = vrot.lane.b32.xlu0 %v2171, 96
      %v2491 = vpop.permute.xlu0 %2490
      %2492 = vrot.lane.b32.xlu0 %v2173, 96
      %v2493 = vpop.permute.xlu0 %2492
      %2494 = vrot.lane.b32.xlu0 %v2175, 96
      %v2495 = vpop.permute.xlu0 %2494
      %2496 = vrot.lane.b32.xlu0 %v2177, 96
      %v2497 = vpop.permute.xlu0 %2496
      %2498 = vrot.lane.b32.xlu0 %v2179, 96
      %v2499 = vpop.permute.xlu0 %2498
      %2500 = vrot.lane.b32.xlu0 %v2181, 96
      %v2501 = vpop.permute.xlu0 %2500
      %2502 = vrot.lane.b32.xlu0 %v2183, 96
      %v2503 = vpop.permute.xlu0 %2502
      %2504 = vrot.lane.b32.xlu0 %v2185, 96
      %v2505 = vpop.permute.xlu0 %2504
      %2506 = vrot.lane.b32.xlu0 %v2187, 96
      %v2507 = vpop.permute.xlu0 %2506
      %2508 = vrot.lane.b32.xlu0 %v2189, 96
      %v2509 = vpop.permute.xlu0 %2508
      %2510 = vrot.lane.b32.xlu0 %v2191, 96
      %v2511 = vpop.permute.xlu0 %2510
      %2512 = vrot.lane.b32.xlu0 %v2193, 96
      %v2513 = vpop.permute.xlu0 %2512
      %2514 = vrot.lane.b32.xlu0 %v2195, 96
      %v2515 = vpop.permute.xlu0 %2514
      %v2676 = vadd.f32 %v1068, %v2197
      %v2677 = vadd.f32 %v1071, %v2199
      %v2678 = vadd.f32 %v1076, %v2201
      %v2679 = vadd.f32 %v1079, %v2203
      %v2680 = vadd.f32 %v1084, %v2205
      %v2681 = vadd.f32 %v1087, %v2207
      %v2682 = vadd.f32 %v1092, %v2209
      %v2683 = vadd.f32 %v1095, %v2211
      %v2684 = vadd.f32 %v1100, %v2213
      %v2685 = vadd.f32 %v1103, %v2215
      %v2686 = vadd.f32 %v1108, %v2217
      %v2687 = vadd.f32 %v1111, %v2219
      %v2688 = vadd.f32 %v1116, %v2221
      %v2689 = vadd.f32 %v1119, %v2223
      %v2690 = vadd.f32 %v1124, %v2225
      %v2691 = vadd.f32 %v1127, %v2227
      %v2692 = vadd.f32 %v1132, %v2229
      %v2693 = vadd.f32 %v1135, %v2231
      %v2694 = vadd.f32 %v1140, %v2233
      %v2695 = vadd.f32 %v1143, %v2235
      %v2696 = vadd.f32 %v1148, %v2237
      %v2697 = vadd.f32 %v1151, %v2239
      %v2698 = vadd.f32 %v1156, %v2241
      %v2699 = vadd.f32 %v1159, %v2243
      %v2700 = vadd.f32 %v1164, %v2245
      %v2701 = vadd.f32 %v1167, %v2247
      %v2702 = vadd.f32 %v1172, %v2249
      %v2703 = vadd.f32 %v1175, %v2251
      %v2704 = vadd.f32 %v1180, %v2253
      %v2705 = vadd.f32 %v1183, %v2255
      %v2706 = vadd.f32 %v1188, %v2257
      %v2707 = vadd.f32 %v1191, %v2259
      %v2708 = vadd.f32 %v1196, %v2261
      %v2709 = vadd.f32 %v1199, %v2263
      %v2710 = vadd.f32 %v1204, %v2265
      %v2711 = vadd.f32 %v1207, %v2267
      %v2712 = vadd.f32 %v1212, %v2269
      %v2713 = vadd.f32 %v1215, %v2271
      %v2714 = vadd.f32 %v1220, %v2273
      %v2715 = vadd.f32 %v1223, %v2275
      %v2716 = vadd.f32 %v1228, %v2277
      %v2717 = vadd.f32 %v1231, %v2279
      %v2718 = vadd.f32 %v1236, %v2281
      %v2719 = vadd.f32 %v1239, %v2283
      %v2720 = vadd.f32 %v1244, %v2285
      %v2721 = vadd.f32 %v1247, %v2287
      %v2722 = vadd.f32 %v1252, %v2289
      %v2723 = vadd.f32 %v1255, %v2291
      %v2724 = vadd.f32 %v1260, %v2293
      %v2725 = vadd.f32 %v1263, %v2295
      %v2726 = vadd.f32 %v1268, %v2297
      %v2727 = vadd.f32 %v1271, %v2299
      %v2728 = vadd.f32 %v1276, %v2301
      %v2729 = vadd.f32 %v1279, %v2303
      %v2730 = vadd.f32 %v1284, %v2305
      %v2731 = vadd.f32 %v1287, %v2307
      %v2732 = vadd.f32 %v1292, %v2309
      %v2733 = vadd.f32 %v1295, %v2311
      %v2734 = vadd.f32 %v1300, %v2313
      %v2735 = vadd.f32 %v1303, %v2315
      %v2736 = vadd.f32 %v1308, %v2317
      %v2737 = vadd.f32 %v1311, %v2319
      %v2738 = vadd.f32 %v1316, %v2321
      %v2739 = vadd.f32 %v1319, %v2323
      %v2740 = vadd.f32 %v1324, %v2325
      %v2741 = vadd.f32 %v1327, %v2327
      %v2742 = vadd.f32 %v1332, %v2329
      %v2743 = vadd.f32 %v1335, %v2331
      %v2744 = vadd.f32 %v1340, %v2333
      %v2745 = vadd.f32 %v1343, %v2335
      %v2746 = vadd.f32 %v1348, %v2337
      %v2747 = vadd.f32 %v1351, %v2339
      %v2748 = vadd.f32 %v1356, %v2341
      %v2749 = vadd.f32 %v1359, %v2343
      %v2750 = vadd.f32 %v1364, %v2345
      %v2751 = vadd.f32 %v1367, %v2347
      %v2752 = vadd.f32 %v1372, %v2349
      %v2753 = vadd.f32 %v1375, %v2351
      %v2754 = vadd.f32 %v1380, %v2353
      %v2755 = vadd.f32 %v1383, %v2355
      %v2756 = vadd.f32 %v1388, %v2357
      %v2757 = vadd.f32 %v1391, %v2359
      %v2758 = vadd.f32 %v1396, %v2361
      %v2759 = vadd.f32 %v1399, %v2363
      %v2760 = vadd.f32 %v1404, %v2365
      %v2761 = vadd.f32 %v1407, %v2367
      %v2762 = vadd.f32 %v1412, %v2369
      %v2763 = vadd.f32 %v1415, %v2371
      %v2764 = vadd.f32 %v1420, %v2373
      %v2765 = vadd.f32 %v1423, %v2375
      %v2766 = vadd.f32 %v1428, %v2377
      %v2767 = vadd.f32 %v1431, %v2379
      %v2768 = vadd.f32 %v1436, %v2381
      %v2769 = vadd.f32 %v1439, %v2383
      %v2770 = vadd.f32 %v1444, %v2385
      %v2771 = vadd.f32 %v1447, %v2387
      %v2772 = vadd.f32 %v1452, %v2389
      %v2773 = vadd.f32 %v1455, %v2391
      %v2774 = vadd.f32 %v1460, %v2393
      %v2775 = vadd.f32 %v1463, %v2395
      %v2776 = vadd.f32 %v1468, %v2397
      %v2777 = vadd.f32 %v1471, %v2399
      %v2778 = vadd.f32 %v1476, %v2401
      %v2779 = vadd.f32 %v1479, %v2403
      %v2780 = vadd.f32 %v1484, %v2405
      %v2781 = vadd.f32 %v1487, %v2407
      %v2782 = vadd.f32 %v1492, %v2409
      %v2783 = vadd.f32 %v1495, %v2411
      %v2784 = vadd.f32 %v1500, %v2413
      %v2785 = vadd.f32 %v1503, %v2415
      %v2786 = vadd.f32 %v1508, %v2417
      %v2787 = vadd.f32 %v1511, %v2419
      %v2788 = vadd.f32 %v1516, %v2421
      %v2789 = vadd.f32 %v1519, %v2423
      %v2790 = vadd.f32 %v1524, %v2425
      %v2791 = vadd.f32 %v1527, %v2427
      %v2792 = vadd.f32 %v1532, %v2429
      %v2793 = vadd.f32 %v1535, %v2431
      %v2794 = vadd.f32 %v1540, %v2433
      %v2795 = vadd.f32 %v1543, %v2435
      %v2796 = vadd.f32 %v1548, %v2437
      %v2797 = vadd.f32 %v1551, %v2439
      %v2798 = vadd.f32 %v1556, %v2441
      %v2799 = vadd.f32 %v1559, %v2443
      %v2800 = vadd.f32 %v1564, %v2445
      %v2801 = vadd.f32 %v1567, %v2447
      %v2802 = vadd.f32 %v1572, %v2449
      %v2803 = vadd.f32 %v1575, %v2451
      %v2804 = vadd.f32 %v1580, %v2453
      %v2805 = vadd.f32 %v1583, %v2455
      %v2806 = vadd.f32 %v1588, %v2457
      %v2807 = vadd.f32 %v1591, %v2459
      %v2808 = vadd.f32 %v1596, %v2461
      %v2809 = vadd.f32 %v1599, %v2463
      %v2810 = vadd.f32 %v1604, %v2465
      %v2811 = vadd.f32 %v1607, %v2467
      %v2812 = vadd.f32 %v1612, %v2469
      %v2813 = vadd.f32 %v1615, %v2471
      %v2814 = vadd.f32 %v1620, %v2473
      %v2815 = vadd.f32 %v1623, %v2475
      %v2816 = vadd.f32 %v1628, %v2477
      %v2817 = vadd.f32 %v1631, %v2479
      %v2818 = vadd.f32 %v1636, %v2481
      %v2819 = vadd.f32 %v1639, %v2483
      %v2820 = vadd.f32 %v1644, %v2485
      %v2821 = vadd.f32 %v1647, %v2487
      %v2822 = vadd.f32 %v1652, %v2489
      %v2823 = vadd.f32 %v1655, %v2491
      %v2824 = vadd.f32 %v1660, %v2493
      %v2825 = vadd.f32 %v1663, %v2495
      %v2826 = vadd.f32 %v1668, %v2497
      %v2827 = vadd.f32 %v1671, %v2499
      %v2828 = vadd.f32 %v1676, %v2501
      %v2829 = vadd.f32 %v1679, %v2503
      %v2830 = vadd.f32 %v1684, %v2505
      %v2831 = vadd.f32 %v1687, %v2507
      %v2832 = vadd.f32 %v1692, %v2509
      %v2833 = vadd.f32 %v1695, %v2511
      %v2834 = vadd.f32 %v1700, %v2513
      %v2835 = vadd.f32 %v1703, %v2515
      %vm2836 = vcmask 1045504
      %v2837 = vrot.slane %v1068, 2
      %v2838 = vrot.slane %v1071, 2
      %v2839 = vsel %vm2836, %v2837, %v2838
      %v2840 = vrot.slane %v1076, 2
      %v2841 = vsel %vm2836, %v2838, %v2840
      %v2842 = vrot.slane %v1079, 2
      %v2843 = vsel %vm2836, %v2840, %v2842
      %v2844 = vrot.slane %v1084, 2
      %v2845 = vsel %vm2836, %v2842, %v2844
      %v2846 = vrot.slane %v1087, 2
      %v2847 = vsel %vm2836, %v2844, %v2846
      %v2848 = vrot.slane %v1092, 2
      %v2849 = vsel %vm2836, %v2846, %v2848
      %v2850 = vrot.slane %v1095, 2
      %v2851 = vsel %vm2836, %v2848, %v2850
      %v2852 = vrot.slane %v1100, 2
      %v2853 = vsel %vm2836, %v2850, %v2852
      %v2854 = vrot.slane %v1103, 2
      %v2855 = vsel %vm2836, %v2852, %v2854
      %v2856 = vrot.slane %v1108, 2
      %v2857 = vsel %vm2836, %v2854, %v2856
      %v2858 = vrot.slane %v1111, 2
      %v2859 = vsel %vm2836, %v2856, %v2858
      %v2860 = vrot.slane %v1116, 2
      %v2861 = vsel %vm2836, %v2858, %v2860
      %v2862 = vrot.slane %v1119, 2
      %v2863 = vsel %vm2836, %v2860, %v2862
      %v2864 = vrot.slane %v1124, 2
      %v2865 = vsel %vm2836, %v2862, %v2864
      %v2866 = vrot.slane %v1127, 2
      %v2867 = vsel %vm2836, %v2864, %v2866
      %v2868 = vrot.slane %v1132, 2
      %v2869 = vsel %vm2836, %v2866, %v2868
      %v2870 = vrot.slane %v1135, 2
      %v2871 = vsel %vm2836, %v2868, %v2870
      %v2872 = vrot.slane %v1140, 2
      %v2873 = vsel %vm2836, %v2870, %v2872
      %v2874 = vrot.slane %v1143, 2
      %v2875 = vsel %vm2836, %v2872, %v2874
      %v2876 = vrot.slane %v1148, 2
      %v2877 = vsel %vm2836, %v2874, %v2876
      %v2878 = vrot.slane %v1151, 2
      %v2879 = vsel %vm2836, %v2876, %v2878
      %v2880 = vrot.slane %v1156, 2
      %v2881 = vsel %vm2836, %v2878, %v2880
      %v2882 = vrot.slane %v1159, 2
      %v2883 = vsel %vm2836, %v2880, %v2882
      %v2884 = vrot.slane %v1164, 2
      %v2885 = vsel %vm2836, %v2882, %v2884
      %v2886 = vrot.slane %v1167, 2
      %v2887 = vsel %vm2836, %v2884, %v2886
      %v2888 = vrot.slane %v1172, 2
      %v2889 = vsel %vm2836, %v2886, %v2888
      %v2890 = vrot.slane %v1175, 2
      %v2891 = vsel %vm2836, %v2888, %v2890
      %v2892 = vrot.slane %v1180, 2
      %v2893 = vsel %vm2836, %v2890, %v2892
      %v2894 = vrot.slane %v1183, 2
      %v2895 = vsel %vm2836, %v2892, %v2894
      %v2896 = vrot.slane %v1188, 2
      %v2897 = vsel %vm2836, %v2894, %v2896
      %v2898 = vrot.slane %v1191, 2
      %v2899 = vsel %vm2836, %v2896, %v2898
      %v2900 = vrot.slane %v1196, 2
      %v2901 = vsel %vm2836, %v2898, %v2900
      %v2902 = vrot.slane %v1199, 2
      %v2903 = vsel %vm2836, %v2900, %v2902
      %v2904 = vrot.slane %v1204, 2
      %v2905 = vsel %vm2836, %v2902, %v2904
      %v2906 = vrot.slane %v1207, 2
      %v2907 = vsel %vm2836, %v2904, %v2906
      %v2908 = vrot.slane %v1212, 2
      %v2909 = vsel %vm2836, %v2906, %v2908
      %v2910 = vrot.slane %v1215, 2
      %v2911 = vsel %vm2836, %v2908, %v2910
      %v2912 = vrot.slane %v1220, 2
      %v2913 = vsel %vm2836, %v2910, %v2912
      %v2914 = vrot.slane %v1223, 2
      %v2915 = vsel %vm2836, %v2912, %v2914
      %v2916 = vrot.slane %v1228, 2
      %v2917 = vsel %vm2836, %v2914, %v2916
      %v2918 = vrot.slane %v1231, 2
      %v2919 = vsel %vm2836, %v2916, %v2918
      %v2920 = vrot.slane %v1236, 2
      %v2921 = vsel %vm2836, %v2918, %v2920
      %v2922 = vrot.slane %v1239, 2
      %v2923 = vsel %vm2836, %v2920, %v2922
      %v2924 = vrot.slane %v1244, 2
      %v2925 = vsel %vm2836, %v2922, %v2924
      %v2926 = vrot.slane %v1247, 2
      %v2927 = vsel %vm2836, %v2924, %v2926
      %v2928 = vrot.slane %v1252, 2
      %v2929 = vsel %vm2836, %v2926, %v2928
      %v2930 = vrot.slane %v1255, 2
      %v2931 = vsel %vm2836, %v2928, %v2930
      %v2932 = vrot.slane %v1260, 2
      %v2933 = vsel %vm2836, %v2930, %v2932
      %v2934 = vrot.slane %v1263, 2
      %v2935 = vsel %vm2836, %v2932, %v2934
      %v2936 = vrot.slane %v1268, 2
      %v2937 = vsel %vm2836, %v2934, %v2936
      %v2938 = vrot.slane %v1271, 2
      %v2939 = vsel %vm2836, %v2936, %v2938
      %v2940 = vrot.slane %v1276, 2
      %v2941 = vsel %vm2836, %v2938, %v2940
      %v2942 = vrot.slane %v1279, 2
      %v2943 = vsel %vm2836, %v2940, %v2942
      %v2944 = vrot.slane %v1284, 2
      %v2945 = vsel %vm2836, %v2942, %v2944
      %v2946 = vrot.slane %v1287, 2
      %v2947 = vsel %vm2836, %v2944, %v2946
      %v2948 = vrot.slane %v1292, 2
      %v2949 = vsel %vm2836, %v2946, %v2948
      %v2950 = vrot.slane %v1295, 2
      %v2951 = vsel %vm2836, %v2948, %v2950
      %v2952 = vrot.slane %v1300, 2
      %v2953 = vsel %vm2836, %v2950, %v2952
      %v2954 = vrot.slane %v1303, 2
      %v2955 = vsel %vm2836, %v2952, %v2954
      %v2956 = vrot.slane %v1308, 2
      %v2957 = vsel %vm2836, %v2954, %v2956
      %v2958 = vrot.slane %v1311, 2
      %v2959 = vsel %vm2836, %v2956, %v2958
      %v2960 = vrot.slane %v1316, 2
      %v2961 = vsel %vm2836, %v2958, %v2960
      %v2962 = vrot.slane %v1319, 2
      %v2963 = vsel %vm2836, %v2960, %v2962
      %v2964 = vrot.slane %v1324, 2
      %v2965 = vsel %vm2836, %v2962, %v2964
      %v2966 = vrot.slane %v1327, 2
      %v2967 = vsel %vm2836, %v2964, %v2966
      %v2968 = vrot.slane %v1332, 2
      %v2969 = vsel %vm2836, %v2966, %v2968
      %v2970 = vrot.slane %v1335, 2
      %v2971 = vsel %vm2836, %v2968, %v2970
      %v2972 = vrot.slane %v1340, 2
      %v2973 = vsel %vm2836, %v2970, %v2972
      %v2974 = vrot.slane %v1343, 2
      %v2975 = vsel %vm2836, %v2972, %v2974
      %v2976 = vrot.slane %v1348, 2
      %v2977 = vsel %vm2836, %v2974, %v2976
      %v2978 = vrot.slane %v1351, 2
      %v2979 = vsel %vm2836, %v2976, %v2978
      %v2980 = vrot.slane %v1356, 2
      %v2981 = vsel %vm2836, %v2978, %v2980
      %v2982 = vrot.slane %v1359, 2
      %v2983 = vsel %vm2836, %v2980, %v2982
      %v2984 = vrot.slane %v1364, 2
      %v2985 = vsel %vm2836, %v2982, %v2984
      %v2986 = vrot.slane %v1367, 2
      %v2987 = vsel %vm2836, %v2984, %v2986
      %v2988 = vrot.slane %v1372, 2
      %v2989 = vsel %vm2836, %v2986, %v2988
      %v2990 = vrot.slane %v1375, 2
      %v2991 = vsel %vm2836, %v2988, %v2990
      %v2992 = vrot.slane %v1380, 2
      %v2993 = vsel %vm2836, %v2990, %v2992
      %v2994 = vrot.slane %v1383, 2
      %v2995 = vsel %vm2836, %v2992, %v2994
      %v2996 = vrot.slane %v1388, 2
      %v2997 = vsel %vm2836, %v2994, %v2996
      %v2998 = vrot.slane %v1391, 2
      %v2999 = vsel %vm2836, %v2996, %v2998
      %v3000 = vrot.slane %v1396, 2
      %v3001 = vsel %vm2836, %v2998, %v3000
      %v3002 = vrot.slane %v1399, 2
      %v3003 = vsel %vm2836, %v3000, %v3002
      %v3004 = vrot.slane %v1404, 2
      %v3005 = vsel %vm2836, %v3002, %v3004
      %v3006 = vrot.slane %v1407, 2
      %v3007 = vsel %vm2836, %v3004, %v3006
      %v3008 = vrot.slane %v1412, 2
      %v3009 = vsel %vm2836, %v3006, %v3008
      %v3010 = vrot.slane %v1415, 2
      %v3011 = vsel %vm2836, %v3008, %v3010
      %v3012 = vrot.slane %v1420, 2
      %v3013 = vsel %vm2836, %v3010, %v3012
      %v3014 = vrot.slane %v1423, 2
      %v3015 = vsel %vm2836, %v3012, %v3014
      %v3016 = vrot.slane %v1428, 2
      %v3017 = vsel %vm2836, %v3014, %v3016
      %v3018 = vrot.slane %v1431, 2
      %v3019 = vsel %vm2836, %v3016, %v3018
      %v3020 = vrot.slane %v1436, 2
      %v3021 = vsel %vm2836, %v3018, %v3020
      %v3022 = vrot.slane %v1439, 2
      %v3023 = vsel %vm2836, %v3020, %v3022
      %v3024 = vrot.slane %v1444, 2
      %v3025 = vsel %vm2836, %v3022, %v3024
      %v3026 = vrot.slane %v1447, 2
      %v3027 = vsel %vm2836, %v3024, %v3026
      %v3028 = vrot.slane %v1452, 2
      %v3029 = vsel %vm2836, %v3026, %v3028
      %v3030 = vrot.slane %v1455, 2
      %v3031 = vsel %vm2836, %v3028, %v3030
      %v3032 = vrot.slane %v1460, 2
      %v3033 = vsel %vm2836, %v3030, %v3032
      %v3034 = vrot.slane %v1463, 2
      %v3035 = vsel %vm2836, %v3032, %v3034
      %v3036 = vrot.slane %v1468, 2
      %v3037 = vsel %vm2836, %v3034, %v3036
      %v3038 = vrot.slane %v1471, 2
      %v3039 = vsel %vm2836, %v3036, %v3038
      %v3040 = vrot.slane %v1476, 2
      %v3041 = vsel %vm2836, %v3038, %v3040
      %v3042 = vrot.slane %v1479, 2
      %v3043 = vsel %vm2836, %v3040, %v3042
      %v3044 = vrot.slane %v1484, 2
      %v3045 = vsel %vm2836, %v3042, %v3044
      %v3046 = vrot.slane %v1487, 2
      %v3047 = vsel %vm2836, %v3044, %v3046
      %v3048 = vrot.slane %v1492, 2
      %v3049 = vsel %vm2836, %v3046, %v3048
      %v3050 = vrot.slane %v1495, 2
      %v3051 = vsel %vm2836, %v3048, %v3050
      %v3052 = vrot.slane %v1500, 2
      %v3053 = vsel %vm2836, %v3050, %v3052
      %v3054 = vrot.slane %v1503, 2
      %v3055 = vsel %vm2836, %v3052, %v3054
      %v3056 = vrot.slane %v1508, 2
      %v3057 = vsel %vm2836, %v3054, %v3056
      %v3058 = vrot.slane %v1511, 2
      %v3059 = vsel %vm2836, %v3056, %v3058
      %v3060 = vrot.slane %v1516, 2
      %v3061 = vsel %vm2836, %v3058, %v3060
      %v3062 = vrot.slane %v1519, 2
      %v3063 = vsel %vm2836, %v3060, %v3062
      %v3064 = vrot.slane %v1524, 2
      %v3065 = vsel %vm2836, %v3062, %v3064
      %v3066 = vrot.slane %v1527, 2
      %v3067 = vsel %vm2836, %v3064, %v3066
      %v3068 = vrot.slane %v1532, 2
      %v3069 = vsel %vm2836, %v3066, %v3068
      %v3070 = vrot.slane %v1535, 2
      %v3071 = vsel %vm2836, %v3068, %v3070
      %v3072 = vrot.slane %v1540, 2
      %v3073 = vsel %vm2836, %v3070, %v3072
      %v3074 = vrot.slane %v1543, 2
      %v3075 = vsel %vm2836, %v3072, %v3074
      %v3076 = vrot.slane %v1548, 2
      %v3077 = vsel %vm2836, %v3074, %v3076
      %v3078 = vrot.slane %v1551, 2
      %v3079 = vsel %vm2836, %v3076, %v3078
      %v3080 = vrot.slane %v1556, 2
      %v3081 = vsel %vm2836, %v3078, %v3080
      %v3082 = vrot.slane %v1559, 2
      %v3083 = vsel %vm2836, %v3080, %v3082
      %v3084 = vrot.slane %v1564, 2
      %v3085 = vsel %vm2836, %v3082, %v3084
      %v3086 = vrot.slane %v1567, 2
      %v3087 = vsel %vm2836, %v3084, %v3086
      %v3088 = vrot.slane %v1572, 2
      %v3089 = vsel %vm2836, %v3086, %v3088
      %v3090 = vrot.slane %v1575, 2
      %v3091 = vsel %vm2836, %v3088, %v3090
      %v3092 = vrot.slane %v1580, 2
      %v3093 = vsel %vm2836, %v3090, %v3092
      %v3094 = vrot.slane %v1583, 2
      %v3095 = vsel %vm2836, %v3092, %v3094
      %v3096 = vrot.slane %v1588, 2
      %v3097 = vsel %vm2836, %v3094, %v3096
      %v3098 = vrot.slane %v1591, 2
      %v3099 = vsel %vm2836, %v3096, %v3098
      %v3100 = vrot.slane %v1596, 2
      %v3101 = vsel %vm2836, %v3098, %v3100
      %v3102 = vrot.slane %v1599, 2
      %v3103 = vsel %vm2836, %v3100, %v3102
      %v3104 = vrot.slane %v1604, 2
      %v3105 = vsel %vm2836, %v3102, %v3104
      %v3106 = vrot.slane %v1607, 2
      %v3107 = vsel %vm2836, %v3104, %v3106
      %v3108 = vrot.slane %v1612, 2
      %v3109 = vsel %vm2836, %v3106, %v3108
      %v3110 = vrot.slane %v1615, 2
      %v3111 = vsel %vm2836, %v3108, %v3110
      %v3112 = vrot.slane %v1620, 2
      %v3113 = vsel %vm2836, %v3110, %v3112
      %v3114 = vrot.slane %v1623, 2
      %v3115 = vsel %vm2836, %v3112, %v3114
      %v3116 = vrot.slane %v1628, 2
      %v3117 = vsel %vm2836, %v3114, %v3116
      %v3118 = vrot.slane %v1631, 2
      %v3119 = vsel %vm2836, %v3116, %v3118
      %v3120 = vrot.slane %v1636, 2
      %v3121 = vsel %vm2836, %v3118, %v3120
      %v3122 = vrot.slane %v1639, 2
      %v3123 = vsel %vm2836, %v3120, %v3122
      %v3124 = vrot.slane %v1644, 2
      %v3125 = vsel %vm2836, %v3122, %v3124
      %v3126 = vrot.slane %v1647, 2
      %v3127 = vsel %vm2836, %v3124, %v3126
      %v3128 = vrot.slane %v1652, 2
      %v3129 = vsel %vm2836, %v3126, %v3128
      %v3130 = vrot.slane %v1655, 2
      %v3131 = vsel %vm2836, %v3128, %v3130
      %v3132 = vrot.slane %v1660, 2
      %v3133 = vsel %vm2836, %v3130, %v3132
      %v3134 = vrot.slane %v1663, 2
      %v3135 = vsel %vm2836, %v3132, %v3134
      %v3136 = vrot.slane %v1668, 2
      %v3137 = vsel %vm2836, %v3134, %v3136
      %v3138 = vrot.slane %v1671, 2
      %v3139 = vsel %vm2836, %v3136, %v3138
      %v3140 = vrot.slane %v1676, 2
      %v3141 = vsel %vm2836, %v3138, %v3140
      %v3142 = vrot.slane %v1679, 2
      %v3143 = vsel %vm2836, %v3140, %v3142
      %v3144 = vrot.slane %v1684, 2
      %v3145 = vsel %vm2836, %v3142, %v3144
      %v3146 = vrot.slane %v1687, 2
      %v3147 = vsel %vm2836, %v3144, %v3146
      %v3148 = vrot.slane %v1692, 2
      %v3149 = vsel %vm2836, %v3146, %v3148
      %v3150 = vrot.slane %v1695, 2
      %v3151 = vsel %vm2836, %v3148, %v3150
      %v3152 = vrot.slane %v1700, 2
      %v3153 = vsel %vm2836, %v3150, %v3152
      %v3154 = vrot.slane %v1703, 2
      %v3155 = vsel %vm2836, %v3152, %v3154
      %v3156 = vrot.slane %v1708, 2
      %v3157 = vsel %vm2836, %v3154, %v3156
      %3158 = vrot.lane.b32.xlu0 %v2839, 64
      %v3159 = vpop.permute.xlu0 %3158
      %3160 = vrot.lane.b32.xlu0 %v2841, 64
      %v3161 = vpop.permute.xlu0 %3160
      %3162 = vrot.lane.b32.xlu0 %v2843, 64
      %v3163 = vpop.permute.xlu0 %3162
      %3164 = vrot.lane.b32.xlu0 %v2845, 64
      %v3165 = vpop.permute.xlu0 %3164
      %3166 = vrot.lane.b32.xlu0 %v2847, 64
      %v3167 = vpop.permute.xlu0 %3166
      %3168 = vrot.lane.b32.xlu0 %v2849, 64
      %v3169 = vpop.permute.xlu0 %3168
      %3170 = vrot.lane.b32.xlu0 %v2851, 64
      %v3171 = vpop.permute.xlu0 %3170
      %3172 = vrot.lane.b32.xlu0 %v2853, 64
      %v3173 = vpop.permute.xlu0 %3172
      %3174 = vrot.lane.b32.xlu0 %v2855, 64
      %v3175 = vpop.permute.xlu0 %3174
      %3176 = vrot.lane.b32.xlu0 %v2857, 64
      %v3177 = vpop.permute.xlu0 %3176
      %3178 = vrot.lane.b32.xlu0 %v2859, 64
      %v3179 = vpop.permute.xlu0 %3178
      %3180 = vrot.lane.b32.xlu0 %v2861, 64
      %v3181 = vpop.permute.xlu0 %3180
      %3182 = vrot.lane.b32.xlu0 %v2863, 64
      %v3183 = vpop.permute.xlu0 %3182
      %3184 = vrot.lane.b32.xlu0 %v2865, 64
      %v3185 = vpop.permute.xlu0 %3184
      %3186 = vrot.lane.b32.xlu0 %v2867, 64
      %v3187 = vpop.permute.xlu0 %3186
      %3188 = vrot.lane.b32.xlu0 %v2869, 64
      %v3189 = vpop.permute.xlu0 %3188
      %3190 = vrot.lane.b32.xlu0 %v2871, 64
      %v3191 = vpop.permute.xlu0 %3190
      %3192 = vrot.lane.b32.xlu0 %v2873, 64
      %v3193 = vpop.permute.xlu0 %3192
      %3194 = vrot.lane.b32.xlu0 %v2875, 64
      %v3195 = vpop.permute.xlu0 %3194
      %3196 = vrot.lane.b32.xlu0 %v2877, 64
      %v3197 = vpop.permute.xlu0 %3196
      %3198 = vrot.lane.b32.xlu0 %v2879, 64
      %v3199 = vpop.permute.xlu0 %3198
      %3200 = vrot.lane.b32.xlu0 %v2881, 64
      %v3201 = vpop.permute.xlu0 %3200
      %3202 = vrot.lane.b32.xlu0 %v2883, 64
      %v3203 = vpop.permute.xlu0 %3202
      %3204 = vrot.lane.b32.xlu0 %v2885, 64
      %v3205 = vpop.permute.xlu0 %3204
      %3206 = vrot.lane.b32.xlu0 %v2887, 64
      %v3207 = vpop.permute.xlu0 %3206
      %3208 = vrot.lane.b32.xlu0 %v2889, 64
      %v3209 = vpop.permute.xlu0 %3208
      %3210 = vrot.lane.b32.xlu0 %v2891, 64
      %v3211 = vpop.permute.xlu0 %3210
      %3212 = vrot.lane.b32.xlu0 %v2893, 64
      %v3213 = vpop.permute.xlu0 %3212
      %3214 = vrot.lane.b32.xlu0 %v2895, 64
      %v3215 = vpop.permute.xlu0 %3214
      %3216 = vrot.lane.b32.xlu0 %v2897, 64
      %v3217 = vpop.permute.xlu0 %3216
      %3218 = vrot.lane.b32.xlu0 %v2899, 64
      %v3219 = vpop.permute.xlu0 %3218
      %3220 = vrot.lane.b32.xlu0 %v2901, 64
      %v3221 = vpop.permute.xlu0 %3220
      %3222 = vrot.lane.b32.xlu0 %v2903, 64
      %v3223 = vpop.permute.xlu0 %3222
      %3224 = vrot.lane.b32.xlu0 %v2905, 64
      %v3225 = vpop.permute.xlu0 %3224
      %3226 = vrot.lane.b32.xlu0 %v2907, 64
      %v3227 = vpop.permute.xlu0 %3226
      %3228 = vrot.lane.b32.xlu0 %v2909, 64
      %v3229 = vpop.permute.xlu0 %3228
      %3230 = vrot.lane.b32.xlu0 %v2911, 64
      %v3231 = vpop.permute.xlu0 %3230
      %3232 = vrot.lane.b32.xlu0 %v2913, 64
      %v3233 = vpop.permute.xlu0 %3232
      %3234 = vrot.lane.b32.xlu0 %v2915, 64
      %v3235 = vpop.permute.xlu0 %3234
      %3236 = vrot.lane.b32.xlu0 %v2917, 64
      %v3237 = vpop.permute.xlu0 %3236
      %3238 = vrot.lane.b32.xlu0 %v2919, 64
      %v3239 = vpop.permute.xlu0 %3238
      %3240 = vrot.lane.b32.xlu0 %v2921, 64
      %v3241 = vpop.permute.xlu0 %3240
      %3242 = vrot.lane.b32.xlu0 %v2923, 64
      %v3243 = vpop.permute.xlu0 %3242
      %3244 = vrot.lane.b32.xlu0 %v2925, 64
      %v3245 = vpop.permute.xlu0 %3244
      %3246 = vrot.lane.b32.xlu0 %v2927, 64
      %v3247 = vpop.permute.xlu0 %3246
      %3248 = vrot.lane.b32.xlu0 %v2929, 64
      %v3249 = vpop.permute.xlu0 %3248
      %3250 = vrot.lane.b32.xlu0 %v2931, 64
      %v3251 = vpop.permute.xlu0 %3250
      %3252 = vrot.lane.b32.xlu0 %v2933, 64
      %v3253 = vpop.permute.xlu0 %3252
      %3254 = vrot.lane.b32.xlu0 %v2935, 64
      %v3255 = vpop.permute.xlu0 %3254
      %3256 = vrot.lane.b32.xlu0 %v2937, 64
      %v3257 = vpop.permute.xlu0 %3256
      %3258 = vrot.lane.b32.xlu0 %v2939, 64
      %v3259 = vpop.permute.xlu0 %3258
      %3260 = vrot.lane.b32.xlu0 %v2941, 64
      %v3261 = vpop.permute.xlu0 %3260
      %3262 = vrot.lane.b32.xlu0 %v2943, 64
      %v3263 = vpop.permute.xlu0 %3262
      %3264 = vrot.lane.b32.xlu0 %v2945, 64
      %v3265 = vpop.permute.xlu0 %3264
      %3266 = vrot.lane.b32.xlu0 %v2947, 64
      %v3267 = vpop.permute.xlu0 %3266
      %3268 = vrot.lane.b32.xlu0 %v2949, 64
      %v3269 = vpop.permute.xlu0 %3268
      %3270 = vrot.lane.b32.xlu0 %v2951, 64
      %v3271 = vpop.permute.xlu0 %3270
      %3272 = vrot.lane.b32.xlu0 %v2953, 64
      %v3273 = vpop.permute.xlu0 %3272
      %3274 = vrot.lane.b32.xlu0 %v2955, 64
      %v3275 = vpop.permute.xlu0 %3274
      %3276 = vrot.lane.b32.xlu0 %v2957, 64
      %v3277 = vpop.permute.xlu0 %3276
      %3278 = vrot.lane.b32.xlu0 %v2959, 64
      %v3279 = vpop.permute.xlu0 %3278
      %3280 = vrot.lane.b32.xlu0 %v2961, 64
      %v3281 = vpop.permute.xlu0 %3280
      %3282 = vrot.lane.b32.xlu0 %v2963, 64
      %v3283 = vpop.permute.xlu0 %3282
      %3284 = vrot.lane.b32.xlu0 %v2965, 64
      %v3285 = vpop.permute.xlu0 %3284
      %3286 = vrot.lane.b32.xlu0 %v2967, 64
      %v3287 = vpop.permute.xlu0 %3286
      %3288 = vrot.lane.b32.xlu0 %v2969, 64
      %v3289 = vpop.permute.xlu0 %3288
      %3290 = vrot.lane.b32.xlu0 %v2971, 64
      %v3291 = vpop.permute.xlu0 %3290
      %3292 = vrot.lane.b32.xlu0 %v2973, 64
      %v3293 = vpop.permute.xlu0 %3292
      %3294 = vrot.lane.b32.xlu0 %v2975, 64
      %v3295 = vpop.permute.xlu0 %3294
      %3296 = vrot.lane.b32.xlu0 %v2977, 64
      %v3297 = vpop.permute.xlu0 %3296
      %3298 = vrot.lane.b32.xlu0 %v2979, 64
      %v3299 = vpop.permute.xlu0 %3298
      %3300 = vrot.lane.b32.xlu0 %v2981, 64
      %v3301 = vpop.permute.xlu0 %3300
      %3302 = vrot.lane.b32.xlu0 %v2983, 64
      %v3303 = vpop.permute.xlu0 %3302
      %3304 = vrot.lane.b32.xlu0 %v2985, 64
      %v3305 = vpop.permute.xlu0 %3304
      %3306 = vrot.lane.b32.xlu0 %v2987, 64
      %v3307 = vpop.permute.xlu0 %3306
      %3308 = vrot.lane.b32.xlu0 %v2989, 64
      %v3309 = vpop.permute.xlu0 %3308
      %3310 = vrot.lane.b32.xlu0 %v2991, 64
      %v3311 = vpop.permute.xlu0 %3310
      %3312 = vrot.lane.b32.xlu0 %v2993, 64
      %v3313 = vpop.permute.xlu0 %3312
      %3314 = vrot.lane.b32.xlu0 %v2995, 64
      %v3315 = vpop.permute.xlu0 %3314
      %3316 = vrot.lane.b32.xlu0 %v2997, 64
      %v3317 = vpop.permute.xlu0 %3316
      %3318 = vrot.lane.b32.xlu0 %v2999, 64
      %v3319 = vpop.permute.xlu0 %3318
      %3320 = vrot.lane.b32.xlu0 %v3001, 64
      %v3321 = vpop.permute.xlu0 %3320
      %3322 = vrot.lane.b32.xlu0 %v3003, 64
      %v3323 = vpop.permute.xlu0 %3322
      %3324 = vrot.lane.b32.xlu0 %v3005, 64
      %v3325 = vpop.permute.xlu0 %3324
      %3326 = vrot.lane.b32.xlu0 %v3007, 64
      %v3327 = vpop.permute.xlu0 %3326
      %3328 = vrot.lane.b32.xlu0 %v3009, 64
      %v3329 = vpop.permute.xlu0 %3328
      %3330 = vrot.lane.b32.xlu0 %v3011, 64
      %v3331 = vpop.permute.xlu0 %3330
      %3332 = vrot.lane.b32.xlu0 %v3013, 64
      %v3333 = vpop.permute.xlu0 %3332
      %3334 = vrot.lane.b32.xlu0 %v3015, 64
      %v3335 = vpop.permute.xlu0 %3334
      %3336 = vrot.lane.b32.xlu0 %v3017, 64
      %v3337 = vpop.permute.xlu0 %3336
      %3338 = vrot.lane.b32.xlu0 %v3019, 64
      %v3339 = vpop.permute.xlu0 %3338
      %3340 = vrot.lane.b32.xlu0 %v3021, 64
      %v3341 = vpop.permute.xlu0 %3340
      %3342 = vrot.lane.b32.xlu0 %v3023, 64
      %v3343 = vpop.permute.xlu0 %3342
      %3344 = vrot.lane.b32.xlu0 %v3025, 64
      %v3345 = vpop.permute.xlu0 %3344
      %3346 = vrot.lane.b32.xlu0 %v3027, 64
      %v3347 = vpop.permute.xlu0 %3346
      %3348 = vrot.lane.b32.xlu0 %v3029, 64
      %v3349 = vpop.permute.xlu0 %3348
      %3350 = vrot.lane.b32.xlu0 %v3031, 64
      %v3351 = vpop.permute.xlu0 %3350
      %3352 = vrot.lane.b32.xlu0 %v3033, 64
      %v3353 = vpop.permute.xlu0 %3352
      %3354 = vrot.lane.b32.xlu0 %v3035, 64
      %v3355 = vpop.permute.xlu0 %3354
      %3356 = vrot.lane.b32.xlu0 %v3037, 64
      %v3357 = vpop.permute.xlu0 %3356
      %3358 = vrot.lane.b32.xlu0 %v3039, 64
      %v3359 = vpop.permute.xlu0 %3358
      %3360 = vrot.lane.b32.xlu0 %v3041, 64
      %v3361 = vpop.permute.xlu0 %3360
      %3362 = vrot.lane.b32.xlu0 %v3043, 64
      %v3363 = vpop.permute.xlu0 %3362
      %3364 = vrot.lane.b32.xlu0 %v3045, 64
      %v3365 = vpop.permute.xlu0 %3364
      %3366 = vrot.lane.b32.xlu0 %v3047, 64
      %v3367 = vpop.permute.xlu0 %3366
      %3368 = vrot.lane.b32.xlu0 %v3049, 64
      %v3369 = vpop.permute.xlu0 %3368
      %3370 = vrot.lane.b32.xlu0 %v3051, 64
      %v3371 = vpop.permute.xlu0 %3370
      %3372 = vrot.lane.b32.xlu0 %v3053, 64
      %v3373 = vpop.permute.xlu0 %3372
      %3374 = vrot.lane.b32.xlu0 %v3055, 64
      %v3375 = vpop.permute.xlu0 %3374
      %3376 = vrot.lane.b32.xlu0 %v3057, 64
      %v3377 = vpop.permute.xlu0 %3376
      %3378 = vrot.lane.b32.xlu0 %v3059, 64
      %v3379 = vpop.permute.xlu0 %3378
      %3380 = vrot.lane.b32.xlu0 %v3061, 64
      %v3381 = vpop.permute.xlu0 %3380
      %3382 = vrot.lane.b32.xlu0 %v3063, 64
      %v3383 = vpop.permute.xlu0 %3382
      %3384 = vrot.lane.b32.xlu0 %v3065, 64
      %v3385 = vpop.permute.xlu0 %3384
      %3386 = vrot.lane.b32.xlu0 %v3067, 64
      %v3387 = vpop.permute.xlu0 %3386
      %3388 = vrot.lane.b32.xlu0 %v3069, 64
      %v3389 = vpop.permute.xlu0 %3388
      %3390 = vrot.lane.b32.xlu0 %v3071, 64
      %v3391 = vpop.permute.xlu0 %3390
      %3392 = vrot.lane.b32.xlu0 %v3073, 64
      %v3393 = vpop.permute.xlu0 %3392
      %3394 = vrot.lane.b32.xlu0 %v3075, 64
      %v3395 = vpop.permute.xlu0 %3394
      %3396 = vrot.lane.b32.xlu0 %v3077, 64
      %v3397 = vpop.permute.xlu0 %3396
      %3398 = vrot.lane.b32.xlu0 %v3079, 64
      %v3399 = vpop.permute.xlu0 %3398
      %3400 = vrot.lane.b32.xlu0 %v3081, 64
      %v3401 = vpop.permute.xlu0 %3400
      %3402 = vrot.lane.b32.xlu0 %v3083, 64
      %v3403 = vpop.permute.xlu0 %3402
      %3404 = vrot.lane.b32.xlu0 %v3085, 64
      %v3405 = vpop.permute.xlu0 %3404
      %3406 = vrot.lane.b32.xlu0 %v3087, 64
      %v3407 = vpop.permute.xlu0 %3406
      %3408 = vrot.lane.b32.xlu0 %v3089, 64
      %v3409 = vpop.permute.xlu0 %3408
      %3410 = vrot.lane.b32.xlu0 %v3091, 64
      %v3411 = vpop.permute.xlu0 %3410
      %3412 = vrot.lane.b32.xlu0 %v3093, 64
      %v3413 = vpop.permute.xlu0 %3412
      %3414 = vrot.lane.b32.xlu0 %v3095, 64
      %v3415 = vpop.permute.xlu0 %3414
      %3416 = vrot.lane.b32.xlu0 %v3097, 64
      %v3417 = vpop.permute.xlu0 %3416
      %3418 = vrot.lane.b32.xlu0 %v3099, 64
      %v3419 = vpop.permute.xlu0 %3418
      %3420 = vrot.lane.b32.xlu0 %v3101, 64
      %v3421 = vpop.permute.xlu0 %3420
      %3422 = vrot.lane.b32.xlu0 %v3103, 64
      %v3423 = vpop.permute.xlu0 %3422
      %3424 = vrot.lane.b32.xlu0 %v3105, 64
      %v3425 = vpop.permute.xlu0 %3424
      %3426 = vrot.lane.b32.xlu0 %v3107, 64
      %v3427 = vpop.permute.xlu0 %3426
      %3428 = vrot.lane.b32.xlu0 %v3109, 64
      %v3429 = vpop.permute.xlu0 %3428
      %3430 = vrot.lane.b32.xlu0 %v3111, 64
      %v3431 = vpop.permute.xlu0 %3430
      %3432 = vrot.lane.b32.xlu0 %v3113, 64
      %v3433 = vpop.permute.xlu0 %3432
      %3434 = vrot.lane.b32.xlu0 %v3115, 64
      %v3435 = vpop.permute.xlu0 %3434
      %3436 = vrot.lane.b32.xlu0 %v3117, 64
      %v3437 = vpop.permute.xlu0 %3436
      %3438 = vrot.lane.b32.xlu0 %v3119, 64
      %v3439 = vpop.permute.xlu0 %3438
      %3440 = vrot.lane.b32.xlu0 %v3121, 64
      %v3441 = vpop.permute.xlu0 %3440
      %3442 = vrot.lane.b32.xlu0 %v3123, 64
      %v3443 = vpop.permute.xlu0 %3442
      %3444 = vrot.lane.b32.xlu0 %v3125, 64
      %v3445 = vpop.permute.xlu0 %3444
      %3446 = vrot.lane.b32.xlu0 %v3127, 64
      %v3447 = vpop.permute.xlu0 %3446
      %3448 = vrot.lane.b32.xlu0 %v3129, 64
      %v3449 = vpop.permute.xlu0 %3448
      %3450 = vrot.lane.b32.xlu0 %v3131, 64
      %v3451 = vpop.permute.xlu0 %3450
      %3452 = vrot.lane.b32.xlu0 %v3133, 64
      %v3453 = vpop.permute.xlu0 %3452
      %3454 = vrot.lane.b32.xlu0 %v3135, 64
      %v3455 = vpop.permute.xlu0 %3454
      %3456 = vrot.lane.b32.xlu0 %v3137, 64
      %v3457 = vpop.permute.xlu0 %3456
      %3458 = vrot.lane.b32.xlu0 %v3139, 64
      %v3459 = vpop.permute.xlu0 %3458
      %3460 = vrot.lane.b32.xlu0 %v3141, 64
      %v3461 = vpop.permute.xlu0 %3460
      %3462 = vrot.lane.b32.xlu0 %v3143, 64
      %v3463 = vpop.permute.xlu0 %3462
      %3464 = vrot.lane.b32.xlu0 %v3145, 64
      %v3465 = vpop.permute.xlu0 %3464
      %3466 = vrot.lane.b32.xlu0 %v3147, 64
      %v3467 = vpop.permute.xlu0 %3466
      %3468 = vrot.lane.b32.xlu0 %v3149, 64
      %v3469 = vpop.permute.xlu0 %3468
      %3470 = vrot.lane.b32.xlu0 %v3151, 64
      %v3471 = vpop.permute.xlu0 %3470
      %3472 = vrot.lane.b32.xlu0 %v3153, 64
      %v3473 = vpop.permute.xlu0 %3472
      %3474 = vrot.lane.b32.xlu0 %v3155, 64
      %v3475 = vpop.permute.xlu0 %3474
      %3476 = vrot.lane.b32.xlu0 %v3157, 64
      %v3477 = vpop.permute.xlu0 %3476
      %v3638 = vadd.f32 %v2676, %v3159
      %v3639 = vadd.f32 %v2677, %v3161
      %v3640 = vadd.f32 %v2678, %v3163
      %v3641 = vadd.f32 %v2679, %v3165
      %v3642 = vadd.f32 %v2680, %v3167
      %v3643 = vadd.f32 %v2681, %v3169
      %v3644 = vadd.f32 %v2682, %v3171
      %v3645 = vadd.f32 %v2683, %v3173
      %v3646 = vadd.f32 %v2684, %v3175
      %v3647 = vadd.f32 %v2685, %v3177
      %v3648 = vadd.f32 %v2686, %v3179
      %v3649 = vadd.f32 %v2687, %v3181
      %v3650 = vadd.f32 %v2688, %v3183
      %v3651 = vadd.f32 %v2689, %v3185
      %v3652 = vadd.f32 %v2690, %v3187
      %v3653 = vadd.f32 %v2691, %v3189
      %v3654 = vadd.f32 %v2692, %v3191
      %v3655 = vadd.f32 %v2693, %v3193
      %v3656 = vadd.f32 %v2694, %v3195
      %v3657 = vadd.f32 %v2695, %v3197
      %v3658 = vadd.f32 %v2696, %v3199
      %v3659 = vadd.f32 %v2697, %v3201
      %v3660 = vadd.f32 %v2698, %v3203
      %v3661 = vadd.f32 %v2699, %v3205
      %v3662 = vadd.f32 %v2700, %v3207
      %v3663 = vadd.f32 %v2701, %v3209
      %v3664 = vadd.f32 %v2702, %v3211
      %v3665 = vadd.f32 %v2703, %v3213
      %v3666 = vadd.f32 %v2704, %v3215
      %v3667 = vadd.f32 %v2705, %v3217
      %v3668 = vadd.f32 %v2706, %v3219
      %v3669 = vadd.f32 %v2707, %v3221
      %v3670 = vadd.f32 %v2708, %v3223
      %v3671 = vadd.f32 %v2709, %v3225
      %v3672 = vadd.f32 %v2710, %v3227
      %v3673 = vadd.f32 %v2711, %v3229
      %v3674 = vadd.f32 %v2712, %v3231
      %v3675 = vadd.f32 %v2713, %v3233
      %v3676 = vadd.f32 %v2714, %v3235
      %v3677 = vadd.f32 %v2715, %v3237
      %v3678 = vadd.f32 %v2716, %v3239
      %v3679 = vadd.f32 %v2717, %v3241
      %v3680 = vadd.f32 %v2718, %v3243
      %v3681 = vadd.f32 %v2719, %v3245
      %v3682 = vadd.f32 %v2720, %v3247
      %v3683 = vadd.f32 %v2721, %v3249
      %v3684 = vadd.f32 %v2722, %v3251
      %v3685 = vadd.f32 %v2723, %v3253
      %v3686 = vadd.f32 %v2724, %v3255
      %v3687 = vadd.f32 %v2725, %v3257
      %v3688 = vadd.f32 %v2726, %v3259
      %v3689 = vadd.f32 %v2727, %v3261
      %v3690 = vadd.f32 %v2728, %v3263
      %v3691 = vadd.f32 %v2729, %v3265
      %v3692 = vadd.f32 %v2730, %v3267
      %v3693 = vadd.f32 %v2731, %v3269
      %v3694 = vadd.f32 %v2732, %v3271
      %v3695 = vadd.f32 %v2733, %v3273
      %v3696 = vadd.f32 %v2734, %v3275
      %v3697 = vadd.f32 %v2735, %v3277
      %v3698 = vadd.f32 %v2736, %v3279
      %v3699 = vadd.f32 %v2737, %v3281
      %v3700 = vadd.f32 %v2738, %v3283
      %v3701 = vadd.f32 %v2739, %v3285
      %v3702 = vadd.f32 %v2740, %v3287
      %v3703 = vadd.f32 %v2741, %v3289
      %v3704 = vadd.f32 %v2742, %v3291
      %v3705 = vadd.f32 %v2743, %v3293
      %v3706 = vadd.f32 %v2744, %v3295
      %v3707 = vadd.f32 %v2745, %v3297
      %v3708 = vadd.f32 %v2746, %v3299
      %v3709 = vadd.f32 %v2747, %v3301
      %v3710 = vadd.f32 %v2748, %v3303
      %v3711 = vadd.f32 %v2749, %v3305
      %v3712 = vadd.f32 %v2750, %v3307
      %v3713 = vadd.f32 %v2751, %v3309
      %v3714 = vadd.f32 %v2752, %v3311
      %v3715 = vadd.f32 %v2753, %v3313
      %v3716 = vadd.f32 %v2754, %v3315
      %v3717 = vadd.f32 %v2755, %v3317
      %v3718 = vadd.f32 %v2756, %v3319
      %v3719 = vadd.f32 %v2757, %v3321
      %v3720 = vadd.f32 %v2758, %v3323
      %v3721 = vadd.f32 %v2759, %v3325
      %v3722 = vadd.f32 %v2760, %v3327
      %v3723 = vadd.f32 %v2761, %v3329
      %v3724 = vadd.f32 %v2762, %v3331
      %v3725 = vadd.f32 %v2763, %v3333
      %v3726 = vadd.f32 %v2764, %v3335
      %v3727 = vadd.f32 %v2765, %v3337
      %v3728 = vadd.f32 %v2766, %v3339
      %v3729 = vadd.f32 %v2767, %v3341
      %v3730 = vadd.f32 %v2768, %v3343
      %v3731 = vadd.f32 %v2769, %v3345
      %v3732 = vadd.f32 %v2770, %v3347
      %v3733 = vadd.f32 %v2771, %v3349
      %v3734 = vadd.f32 %v2772, %v3351
      %v3735 = vadd.f32 %v2773, %v3353
      %v3736 = vadd.f32 %v2774, %v3355
      %v3737 = vadd.f32 %v2775, %v3357
      %v3738 = vadd.f32 %v2776, %v3359
      %v3739 = vadd.f32 %v2777, %v3361
      %v3740 = vadd.f32 %v2778, %v3363
      %v3741 = vadd.f32 %v2779, %v3365
      %v3742 = vadd.f32 %v2780, %v3367
      %v3743 = vadd.f32 %v2781, %v3369
      %v3744 = vadd.f32 %v2782, %v3371
      %v3745 = vadd.f32 %v2783, %v3373
      %v3746 = vadd.f32 %v2784, %v3375
      %v3747 = vadd.f32 %v2785, %v3377
      %v3748 = vadd.f32 %v2786, %v3379
      %v3749 = vadd.f32 %v2787, %v3381
      %v3750 = vadd.f32 %v2788, %v3383
      %v3751 = vadd.f32 %v2789, %v3385
      %v3752 = vadd.f32 %v2790, %v3387
      %v3753 = vadd.f32 %v2791, %v3389
      %v3754 = vadd.f32 %v2792, %v3391
      %v3755 = vadd.f32 %v2793, %v3393
      %v3756 = vadd.f32 %v2794, %v3395
      %v3757 = vadd.f32 %v2795, %v3397
      %v3758 = vadd.f32 %v2796, %v3399
      %v3759 = vadd.f32 %v2797, %v3401
      %v3760 = vadd.f32 %v2798, %v3403
      %v3761 = vadd.f32 %v2799, %v3405
      %v3762 = vadd.f32 %v2800, %v3407
      %v3763 = vadd.f32 %v2801, %v3409
      %v3764 = vadd.f32 %v2802, %v3411
      %v3765 = vadd.f32 %v2803, %v3413
      %v3766 = vadd.f32 %v2804, %v3415
      %v3767 = vadd.f32 %v2805, %v3417
      %v3768 = vadd.f32 %v2806, %v3419
      %v3769 = vadd.f32 %v2807, %v3421
      %v3770 = vadd.f32 %v2808, %v3423
      %v3771 = vadd.f32 %v2809, %v3425
      %v3772 = vadd.f32 %v2810, %v3427
      %v3773 = vadd.f32 %v2811, %v3429
      %v3774 = vadd.f32 %v2812, %v3431
      %v3775 = vadd.f32 %v2813, %v3433
      %v3776 = vadd.f32 %v2814, %v3435
      %v3777 = vadd.f32 %v2815, %v3437
      %v3778 = vadd.f32 %v2816, %v3439
      %v3779 = vadd.f32 %v2817, %v3441
      %v3780 = vadd.f32 %v2818, %v3443
      %v3781 = vadd.f32 %v2819, %v3445
      %v3782 = vadd.f32 %v2820, %v3447
      %v3783 = vadd.f32 %v2821, %v3449
      %v3784 = vadd.f32 %v2822, %v3451
      %v3785 = vadd.f32 %v2823, %v3453
      %v3786 = vadd.f32 %v2824, %v3455
      %v3787 = vadd.f32 %v2825, %v3457
      %v3788 = vadd.f32 %v2826, %v3459
      %v3789 = vadd.f32 %v2827, %v3461
      %v3790 = vadd.f32 %v2828, %v3463
      %v3791 = vadd.f32 %v2829, %v3465
      %v3792 = vadd.f32 %v2830, %v3467
      %v3793 = vadd.f32 %v2831, %v3469
      %v3794 = vadd.f32 %v2832, %v3471
      %v3795 = vadd.f32 %v2833, %v3473
      %v3796 = vadd.f32 %v2834, %v3475
      %v3797 = vadd.f32 %v2835, %v3477
      %v3798 = vmax.f32 %v3638, %v3643
      %v3799 = vmax.f32 %v3639, %v3644
      %v3800 = vmax.f32 %v3640, %v3645
      %v3801 = vmax.f32 %v3641, %v3646
      %v3802 = vmax.f32 %v3642, %v3647
      %vm3803 = vcmask 261120
      %3804 = vst.msk [vmem:[#allocation2] sm:$0xff] %vm3803, %v3798
      %3805 = vst.msk [vmem:[#allocation2 + $0x8] sm:$0xff] %vm3803, %v3799
      %3806 = vst.msk [vmem:[#allocation2 + $0x10] sm:$0xff] %vm3803, %v3800
      %3807 = vst.msk [vmem:[#allocation2 + $0x18] sm:$0xff] %vm3803, %v3801
      %3808 = vst.msk [vmem:[#allocation2 + $0x20] sm:$0xff] %vm3803, %v3802
      %v3809 = vmax.f32 %v3648, %v3653
      %v3810 = vmax.f32 %v3649, %v3654
      %v3811 = vmax.f32 %v3650, %v3655
      %v3812 = vmax.f32 %v3651, %v3656
      %v3813 = vmax.f32 %v3652, %v3657
      %s3814 = scalar_lea.vmem [#allocation2], 40
      %3815 = vst.msk [vmem:[%s3814] sm:$0xff] %vm3803, %v3809
      %3816 = vst.msk [vmem:[%s3814 + $0x8] sm:$0xff] %vm3803, %v3810
      %3817 = vst.msk [vmem:[%s3814 + $0x10] sm:$0xff] %vm3803, %v3811
      %3818 = vst.msk [vmem:[%s3814 + $0x18] sm:$0xff] %vm3803, %v3812
      %3819 = vst.msk [vmem:[%s3814 + $0x20] sm:$0xff] %vm3803, %v3813
      %v3820 = vmax.f32 %v3658, %v3663
      %v3821 = vmax.f32 %v3659, %v3664
      %v3822 = vmax.f32 %v3660, %v3665
      %v3823 = vmax.f32 %v3661, %v3666
      %v3824 = vmax.f32 %v3662, %v3667
      %s3825 = scalar_lea.vmem [#allocation2], 80
      %3826 = vst.msk [vmem:[%s3825] sm:$0xff] %vm3803, %v3820
      %3827 = vst.msk [vmem:[%s3825 + $0x8] sm:$0xff] %vm3803, %v3821
      %3828 = vst.msk [vmem:[%s3825 + $0x10] sm:$0xff] %vm3803, %v3822
      %3829 = vst.msk [vmem:[%s3825 + $0x18] sm:$0xff] %vm3803, %v3823
      %3830 = vst.msk [vmem:[%s3825 + $0x20] sm:$0xff] %vm3803, %v3824
      %v3831 = vmax.f32 %v3668, %v3673
      %v3832 = vmax.f32 %v3669, %v3674
      %v3833 = vmax.f32 %v3670, %v3675
      %v3834 = vmax.f32 %v3671, %v3676
      %v3835 = vmax.f32 %v3672, %v3677
      %s3836 = scalar_lea.vmem [#allocation2], 120
      %3837 = vst.msk [vmem:[%s3836] sm:$0xff] %vm3803, %v3831
      %3838 = vst.msk [vmem:[%s3836 + $0x8] sm:$0xff] %vm3803, %v3832
      %3839 = vst.msk [vmem:[%s3836 + $0x10] sm:$0xff] %vm3803, %v3833
      %3840 = vst.msk [vmem:[%s3836 + $0x18] sm:$0xff] %vm3803, %v3834
      %3841 = vst.msk [vmem:[%s3836 + $0x20] sm:$0xff] %vm3803, %v3835
      %v3842 = vmax.f32 %v3678, %v3683
      %v3843 = vmax.f32 %v3679, %v3684
      %v3844 = vmax.f32 %v3680, %v3685
      %v3845 = vmax.f32 %v3681, %v3686
      %v3846 = vmax.f32 %v3682, %v3687
      %s3847 = scalar_lea.vmem [#allocation2], 160
      %3848 = vst.msk [vmem:[%s3847] sm:$0xff] %vm3803, %v3842
      %3849 = vst.msk [vmem:[%s3847 + $0x8] sm:$0xff] %vm3803, %v3843
      %3850 = vst.msk [vmem:[%s3847 + $0x10] sm:$0xff] %vm3803, %v3844
      %3851 = vst.msk [vmem:[%s3847 + $0x18] sm:$0xff] %vm3803, %v3845
      %3852 = vst.msk [vmem:[%s3847 + $0x20] sm:$0xff] %vm3803, %v3846
      %v3853 = vmax.f32 %v3688, %v3693
      %v3854 = vmax.f32 %v3689, %v3694
      %v3855 = vmax.f32 %v3690, %v3695
      %v3856 = vmax.f32 %v3691, %v3696
      %v3857 = vmax.f32 %v3692, %v3697
      %s3858 = scalar_lea.vmem [#allocation2], 200
      %3859 = vst.msk [vmem:[%s3858] sm:$0xff] %vm3803, %v3853
      %3860 = vst.msk [vmem:[%s3858 + $0x8] sm:$0xff] %vm3803, %v3854
      %3861 = vst.msk [vmem:[%s3858 + $0x10] sm:$0xff] %vm3803, %v3855
      %3862 = vst.msk [vmem:[%s3858 + $0x18] sm:$0xff] %vm3803, %v3856
      %3863 = vst.msk [vmem:[%s3858 + $0x20] sm:$0xff] %vm3803, %v3857
      %v3864 = vmax.f32 %v3698, %v3703
      %v3865 = vmax.f32 %v3699, %v3704
      %v3866 = vmax.f32 %v3700, %v3705
      %v3867 = vmax.f32 %v3701, %v3706
      %v3868 = vmax.f32 %v3702, %v3707
      %s3869 = scalar_lea.vmem [#allocation2], 240
      %3870 = vst.msk [vmem:[%s3869] sm:$0xff] %vm3803, %v3864
      %3871 = vst.msk [vmem:[%s3869 + $0x8] sm:$0xff] %vm3803, %v3865
      %3872 = vst.msk [vmem:[%s3869 + $0x10] sm:$0xff] %vm3803, %v3866
      %3873 = vst.msk [vmem:[%s3869 + $0x18] sm:$0xff] %vm3803, %v3867
      %3874 = vst.msk [vmem:[%s3869 + $0x20] sm:$0xff] %vm3803, %v3868
      %v3875 = vmax.f32 %v3708, %v3713
      %v3876 = vmax.f32 %v3709, %v3714
      %v3877 = vmax.f32 %v3710, %v3715
      %v3878 = vmax.f32 %v3711, %v3716
      %v3879 = vmax.f32 %v3712, %v3717
      %s3880 = scalar_lea.vmem [#allocation2], 280
      %3881 = vst.msk [vmem:[%s3880] sm:$0xff] %vm3803, %v3875
      %3882 = vst.msk [vmem:[%s3880 + $0x8] sm:$0xff] %vm3803, %v3876
      %3883 = vst.msk [vmem:[%s3880 + $0x10] sm:$0xff] %vm3803, %v3877
      %3884 = vst.msk [vmem:[%s3880 + $0x18] sm:$0xff] %vm3803, %v3878
      %3885 = vst.msk [vmem:[%s3880 + $0x20] sm:$0xff] %vm3803, %v3879
      %v3886 = vmax.f32 %v3718, %v3723
      %v3887 = vmax.f32 %v3719, %v3724
      %v3888 = vmax.f32 %v3720, %v3725
      %v3889 = vmax.f32 %v3721, %v3726
      %v3890 = vmax.f32 %v3722, %v3727
      %s3891 = scalar_lea.vmem [#allocation2], 320
      %3892 = vst.msk [vmem:[%s3891] sm:$0xff] %vm3803, %v3886
      %3893 = vst.msk [vmem:[%s3891 + $0x8] sm:$0xff] %vm3803, %v3887
      %3894 = vst.msk [vmem:[%s3891 + $0x10] sm:$0xff] %vm3803, %v3888
      %3895 = vst.msk [vmem:[%s3891 + $0x18] sm:$0xff] %vm3803, %v3889
      %3896 = vst.msk [vmem:[%s3891 + $0x20] sm:$0xff] %vm3803, %v3890
      %v3897 = vmax.f32 %v3728, %v3733
      %v3898 = vmax.f32 %v3729, %v3734
      %v3899 = vmax.f32 %v3730, %v3735
      %v3900 = vmax.f32 %v3731, %v3736
      %v3901 = vmax.f32 %v3732, %v3737
      %s3902 = scalar_lea.vmem [#allocation2], 360
      %3903 = vst.msk [vmem:[%s3902] sm:$0xff] %vm3803, %v3897
      %3904 = vst.msk [vmem:[%s3902 + $0x8] sm:$0xff] %vm3803, %v3898
      %3905 = vst.msk [vmem:[%s3902 + $0x10] sm:$0xff] %vm3803, %v3899
      %3906 = vst.msk [vmem:[%s3902 + $0x18] sm:$0xff] %vm3803, %v3900
      %3907 = vst.msk [vmem:[%s3902 + $0x20] sm:$0xff] %vm3803, %v3901
      %v3908 = vmax.f32 %v3738, %v3743
      %v3909 = vmax.f32 %v3739, %v3744
      %v3910 = vmax.f32 %v3740, %v3745
      %v3911 = vmax.f32 %v3741, %v3746
      %v3912 = vmax.f32 %v3742, %v3747
      %s3913 = scalar_lea.vmem [#allocation2], 400
      %3914 = vst.msk [vmem:[%s3913] sm:$0xff] %vm3803, %v3908
      %3915 = vst.msk [vmem:[%s3913 + $0x8] sm:$0xff] %vm3803, %v3909
      %3916 = vst.msk [vmem:[%s3913 + $0x10] sm:$0xff] %vm3803, %v3910
      %3917 = vst.msk [vmem:[%s3913 + $0x18] sm:$0xff] %vm3803, %v3911
      %3918 = vst.msk [vmem:[%s3913 + $0x20] sm:$0xff] %vm3803, %v3912
      %v3919 = vmax.f32 %v3748, %v3753
      %v3920 = vmax.f32 %v3749, %v3754
      %v3921 = vmax.f32 %v3750, %v3755
      %v3922 = vmax.f32 %v3751, %v3756
      %v3923 = vmax.f32 %v3752, %v3757
      %s3924 = scalar_lea.vmem [#allocation2], 440
      %3925 = vst.msk [vmem:[%s3924] sm:$0xff] %vm3803, %v3919
      %3926 = vst.msk [vmem:[%s3924 + $0x8] sm:$0xff] %vm3803, %v3920
      %3927 = vst.msk [vmem:[%s3924 + $0x10] sm:$0xff] %vm3803, %v3921
      %3928 = vst.msk [vmem:[%s3924 + $0x18] sm:$0xff] %vm3803, %v3922
      %3929 = vst.msk [vmem:[%s3924 + $0x20] sm:$0xff] %vm3803, %v3923
      %v3930 = vmax.f32 %v3758, %v3763
      %v3931 = vmax.f32 %v3759, %v3764
      %v3932 = vmax.f32 %v3760, %v3765
      %v3933 = vmax.f32 %v3761, %v3766
      %v3934 = vmax.f32 %v3762, %v3767
      %s3935 = scalar_lea.vmem [#allocation2], 480
      %3936 = vst.msk [vmem:[%s3935] sm:$0xff] %vm3803, %v3930
      %3937 = vst.msk [vmem:[%s3935 + $0x8] sm:$0xff] %vm3803, %v3931
      %3938 = vst.msk [vmem:[%s3935 + $0x10] sm:$0xff] %vm3803, %v3932
      %3939 = vst.msk [vmem:[%s3935 + $0x18] sm:$0xff] %vm3803, %v3933
      %3940 = vst.msk [vmem:[%s3935 + $0x20] sm:$0xff] %vm3803, %v3934
      %v3941 = vmax.f32 %v3768, %v3773
      %v3942 = vmax.f32 %v3769, %v3774
      %v3943 = vmax.f32 %v3770, %v3775
      %v3944 = vmax.f32 %v3771, %v3776
      %v3945 = vmax.f32 %v3772, %v3777
      %s3946 = scalar_lea.vmem [#allocation2], 520
      %3947 = vst.msk [vmem:[%s3946] sm:$0xff] %vm3803, %v3941
      %3948 = vst.msk [vmem:[%s3946 + $0x8] sm:$0xff] %vm3803, %v3942
      %3949 = vst.msk [vmem:[%s3946 + $0x10] sm:$0xff] %vm3803, %v3943
      %3950 = vst.msk [vmem:[%s3946 + $0x18] sm:$0xff] %vm3803, %v3944
      %3951 = vst.msk [vmem:[%s3946 + $0x20] sm:$0xff] %vm3803, %v3945
      %v3952 = vmax.f32 %v3778, %v3783
      %v3953 = vmax.f32 %v3779, %v3784
      %v3954 = vmax.f32 %v3780, %v3785
      %v3955 = vmax.f32 %v3781, %v3786
      %v3956 = vmax.f32 %v3782, %v3787
      %s3957 = scalar_lea.vmem [#allocation2], 560
      %3958 = vst.msk [vmem:[%s3957] sm:$0xff] %vm3803, %v3952
      %3959 = vst.msk [vmem:[%s3957 + $0x8] sm:$0xff] %vm3803, %v3953
      %3960 = vst.msk [vmem:[%s3957 + $0x10] sm:$0xff] %vm3803, %v3954
      %3961 = vst.msk [vmem:[%s3957 + $0x18] sm:$0xff] %vm3803, %v3955
      %3962 = vst.msk [vmem:[%s3957 + $0x20] sm:$0xff] %vm3803, %v3956
      %v3963 = vmax.f32 %v3788, %v3793
      %v3964 = vmax.f32 %v3789, %v3794
      %v3965 = vmax.f32 %v3790, %v3795
      %v3966 = vmax.f32 %v3791, %v3796
      %v3967 = vmax.f32 %v3792, %v3797
      %s3968 = scalar_lea.vmem [#allocation2], 600
      %3969 = vst.msk [vmem:[%s3968] sm:$0xff] %vm3803, %v3963
      %3970 = vst.msk [vmem:[%s3968 + $0x8] sm:$0xff] %vm3803, %v3964
      %3971 = vst.msk [vmem:[%s3968 + $0x10] sm:$0xff] %vm3803, %v3965
      %3972 = vst.msk [vmem:[%s3968 + $0x18] sm:$0xff] %vm3803, %v3966
      %3973 = vst.msk [vmem:[%s3968 + $0x20] sm:$0xff] %vm3803, %v3967
      %v3974 = vld [vmem:[#allocation2] ss:$2 sm:$0xff]
      %s3975 = scalar_lea.vmem [#allocation2], 16
      %v3976 = vld [vmem:[%s3975] ss:$2 sm:$0xff]
      %s3977 = scalar_lea.vmem [#allocation2], 40
      %v3978 = vld [vmem:[%s3977] ss:$2 sm:$0xff]
      %s3979 = scalar_lea.vmem [#allocation2], 56
      %v3980 = vld [vmem:[%s3979] ss:$2 sm:$0xff]
      %s3981 = scalar_lea.vmem [#allocation2], 80
      %v3982 = vld [vmem:[%s3981] ss:$2 sm:$0xff]
      %s3983 = scalar_lea.vmem [#allocation2], 96
      %v3984 = vld [vmem:[%s3983] ss:$2 sm:$0xff]
      %s3985 = scalar_lea.vmem [#allocation2], 120
      %v3986 = vld [vmem:[%s3985] ss:$2 sm:$0xff]
      %s3987 = scalar_lea.vmem [#allocation2], 136
      %v3988 = vld [vmem:[%s3987] ss:$2 sm:$0xff]
      %s3989 = scalar_lea.vmem [#allocation2], 160
      %v3990 = vld [vmem:[%s3989] ss:$2 sm:$0xff]
      %s3991 = scalar_lea.vmem [#allocation2], 176
      %v3992 = vld [vmem:[%s3991] ss:$2 sm:$0xff]
      %s3993 = scalar_lea.vmem [#allocation2], 200
      %v3994 = vld [vmem:[%s3993] ss:$2 sm:$0xff]
      %s3995 = scalar_lea.vmem [#allocation2], 216
      %v3996 = vld [vmem:[%s3995] ss:$2 sm:$0xff]
      %s3997 = scalar_lea.vmem [#allocation2], 240
      %v3998 = vld [vmem:[%s3997] ss:$2 sm:$0xff]
      %s3999 = scalar_lea.vmem [#allocation2], 256
      %v4000 = vld [vmem:[%s3999] ss:$2 sm:$0xff]
      %s4001 = scalar_lea.vmem [#allocation2], 280
      %v4002 = vld [vmem:[%s4001] ss:$2 sm:$0xff]
      %s4003 = scalar_lea.vmem [#allocation2], 296
      %v4004 = vld [vmem:[%s4003] ss:$2 sm:$0xff]
      %s4005 = scalar_lea.vmem [#allocation2], 320
      %v4006 = vld [vmem:[%s4005] ss:$2 sm:$0xff]
      %s4007 = scalar_lea.vmem [#allocation2], 336
      %v4008 = vld [vmem:[%s4007] ss:$2 sm:$0xff]
      %s4009 = scalar_lea.vmem [#allocation2], 360
      %v4010 = vld [vmem:[%s4009] ss:$2 sm:$0xff]
      %s4011 = scalar_lea.vmem [#allocation2], 376
      %v4012 = vld [vmem:[%s4011] ss:$2 sm:$0xff]
      %s4013 = scalar_lea.vmem [#allocation2], 400
      %v4014 = vld [vmem:[%s4013] ss:$2 sm:$0xff]
      %s4015 = scalar_lea.vmem [#allocation2], 416
      %v4016 = vld [vmem:[%s4015] ss:$2 sm:$0xff]
      %s4017 = scalar_lea.vmem [#allocation2], 440
      %v4018 = vld [vmem:[%s4017] ss:$2 sm:$0xff]
      %s4019 = scalar_lea.vmem [#allocation2], 456
      %v4020 = vld [vmem:[%s4019] ss:$2 sm:$0xff]
      %s4021 = scalar_lea.vmem [#allocation2], 480
      %v4022 = vld [vmem:[%s4021] ss:$2 sm:$0xff]
      %s4023 = scalar_lea.vmem [#allocation2], 496
      %v4024 = vld [vmem:[%s4023] ss:$2 sm:$0xff]
      %s4025 = scalar_lea.vmem [#allocation2], 520
      %v4026 = vld [vmem:[%s4025] ss:$2 sm:$0xff]
      %s4027 = scalar_lea.vmem [#allocation2], 536
      %v4028 = vld [vmem:[%s4027] ss:$2 sm:$0xff]
      %s4029 = scalar_lea.vmem [#allocation2], 560
      %v4030 = vld [vmem:[%s4029] ss:$2 sm:$0xff]
      %s4031 = scalar_lea.vmem [#allocation2], 576
      %v4032 = vld [vmem:[%s4031] ss:$2 sm:$0xff]
      %s4033 = scalar_lea.vmem [#allocation2], 600
      %v4034 = vld [vmem:[%s4033] ss:$2 sm:$0xff]
      %s4035 = scalar_lea.vmem [#allocation2], 616
      %v4036 = vld [vmem:[%s4035] ss:$2 sm:$0xff]
      %s4037 = scalar_lea.vmem [#allocation2], 1
      %v4038 = vld [vmem:[%s4037] ss:$2 sm:$0xff]
      %s4039 = scalar_lea.vmem [#allocation2], 17
      %v4040 = vld [vmem:[%s4039] ss:$2 sm:$0xff]
      %s4041 = scalar_lea.vmem [#allocation2], 41
      %v4042 = vld [vmem:[%s4041] ss:$2 sm:$0xff]
      %s4043 = scalar_lea.vmem [#allocation2], 57
      %v4044 = vld [vmem:[%s4043] ss:$2 sm:$0xff]
      %s4045 = scalar_lea.vmem [#allocation2], 81
      %v4046 = vld [vmem:[%s4045] ss:$2 sm:$0xff]
      %s4047 = scalar_lea.vmem [#allocation2], 97
      %v4048 = vld [vmem:[%s4047] ss:$2 sm:$0xff]
      %s4049 = scalar_lea.vmem [#allocation2], 121
      %v4050 = vld [vmem:[%s4049] ss:$2 sm:$0xff]
      %s4051 = scalar_lea.vmem [#allocation2], 137
      %v4052 = vld [vmem:[%s4051] ss:$2 sm:$0xff]
      %s4053 = scalar_lea.vmem [#allocation2], 161
      %v4054 = vld [vmem:[%s4053] ss:$2 sm:$0xff]
      %s4055 = scalar_lea.vmem [#allocation2], 177
      %v4056 = vld [vmem:[%s4055] ss:$2 sm:$0xff]
      %s4057 = scalar_lea.vmem [#allocation2], 201
      %v4058 = vld [vmem:[%s4057] ss:$2 sm:$0xff]
      %s4059 = scalar_lea.vmem [#allocation2], 217
      %v4060 = vld [vmem:[%s4059] ss:$2 sm:$0xff]
      %s4061 = scalar_lea.vmem [#allocation2], 241
      %v4062 = vld [vmem:[%s4061] ss:$2 sm:$0xff]
      %s4063 = scalar_lea.vmem [#allocation2], 257
      %v4064 = vld [vmem:[%s4063] ss:$2 sm:$0xff]
      %s4065 = scalar_lea.vmem [#allocation2], 281
      %v4066 = vld [vmem:[%s4065] ss:$2 sm:$0xff]
      %s4067 = scalar_lea.vmem [#allocation2], 297
      %v4068 = vld [vmem:[%s4067] ss:$2 sm:$0xff]
      %s4069 = scalar_lea.vmem [#allocation2], 321
      %v4070 = vld [vmem:[%s4069] ss:$2 sm:$0xff]
      %s4071 = scalar_lea.vmem [#allocation2], 337
      %v4072 = vld [vmem:[%s4071] ss:$2 sm:$0xff]
      %s4073 = scalar_lea.vmem [#allocation2], 361
      %v4074 = vld [vmem:[%s4073] ss:$2 sm:$0xff]
      %s4075 = scalar_lea.vmem [#allocation2], 377
      %v4076 = vld [vmem:[%s4075] ss:$2 sm:$0xff]
      %s4077 = scalar_lea.vmem [#allocation2], 401
      %v4078 = vld [vmem:[%s4077] ss:$2 sm:$0xff]
      %s4079 = scalar_lea.vmem [#allocation2], 417
      %v4080 = vld [vmem:[%s4079] ss:$2 sm:$0xff]
      %s4081 = scalar_lea.vmem [#allocation2], 441
      %v4082 = vld [vmem:[%s4081] ss:$2 sm:$0xff]
      %s4083 = scalar_lea.vmem [#allocation2], 457
      %v4084 = vld [vmem:[%s4083] ss:$2 sm:$0xff]
      %s4085 = scalar_lea.vmem [#allocation2], 481
      %v4086 = vld [vmem:[%s4085] ss:$2 sm:$0xff]
      %s4087 = scalar_lea.vmem [#allocation2], 497
      %v4088 = vld [vmem:[%s4087] ss:$2 sm:$0xff]
      %s4089 = scalar_lea.vmem [#allocation2], 521
      %v4090 = vld [vmem:[%s4089] ss:$2 sm:$0xff]
      %s4091 = scalar_lea.vmem [#allocation2], 537
      %v4092 = vld [vmem:[%s4091] ss:$2 sm:$0xff]
      %s4093 = scalar_lea.vmem [#allocation2], 561
      %v4094 = vld [vmem:[%s4093] ss:$2 sm:$0xff]
      %s4095 = scalar_lea.vmem [#allocation2], 577
      %v4096 = vld [vmem:[%s4095] ss:$2 sm:$0xff]
      %s4097 = scalar_lea.vmem [#allocation2], 601
      %v4098 = vld [vmem:[%s4097] ss:$2 sm:$0xff]
      %s4099 = scalar_lea.vmem [#allocation2], 617
      %v4100 = vld [vmem:[%s4099] ss:$2 sm:$0xff]
      %v4101 = vmax.f32 %v3974, %v4038
      %v4102 = vmax.f32 %v3976, %v4040
      %v4103 = vmax.f32 %v3978, %v4042
      %v4104 = vmax.f32 %v3980, %v4044
      %v4105 = vmax.f32 %v3982, %v4046
      %v4106 = vmax.f32 %v3984, %v4048
      %v4107 = vmax.f32 %v3986, %v4050
      %v4108 = vmax.f32 %v3988, %v4052
      %v4109 = vmax.f32 %v3990, %v4054
      %v4110 = vmax.f32 %v3992, %v4056
      %v4111 = vmax.f32 %v3994, %v4058
      %v4112 = vmax.f32 %v3996, %v4060
      %v4113 = vmax.f32 %v3998, %v4062
      %v4114 = vmax.f32 %v4000, %v4064
      %v4115 = vmax.f32 %v4002, %v4066
      %v4116 = vmax.f32 %v4004, %v4068
      %v4117 = vmax.f32 %v4006, %v4070
      %v4118 = vmax.f32 %v4008, %v4072
      %v4119 = vmax.f32 %v4010, %v4074
      %v4120 = vmax.f32 %v4012, %v4076
      %v4121 = vmax.f32 %v4014, %v4078
      %v4122 = vmax.f32 %v4016, %v4080
      %v4123 = vmax.f32 %v4018, %v4082
      %v4124 = vmax.f32 %v4020, %v4084
      %v4125 = vmax.f32 %v4022, %v4086
      %v4126 = vmax.f32 %v4024, %v4088
      %v4127 = vmax.f32 %v4026, %v4090
      %v4128 = vmax.f32 %v4028, %v4092
      %v4129 = vmax.f32 %v4030, %v4094
      %v4130 = vmax.f32 %v4032, %v4096
      %v4131 = vmax.f32 %v4034, %v4098
      %v4132 = vmax.f32 %v4036, %v4100
      %v4133 = vld [vmem:[%s2] sm:$0x1]
      %v4135 = vlaneseq
      %v4136 = vshrl.u32 %v4135, 7
      %v4137 = vsub.s32 0, %v4136
      %v4138 = vrot.slane %v4133, %v4137
      %v4140 = vadd.f32 %v4101, %v4138
      %v4141 = vadd.f32 %v4102, %v4138
      %v4142 = vadd.f32 %v4103, %v4138
      %v4143 = vadd.f32 %v4104, %v4138
      %v4144 = vadd.f32 %v4105, %v4138
      %v4145 = vadd.f32 %v4106, %v4138
      %v4146 = vadd.f32 %v4107, %v4138
      %v4147 = vadd.f32 %v4108, %v4138
      %v4148 = vadd.f32 %v4109, %v4138
      %v4149 = vadd.f32 %v4110, %v4138
      %v4150 = vadd.f32 %v4111, %v4138
      %v4151 = vadd.f32 %v4112, %v4138
      %v4152 = vadd.f32 %v4113, %v4138
      %v4153 = vadd.f32 %v4114, %v4138
      %v4154 = vadd.f32 %v4115, %v4138
      %v4155 = vadd.f32 %v4116, %v4138
      %v4156 = vadd.f32 %v4117, %v4138
      %v4157 = vadd.f32 %v4118, %v4138
      %v4158 = vadd.f32 %v4119, %v4138
      %v4159 = vadd.f32 %v4120, %v4138
      %v4160 = vadd.f32 %v4121, %v4138
      %v4161 = vadd.f32 %v4122, %v4138
      %v4162 = vadd.f32 %v4123, %v4138
      %v4163 = vadd.f32 %v4124, %v4138
      %v4164 = vadd.f32 %v4125, %v4138
      %v4165 = vadd.f32 %v4126, %v4138
      %v4166 = vadd.f32 %v4127, %v4138
      %v4167 = vadd.f32 %v4128, %v4138
      %v4168 = vadd.f32 %v4129, %v4138
      %v4169 = vadd.f32 %v4130, %v4138
      %v4170 = vadd.f32 %v4131, %v4138
      %v4171 = vadd.f32 %v4132, %v4138
      %v4172 = vmax.f32 %v4140, 0.0
      %v4173 = vmax.f32 %v4141, 0.0
      %v4174 = vmax.f32 %v4142, 0.0
      %v4175 = vmax.f32 %v4143, 0.0
      %v4176 = vmax.f32 %v4144, 0.0
      %v4177 = vmax.f32 %v4145, 0.0
      %v4178 = vmax.f32 %v4146, 0.0
      %v4179 = vmax.f32 %v4147, 0.0
      %v4180 = vmax.f32 %v4148, 0.0
      %v4181 = vmax.f32 %v4149, 0.0
      %v4182 = vmax.f32 %v4150, 0.0
      %v4183 = vmax.f32 %v4151, 0.0
      %v4184 = vmax.f32 %v4152, 0.0
      %v4185 = vmax.f32 %v4153, 0.0
      %v4186 = vmax.f32 %v4154, 0.0
      %v4187 = vmax.f32 %v4155, 0.0
      %v4188 = vmax.f32 %v4156, 0.0
      %v4189 = vmax.f32 %v4157, 0.0
      %v4190 = vmax.f32 %v4158, 0.0
      %v4191 = vmax.f32 %v4159, 0.0
      %v4192 = vmax.f32 %v4160, 0.0
      %v4193 = vmax.f32 %v4161, 0.0
      %v4194 = vmax.f32 %v4162, 0.0
      %v4195 = vmax.f32 %v4163, 0.0
      %v4196 = vmax.f32 %v4164, 0.0
      %v4197 = vmax.f32 %v4165, 0.0
      %v4198 = vmax.f32 %v4166, 0.0
      %v4199 = vmax.f32 %v4167, 0.0
      %v4200 = vmax.f32 %v4168, 0.0
      %v4201 = vmax.f32 %v4169, 0.0
      %v4202 = vmax.f32 %v4170, 0.0
      %v4203 = vmax.f32 %v4171, 0.0
      %v4204 = vpack.c.bf16 %v4173, %v4172
      %v4205 = vpack.c.bf16 %v4175, %v4174
      %v4206 = vpack.c.bf16 %v4177, %v4176
      %v4207 = vpack.c.bf16 %v4179, %v4178
      %v4208 = vpack.c.bf16 %v4181, %v4180
      %v4209 = vpack.c.bf16 %v4183, %v4182
      %v4210 = vpack.c.bf16 %v4185, %v4184
      %v4211 = vpack.c.bf16 %v4187, %v4186
      %v4212 = vpack.c.bf16 %v4189, %v4188
      %v4213 = vpack.c.bf16 %v4191, %v4190
      %v4214 = vpack.c.bf16 %v4193, %v4192
      %v4215 = vpack.c.bf16 %v4195, %v4194
      %v4216 = vpack.c.bf16 %v4197, %v4196
      %v4217 = vpack.c.bf16 %v4199, %v4198
      %v4218 = vpack.c.bf16 %v4201, %v4200
      %v4219 = vpack.c.bf16 %v4203, %v4202
      %v4236 = vunpack.c.l.b16 %v4204
      %v4237 = vunpack.c.h.b16 %v4204
      %v4238 = vunpack.c.l.b16 %v4205
      %v4239 = vunpack.c.h.b16 %v4205
      %v4240 = vunpack.c.l.b16 %v4206
      %v4241 = vunpack.c.h.b16 %v4206
      %v4242 = vunpack.c.l.b16 %v4207
      %v4243 = vunpack.c.h.b16 %v4207
      %v4244 = vunpack.c.l.b16 %v4208
      %v4245 = vunpack.c.h.b16 %v4208
      %v4246 = vunpack.c.l.b16 %v4209
      %v4247 = vunpack.c.h.b16 %v4209
      %v4248 = vunpack.c.l.b16 %v4210
      %v4249 = vunpack.c.h.b16 %v4210
      %v4250 = vunpack.c.l.b16 %v4211
      %v4251 = vunpack.c.h.b16 %v4211
      %v4252 = vunpack.c.l.b16 %v4212
      %v4253 = vunpack.c.h.b16 %v4212
      %v4254 = vunpack.c.l.b16 %v4213
      %v4255 = vunpack.c.h.b16 %v4213
      %v4256 = vunpack.c.l.b16 %v4214
      %v4257 = vunpack.c.h.b16 %v4214
      %v4258 = vunpack.c.l.b16 %v4215
      %v4259 = vunpack.c.h.b16 %v4215
      %v4260 = vunpack.c.l.b16 %v4216
      %v4261 = vunpack.c.h.b16 %v4216
      %v4262 = vunpack.c.l.b16 %v4217
      %v4263 = vunpack.c.h.b16 %v4217
      %v4264 = vunpack.c.l.b16 %v4218
      %v4265 = vunpack.c.h.b16 %v4218
      %v4266 = vunpack.c.l.b16 %v4219
      %v4267 = vunpack.c.h.b16 %v4219
      %v4268 = vpack.c.b16 %v4236, %v4236
      %v4269 = vpack.c.b16 %v4237, %v4237
      %v4270 = vpack.c.b16 %v4238, %v4238
      %v4271 = vpack.c.b16 %v4239, %v4239
      %v4272 = vpack.c.b16 %v4240, %v4240
      %v4273 = vpack.c.b16 %v4241, %v4241
      %v4274 = vpack.c.b16 %v4242, %v4242
      %v4275 = vpack.c.b16 %v4243, %v4243
      %v4276 = vpack.c.b16 %v4244, %v4244
      %v4277 = vpack.c.b16 %v4245, %v4245
      %v4278 = vpack.c.b16 %v4246, %v4246
      %v4279 = vpack.c.b16 %v4247, %v4247
      %v4280 = vpack.c.b16 %v4248, %v4248
      %v4281 = vpack.c.b16 %v4249, %v4249
      %v4282 = vpack.c.b16 %v4250, %v4250
      %v4283 = vpack.c.b16 %v4251, %v4251
      %v4284 = vpack.c.b16 %v4252, %v4252
      %v4285 = vpack.c.b16 %v4253, %v4253
      %v4286 = vpack.c.b16 %v4254, %v4254
      %v4287 = vpack.c.b16 %v4255, %v4255
      %v4288 = vpack.c.b16 %v4256, %v4256
      %v4289 = vpack.c.b16 %v4257, %v4257
      %v4290 = vpack.c.b16 %v4258, %v4258
      %v4291 = vpack.c.b16 %v4259, %v4259
      %v4292 = vpack.c.b16 %v4260, %v4260
      %v4293 = vpack.c.b16 %v4261, %v4261
      %v4294 = vpack.c.b16 %v4262, %v4262
      %v4295 = vpack.c.b16 %v4263, %v4263
      %v4296 = vpack.c.b16 %v4264, %v4264
      %v4297 = vpack.c.b16 %v4265, %v4265
      %v4298 = vpack.c.b16 %v4266, %v4266
      %v4299 = vpack.c.b16 %v4267, %v4267
      %vm4332 = vcmask 257024
      %4333 = vst.msk [vmem:[%s208] sm:$0xf] %vm4332, %v4268
      %4334 = vst.msk [vmem:[%s208 + $0x4] sm:$0xf] %vm4332, %v4269
      %4335 = vst.msk [vmem:[%s208 + $0x8] sm:$0xf] %vm4332, %v4270
      %4336 = vst.msk [vmem:[%s208 + $0xc] sm:$0xf] %vm4332, %v4271
      %4337 = vst.msk [vmem:[%s208 + $0x10] sm:$0xf] %vm4332, %v4272
      %4338 = vst.msk [vmem:[%s208 + $0x14] sm:$0xf] %vm4332, %v4273
      %4339 = vst.msk [vmem:[%s208 + $0x18] sm:$0xf] %vm4332, %v4274
      %4340 = vst.msk [vmem:[%s208 + $0x1c] sm:$0xf] %vm4332, %v4275
      %4341 = vst.msk [vmem:[%s208 + $0x20] sm:$0xf] %vm4332, %v4276
      %4342 = vst.msk [vmem:[%s208 + $0x24] sm:$0xf] %vm4332, %v4277
      %4343 = vst.msk [vmem:[%s208 + $0x28] sm:$0xf] %vm4332, %v4278
      %4344 = vst.msk [vmem:[%s208 + $0x2c] sm:$0xf] %vm4332, %v4279
      %4345 = vst.msk [vmem:[%s208 + $0x30] sm:$0xf] %vm4332, %v4280
      %4346 = vst.msk [vmem:[%s208 + $0x34] sm:$0xf] %vm4332, %v4281
      %4347 = vst.msk [vmem:[%s208 + $0x38] sm:$0xf] %vm4332, %v4282
      %4348 = vst.msk [vmem:[%s208 + $0x3c] sm:$0xf] %vm4332, %v4283
      %4349 = vst.msk [vmem:[%s208 + $0x40] sm:$0xf] %vm4332, %v4284
      %4350 = vst.msk [vmem:[%s208 + $0x44] sm:$0xf] %vm4332, %v4285
      %4351 = vst.msk [vmem:[%s208 + $0x48] sm:$0xf] %vm4332, %v4286
      %4352 = vst.msk [vmem:[%s208 + $0x4c] sm:$0xf] %vm4332, %v4287
      %4353 = vst.msk [vmem:[%s208 + $0x50] sm:$0xf] %vm4332, %v4288
      %4354 = vst.msk [vmem:[%s208 + $0x54] sm:$0xf] %vm4332, %v4289
      %4355 = vst.msk [vmem:[%s208 + $0x58] sm:$0xf] %vm4332, %v4290
      %4356 = vst.msk [vmem:[%s208 + $0x5c] sm:$0xf] %vm4332, %v4291
      %4357 = vst.msk [vmem:[%s208 + $0x60] sm:$0xf] %vm4332, %v4292
      %4358 = vst.msk [vmem:[%s208 + $0x64] sm:$0xf] %vm4332, %v4293
      %4359 = vst.msk [vmem:[%s208 + $0x68] sm:$0xf] %vm4332, %v4294
      %4360 = vst.msk [vmem:[%s208 + $0x6c] sm:$0xf] %vm4332, %v4295
      %4361 = vst.msk [vmem:[%s208 + $0x70] sm:$0xf] %vm4332, %v4296
      %4362 = vst.msk [vmem:[%s208 + $0x74] sm:$0xf] %vm4332, %v4297
      %4363 = vst.msk [vmem:[%s208 + $0x78] sm:$0xf] %vm4332, %v4298
      %4364 = vst.msk [vmem:[%s208 + $0x7c] sm:$0xf] %vm4332, %v4299
      %s4365 = smul.u32 16, %s19
      %p4366 = scmp.lt.s32.totalorder %s18, 1
      %s4367 = scalar_select %p4366, %s18, 1
      %p4368 = scmp.lt.s32.totalorder %s4365, 15
      %s4369 = scalar_select %p4368, %s4365, 15
      %s4370 = smul.addr %s4369, 2
      %s4371 = smul.addr %s4367, 32
      %s4372 = sadd.s32 %s4370, %s4371
      %s4373 = smul.addr %s4372, 4
      %s4374 = scalar_lea.vmem %s3, %s4373
      // Predicated region
      $region33: #{hair_feature_extractor_forward.4} parent=31 // pred_check
        %p4375 = pneg %p116
      $region34: #{hair_feature_extractor_forward.4} parent=31 // pred_check_branch
        %4377 = sbr.rel (%p4375) target = $region36
      $region35: #{hair_feature_extractor_forward.4} parent=31 // pred_region
        %s4378 = smul.u32 16, %s19
      $region36: #{hair_feature_extractor_forward.4} parent=31 // pred_fallthru
        _
    $region32: #{hair_feature_extractor_forward.4} parent=5 // pred_fallthru
      _
    %p4379 = scmp.le.s32.totalorder 2, %s9
    // Predicated region
    $region37: #{hair_feature_extractor_forward.4} parent=5 // pred_check
      %p4380 = pneg %p4379
    $region38: #{hair_feature_extractor_forward.4} parent=5 // pred_check_branch
      %4382 = sbr.rel (%p4380) target = $region40
    $region39: #{hair_feature_extractor_forward.4} parent=5 // pred_region
      %s4383 = ssub.s32 %s9, 2
      // Predicated region
      $region41: #{hair_feature_extractor_forward.4} parent=39 // pred_check
        %p4384 = pneg %p122
      $region42: #{hair_feature_extractor_forward.4} parent=39 // pred_check_branch
        %4386 = sbr.rel (%p4384) target = $region44
      $region43: #{hair_feature_extractor_forward.4} parent=39 // pred_region
        %s4387 = smul.u32 16, %s21
        %p4388 = scmp.lt.s32.totalorder %s20, 1
        %s4389 = scalar_select %p4388, %s20, 1
        %p4390 = scmp.lt.s32.totalorder %s4387, 15
        %s4391 = scalar_select %p4390, %s4387, 15
        %s4392 = smul.addr %s4391, 2
        %s4393 = smul.addr %s4389, 32
        %s4394 = sadd.s32 %s4392, %s4393
        %s4395 = smul.addr %s4394, 4
        %s4396 = scalar_lea.vmem %s3, %s4395
      $region44: #{hair_feature_extractor_forward.4} parent=39 // pred_fallthru
        _
    $region40: #{hair_feature_extractor_forward.4} parent=5 // pred_fallthru
      _
  $region6: #{hair_feature_extractor_forward.4} parent=0 // loop_footer
    %s13 = sadd.s32 1, %s9
  $region7: #{hair_feature_extractor_forward.4} parent=0 // loop_footer_branch
    %8 = sbr.rel target = $region3
  $region8: #{hair_feature_extractor_forward.4} parent=0 // loop_exit
    _

// kernel: hair_feature_extractor_forward.6
$region0: #{hair_feature_extractor_forward.6}
  #allocation0 [shape = 'u32[]', space=smem, size = 0x4, offset = 0x4, fixed_abs, tag = 'smem constant byte address 0x4 - core index']
  #allocation1 [shape = 'u32[144,128]{1,0:T(1,128)}', space=vmem, size = 0x12000, scoped, tag = 'internal scratch']
  #allocation2 [shape = 'f32[4,16,128]{2,1,0:T(8,128)}', space=vmem, size = 0x8000, scoped, tag = 'scratch operand']
  %s0 = inlined_call_operand.vmem [shape: bf16[2,1,136,192], index: 0, kind: input, shape index: {}]
  %s1 = inlined_call_operand.vmem [shape: bf16[192,384], index: 1, kind: input, shape index: {}]
  %s2 = inlined_call_operand.vmem [shape: f32[1,128], index: 2, kind: input, shape index: {}]
  %s3 = inlined_call_operand.vmem [shape: bf16[2,4,4,128], index: 3, kind: output, shape index: {}]
  %s4 = sld [smem:[#allocation0]]
  $region45: #{hair_feature_extractor_forward.6} parent=0
    _
  %s6 = ssub.s32 1, %s4
  %s7 = scalar_select 0, %s6, %s4
  loop: start=0, step=1, limit=4
  $region2: #{hair_feature_extractor_forward.6} parent=0 // loop_pre_header
    _
  $region3: #{hair_feature_extractor_forward.6} parent=0 // loop_header
    %s9 = sphi 0, %s13
    %p10 = scmp.ge.s32.totalorder %s9, 4
    %s16 = sphi 0, %s28
    %s17 = sphi 0, %s24
    %s18 = sphi 0, %s16
    %s19 = sphi 0, %s17
    %s20 = sphi 0, %s18
    %s21 = sphi 0, %s19
    %s33 = sphi 0, %s35
    %s36 = sphi 0, %s33
    %s37 = sphi 0, %s36
    %s53 = sphi 0, %s37
    %s57 = sphi 0, %s57
    %s59 = sphi 0, %s57
    %s60 = sphi 0, %s59
    %s74 = sphi 0, %s60
    %s78 = sphi 0, %s78
    %s80 = sphi 0, %s78
    %s81 = sphi 0, %s80
    %s95 = sphi 0, %s81
    %s103 = sphi 0, %s105
    %s106 = sphi 0, %s103
    %s107 = sphi 0, %s106
    %s123 = sphi 0, %s107
  $region4: #{hair_feature_extractor_forward.6} parent=0 // loop_header_branch
    %12 = sbr.rel (%p10) target = $region8
  $region5: #{hair_feature_extractor_forward.6} parent=0 // loop_body
    %s14 = ssub.s32 %s9, 1
    %s15 = ssub.s32 %s9, 2
    %s22 = sadd.s32 1, %s17
    %p23 = scmp.ge.s32.totalorder %s22, 1
    %s24 = scalar_select %p23, 0, %s22
    %s25 = sadd.s32 1, %s16
    %s26 = scalar_select %p23, %s25, %s16
    %p27 = scmp.ge.s32.totalorder %s26, 2
    %s28 = scalar_select %p27, 0, %s26
    %s29 = ssub.s32 %s16, %s28
    %s30 = ssub.s32 %s17, %s24
    %s31 = sor.u32 %s29, %s30
    %p32 = scmp.eq.s32.totalorder %s31, 0
    %s34 = sadd.s32 %s33, 1
    %s35 = scalar_select %p32, %s33, %s34
    %p38 = pneg %p32
    %p39 = scmp.eq.s32.totalorder %s9, 1
    %p40 = por %p38, %p39
    %p41 = scmp.ne.s32.totalorder %s33, %s36
    %p42 = scmp.eq.s32.totalorder %s9, 0
    %p43 = por %p41, %p42
    %p44 = scmp.ne.s32.totalorder %s33, %s36
    %p45 = scmp.eq.s32.totalorder %s14, 1
    %p46 = por %p44, %p45
    %p47 = scmp.ne.s32.totalorder %s36, %s37
    %p48 = scmp.eq.s32.totalorder %s14, 0
    %p49 = por %p47, %p48
    %p50 = scmp.ne.s32.totalorder %s36, %s37
    %p51 = scmp.eq.s32.totalorder %s15, 1
    %p52 = por %p50, %p51
    %p54 = scmp.ne.s32.totalorder %s37, %s53
    %p55 = scmp.eq.s32.totalorder %s15, 0
    %p56 = por %p54, %p55
    %s58 = sadd.s32 %s57, 1
    %p61 = scmp.eq.s32.totalorder %s9, 1
    %p62 = scmp.ne.s32.totalorder %s57, %s59
    %p63 = scmp.eq.s32.totalorder %s9, 0
    %p64 = por %p62, %p63
    %p65 = scmp.ne.s32.totalorder %s57, %s59
    %p66 = scmp.eq.s32.totalorder %s14, 1
    %p67 = por %p65, %p66
    %p68 = scmp.ne.s32.totalorder %s59, %s60
    %p69 = scmp.eq.s32.totalorder %s14, 0
    %p70 = por %p68, %p69
    %p71 = scmp.ne.s32.totalorder %s59, %s60
    %p72 = scmp.eq.s32.totalorder %s15, 1
    %p73 = por %p71, %p72
    %p75 = scmp.ne.s32.totalorder %s60, %s74
    %p76 = scmp.eq.s32.totalorder %s15, 0
    %p77 = por %p75, %p76
    %s79 = sadd.s32 %s78, 1
    %p82 = scmp.eq.s32.totalorder %s9, 1
    %p83 = scmp.ne.s32.totalorder %s78, %s80
    %p84 = scmp.eq.s32.totalorder %s9, 0
    %p85 = por %p83, %p84
    %p86 = scmp.ne.s32.totalorder %s78, %s80
    %p87 = scmp.eq.s32.totalorder %s14, 1
    %p88 = por %p86, %p87
    %p89 = scmp.ne.s32.totalorder %s80, %s81
    %p90 = scmp.eq.s32.totalorder %s14, 0
    %p91 = por %p89, %p90
    %p92 = scmp.ne.s32.totalorder %s80, %s81
    %p93 = scmp.eq.s32.totalorder %s15, 1
    %p94 = por %p92, %p93
    %p96 = scmp.ne.s32.totalorder %s81, %s95
    %p97 = scmp.eq.s32.totalorder %s15, 0
    %p98 = por %p96, %p97
    %s99 = ssub.s32 %s16, %s28
    %s100 = ssub.s32 %s17, %s24
    %s101 = sor.u32 %s99, %s100
    %p102 = scmp.eq.s32.totalorder %s101, 0
    %s104 = sadd.s32 %s103, 1
    %s105 = scalar_select %p102, %s103, %s104
    %p108 = pneg %p102
    %p109 = scmp.eq.s32.totalorder %s9, 1
    %p110 = por %p108, %p109
    %p111 = scmp.ne.s32.totalorder %s103, %s106
    %p112 = scmp.eq.s32.totalorder %s9, 0
    %p113 = por %p111, %p112
    %p114 = scmp.ne.s32.totalorder %s103, %s106
    %p115 = scmp.eq.s32.totalorder %s14, 1
    %p116 = por %p114, %p115
    %p117 = scmp.ne.s32.totalorder %s106, %s107
    %p118 = scmp.eq.s32.totalorder %s14, 0
    %p119 = por %p117, %p118
    %p120 = scmp.ne.s32.totalorder %s106, %s107
    %p121 = scmp.eq.s32.totalorder %s15, 1
    %p122 = por %p120, %p121
    %p124 = scmp.ne.s32.totalorder %s107, %s123
    %p125 = scmp.eq.s32.totalorder %s15, 0
    %p126 = por %p124, %p125
    %p127 = scmp.le.s32.totalorder 1, %s9
    %p128 = scmp.lt.s32.totalorder %s9, 3
    %p129 = pnand %p127, %p128
    %p130 = pneg %p129
    // Predicated region
    $region9: #{hair_feature_extractor_forward.6} parent=5 // pred_check
      _
    $region10: #{hair_feature_extractor_forward.6} parent=5 // pred_check_branch
      %132 = sbr.rel (%p129) target = $region12
    $region11: #{hair_feature_extractor_forward.6} parent=5 // pred_region
      %s133 = ssub.s32 %s9, 1
      // Predicated region
      $region13: #{hair_feature_extractor_forward.6} parent=11 // pred_check
        %p134 = pneg %p70
      $region14: #{hair_feature_extractor_forward.6} parent=11 // pred_check_branch
        %136 = sbr.rel (%p134) target = $region16
      $region15: #{hair_feature_extractor_forward.6} parent=11 // pred_region
        _
      $region16: #{hair_feature_extractor_forward.6} parent=11 // pred_fallthru
        _
      // Predicated region
      $region17: #{hair_feature_extractor_forward.6} parent=11 // pred_check
        %p137 = pneg %p91
      $region18: #{hair_feature_extractor_forward.6} parent=11 // pred_check_branch
        %139 = sbr.rel (%p137) target = $region20
      $region19: #{hair_feature_extractor_forward.6} parent=11 // pred_region
        _
      $region20: #{hair_feature_extractor_forward.6} parent=11 // pred_fallthru
        _
    $region12: #{hair_feature_extractor_forward.6} parent=5 // pred_fallthru
      _
    %p140 = scmp.lt.s32.totalorder %s9, 2
    // Predicated region
    $region21: #{hair_feature_extractor_forward.6} parent=5 // pred_check
      %p141 = pneg %p140
    $region22: #{hair_feature_extractor_forward.6} parent=5 // pred_check_branch
      %143 = sbr.rel (%p141) target = $region24
    $region23: #{hair_feature_extractor_forward.6} parent=5 // pred_region
      // Predicated region
      $region25: #{hair_feature_extractor_forward.6} parent=23 // pred_check
        %p144 = pneg %p43
      $region26: #{hair_feature_extractor_forward.6} parent=23 // pred_check_branch
        %146 = sbr.rel (%p144) target = $region28
      $region27: #{hair_feature_extractor_forward.6} parent=23 // pred_region
        %p147 = scmp.lt.s32.totalorder %s16, 1
        %s148 = scalar_select %p147, %s16, 1
        %p149 = scmp.lt.s32.totalorder %s17, 0
        %s150 = scalar_select %p149, %s17, 0
        %s151 = smul.addr %s150, 34
        %s152 = smul.addr %s148, 34
        %s153 = sadd.s32 %s151, %s152
        %s154 = smul.addr %s153, 4
        %s155 = scalar_lea.vmem %s0, %s154
      $region28: #{hair_feature_extractor_forward.6} parent=23 // pred_fallthru
        _
    $region24: #{hair_feature_extractor_forward.6} parent=5 // pred_fallthru
      _
    %p156 = scmp.le.s32.totalorder 1, %s9
    %p157 = scmp.lt.s32.totalorder %s9, 3
    %p158 = pnand %p156, %p157
    %p159 = pneg %p158
    // Predicated region
    $region29: #{hair_feature_extractor_forward.6} parent=5 // pred_check
      _
    $region30: #{hair_feature_extractor_forward.6} parent=5 // pred_check_branch
      %161 = sbr.rel (%p158) target = $region32
    $region31: #{hair_feature_extractor_forward.6} parent=5 // pred_region
      %s162 = ssub.s32 %s9, 1
      %p163 = scmp.lt.s32.totalorder %s18, 1
      %s164 = scalar_select %p163, %s18, 1
      %p165 = scmp.lt.s32.totalorder %s19, 0
      %s166 = scalar_select %p165, %s19, 0
      %s167 = smul.addr %s166, 34
      %s168 = smul.addr %s164, 34
      %s169 = sadd.s32 %s167, %s168
      %s170 = smul.addr %s169, 4
      %s171 = scalar_lea.vmem %s0, %s170
      %p172 = pneg %p49
      %p173 = pneg %p46
      %p174 = pneg %p70
      %p175 = pneg %p67
      %p176 = pneg %p91
      %p177 = pneg %p88
      %p178 = pneg %p119
      %p179 = pneg %p116
      %s180 = smul.u32 4, %s19
      %p181 = scmp.lt.s32.totalorder %s18, 1
      %s182 = scalar_select %p181, %s18, 1
      %p183 = scmp.lt.s32.totalorder %s180, 3
      %s184 = scalar_select %p183, %s180, 3
      %s185 = smul.addr %s182, 4
      %s186 = sadd.s32 %s184, %s185
      %s187 = smul.addr %s186, 2
      %s188 = scalar_lea.vmem %s3, %s187
      %p189 = scmp.lt.s32.totalorder %s18, 1
      %s190 = scalar_select %p189, %s18, 1
      %p191 = scmp.lt.s32.totalorder %s19, 0
      %s192 = scalar_select %p191, %s19, 0
      %s193 = smul.addr %s192, 34
      %s194 = smul.addr %s190, 34
      %s195 = sadd.s32 %s193, %s194
      %s196 = smul.addr %s195, 4
      %s197 = scalar_lea.vmem %s0, %s196
      %s198 = smul.u32 4, %s19
      %p199 = scmp.lt.s32.totalorder %s18, 1
      %s200 = scalar_select %p199, %s18, 1
      %p201 = scmp.lt.s32.totalorder %s198, 3
      %s202 = scalar_select %p201, %s198, 3
      %s203 = smul.addr %s200, 4
      %s204 = sadd.s32 %s202, %s203
      %s205 = smul.addr %s204, 2
      %s206 = scalar_lea.vmem %s3, %s205
      %s207 = smul.u32 4, %s19
      %v209 = vld [vmem:[%s197] sm:$0xff]
      %v210 = vld [vmem:[%s197 + $0x8] sm:$0xff]
      %v211 = vld [vmem:[%s197 + $0x10] sm:$0xff]
      %v212 = vld [vmem:[%s197 + $0x18] sm:$0xff]
      %v213 = vld [vmem:[%s197 + $0x20] sm:$0xff]
      %v214 = vld [vmem:[%s197 + $0x28] sm:$0xff]
      %v215 = vld [vmem:[%s197 + $0x30] sm:$0xff]
      %v216 = vld [vmem:[%s197 + $0x38] sm:$0xff]
      %v217 = vld [vmem:[%s197 + $0x40] sm:$0xff]
      %v218 = vld [vmem:[%s197 + $0x48] sm:$0xff]
      %v219 = vld [vmem:[%s197 + $0x50] sm:$0xff]
      %v220 = vld [vmem:[%s197 + $0x58] sm:$0xff]
      %v221 = vld [vmem:[%s197 + $0x60] sm:$0xff]
      %v222 = vld [vmem:[%s197 + $0x68] sm:$0xff]
      %v223 = vld [vmem:[%s197 + $0x70] sm:$0xff]
      %v224 = vld [vmem:[%s197 + $0x78] sm:$0xff]
      %v225 = vld [vmem:[%s197 + $0x80] sm:$0x11]
      %v226 = vld [vmem:[%s1] sm:$0xff]
      %v227 = vld [vmem:[%s1 + $0x8] sm:$0xf]
      %v228 = vld [vmem:[%s1 + $0xc] sm:$0xff]
      %v229 = vld [vmem:[%s1 + $0x14] sm:$0xf]
      %v230 = vld [vmem:[%s1 + $0x18] sm:$0xff]
      %v231 = vld [vmem:[%s1 + $0x20] sm:$0xf]
      %v232 = vld [vmem:[%s1 + $0x24] sm:$0xff]
      %v233 = vld [vmem:[%s1 + $0x2c] sm:$0xf]
      %v234 = vld [vmem:[%s1 + $0x30] sm:$0xff]
      %v235 = vld [vmem:[%s1 + $0x38] sm:$0xf]
      %v236 = vld [vmem:[%s1 + $0x3c] sm:$0xff]
      %v237 = vld [vmem:[%s1 + $0x44] sm:$0xf]
      %v238 = vld [vmem:[%s1 + $0x48] sm:$0xff]
      %v239 = vld [vmem:[%s1 + $0x50] sm:$0xf]
      %v240 = vld [vmem:[%s1 + $0x54] sm:$0xff]
      %v241 = vld [vmem:[%s1 + $0x5c] sm:$0xf]
      %v242 = vld [vmem:[%s1 + $0x60] sm:$0xff]
      %v243 = vld [vmem:[%s1 + $0x68] sm:$0xf]
      %v244 = vld [vmem:[%s1 + $0x6c] sm:$0xff]
      %v245 = vld [vmem:[%s1 + $0x74] sm:$0xf]
      %v246 = vld [vmem:[%s1 + $0x78] sm:$0xff]
      %v247 = vld [vmem:[%s1 + $0x80] sm:$0xf]
      %v248 = vld [vmem:[%s1 + $0x84] sm:$0xff]
      %v249 = vld [vmem:[%s1 + $0x8c] sm:$0xf]
      %v250 = vld [vmem:[%s1 + $0x90] sm:$0xff]
      %v251 = vld [vmem:[%s1 + $0x98] sm:$0xf]
      %v252 = vld [vmem:[%s1 + $0x9c] sm:$0xff]
      %v253 = vld [vmem:[%s1 + $0xa4] sm:$0xf]
      %v254 = vld [vmem:[%s1 + $0xa8] sm:$0xff]
      %v255 = vld [vmem:[%s1 + $0xb0] sm:$0xf]
      %v256 = vld [vmem:[%s1 + $0xb4] sm:$0xff]
      %v257 = vld [vmem:[%s1 + $0xbc] sm:$0xf]
      %v258 = vld [vmem:[%s1 + $0xc0] sm:$0xff]
      %v259 = vld [vmem:[%s1 + $0xc8] sm:$0xf]
      %v260 = vld [vmem:[%s1 + $0xcc] sm:$0xff]
      %v261 = vld [vmem:[%s1 + $0xd4] sm:$0xf]
      %v262 = vld [vmem:[%s1 + $0xd8] sm:$0xff]
      %v263 = vld [vmem:[%s1 + $0xe0] sm:$0xf]
      %v264 = vld [vmem:[%s1 + $0xe4] sm:$0xff]
      %v265 = vld [vmem:[%s1 + $0xec] sm:$0xf]
      %v266 = vld [vmem:[%s1 + $0xf0] sm:$0xff]
      %v267 = vld [vmem:[%s1 + $0xf8] sm:$0xf]
      %v268 = vld [vmem:[%s1 + $0xfc] sm:$0xff]
      %v269 = vld [vmem:[%s1 + $0x104] sm:$0xf]
      %v270 = vld [vmem:[%s1 + $0x108] sm:$0xff]
      %v271 = vld [vmem:[%s1 + $0x110] sm:$0xf]
      %v272 = vld [vmem:[%s1 + $0x114] sm:$0xff]
      %v273 = vld [vmem:[%s1 + $0x11c] sm:$0xf]
      %v291 = vunpack.c.l.b16 %v209
      %v292 = vunpack.c.h.b16 %v209
      %v293 = vunpack.c.l.b16 %v210
      %v294 = vunpack.c.h.b16 %v210
      %v295 = vunpack.c.l.b16 %v211
      %v296 = vunpack.c.h.b16 %v211
      %v297 = vunpack.c.l.b16 %v212
      %v298 = vunpack.c.h.b16 %v212
      %v299 = vunpack.c.l.b16 %v213
      %v300 = vunpack.c.h.b16 %v213
      %v301 = vunpack.c.l.b16 %v214
      %v302 = vunpack.c.h.b16 %v214
      %v303 = vunpack.c.l.b16 %v215
      %v304 = vunpack.c.h.b16 %v215
      %v305 = vunpack.c.l.b16 %v216
      %v306 = vunpack.c.h.b16 %v216
      %v307 = vunpack.c.l.b16 %v217
      %v308 = vunpack.c.h.b16 %v217
      %v309 = vunpack.c.l.b16 %v218
      %v310 = vunpack.c.h.b16 %v218
      %v311 = vunpack.c.l.b16 %v219
      %v312 = vunpack.c.h.b16 %v219
      %v313 = vunpack.c.l.b16 %v220
      %v314 = vunpack.c.h.b16 %v220
      %v315 = vunpack.c.l.b16 %v221
      %v316 = vunpack.c.h.b16 %v221
      %v317 = vunpack.c.l.b16 %v222
      %v318 = vunpack.c.h.b16 %v222
      %v319 = vunpack.c.l.b16 %v223
      %v320 = vunpack.c.h.b16 %v223
      %v321 = vunpack.c.l.b16 %v224
      %v322 = vunpack.c.h.b16 %v224
      %v323 = vunpack.c.l.b16 %v225
      %v324 = vunpack.c.h.b16 %v225
      %v325 = vpack.c.b16 %v293, %v291
      %v326 = vpack.c.b16 %v294, %v292
      %v327 = vpack.c.b16 %v297, %v295
      %v328 = vpack.c.b16 %v298, %v296
      %v329 = vpack.c.b16 %v301, %v299
      %v330 = vpack.c.b16 %v302, %v300
      %v331 = vpack.c.b16 %v305, %v303
      %v332 = vpack.c.b16 %v306, %v304
      %v333 = vpack.c.b16 %v309, %v307
      %v334 = vpack.c.b16 %v310, %v308
      %v335 = vpack.c.b16 %v313, %v311
      %v336 = vpack.c.b16 %v314, %v312
      %v337 = vpack.c.b16 %v317, %v315
      %v338 = vpack.c.b16 %v318, %v316
      %v339 = vpack.c.b16 %v321, %v319
      %v340 = vpack.c.b16 %v322, %v320
      %v341 = vpack.c.b16 %v323, %v323
      %v342 = vpack.c.b16 %v324, %v324
      %v400 = vunpack.c.l.b16 %v226
      %v401 = vunpack.c.h.b16 %v226
      %v402 = vunpack.c.l.b16 %v227
      %v403 = vunpack.c.l.b16 %v228
      %v404 = vunpack.c.h.b16 %v228
      %v405 = vunpack.c.l.b16 %v229
      %v406 = vunpack.c.l.b16 %v230
      %v407 = vunpack.c.h.b16 %v230
      %v408 = vunpack.c.l.b16 %v231
      %v409 = vunpack.c.l.b16 %v232
      %v410 = vunpack.c.h.b16 %v232
      %v411 = vunpack.c.l.b16 %v233
      %v412 = vunpack.c.l.b16 %v234
      %v413 = vunpack.c.h.b16 %v234
      %v414 = vunpack.c.l.b16 %v235
      %v415 = vunpack.c.l.b16 %v236
      %v416 = vunpack.c.h.b16 %v236
      %v417 = vunpack.c.l.b16 %v237
      %v418 = vunpack.c.l.b16 %v238
      %v419 = vunpack.c.h.b16 %v238
      %v420 = vunpack.c.l.b16 %v239
      %v421 = vunpack.c.l.b16 %v240
      %v422 = vunpack.c.h.b16 %v240
      %v423 = vunpack.c.l.b16 %v241
      %v424 = vunpack.c.l.b16 %v242
      %v425 = vunpack.c.h.b16 %v242
      %v426 = vunpack.c.l.b16 %v243
      %v427 = vunpack.c.l.b16 %v244
      %v428 = vunpack.c.h.b16 %v244
      %v429 = vunpack.c.l.b16 %v245
      %v430 = vunpack.c.l.b16 %v246
      %v431 = vunpack.c.h.b16 %v246
      %v432 = vunpack.c.l.b16 %v247
      %v433 = vunpack.c.l.b16 %v248
      %v434 = vunpack.c.h.b16 %v248
      %v435 = vunpack.c.l.b16 %v249
      %v436 = vunpack.c.l.b16 %v250
      %v437 = vunpack.c.h.b16 %v250
      %v438 = vunpack.c.l.b16 %v251
      %v439 = vunpack.c.l.b16 %v252
      %v440 = vunpack.c.h.b16 %v252
      %v441 = vunpack.c.l.b16 %v253
      %v442 = vunpack.c.l.b16 %v254
      %v443 = vunpack.c.h.b16 %v254
      %v444 = vunpack.c.l.b16 %v255
      %v445 = vunpack.c.l.b16 %v256
      %v446 = vunpack.c.h.b16 %v256
      %v447 = vunpack.c.l.b16 %v257
      %v448 = vunpack.c.l.b16 %v258
      %v449 = vunpack.c.h.b16 %v258
      %v450 = vunpack.c.l.b16 %v259
      %v451 = vunpack.c.l.b16 %v260
      %v452 = vunpack.c.h.b16 %v260
      %v453 = vunpack.c.l.b16 %v261
      %v454 = vunpack.c.l.b16 %v262
      %v455 = vunpack.c.h.b16 %v262
      %v456 = vunpack.c.l.b16 %v263
      %v457 = vunpack.c.l.b16 %v264
      %v458 = vunpack.c.h.b16 %v264
      %v459 = vunpack.c.l.b16 %v265
      %v460 = vunpack.c.l.b16 %v266
      %v461 = vunpack.c.h.b16 %v266
      %v462 = vunpack.c.l.b16 %v267
      %v463 = vunpack.c.l.b16 %v268
      %v464 = vunpack.c.h.b16 %v268
      %v465 = vunpack.c.l.b16 %v269
      %v466 = vunpack.c.l.b16 %v270
      %v467 = vunpack.c.h.b16 %v270
      %v468 = vunpack.c.l.b16 %v271
      %v469 = vunpack.c.l.b16 %v272
      %v470 = vunpack.c.h.b16 %v272
      %v471 = vunpack.c.l.b16 %v273
      %v472 = vpack.c.b16 %v403, %v400
      %v473 = vpack.c.b16 %v404, %v401
      %v474 = vpack.c.b16 %v405, %v402
      %v475 = vpack.c.b16 %v409, %v406
      %v476 = vpack.c.b16 %v410, %v407
      %v477 = vpack.c.b16 %v411, %v408
      %v478 = vpack.c.b16 %v415, %v412
      %v479 = vpack.c.b16 %v416, %v413
      %v480 = vpack.c.b16 %v417, %v414
      %v481 = vpack.c.b16 %v421, %v418
      %v482 = vpack.c.b16 %v422, %v419
      %v483 = vpack.c.b16 %v423, %v420
      %v484 = vpack.c.b16 %v427, %v424
      %v485 = vpack.c.b16 %v428, %v425
      %v486 = vpack.c.b16 %v429, %v426
      %v487 = vpack.c.b16 %v433, %v430
      %v488 = vpack.c.b16 %v434, %v431
      %v489 = vpack.c.b16 %v435, %v432
      %v490 = vpack.c.b16 %v439, %v436
      %v491 = vpack.c.b16 %v440, %v437
      %v492 = vpack.c.b16 %v441, %v438
      %v493 = vpack.c.b16 %v445, %v442
      %v494 = vpack.c.b16 %v446, %v443
      %v495 = vpack.c.b16 %v447, %v444
      %v496 = vpack.c.b16 %v451, %v448
      %v497 = vpack.c.b16 %v452, %v449
      %v498 = vpack.c.b16 %v453, %v450
      %v499 = vpack.c.b16 %v457, %v454
      %v500 = vpack.c.b16 %v458, %v455
      %v501 = vpack.c.b16 %v459, %v456
      %v502 = vpack.c.b16 %v463, %v460
      %v503 = vpack.c.b16 %v464, %v461
      %v504 = vpack.c.b16 %v465, %v462
      %v505 = vpack.c.b16 %v469, %v466
      %v506 = vpack.c.b16 %v470, %v467
      %v507 = vpack.c.b16 %v471, %v468
      %vm544 = vcmask 523264
      %v546 = vsel %vm544, %v326, 0
      %v549 = vsel %vm544, %v328, 0
      %v552 = vsel %vm544, %v330, 0
      %v555 = vsel %vm544, %v332, 0
      %v558 = vsel %vm544, %v334, 0
      %v561 = vsel %vm544, %v336, 0
      %v564 = vsel %vm544, %v338, 0
      %v567 = vsel %vm544, %v340, 0
      %v570 = vsel %vm544, %v342, 0
      %572 = vmatprep.subr.bf16.mxu0 %v473
      %573 = vmatpush1.bf16.msra.mxu0 %v472
      %574 = vmatprep.subr.bf16.mxu0 %v476
      %575 = vmatpush1.bf16.msra.mxu0 %v475
      %576 = vmatprep.subr.bf16.mxu0 %v479
      %577 = vmatpush1.bf16.msra.mxu0 %v478
      %578 = vmatprep.subr.bf16.mxu0 %v482
      %579 = vmatpush1.bf16.msra.mxu0 %v481
      %580 = vmatprep.subr.bf16.mxu0 %v485
      %581 = vmatpush1.bf16.msra.mxu0 %v484
      %582 = vmatprep.subr.bf16.mxu0 %v488
      %583 = vmatpush1.bf16.msra.mxu0 %v487
      %584 = vmatprep.subr.bf16.mxu0 %v491
      %585 = vmatpush1.bf16.msra.mxu0 %v490
      %586 = vmatprep.subr.bf16.mxu0 %v494
      %587 = vmatpush1.bf16.msra.mxu0 %v493
      %588 = vmatprep.subr.bf16.mxu0 %v497
      %589 = vmatpush1.bf16.msra.mxu0 %v496
      %590 = vmatprep.subr.bf16.mxu0 %v500
      %591 = vmatpush1.bf16.msra.mxu0 %v499
      %592 = vmatprep.subr.bf16.mxu0 %v503
      %593 = vmatpush1.bf16.msra.mxu0 %v502
      %594 = vmatprep.subr.bf16.mxu0 %v506
      %595 = vmatpush1.bf16.msra.mxu0 %v505
      %596 = vmatprep.subr.bf16.mxu0 0
      %597 = vmatpush1.bf16.msra.mxu0 0
      %598 = vmatprep.subr.bf16.mxu0 0
      %599 = vmatpush1.bf16.msra.mxu0 0
      %600 = vmatprep.subr.bf16.mxu0 0
      %601 = vmatpush1.bf16.msra.mxu0 0
      %602 = vmatprep.subr.bf16.mxu0 0
      %603 = vmatpush1.bf16.msra.mxu0 0
      %604 = vmatprep.mubr.bf16.mxu0 %v546
      %605 = vmatmul.mubr.bf16.gmra.mrb[0].mxu0 %v325
      %v606 = vpop.f32.mrb[0].mxu0
      %v607 = vadd.f32 0.0, %v606
      %v608 = vpop.f32.mrb[0].mxu0
      %v609 = vadd.f32 0.0, %v608
      %v610 = vpop.f32.mrb[0].mxu0
      %v611 = vadd.f32 0.0, %v610
      %v612 = vpop.f32.mrb[0].mxu0
      %v613 = vadd.f32 0.0, %v612
      %614 = vmatprep.mubr.bf16.mxu0 %v549
      %615 = vmatmul.mubr.bf16.gmra.mrb[0].mxu0 %v327
      %v616 = vpop.f32.mrb[0].mxu0
      %v617 = vadd.f32 0.0, %v616
      %v618 = vpop.f32.mrb[0].mxu0
      %v619 = vadd.f32 0.0, %v618
      %v620 = vpop.f32.mrb[0].mxu0
      %v621 = vadd.f32 0.0, %v620
      %v622 = vpop.f32.mrb[0].mxu0
      %v623 = vadd.f32 0.0, %v622
      %624 = vmatprep.mubr.bf16.mxu0 %v552
      %625 = vmatmul.mubr.bf16.gmra.mrb[0].mxu0 %v329
      %v626 = vpop.f32.mrb[0].mxu0
      %v627 = vadd.f32 0.0, %v626
      %v628 = vpop.f32.mrb[0].mxu0
      %v629 = vadd.f32 0.0, %v628
      %v630 = vpop.f32.mrb[0].mxu0
      %v631 = vadd.f32 0.0, %v630
      %v632 = vpop.f32.mrb[0].mxu0
      %v633 = vadd.f32 0.0, %v632
      %634 = vmatprep.mubr.bf16.mxu0 %v555
      %635 = vmatmul.mubr.bf16.gmra.mrb[0].mxu0 %v331
      %v636 = vpop.f32.mrb[0].mxu0
      %v637 = vadd.f32 0.0, %v636
      %v638 = vpop.f32.mrb[0].mxu0
      %v639 = vadd.f32 0.0, %v638
      %v640 = vpop.f32.mrb[0].mxu0
      %v641 = vadd.f32 0.0, %v640
      %v642 = vpop.f32.mrb[0].mxu0
      %v643 = vadd.f32 0.0, %v642
      %644 = vmatprep.mubr.bf16.mxu0 %v558
      %645 = vmatmul.mubr.bf16.gmra.mrb[0].mxu0 %v333
      %v646 = vpop.f32.mrb[0].mxu0
      %v647 = vadd.f32 0.0, %v646
      %v648 = vpop.f32.mrb[0].mxu0
      %v649 = vadd.f32 0.0, %v648
      %v650 = vpop.f32.mrb[0].mxu0
      %v651 = vadd.f32 0.0, %v650
      %v652 = vpop.f32.mrb[0].mxu0
      %v653 = vadd.f32 0.0, %v652
      %654 = vmatprep.mubr.bf16.mxu0 %v561
      %655 = vmatmul.mubr.bf16.gmra.mrb[0].mxu0 %v335
      %v656 = vpop.f32.mrb[0].mxu0
      %v657 = vadd.f32 0.0, %v656
      %v658 = vpop.f32.mrb[0].mxu0
      %v659 = vadd.f32 0.0, %v658
      %v660 = vpop.f32.mrb[0].mxu0
      %v661 = vadd.f32 0.0, %v660
      %v662 = vpop.f32.mrb[0].mxu0
      %v663 = vadd.f32 0.0, %v662
      %664 = vmatprep.mubr.bf16.mxu0 %v564
      %665 = vmatmul.mubr.bf16.gmra.mrb[0].mxu0 %v337
      %v666 = vpop.f32.mrb[0].mxu0
      %v667 = vadd.f32 0.0, %v666
      %v668 = vpop.f32.mrb[0].mxu0
      %v669 = vadd.f32 0.0, %v668
      %v670 = vpop.f32.mrb[0].mxu0
      %v671 = vadd.f32 0.0, %v670
      %v672 = vpop.f32.mrb[0].mxu0
      %v673 = vadd.f32 0.0, %v672
      %674 = vmatprep.mubr.bf16.mxu0 %v567
      %675 = vmatmul.mubr.bf16.gmra.mrb[0].mxu0 %v339
      %v676 = vpop.f32.mrb[0].mxu0
      %v677 = vadd.f32 0.0, %v676
      %v678 = vpop.f32.mrb[0].mxu0
      %v679 = vadd.f32 0.0, %v678
      %v680 = vpop.f32.mrb[0].mxu0
      %v681 = vadd.f32 0.0, %v680
      %v682 = vpop.f32.mrb[0].mxu0
      %v683 = vadd.f32 0.0, %v682
      %684 = vmatprep.mubr.bf16.mxu0 %v570
      %685 = vmatmul.mubr.bf16.gmra.mrb[0].mxu0 %v341
      %v686 = vpop.f32.mrb[0].mxu0
      %v687 = vpop.f32.mrb[0].mxu0
      %v688 = vadd.f32 0.0, %v687
      %v689 = vpop.f32.mrb[0].mxu0
      %v690 = vpop.f32.mrb[0].mxu0
      %691 = vdwg.mxu0
      %692 = vmatprep.subr.bf16.mxu0 0
      %693 = vmatpush1.bf16.msra.mxu0 %v474
      %694 = vmatprep.subr.bf16.mxu0 0
      %695 = vmatpush1.bf16.msra.mxu0 %v477
      %696 = vmatprep.subr.bf16.mxu0 0
      %697 = vmatpush1.bf16.msra.mxu0 %v480
      %698 = vmatprep.subr.bf16.mxu0 0
      %699 = vmatpush1.bf16.msra.mxu0 %v483
      %700 = vmatprep.subr.bf16.mxu0 0
      %701 = vmatpush1.bf16.msra.mxu0 %v486
      %702 = vmatprep.subr.bf16.mxu0 0
      %703 = vmatpush1.bf16.msra.mxu0 %v489
      %704 = vmatprep.subr.bf16.mxu0 0
      %705 = vmatpush1.bf16.msra.mxu0 %v492
      %706 = vmatprep.subr.bf16.mxu0 0
      %707 = vmatpush1.bf16.msra.mxu0 %v495
      %708 = vmatprep.subr.bf16.mxu0 0
      %709 = vmatpush1.bf16.msra.mxu0 %v498
      %710 = vmatprep.subr.bf16.mxu0 0
      %711 = vmatpush1.bf16.msra.mxu0 %v501
      %712 = vmatprep.subr.bf16.mxu0 0
      %713 = vmatpush1.bf16.msra.mxu0 %v504
      %714 = vmatprep.subr.bf16.mxu0 0
      %715 = vmatpush1.bf16.msra.mxu0 %v507
      %716 = vmatprep.subr.bf16.mxu0 0
      %717 = vmatpush1.bf16.msra.mxu0 0
      %718 = vmatprep.subr.bf16.mxu0 0
      %719 = vmatpush1.bf16.msra.mxu0 0
      %720 = vmatprep.subr.bf16.mxu0 0
      %721 = vmatpush1.bf16.msra.mxu0 0
      %722 = vmatprep.subr.bf16.mxu0 0
      %723 = vmatpush1.bf16.msra.mxu0 0
      %724 = vmatprep.mubr.bf16.mxu0 %v546
      %725 = vmatmul.mubr.bf16.gmra.mrb[0].mxu0 %v325
      %v726 = vpop.f32.mrb[0].mxu0
      %v727 = vadd.f32 0.0, %v726
      %v728 = vpop.f32.mrb[0].mxu0
      %v729 = vpop.f32.mrb[0].mxu0
      %v730 = vadd.f32 0.0, %v729
      %v731 = vpop.f32.mrb[0].mxu0
      %732 = vmatprep.mubr.bf16.mxu0 %v549
      %733 = vmatmul.mubr.bf16.gmra.mrb[0].mxu0 %v327
      %v734 = vpop.f32.mrb[0].mxu0
      %v735 = vadd.f32 0.0, %v734
      %v736 = vpop.f32.mrb[0].mxu0
      %v737 = vpop.f32.mrb[0].mxu0
      %v738 = vadd.f32 0.0, %v737
      %v739 = vpop.f32.mrb[0].mxu0
      %740 = vmatprep.mubr.bf16.mxu0 %v552
      %741 = vmatmul.mubr.bf16.gmra.mrb[0].mxu0 %v329
      %v742 = vpop.f32.mrb[0].mxu0
      %v743 = vadd.f32 0.0, %v742
      %v744 = vpop.f32.mrb[0].mxu0
      %v745 = vpop.f32.mrb[0].mxu0
      %v746 = vadd.f32 0.0, %v745
      %v747 = vpop.f32.mrb[0].mxu0
      %748 = vmatprep.mubr.bf16.mxu0 %v555
      %749 = vmatmul.mubr.bf16.gmra.mrb[0].mxu0 %v331
      %v750 = vpop.f32.mrb[0].mxu0
      %v751 = vadd.f32 0.0, %v750
      %v752 = vpop.f32.mrb[0].mxu0
      %v753 = vpop.f32.mrb[0].mxu0
      %v754 = vadd.f32 0.0, %v753
      %v755 = vpop.f32.mrb[0].mxu0
      %756 = vmatprep.mubr.bf16.mxu0 %v558
      %757 = vmatmul.mubr.bf16.gmra.mrb[0].mxu0 %v333
      %v758 = vpop.f32.mrb[0].mxu0
      %v759 = vadd.f32 0.0, %v758
      %v760 = vpop.f32.mrb[0].mxu0
      %v761 = vpop.f32.mrb[0].mxu0
      %v762 = vadd.f32 0.0, %v761
      %v763 = vpop.f32.mrb[0].mxu0
      %764 = vmatprep.mubr.bf16.mxu0 %v561
      %765 = vmatmul.mubr.bf16.gmra.mrb[0].mxu0 %v335
      %v766 = vpop.f32.mrb[0].mxu0
      %v767 = vadd.f32 0.0, %v766
      %v768 = vpop.f32.mrb[0].mxu0
      %v769 = vpop.f32.mrb[0].mxu0
      %v770 = vadd.f32 0.0, %v769
      %v771 = vpop.f32.mrb[0].mxu0
      %772 = vmatprep.mubr.bf16.mxu0 %v564
      %773 = vmatmul.mubr.bf16.gmra.mrb[0].mxu0 %v337
      %v774 = vpop.f32.mrb[0].mxu0
      %v775 = vadd.f32 0.0, %v774
      %v776 = vpop.f32.mrb[0].mxu0
      %v777 = vpop.f32.mrb[0].mxu0
      %v778 = vadd.f32 0.0, %v777
      %v779 = vpop.f32.mrb[0].mxu0
      %780 = vmatprep.mubr.bf16.mxu0 %v567
      %781 = vmatmul.mubr.bf16.gmra.mrb[0].mxu0 %v339
      %v782 = vpop.f32.mrb[0].mxu0
      %v783 = vadd.f32 0.0, %v782
      %v784 = vpop.f32.mrb[0].mxu0
      %v785 = vpop.f32.mrb[0].mxu0
      %v786 = vadd.f32 0.0, %v785
      %v787 = vpop.f32.mrb[0].mxu0
      %788 = vmatprep.mubr.bf16.mxu0 %v570
      %789 = vmatmul.mubr.bf16.gmra.mrb[0].mxu0 %v341
      %v790 = vpop.f32.mrb[0].mxu0
      %v791 = vadd.f32 0.0, %v790
      %v792 = vpop.f32.mrb[0].mxu0
      %v793 = vpop.f32.mrb[0].mxu0
      %v794 = vpop.f32.mrb[0].mxu0
      %795 = vdwg.mxu0
      %vm813 = vcmask 1046528
      %v814 = vrot.slane %v609, 1
      %v815 = vrot.slane %v613, 1
      %v816 = vsel %vm813, %v814, %v815
      %v817 = vrot.slane %v619, 1
      %v818 = vsel %vm813, %v815, %v817
      %v819 = vrot.slane %v623, 1
      %v820 = vsel %vm813, %v817, %v819
      %v821 = vrot.slane %v629, 1
      %v822 = vsel %vm813, %v819, %v821
      %v823 = vrot.slane %v633, 1
      %v824 = vsel %vm813, %v821, %v823
      %v825 = vrot.slane %v639, 1
      %v826 = vsel %vm813, %v823, %v825
      %v827 = vrot.slane %v643, 1
      %v828 = vsel %vm813, %v825, %v827
      %v829 = vrot.slane %v649, 1
      %v830 = vsel %vm813, %v827, %v829
      %v831 = vrot.slane %v653, 1
      %v832 = vsel %vm813, %v829, %v831
      %v833 = vrot.slane %v659, 1
      %v834 = vsel %vm813, %v831, %v833
      %v835 = vrot.slane %v663, 1
      %v836 = vsel %vm813, %v833, %v835
      %v837 = vrot.slane %v669, 1
      %v838 = vsel %vm813, %v835, %v837
      %v839 = vrot.slane %v673, 1
      %v840 = vsel %vm813, %v837, %v839
      %v841 = vrot.slane %v679, 1
      %v842 = vsel %vm813, %v839, %v841
      %v843 = vrot.slane %v683, 1
      %v844 = vsel %vm813, %v841, %v843
      %v845 = vrot.slane %v688, 1
      %v846 = vsel %vm813, %v843, %v845
      %v863 = vadd.f32 %v607, %v816
      %v864 = vadd.f32 %v611, %v818
      %v865 = vadd.f32 %v617, %v820
      %v866 = vadd.f32 %v621, %v822
      %v867 = vadd.f32 %v627, %v824
      %v868 = vadd.f32 %v631, %v826
      %v869 = vadd.f32 %v637, %v828
      %v870 = vadd.f32 %v641, %v830
      %v871 = vadd.f32 %v647, %v832
      %v872 = vadd.f32 %v651, %v834
      %v873 = vadd.f32 %v657, %v836
      %v874 = vadd.f32 %v661, %v838
      %v875 = vadd.f32 %v667, %v840
      %v876 = vadd.f32 %v671, %v842
      %v877 = vadd.f32 %v677, %v844
      %v878 = vadd.f32 %v681, %v846
      %vm896 = vcmask 1045504
      %v897 = vrot.slane %v727, 2
      %v898 = vrot.slane %v730, 2
      %v899 = vsel %vm896, %v897, %v898
      %v900 = vrot.slane %v735, 2
      %v901 = vsel %vm896, %v898, %v900
      %v902 = vrot.slane %v738, 2
      %v903 = vsel %vm896, %v900, %v902
      %v904 = vrot.slane %v743, 2
      %v905 = vsel %vm896, %v902, %v904
      %v906 = vrot.slane %v746, 2
      %v907 = vsel %vm896, %v904, %v906
      %v908 = vrot.slane %v751, 2
      %v909 = vsel %vm896, %v906, %v908
      %v910 = vrot.slane %v754, 2
      %v911 = vsel %vm896, %v908, %v910
      %v912 = vrot.slane %v759, 2
      %v913 = vsel %vm896, %v910, %v912
      %v914 = vrot.slane %v762, 2
      %v915 = vsel %vm896, %v912, %v914
      %v916 = vrot.slane %v767, 2
      %v917 = vsel %vm896, %v914, %v916
      %v918 = vrot.slane %v770, 2
      %v919 = vsel %vm896, %v916, %v918
      %v920 = vrot.slane %v775, 2
      %v921 = vsel %vm896, %v918, %v920
      %v922 = vrot.slane %v778, 2
      %v923 = vsel %vm896, %v920, %v922
      %v924 = vrot.slane %v783, 2
      %v925 = vsel %vm896, %v922, %v924
      %v926 = vrot.slane %v786, 2
      %v927 = vsel %vm896, %v924, %v926
      %v928 = vrot.slane %v791, 2
      %v929 = vsel %vm896, %v926, %v928
      %v946 = vadd.f32 %v863, %v899
      %v947 = vadd.f32 %v864, %v901
      %v948 = vadd.f32 %v865, %v903
      %v949 = vadd.f32 %v866, %v905
      %v950 = vadd.f32 %v867, %v907
      %v951 = vadd.f32 %v868, %v909
      %v952 = vadd.f32 %v869, %v911
      %v953 = vadd.f32 %v870, %v913
      %v954 = vadd.f32 %v871, %v915
      %v955 = vadd.f32 %v872, %v917
      %v956 = vadd.f32 %v873, %v919
      %v957 = vadd.f32 %v874, %v921
      %v958 = vadd.f32 %v875, %v923
      %v959 = vadd.f32 %v876, %v925
      %v960 = vadd.f32 %v877, %v927
      %v961 = vadd.f32 %v878, %v929
      %v962 = vmax.f32 %v946, %v948
      %v963 = vmax.f32 %v947, %v949
      %964 = vst [vmem:[#allocation2] sm:$0xff] %v962
      %965 = vst [vmem:[#allocation2 + $0x8] sm:$0xff] %v963
      %v966 = vmax.f32 %v950, %v952
      %v967 = vmax.f32 %v951, %v953
      %s968 = scalar_lea.vmem [#allocation2], 16
      %969 = vst [vmem:[%s968] sm:$0xff] %v966
      %970 = vst [vmem:[%s968 + $0x8] sm:$0xff] %v967
      %v971 = vmax.f32 %v954, %v956
      %v972 = vmax.f32 %v955, %v957
      %s973 = scalar_lea.vmem [#allocation2], 32
      %974 = vst [vmem:[%s973] sm:$0xff] %v971
      %975 = vst [vmem:[%s973 + $0x8] sm:$0xff] %v972
      %v976 = vmax.f32 %v958, %v960
      %v977 = vmax.f32 %v959, %v961
      %s978 = scalar_lea.vmem [#allocation2], 48
      %979 = vst [vmem:[%s978] sm:$0xff] %v976
      %980 = vst [vmem:[%s978 + $0x8] sm:$0xff] %v977
      %v981 = vld [vmem:[#allocation2] ss:$2 sm:$0xf]
      %s982 = scalar_lea.vmem [#allocation2], 16
      %v983 = vld [vmem:[%s982] ss:$2 sm:$0xf]
      %s984 = scalar_lea.vmem [#allocation2], 32
      %v985 = vld [vmem:[%s984] ss:$2 sm:$0xf]
      %s986 = scalar_lea.vmem [#allocation2], 48
      %v987 = vld [vmem:[%s986] ss:$2 sm:$0xf]
      %s988 = scalar_lea.vmem [#allocation2], 1
      %v989 = vld [vmem:[%s988] ss:$2 sm:$0xf]
      %s990 = scalar_lea.vmem [#allocation2], 17
      %v991 = vld [vmem:[%s990] ss:$2 sm:$0xf]
      %s992 = scalar_lea.vmem [#allocation2], 33
      %v993 = vld [vmem:[%s992] ss:$2 sm:$0xf]
      %s994 = scalar_lea.vmem [#allocation2], 49
      %v995 = vld [vmem:[%s994] ss:$2 sm:$0xf]
      %v996 = vmax.f32 %v981, %v989
      %v997 = vmax.f32 %v983, %v991
      %v998 = vmax.f32 %v985, %v993
      %v999 = vmax.f32 %v987, %v995
      %v1000 = vld [vmem:[%s2] sm:$0x1]
      %v1002 = vlaneseq
      %v1003 = vshrl.u32 %v1002, 7
      %v1004 = vsub.s32 0, %v1003
      %v1005 = vrot.slane %v1000, %v1004
      %v1007 = vadd.f32 %v996, %v1005
      %v1008 = vadd.f32 %v997, %v1005
      %v1009 = vadd.f32 %v998, %v1005
      %v1010 = vadd.f32 %v999, %v1005
      %v1011 = vmax.f32 %v1007, 0.0
      %v1012 = vmax.f32 %v1008, 0.0
      %v1013 = vmax.f32 %v1009, 0.0
      %v1014 = vmax.f32 %v1010, 0.0
      %v1015 = vpack.c.bf16 %v1011, %v1011
      %v1016 = vpack.c.bf16 %v1012, %v1012
      %v1017 = vpack.c.bf16 %v1013, %v1013
      %v1018 = vpack.c.bf16 %v1014, %v1014
      %1019 = vst [vmem:[%s206] sm:$0x3] %v1015
      %1020 = vst [vmem:[%s206 + $0x2] sm:$0x3] %v1016
      %1021 = vst [vmem:[%s206 + $0x4] sm:$0x3] %v1017
      %1022 = vst [vmem:[%s206 + $0x6] sm:$0x3] %v1018
      %s1023 = smul.u32 4, %s19
      %p1024 = scmp.lt.s32.totalorder %s18, 1
      %s1025 = scalar_select %p1024, %s18, 1
      %p1026 = scmp.lt.s32.totalorder %s1023, 3
      %s1027 = scalar_select %p1026, %s1023, 3
      %s1028 = smul.addr %s1025, 4
      %s1029 = sadd.s32 %s1027, %s1028
      %s1030 = smul.addr %s1029, 2
      %s1031 = scalar_lea.vmem %s3, %s1030
      // Predicated region
      $region33: #{hair_feature_extractor_forward.6} parent=31 // pred_check
        %p1032 = pneg %p116
      $region34: #{hair_feature_extractor_forward.6} parent=31 // pred_check_branch
        %1034 = sbr.rel (%p1032) target = $region36
      $region35: #{hair_feature_extractor_forward.6} parent=31 // pred_region
        %s1035 = smul.u32 4, %s19
      $region36: #{hair_feature_extractor_forward.6} parent=31 // pred_fallthru
        _
    $region32: #{hair_feature_extractor_forward.6} parent=5 // pred_fallthru
      _
    %p1036 = scmp.le.s32.totalorder 2, %s9
    // Predicated region
    $region37: #{hair_feature_extractor_forward.6} parent=5 // pred_check
      %p1037 = pneg %p1036
    $region38: #{hair_feature_extractor_forward.6} parent=5 // pred_check_branch
      %1039 = sbr.rel (%p1037) target = $region40
    $region39: #{hair_feature_extractor_forward.6} parent=5 // pred_region
      %s1040 = ssub.s32 %s9, 2
      // Predicated region
      $region41: #{hair_feature_extractor_forward.6} parent=39 // pred_check
        %p1041 = pneg %p122
      $region42: #{hair_feature_extractor_forward.6} parent=39 // pred_check_branch
        %1043 = sbr.rel (%p1041) target = $region44
      $region43: #{hair_feature_extractor_forward.6} parent=39 // pred_region
        %s1044 = smul.u32 4, %s21
        %p1045 = scmp.lt.s32.totalorder %s20, 1
        %s1046 = scalar_select %p1045, %s20, 1
        %p1047 = scmp.lt.s32.totalorder %s1044, 3
        %s1048 = scalar_select %p1047, %s1044, 3
        %s1049 = smul.addr %s1046, 4
        %s1050 = sadd.s32 %s1048, %s1049
        %s1051 = smul.addr %s1050, 2
        %s1052 = scalar_lea.vmem %s3, %s1051
      $region44: #{hair_feature_extractor_forward.6} parent=39 // pred_fallthru
        _
    $region40: #{hair_feature_extractor_forward.6} parent=5 // pred_fallthru
      _
  $region6: #{hair_feature_extractor_forward.6} parent=0 // loop_footer
    %s13 = sadd.s32 1, %s9
  $region7: #{hair_feature_extractor_forward.6} parent=0 // loop_footer_branch
    %8 = sbr.rel target = $region3
  $region8: #{hair_feature_extractor_forward.6} parent=0 // loop_exit
    _

// kernel: hair_feature_extractor_forward.7
$region0: #{hair_feature_extractor_forward.7}
  #allocation0 [shape = 'u32[]', space=smem, size = 0x4, offset = 0x4, fixed_abs, tag = 'smem constant byte address 0x4 - core index']
  #allocation1 [shape = 'u32[144,128]{1,0:T(1,128)}', space=vmem, size = 0x12000, scoped, tag = 'internal scratch']
  #allocation2 [shape = 'f32[2,1]{1,0:T(2,128)}', space=vmem, size = 0x400, scoped, tag = 'scratch operand']
  #allocation3 [shape = 'f32[1,1]{1,0:T(1,128)S(1)}', space=vmem, size = 0x200, scoped, tag = 'scoped memory for hair_feature_extractor_forward.7']
  %s0 = inlined_call_operand.vmem [shape: bf16[2,2048], index: 0, kind: input, shape index: {}]
  %s1 = inlined_call_operand.vmem [shape: f32[1,2048], index: 1, kind: input, shape index: {}]
  %s2 = inlined_call_operand.<no memory space> [shape: f32[1,1], index: 2, kind: input, shape index: {}]
  %s3 = inlined_call_operand.vmem [shape: f32[2,1], index: 3, kind: output, shape index: {}]
  %s4 = sld [smem:[#allocation0]]
  $region30: #{hair_feature_extractor_forward.7} parent=0
    _
  %s6 = ssub.s32 1, %s4
  %s7 = scalar_select 0, %s6, %s4
  %v8 = vstv %s2
  %9 = vst [vmem:[#allocation3] sm:$0x1] %v8
  // Predicated region
  $region2: #{hair_feature_extractor_forward.7} parent=0 // pred_check
    _
  $region3: #{hair_feature_extractor_forward.7} parent=0 // pred_check_branch
    %11 = sbr.rel (0) target = $region5
  $region4: #{hair_feature_extractor_forward.7} parent=0 // pred_region
    _
  $region5: #{hair_feature_extractor_forward.7} parent=0 // pred_fallthru
    _
  // Predicated region
  $region6: #{hair_feature_extractor_forward.7} parent=0 // pred_check
    _
  $region7: #{hair_feature_extractor_forward.7} parent=0 // pred_check_branch
    %13 = sbr.rel (0) target = $region9
  $region8: #{hair_feature_extractor_forward.7} parent=0 // pred_region
    _
  $region9: #{hair_feature_extractor_forward.7} parent=0 // pred_fallthru
    _
  // Predicated region
  $region10: #{hair_feature_extractor_forward.7} parent=0 // pred_check
    _
  $region11: #{hair_feature_extractor_forward.7} parent=0 // pred_check_branch
    %15 = sbr.rel (0) target = $region13
  $region12: #{hair_feature_extractor_forward.7} parent=0 // pred_region
    _
  $region13: #{hair_feature_extractor_forward.7} parent=0 // pred_fallthru
    _
  %p16 = scmp.eq.s32.totalorder 0, 0
  // Predicated region
  $region14: #{hair_feature_extractor_forward.7} parent=0 // pred_check
    %p17 = pneg %p16
  $region15: #{hair_feature_extractor_forward.7} parent=0 // pred_check_branch
    %19 = sbr.rel (%p17) target = $region17
  $region16: #{hair_feature_extractor_forward.7} parent=0 // pred_region
    %vm20 = vcmask 1024
    %21 = vst.msk [vmem:[#allocation2] sm:$0x3] %vm20, 0.0
  $region17: #{hair_feature_extractor_forward.7} parent=0 // pred_fallthru
    _
  %v22 = vld [vmem:[%s0] sm:$0xff]
  %v23 = vld [vmem:[%s0 + $0x8] sm:$0xff]
  %v24 = vunpack.c.l.bf16 %v22
  %v25 = vunpack.c.h.bf16 %v22
  %v26 = vunpack.c.l.bf16 %v23
  %v27 = vunpack.c.h.bf16 %v23
  %v28 = vld [vmem:[%s1] sm:$0xff]
  %v29 = vld [vmem:[%s1 + $0x8] sm:$0xff]
  %v30 = vld [vmem:[#allocation2] sm:$0x3]
  %v33 = vlaneseq
  %v34 = vshrl.u32 %v33, 7
  %v35 = vsub.s32 0, %v34
  %v36 = vrot.slane %v28, %v35
  %v37 = vlaneseq
  %v38 = vshrl.u32 %v37, 7
  %v39 = vsub.s32 1, %v38
  %v40 = vrot.slane %v28, %v39
  %v41 = vlaneseq
  %v42 = vshrl.u32 %v41, 7
  %v43 = vsub.s32 2, %v42
  %v44 = vrot.slane %v28, %v43
  %v45 = vlaneseq
  %v46 = vshrl.u32 %v45, 7
  %v47 = vsub.s32 3, %v46
  %v48 = vrot.slane %v28, %v47
  %v49 = vlaneseq
  %v50 = vshrl.u32 %v49, 7
  %v51 = vsub.s32 4, %v50
  %v52 = vrot.slane %v28, %v51
  %v53 = vlaneseq
  %v54 = vshrl.u32 %v53, 7
  %v55 = vsub.s32 5, %v54
  %v56 = vrot.slane %v28, %v55
  %v57 = vlaneseq
  %v58 = vshrl.u32 %v57, 7
  %v59 = vsub.s32 6, %v58
  %v60 = vrot.slane %v28, %v59
  %v61 = vlaneseq
  %v62 = vshrl.u32 %v61, 7
  %v63 = vsub.s32 7, %v62
  %v64 = vrot.slane %v28, %v63
  %v65 = vlaneseq
  %v66 = vshrl.u32 %v65, 7
  %v67 = vsub.s32 0, %v66
  %v68 = vrot.slane %v29, %v67
  %v69 = vlaneseq
  %v70 = vshrl.u32 %v69, 7
  %v71 = vsub.s32 1, %v70
  %v72 = vrot.slane %v29, %v71
  %v73 = vlaneseq
  %v74 = vshrl.u32 %v73, 7
  %v75 = vsub.s32 2, %v74
  %v76 = vrot.slane %v29, %v75
  %v77 = vlaneseq
  %v78 = vshrl.u32 %v77, 7
  %v79 = vsub.s32 3, %v78
  %v80 = vrot.slane %v29, %v79
  %v81 = vlaneseq
  %v82 = vshrl.u32 %v81, 7
  %v83 = vsub.s32 4, %v82
  %v84 = vrot.slane %v29, %v83
  %v85 = vlaneseq
  %v86 = vshrl.u32 %v85, 7
  %v87 = vsub.s32 5, %v86
  %v88 = vrot.slane %v29, %v87
  %v89 = vlaneseq
  %v90 = vshrl.u32 %v89, 7
  %v91 = vsub.s32 6, %v90
  %v92 = vrot.slane %v29, %v91
  %v93 = vlaneseq
  %v94 = vshrl.u32 %v93, 7
  %v95 = vsub.s32 7, %v94
  %v96 = vrot.slane %v29, %v95
  %v97 = vcombine.low %v36, %v40
  %v98 = vcombine.low %v44, %v48
  %v100 = vunpack.c.l.s4 1983009808
  %v101 = vunpack.c.0.s8 %v100
  %v102 = vlaneseq
  %v103 = vshrl.u32 %v102, 7
  %v104 = vsub.s32 %v101, %v103
  %v105 = vrot.slane %v97, %v104
  %v107 = vunpack.c.l.s4 1983009808
  %v108 = vunpack.c.0.s8 %v107
  %v109 = vlaneseq
  %v110 = vshrl.u32 %v109, 7
  %v111 = vsub.s32 %v108, %v110
  %v112 = vrot.slane %v98, %v111
  %v113 = vcombine.low %v105, %v112
  %v114 = vcombine.low %v52, %v56
  %v115 = vcombine.low %v60, %v64
  %v117 = vunpack.c.l.s4 1983009808
  %v118 = vunpack.c.0.s8 %v117
  %v119 = vlaneseq
  %v120 = vshrl.u32 %v119, 7
  %v121 = vsub.s32 %v118, %v120
  %v122 = vrot.slane %v114, %v121
  %v124 = vunpack.c.l.s4 1983009808
  %v125 = vunpack.c.0.s8 %v124
  %v126 = vlaneseq
  %v127 = vshrl.u32 %v126, 7
  %v128 = vsub.s32 %v125, %v127
  %v129 = vrot.slane %v115, %v128
  %v130 = vcombine.low %v122, %v129
  %v131 = vcombine.low %v68, %v72
  %v132 = vcombine.low %v76, %v80
  %v134 = vunpack.c.l.s4 1983009808
  %v135 = vunpack.c.0.s8 %v134
  %v136 = vlaneseq
  %v137 = vshrl.u32 %v136, 7
  %v138 = vsub.s32 %v135, %v137
  %v139 = vrot.slane %v131, %v138
  %v141 = vunpack.c.l.s4 1983009808
  %v142 = vunpack.c.0.s8 %v141
  %v143 = vlaneseq
  %v144 = vshrl.u32 %v143, 7
  %v145 = vsub.s32 %v142, %v144
  %v146 = vrot.slane %v132, %v145
  %v147 = vcombine.low %v139, %v146
  %v148 = vcombine.low %v84, %v88
  %v149 = vcombine.low %v92, %v96
  %v151 = vunpack.c.l.s4 1983009808
  %v152 = vunpack.c.0.s8 %v151
  %v153 = vlaneseq
  %v154 = vshrl.u32 %v153, 7
  %v155 = vsub.s32 %v152, %v154
  %v156 = vrot.slane %v148, %v155
  %v158 = vunpack.c.l.s4 1983009808
  %v159 = vunpack.c.0.s8 %v158
  %v160 = vlaneseq
  %v161 = vshrl.u32 %v160, 7
  %v162 = vsub.s32 %v159, %v161
  %v163 = vrot.slane %v149, %v162
  %v164 = vcombine.low %v156, %v163
  %v169 = vmul.f32 %v24, %v113
  %v170 = vmul.f32 %v25, %v130
  %v171 = vmul.f32 %v26, %v147
  %v172 = vmul.f32 %v27, %v164
  %v177 = vcombine.high %v169, %v169
  %v179 = vunpack.c.l.s4 1983009808
  %v180 = vunpack.c.0.s8 %v179
  %v181 = vlaneseq
  %v182 = vshrl.u32 %v181, 7
  %v183 = vsub.s32 %v180, %v182
  %v184 = vrot.slane %v169, %v183
  %v186 = vunpack.c.l.s4 1983009808
  %v187 = vunpack.c.0.s8 %v186
  %v188 = vlaneseq
  %v189 = vshrl.u32 %v188, 7
  %v190 = vsub.s32 %v187, %v189
  %v191 = vrot.slane %v177, %v190
  %v192 = vcombine.high %v184, %v184
  %v193 = vcombine.high %v191, %v191
  %v194 = vcombine.high %v170, %v170
  %v196 = vunpack.c.l.s4 1983009808
  %v197 = vunpack.c.0.s8 %v196
  %v198 = vlaneseq
  %v199 = vshrl.u32 %v198, 7
  %v200 = vsub.s32 %v197, %v199
  %v201 = vrot.slane %v170, %v200
  %v203 = vunpack.c.l.s4 1983009808
  %v204 = vunpack.c.0.s8 %v203
  %v205 = vlaneseq
  %v206 = vshrl.u32 %v205, 7
  %v207 = vsub.s32 %v204, %v206
  %v208 = vrot.slane %v194, %v207
  %v209 = vcombine.high %v201, %v201
  %v210 = vcombine.high %v208, %v208
  %v211 = vcombine.high %v171, %v171
  %v213 = vunpack.c.l.s4 1983009808
  %v214 = vunpack.c.0.s8 %v213
  %v215 = vlaneseq
  %v216 = vshrl.u32 %v215, 7
  %v217 = vsub.s32 %v214, %v216
  %v218 = vrot.slane %v171, %v217
  %v220 = vunpack.c.l.s4 1983009808
  %v221 = vunpack.c.0.s8 %v220
  %v222 = vlaneseq
  %v223 = vshrl.u32 %v222, 7
  %v224 = vsub.s32 %v221, %v223
  %v225 = vrot.slane %v211, %v224
  %v226 = vcombine.high %v218, %v218
  %v227 = vcombine.high %v225, %v225
  %v228 = vcombine.high %v172, %v172
  %v230 = vunpack.c.l.s4 1983009808
  %v231 = vunpack.c.0.s8 %v230
  %v232 = vlaneseq
  %v233 = vshrl.u32 %v232, 7
  %v234 = vsub.s32 %v231, %v233
  %v235 = vrot.slane %v172, %v234
  %v237 = vunpack.c.l.s4 1983009808
  %v238 = vunpack.c.0.s8 %v237
  %v239 = vlaneseq
  %v240 = vshrl.u32 %v239, 7
  %v241 = vsub.s32 %v238, %v240
  %v242 = vrot.slane %v228, %v241
  %v243 = vcombine.high %v235, %v235
  %v244 = vcombine.high %v242, %v242
  %vm261 = vcmask 1041408
  %v262 = vsel %vm261, %v184, 0.0
  %v263 = vsel %vm261, %v192, 0.0
  %v264 = vadd.f32 %v262, %v263
  %v265 = vsel %vm261, %v191, 0.0
  %v266 = vadd.f32 %v264, %v265
  %v267 = vsel %vm261, %v193, 0.0
  %v268 = vadd.f32 %v266, %v267
  %v269 = vsel %vm261, %v201, 0.0
  %v270 = vadd.f32 %v268, %v269
  %v271 = vsel %vm261, %v209, 0.0
  %v272 = vadd.f32 %v270, %v271
  %v273 = vsel %vm261, %v208, 0.0
  %v274 = vadd.f32 %v272, %v273
  %v275 = vsel %vm261, %v210, 0.0
  %v276 = vadd.f32 %v274, %v275
  %v277 = vsel %vm261, %v218, 0.0
  %v278 = vadd.f32 %v276, %v277
  %v279 = vsel %vm261, %v226, 0.0
  %v280 = vadd.f32 %v278, %v279
  %v281 = vsel %vm261, %v225, 0.0
  %v282 = vadd.f32 %v280, %v281
  %v283 = vsel %vm261, %v227, 0.0
  %v284 = vadd.f32 %v282, %v283
  %v285 = vsel %vm261, %v235, 0.0
  %v286 = vadd.f32 %v284, %v285
  %v287 = vsel %vm261, %v243, 0.0
  %v288 = vadd.f32 %v286, %v287
  %v289 = vsel %vm261, %v242, 0.0
  %v290 = vadd.f32 %v288, %v289
  %v291 = vsel %vm261, %v244, 0.0
  %v292 = vadd.f32 %v290, %v291
  %293 = vadd.xlane.f32.xlu0 %v292
  %v294 = vpop.xlane.xlu0 %293
  %v295 = vadd.f32 %v30, %v294
  %vm296 = vcmask 1024
  %297 = vst.msk [vmem:[#allocation2] sm:$0x3] %vm296, %v295
  // Predicated region
  $region18: #{hair_feature_extractor_forward.7} parent=0 // pred_check
    %p298 = pneg %p16
  $region19: #{hair_feature_extractor_forward.7} parent=0 // pred_check_branch
    %300 = sbr.rel (%p298) target = $region21
  $region20: #{hair_feature_extractor_forward.7} parent=0 // pred_region
    %v301 = vld [vmem:[#allocation2] sm:$0x3]
    %v302 = vld [vmem:[#allocation3] sm:$0x1]
    %v304 = vlaneseq
    %v305 = vshrl.u32 %v304, 7
    %v306 = vsub.s32 0, %v305
    %v307 = vrot.slane %v302, %v306
    %v309 = vadd.f32 %v301, %v307
    %v310 = vsub.f32 0.0, %v309
    %v311 = vmul.f32 %v310, 1.442695
    %v312 = vpow.pop %v311
    %v313 = vadd.f32 %v312, 1.0
    %v314 = vrcp.pop %v313
    %v315 = vmul.f32 6.0, %v314
    %v316 = vadd.f32 %v315, 1.0
    %317 = vst.msk [vmem:[%s3] sm:$0x3] %vm296, %v316
  $region21: #{hair_feature_extractor_forward.7} parent=0 // pred_fallthru
    _
  // Predicated region
  $region22: #{hair_feature_extractor_forward.7} parent=0 // pred_check
    _
  $region23: #{hair_feature_extractor_forward.7} parent=0 // pred_check_branch
    %319 = sbr.rel (0) target = $region25
  $region24: #{hair_feature_extractor_forward.7} parent=0 // pred_region
    _
  $region25: #{hair_feature_extractor_forward.7} parent=0 // pred_fallthru
    _
  // Predicated region
  $region26: #{hair_feature_extractor_forward.7} parent=0 // pred_check
    _
  $region27: #{hair_feature_extractor_forward.7} parent=0 // pred_check_branch
    %321 = sbr.rel (0) target = $region29
  $region28: #{hair_feature_extractor_forward.7} parent=0 // pred_region
    _
  $region29: #{hair_feature_extractor_forward.7} parent=0 // pred_fallthru
    _

</llo_original>
